<compile_context>
chip_gen: v7x
topology: tpu7x:2x2x1
jax: 0.10.0
libtpu: 0.0.40
codegen_flags: <defaults>
</compile_context>

<pallas_src>
import functools

import jax
import jax.numpy as jnp
import numpy as np
from jax import lax
from jax.experimental import pallas as pl
from jax.experimental.pallas import tpu as pltpu


# ----------------------------- fused Pallas kernel ---------------------------

def _fused_osa_kernel(x_ref, w0_ref, b0_ref, wr_ref, br_ref,
                      wcx_ref, wcl_ref, bc_ref, wfc_ref, bfc_ref,
                      o_ref, *, H, W, n_layers):
    HW = H * W
    # Zero row padding for the flattened (h*W + w) layout; rounded up to a multiple
    # of 8 so the in-kernel concatenation stays sublane-aligned.
    PAD = ((W + 1 + 7) // 8) * 8

    # Column index of every output row -> masks for the W boundary of the 3x3 conv.
    col = lax.broadcasted_iota(jnp.int32, (HW, 1), 0) % W
    w_mask = {-1: col >= 1, 0: None, 1: col <= (W - 2)}

    def conv3x3_bn_relu(inp, w9, b_row):
        """3x3 SAME conv as 9 shifted matmuls.

        inp: (HW, Ci) f32, w9: (9, Ci, Co) (BN scale pre-folded), b_row: (1, Co)."""
        ci = inp.shape[1]
        zpad = jnp.zeros((PAD, ci), jnp.float32)
        xp = jnp.concatenate([zpad, inp, zpad], axis=0)        # (HW + 2*PAD, Ci)
        acc = None
        k = 0
        for dh in (-1, 0, 1):
            for dw in (-1, 0, 1):
                start = PAD + dh * W + dw                      # rows (h+dh, w+dw)
                patch = xp[start:start + HW, :]
                if w_mask[dw] is not None:
                    patch = jnp.where(w_mask[dw], patch, 0.0)  # zero W-boundary reads
                term = jnp.dot(patch, w9[k], preferred_element_type=jnp.float32)
                acc = term if acc is None else acc + term
                k += 1
        return jnp.maximum(acc + b_row, 0.0)                   # folded BN bias + ReLU

    x = x_ref[0].astype(jnp.float32)                           # (HW, Cin)
    w0 = w0_ref[...]
    wr = wr_ref[...]
    br = br_ref[...]
    wcl = wcl_ref[...]

    # Stage-wise 3x3 convs; every intermediate stays in VMEM/vregs.
    feats = []
    h = conv3x3_bn_relu(x, w0, b0_ref[...])
    feats.append(h)
    for l in range(n_layers - 1):
        h = conv3x3_bn_relu(h, wr[l], br[l])
        feats.append(h)

    # "Concat" 1x1 conv + BN + ReLU as a sum of per-source matmuls
    # (torch.cat(output, dim=1) is never materialized).
    ycat = jnp.dot(x, wcx_ref[...], preferred_element_type=jnp.float32)
    for l in range(n_layers):
        ycat = ycat + jnp.dot(feats[l], wcl[l], preferred_element_type=jnp.float32)
    ycat = jnp.maximum(ycat + bc_ref[...], 0.0)

    # eSE: AdaptiveAvgPool2d(1) -> 1x1 conv (fc) -> Hsigmoid -> channel gate.
    avg = jnp.sum(ycat, axis=0, keepdims=True) * (1.0 / HW)    # (1, Cc)
    gate = jnp.dot(avg, wfc_ref[...], preferred_element_type=jnp.float32) + bfc_ref[...]
    gate = jnp.clip(gate + 3.0, 0.0, 6.0) * (1.0 / 6.0)        # relu6(x+3)/6
    o_ref[...] = (ycat * gate)[None].astype(o_ref.dtype)


# ----------------------------- JAX wrapper ------------------------------------

def _prep_fused_params(params, in_ch):
    """Fold eval-mode BN scales into conv weights and split concat_w per source."""
    layers = params["layers"]
    L = len(layers)
    S = layers[0][0].shape[-1]

    w0 = (layers[0][0] * layers[0][1][0]).reshape(9, in_ch, S)      # (9, Cin, S)
    b0 = layers[0][2]                                               # (1, S)
    if L > 1:
        wr = jnp.stack([(layers[l][0] * layers[l][1][0]).reshape(9, S, S)
                        for l in range(1, L)], axis=0)              # (L-1, 9, S, S)
        br = jnp.stack([layers[l][2] for l in range(1, L)], axis=0)  # (L-1, 1, S)
    else:  # dummy (never read when n_layers == 1)
        wr = jnp.zeros((1, 9, S, S), jnp.float32)
        br = jnp.zeros((1, 1, S), jnp.float32)

    wc = params["concat_w"] * params["concat_scale"][0]             # fold BN scale
    wcx = wc[:in_ch]                                                # (Cin, Cc)
    wcl = jnp.stack([wc[in_ch + l * S: in_ch + (l + 1) * S] for l in range(L)],
                    axis=0)                                         # (L, S, Cc)
    return w0, b0, wr, br, wcx, wcl, params["concat_bias"], params["fc_w"], params["fc_b"]


def osa_module_forward(x, params, identity=False):
    """Forward of _OSA_module (depthwise=False). x: (N, H, W, in_ch) NHWC."""
    N, H, W, Cin = x.shape
    L = len(params["layers"])
    Cc = params["concat_w"].shape[-1]
    HW = H * W

    w0, b0, wr, br, wcx, wcl, bc, wfc, bfc = _prep_fused_params(params, Cin)
    xflat = x.reshape(N, HW, Cin)

    out = pl.pallas_call(
        functools.partial(_fused_osa_kernel, H=H, W=W, n_layers=L),
        out_shape=jax.ShapeDtypeStruct((N, HW, Cc), x.dtype),
        grid=(N,),
        in_specs=[
            pl.BlockSpec((1, HW, Cin), lambda b: (b, 0, 0)),   # x (one image / step)
            pl.BlockSpec(w0.shape, lambda b: (0, 0, 0)),       # layer-0 3x3 weight
            pl.BlockSpec(b0.shape, lambda b: (0, 0)),
            pl.BlockSpec(wr.shape, lambda b: (0, 0, 0, 0)),    # layers 1..L-1 weights
            pl.BlockSpec(br.shape, lambda b: (0, 0, 0)),
            pl.BlockSpec(wcx.shape, lambda b: (0, 0)),         # concat_w slice for x
            pl.BlockSpec(wcl.shape, lambda b: (0, 0, 0)),      # concat_w per layer
            pl.BlockSpec(bc.shape, lambda b: (0, 0)),
            pl.BlockSpec(wfc.shape, lambda b: (0, 0)),         # eSE fc
            pl.BlockSpec(bfc.shape, lambda b: (0, 0)),
        ],
        out_specs=pl.BlockSpec((1, HW, Cc), lambda b: (b, 0, 0)),
        compiler_params=pltpu.CompilerParams(
            dimension_semantics=("parallel",),        # batch -> both TCs on v7x
            vmem_limit_bytes=32 * 1024 * 1024),       # raise toward 128 MiB on v5e/v6e
                                                      # if HW tiles are enlarged
    )(xflat, w0, b0, wr, br, wcx, wcl, bc, wfc, bfc)

    out = out.reshape(N, H, W, Cc)
    if identity:
        out = out + x          # module adds the raw input (needs in_ch == concat_ch)
    return out


# ----------------------------- pure-JAX reference -----------------------------

def osa_module_reference(x, params, identity=False):
    outputs = [x]
    h = x
    for (w, s, b) in params["layers"]:
        y = lax.conv_general_dilated(h, w, (1, 1), "SAME",
                                     dimension_numbers=("NHWC", "HWIO", "NHWC"))
        h = jnp.maximum(y * s[0] + b[0], 0.0)
        outputs.append(h)
    xcat = jnp.concatenate(outputs, axis=-1)
    y = jnp.einsum("nhwc,cd->nhwd", xcat, params["concat_w"])
    y = jnp.maximum(y * params["concat_scale"][0] + params["concat_bias"][0], 0.0)
    avg = jnp.mean(y, axis=(1, 2))                                   # (N, Cc)
    s = avg @ params["fc_w"] + params["fc_b"][0]
    s = jnp.clip(s + 3.0, 0.0, 6.0) / 6.0
    out = y * s[:, None, None, :]
    if identity:
        out = out + x
    return out


# ----------------------------- param init -------------------------------------

def _fold_bn(gamma, beta, mean, var, eps=1e-5):
    scale = gamma / jnp.sqrt(var + eps)
    bias = beta - mean * scale
    return scale[None, :], bias[None, :]


def init_params(key, in_ch, stage_ch, concat_ch, layer_per_block):
    keys = iter(jax.random.split(key, 5 * layer_per_block + 8))
    params = {"layers": []}
    cin = in_ch
    for _ in range(layer_per_block):
        w = 0.1 * jax.random.normal(next(keys), (3, 3, cin, stage_ch), jnp.float32)
        gamma = 1.0 + 0.1 * jax.random.normal(next(keys), (stage_ch,), jnp.float32)
        beta = 0.1 * jax.random.normal(next(keys), (stage_ch,), jnp.float32)
        mean = 0.1 * jax.random.normal(next(keys), (stage_ch,), jnp.float32)
        var = 0.5 + jnp.abs(jax.random.normal(next(keys), (stage_ch,), jnp.float32))
        s, b = _fold_bn(gamma, beta, mean, var)
        params["layers"].append((w, s, b))
        cin = stage_ch
    ctot = in_ch + layer_per_block * stage_ch
    params["concat_w"] = 0.1 * jax.random.normal(next(keys), (ctot, concat_ch), jnp.float32)
    gamma = 1.0 + 0.1 * jax.random.normal(next(keys), (concat_ch,), jnp.float32)
    beta = 0.1 * jax.random.normal(next(keys), (concat_ch,), jnp.float32)
    mean = 0.1 * jax.random.normal(next(keys), (concat_ch,), jnp.float32)
    var = 0.5 + jnp.abs(jax.random.normal(next(keys), (concat_ch,), jnp.float32))
    params["concat_scale"], params["concat_bias"] = _fold_bn(gamma, beta, mean, var)
    params["fc_w"] = 0.1 * jax.random.normal(next(keys), (concat_ch, concat_ch), jnp.float32)
    params["fc_b"] = 0.1 * jax.random.normal(next(keys), (1, concat_ch), jnp.float32)
    return params


# ----------------------------- main --------------------------------------------

if __name__ == "__main__":
    key = jax.random.PRNGKey(0)
    k_x, k_p = jax.random.split(key)

    # _OSA_module(in_ch=4, stage_ch=8, concat_ch=16, layer_per_block=3),
    # batch=2, spatial=16x16.
    N, H, W = 2, 16, 16
    in_ch, stage_ch, concat_ch, layer_per_block = 4, 8, 16, 3

    x = jax.random.normal(k_x, (N, H, W, in_ch), jnp.float32)   # NHWC (== NCHW [2,4,16,16])
    params = init_params(k_p, in_ch, stage_ch, concat_ch, layer_per_block)

    out = osa_module_forward(x, params, identity=False)
    out = jax.block_until_ready(out)

    ref = jax.block_until_ready(osa_module_reference(x, params, identity=False))
    np.testing.assert_allclose(np.asarray(out), np.asarray(ref), rtol=1e-3, atol=1e-3)

    print("KERNEL_OK")
</pallas_src>

<mosaic_0001>
module attributes {stable_mosaic.version = 11 : i64} {
  func.func @_fused_osa_kernel(%arg0: i32, %arg1: memref<1x256x4xf32, #tpu.memory_space<vmem>>, %arg2: memref<9x4x8xf32, #tpu.memory_space<vmem>>, %arg3: memref<1x8xf32, #tpu.memory_space<vmem>>, %arg4: memref<2x9x8x8xf32, #tpu.memory_space<vmem>>, %arg5: memref<2x1x8xf32, #tpu.memory_space<vmem>>, %arg6: memref<4x16xf32, #tpu.memory_space<vmem>>, %arg7: memref<3x8x16xf32, #tpu.memory_space<vmem>>, %arg8: memref<1x16xf32, #tpu.memory_space<vmem>>, %arg9: memref<16x16xf32, #tpu.memory_space<vmem>>, %arg10: memref<1x16xf32, #tpu.memory_space<vmem>>, %arg11: memref<1x256x16xf32, #tpu.memory_space<vmem>>) attributes {dimension_semantics = [#tpu.dimension_semantics<parallel>], iteration_bounds = array<i64: 2>, scalar_prefetch = 0 : i64, scratch_operands = 0 : i64, tpu.core_type = #tpu.core_type<tc>, window_params = [{transform_indices = @transform_0, window_bounds = array<i64: 1, 256, 4>}, {pipeline_mode = #tpu.pipeline_mode<synchronous>, transform_indices = @transform_1, window_bounds = array<i64: 9, 4, 8>}, {pipeline_mode = #tpu.pipeline_mode<synchronous>, transform_indices = @transform_2, window_bounds = array<i64: 1, 8>}, {pipeline_mode = #tpu.pipeline_mode<synchronous>, transform_indices = @transform_3, window_bounds = array<i64: 2, 9, 8, 8>}, {pipeline_mode = #tpu.pipeline_mode<synchronous>, transform_indices = @transform_4, window_bounds = array<i64: 2, 1, 8>}, {pipeline_mode = #tpu.pipeline_mode<synchronous>, transform_indices = @transform_5, window_bounds = array<i64: 4, 16>}, {pipeline_mode = #tpu.pipeline_mode<synchronous>, transform_indices = @transform_6, window_bounds = array<i64: 3, 8, 16>}, {pipeline_mode = #tpu.pipeline_mode<synchronous>, transform_indices = @transform_7, window_bounds = array<i64: 1, 16>}, {pipeline_mode = #tpu.pipeline_mode<synchronous>, transform_indices = @transform_8, window_bounds = array<i64: 16, 16>}, {pipeline_mode = #tpu.pipeline_mode<synchronous>, transform_indices = @transform_9, window_bounds = array<i64: 1, 16>}, {transform_indices = @transform_10, window_bounds = array<i64: 1, 256, 16>}]} {
    %0 = tpu.iota {dimensions = array<i32: 0>} : vector<256x1xi32>
    %c16_i32 = arith.constant 16 : i32
    %c0_i32 = arith.constant 0 : i32
    %1 = arith.cmpi eq, %c16_i32, %c0_i32 : i32
    %c1_i32 = arith.constant 1 : i32
    %2 = arith.select %1, %c1_i32, %c16_i32 : i32
    %3 = vector.broadcast %2 : i32 to vector<256x1xi32>
    %4 = arith.remsi %0, %3 : vector<256x1xi32>
    %c0_i32_0 = arith.constant 0 : i32
    %5 = vector.broadcast %c0_i32_0 : i32 to vector<256x1xi32>
    %6 = arith.cmpi ne, %4, %5 : vector<256x1xi32>
    %c0_i32_1 = arith.constant 0 : i32
    %7 = vector.broadcast %c0_i32_1 : i32 to vector<256x1xi32>
    %8 = arith.cmpi slt, %4, %7 : vector<256x1xi32>
    %c0_i32_2 = arith.constant 0 : i32
    %9 = arith.cmpi slt, %2, %c0_i32_2 : i32
    %10 = vector.broadcast %9 : i1 to vector<256x1xi1>
    %11 = vector.broadcast %10 : vector<256x1xi1> to vector<256x1xi1>
    %12 = arith.xori %8, %11 : vector<256x1xi1>
    %13 = arith.andi %12, %6 : vector<256x1xi1>
    %14 = vector.broadcast %2 : i32 to vector<256x1xi32>
    %15 = arith.addi %4, %14 : vector<256x1xi32>
    %16 = arith.select %13, %15, %4 : vector<256x1xi1>, vector<256x1xi32>
    %c1_i32_3 = arith.constant 1 : i32
    %17 = vector.broadcast %c1_i32_3 : i32 to vector<256x1xi32>
    %18 = arith.cmpi sge, %16, %17 : vector<256x1xi32>
    %c14_i32 = arith.constant 14 : i32
    %19 = vector.broadcast %c14_i32 : i32 to vector<256x1xi32>
    %20 = arith.cmpi sle, %16, %19 : vector<256x1xi32>
    %c0 = arith.constant 0 : index
    %c0_4 = arith.constant 0 : index
    %c0_5 = arith.constant 0 : index
    %21 = vector.load %arg1[%c0, %c0_4, %c0_5] : memref<1x256x4xf32, #tpu.memory_space<vmem>>, vector<1x256x4xf32>
    %22 = vector.shape_cast %21 : vector<1x256x4xf32> to vector<256x4xf32>
    %c0_6 = arith.constant 0 : index
    %c0_7 = arith.constant 0 : index
    %c0_8 = arith.constant 0 : index
    %23 = vector.load %arg2[%c0_6, %c0_7, %c0_8] : memref<9x4x8xf32, #tpu.memory_space<vmem>>, vector<9x4x8xf32>
    %c0_9 = arith.constant 0 : index
    %c0_10 = arith.constant 0 : index
    %c0_11 = arith.constant 0 : index
    %c0_12 = arith.constant 0 : index
    %24 = vector.load %arg4[%c0_9, %c0_10, %c0_11, %c0_12] : memref<2x9x8x8xf32, #tpu.memory_space<vmem>>, vector<2x9x8x8xf32>
    %c0_13 = arith.constant 0 : index
    %c0_14 = arith.constant 0 : index
    %c0_15 = arith.constant 0 : index
    %25 = vector.load %arg5[%c0_13, %c0_14, %c0_15] : memref<2x1x8xf32, #tpu.memory_space<vmem>>, vector<2x1x8xf32>
    %c0_16 = arith.constant 0 : index
    %c0_17 = arith.constant 0 : index
    %c0_18 = arith.constant 0 : index
    %26 = vector.load %arg7[%c0_16, %c0_17, %c0_18] : memref<3x8x16xf32, #tpu.memory_space<vmem>>, vector<3x8x16xf32>
    %c0_19 = arith.constant 0 : index
    %c0_20 = arith.constant 0 : index
    %27 = vector.load %arg3[%c0_19, %c0_20] : memref<1x8xf32, #tpu.memory_space<vmem>>, vector<1x8xf32>
    %cst = arith.constant 0.000000e+00 : f32
    %28 = vector.broadcast %cst : f32 to vector<24x4xf32>
    %29 = tpu.concatenate %28, %22, %28 in 0 : vector<24x4xf32>, vector<256x4xf32>, vector<24x4xf32> -> vector<304x4xf32>
    %30 = vector.extract_strided_slice %29 {offsets = [7, 0], sizes = [256, 4], strides = [1, 1]} : vector<304x4xf32> to vector<256x4xf32>
    %cst_21 = arith.constant 0.000000e+00 : f32
    %31 = vector.shape_cast %18 : vector<256x1xi1> to vector<256x1xi1>
    %32 = vector.broadcast %31 : vector<256x1xi1> to vector<256x4xi1>
    %33 = vector.broadcast %cst_21 : f32 to vector<256x4xf32>
    %34 = arith.select %32, %30, %33 : vector<256x4xi1>, vector<256x4xf32>
    %35 = vector.extract_strided_slice %23 {offsets = [0, 0, 0], sizes = [1, 4, 8], strides = [1, 1, 1]} : vector<9x4x8xf32> to vector<1x4x8xf32>
    %36 = vector.shape_cast %35 : vector<1x4x8xf32> to vector<4x8xf32>
    %cst_22 = arith.constant dense<0.000000e+00> : vector<256x8xf32>
    %37 = tpu.matmul %34, %36, %cst_22 {dimension_numbers = #tpu.dot_dimension_numbers<[1], [0], [0], [1], [0, 0, 1, 1], [], []>} : vector<256x4xf32>, vector<4x8xf32>, vector<256x8xf32> -> vector<256x8xf32>
    %38 = vector.extract_strided_slice %29 {offsets = [8, 0], sizes = [256, 4], strides = [1, 1]} : vector<304x4xf32> to vector<256x4xf32>
    %39 = vector.extract_strided_slice %23 {offsets = [1, 0, 0], sizes = [1, 4, 8], strides = [1, 1, 1]} : vector<9x4x8xf32> to vector<1x4x8xf32>
    %40 = vector.shape_cast %39 : vector<1x4x8xf32> to vector<4x8xf32>
    %cst_23 = arith.constant dense<0.000000e+00> : vector<256x8xf32>
    %41 = tpu.matmul %38, %40, %cst_23 {dimension_numbers = #tpu.dot_dimension_numbers<[1], [0], [0], [1], [0, 0, 1, 1], [], []>} : vector<256x4xf32>, vector<4x8xf32>, vector<256x8xf32> -> vector<256x8xf32>
    %42 = arith.addf %37, %41 : vector<256x8xf32>
    %43 = vector.extract_strided_slice %29 {offsets = [9, 0], sizes = [256, 4], strides = [1, 1]} : vector<304x4xf32> to vector<256x4xf32>
    %cst_24 = arith.constant 0.000000e+00 : f32
    %44 = vector.shape_cast %20 : vector<256x1xi1> to vector<256x1xi1>
    %45 = vector.broadcast %44 : vector<256x1xi1> to vector<256x4xi1>
    %46 = vector.broadcast %cst_24 : f32 to vector<256x4xf32>
    %47 = arith.select %45, %43, %46 : vector<256x4xi1>, vector<256x4xf32>
    %48 = vector.extract_strided_slice %23 {offsets = [2, 0, 0], sizes = [1, 4, 8], strides = [1, 1, 1]} : vector<9x4x8xf32> to vector<1x4x8xf32>
    %49 = vector.shape_cast %48 : vector<1x4x8xf32> to vector<4x8xf32>
    %cst_25 = arith.constant dense<0.000000e+00> : vector<256x8xf32>
    %50 = tpu.matmul %47, %49, %cst_25 {dimension_numbers = #tpu.dot_dimension_numbers<[1], [0], [0], [1], [0, 0, 1, 1], [], []>} : vector<256x4xf32>, vector<4x8xf32>, vector<256x8xf32> -> vector<256x8xf32>
    %51 = arith.addf %42, %50 : vector<256x8xf32>
    %52 = vector.extract_strided_slice %29 {offsets = [23, 0], sizes = [256, 4], strides = [1, 1]} : vector<304x4xf32> to vector<256x4xf32>
    %cst_26 = arith.constant 0.000000e+00 : f32
    %53 = vector.shape_cast %18 : vector<256x1xi1> to vector<256x1xi1>
    %54 = vector.broadcast %53 : vector<256x1xi1> to vector<256x4xi1>
    %55 = vector.broadcast %cst_26 : f32 to vector<256x4xf32>
    %56 = arith.select %54, %52, %55 : vector<256x4xi1>, vector<256x4xf32>
    %57 = vector.extract_strided_slice %23 {offsets = [3, 0, 0], sizes = [1, 4, 8], strides = [1, 1, 1]} : vector<9x4x8xf32> to vector<1x4x8xf32>
    %58 = vector.shape_cast %57 : vector<1x4x8xf32> to vector<4x8xf32>
    %cst_27 = arith.constant dense<0.000000e+00> : vector<256x8xf32>
    %59 = tpu.matmul %56, %58, %cst_27 {dimension_numbers = #tpu.dot_dimension_numbers<[1], [0], [0], [1], [0, 0, 1, 1], [], []>} : vector<256x4xf32>, vector<4x8xf32>, vector<256x8xf32> -> vector<256x8xf32>
    %60 = arith.addf %51, %59 : vector<256x8xf32>
    %61 = vector.extract_strided_slice %29 {offsets = [24, 0], sizes = [256, 4], strides = [1, 1]} : vector<304x4xf32> to vector<256x4xf32>
    %62 = vector.extract_strided_slice %23 {offsets = [4, 0, 0], sizes = [1, 4, 8], strides = [1, 1, 1]} : vector<9x4x8xf32> to vector<1x4x8xf32>
    %63 = vector.shape_cast %62 : vector<1x4x8xf32> to vector<4x8xf32>
    %cst_28 = arith.constant dense<0.000000e+00> : vector<256x8xf32>
    %64 = tpu.matmul %61, %63, %cst_28 {dimension_numbers = #tpu.dot_dimension_numbers<[1], [0], [0], [1], [0, 0, 1, 1], [], []>} : vector<256x4xf32>, vector<4x8xf32>, vector<256x8xf32> -> vector<256x8xf32>
    %65 = arith.addf %60, %64 : vector<256x8xf32>
    %66 = vector.extract_strided_slice %29 {offsets = [25, 0], sizes = [256, 4], strides = [1, 1]} : vector<304x4xf32> to vector<256x4xf32>
    %cst_29 = arith.constant 0.000000e+00 : f32
    %67 = vector.shape_cast %20 : vector<256x1xi1> to vector<256x1xi1>
    %68 = vector.broadcast %67 : vector<256x1xi1> to vector<256x4xi1>
    %69 = vector.broadcast %cst_29 : f32 to vector<256x4xf32>
    %70 = arith.select %68, %66, %69 : vector<256x4xi1>, vector<256x4xf32>
    %71 = vector.extract_strided_slice %23 {offsets = [5, 0, 0], sizes = [1, 4, 8], strides = [1, 1, 1]} : vector<9x4x8xf32> to vector<1x4x8xf32>
    %72 = vector.shape_cast %71 : vector<1x4x8xf32> to vector<4x8xf32>
    %cst_30 = arith.constant dense<0.000000e+00> : vector<256x8xf32>
    %73 = tpu.matmul %70, %72, %cst_30 {dimension_numbers = #tpu.dot_dimension_numbers<[1], [0], [0], [1], [0, 0, 1, 1], [], []>} : vector<256x4xf32>, vector<4x8xf32>, vector<256x8xf32> -> vector<256x8xf32>
    %74 = arith.addf %65, %73 : vector<256x8xf32>
    %75 = vector.extract_strided_slice %29 {offsets = [39, 0], sizes = [256, 4], strides = [1, 1]} : vector<304x4xf32> to vector<256x4xf32>
    %cst_31 = arith.constant 0.000000e+00 : f32
    %76 = vector.shape_cast %18 : vector<256x1xi1> to vector<256x1xi1>
    %77 = vector.broadcast %76 : vector<256x1xi1> to vector<256x4xi1>
    %78 = vector.broadcast %cst_31 : f32 to vector<256x4xf32>
    %79 = arith.select %77, %75, %78 : vector<256x4xi1>, vector<256x4xf32>
    %80 = vector.extract_strided_slice %23 {offsets = [6, 0, 0], sizes = [1, 4, 8], strides = [1, 1, 1]} : vector<9x4x8xf32> to vector<1x4x8xf32>
    %81 = vector.shape_cast %80 : vector<1x4x8xf32> to vector<4x8xf32>
    %cst_32 = arith.constant dense<0.000000e+00> : vector<256x8xf32>
    %82 = tpu.matmul %79, %81, %cst_32 {dimension_numbers = #tpu.dot_dimension_numbers<[1], [0], [0], [1], [0, 0, 1, 1], [], []>} : vector<256x4xf32>, vector<4x8xf32>, vector<256x8xf32> -> vector<256x8xf32>
    %83 = arith.addf %74, %82 : vector<256x8xf32>
    %84 = vector.extract_strided_slice %29 {offsets = [40, 0], sizes = [256, 4], strides = [1, 1]} : vector<304x4xf32> to vector<256x4xf32>
    %85 = vector.extract_strided_slice %23 {offsets = [7, 0, 0], sizes = [1, 4, 8], strides = [1, 1, 1]} : vector<9x4x8xf32> to vector<1x4x8xf32>
    %86 = vector.shape_cast %85 : vector<1x4x8xf32> to vector<4x8xf32>
    %cst_33 = arith.constant dense<0.000000e+00> : vector<256x8xf32>
    %87 = tpu.matmul %84, %86, %cst_33 {dimension_numbers = #tpu.dot_dimension_numbers<[1], [0], [0], [1], [0, 0, 1, 1], [], []>} : vector<256x4xf32>, vector<4x8xf32>, vector<256x8xf32> -> vector<256x8xf32>
    %88 = arith.addf %83, %87 : vector<256x8xf32>
    %89 = vector.extract_strided_slice %29 {offsets = [41, 0], sizes = [256, 4], strides = [1, 1]} : vector<304x4xf32> to vector<256x4xf32>
    %cst_34 = arith.constant 0.000000e+00 : f32
    %90 = vector.shape_cast %20 : vector<256x1xi1> to vector<256x1xi1>
    %91 = vector.broadcast %90 : vector<256x1xi1> to vector<256x4xi1>
    %92 = vector.broadcast %cst_34 : f32 to vector<256x4xf32>
    %93 = arith.select %91, %89, %92 : vector<256x4xi1>, vector<256x4xf32>
    %94 = vector.extract_strided_slice %23 {offsets = [8, 0, 0], sizes = [1, 4, 8], strides = [1, 1, 1]} : vector<9x4x8xf32> to vector<1x4x8xf32>
    %95 = vector.shape_cast %94 : vector<1x4x8xf32> to vector<4x8xf32>
    %cst_35 = arith.constant dense<0.000000e+00> : vector<256x8xf32>
    %96 = tpu.matmul %93, %95, %cst_35 {dimension_numbers = #tpu.dot_dimension_numbers<[1], [0], [0], [1], [0, 0, 1, 1], [], []>} : vector<256x4xf32>, vector<4x8xf32>, vector<256x8xf32> -> vector<256x8xf32>
    %97 = arith.addf %88, %96 : vector<256x8xf32>
    %98 = vector.broadcast %27 : vector<1x8xf32> to vector<256x8xf32>
    %99 = arith.addf %97, %98 : vector<256x8xf32>
    %cst_36 = arith.constant 0.000000e+00 : f32
    %100 = vector.broadcast %cst_36 : f32 to vector<256x8xf32>
    %101 = arith.maximumf %99, %100 : vector<256x8xf32>
    %102 = vector.extract_strided_slice %24 {offsets = [0, 0, 0, 0], sizes = [1, 9, 8, 8], strides = [1, 1, 1, 1]} : vector<2x9x8x8xf32> to vector<1x9x8x8xf32>
    %103 = vector.shape_cast %102 : vector<1x9x8x8xf32> to vector<9x8x8xf32>
    %104 = vector.extract_strided_slice %25 {offsets = [0, 0, 0], sizes = [1, 1, 8], strides = [1, 1, 1]} : vector<2x1x8xf32> to vector<1x1x8xf32>
    %105 = vector.shape_cast %104 : vector<1x1x8xf32> to vector<1x8xf32>
    %cst_37 = arith.constant 0.000000e+00 : f32
    %106 = vector.broadcast %cst_37 : f32 to vector<24x8xf32>
    %107 = tpu.concatenate %106, %101, %106 in 0 : vector<24x8xf32>, vector<256x8xf32>, vector<24x8xf32> -> vector<304x8xf32>
    %108 = vector.extract_strided_slice %107 {offsets = [7, 0], sizes = [256, 8], strides = [1, 1]} : vector<304x8xf32> to vector<256x8xf32>
    %cst_38 = arith.constant 0.000000e+00 : f32
    %109 = vector.shape_cast %18 : vector<256x1xi1> to vector<256x1xi1>
    %110 = vector.broadcast %109 : vector<256x1xi1> to vector<256x8xi1>
    %111 = vector.broadcast %cst_38 : f32 to vector<256x8xf32>
    %112 = arith.select %110, %108, %111 : vector<256x8xi1>, vector<256x8xf32>
    %113 = vector.extract_strided_slice %103 {offsets = [0, 0, 0], sizes = [1, 8, 8], strides = [1, 1, 1]} : vector<9x8x8xf32> to vector<1x8x8xf32>
    %114 = vector.shape_cast %113 : vector<1x8x8xf32> to vector<8x8xf32>
    %cst_39 = arith.constant dense<0.000000e+00> : vector<256x8xf32>
    %115 = tpu.matmul %112, %114, %cst_39 {dimension_numbers = #tpu.dot_dimension_numbers<[1], [0], [0], [1], [0, 0, 1, 1], [], []>} : vector<256x8xf32>, vector<8x8xf32>, vector<256x8xf32> -> vector<256x8xf32>
    %116 = vector.extract_strided_slice %107 {offsets = [8, 0], sizes = [256, 8], strides = [1, 1]} : vector<304x8xf32> to vector<256x8xf32>
    %117 = vector.extract_strided_slice %103 {offsets = [1, 0, 0], sizes = [1, 8, 8], strides = [1, 1, 1]} : vector<9x8x8xf32> to vector<1x8x8xf32>
    %118 = vector.shape_cast %117 : vector<1x8x8xf32> to vector<8x8xf32>
    %cst_40 = arith.constant dense<0.000000e+00> : vector<256x8xf32>
    %119 = tpu.matmul %116, %118, %cst_40 {dimension_numbers = #tpu.dot_dimension_numbers<[1], [0], [0], [1], [0, 0, 1, 1], [], []>} : vector<256x8xf32>, vector<8x8xf32>, vector<256x8xf32> -> vector<256x8xf32>
    %120 = arith.addf %115, %119 : vector<256x8xf32>
    %121 = vector.extract_strided_slice %107 {offsets = [9, 0], sizes = [256, 8], strides = [1, 1]} : vector<304x8xf32> to vector<256x8xf32>
    %cst_41 = arith.constant 0.000000e+00 : f32
    %122 = vector.shape_cast %20 : vector<256x1xi1> to vector<256x1xi1>
    %123 = vector.broadcast %122 : vector<256x1xi1> to vector<256x8xi1>
    %124 = vector.broadcast %cst_41 : f32 to vector<256x8xf32>
    %125 = arith.select %123, %121, %124 : vector<256x8xi1>, vector<256x8xf32>
    %126 = vector.extract_strided_slice %103 {offsets = [2, 0, 0], sizes = [1, 8, 8], strides = [1, 1, 1]} : vector<9x8x8xf32> to vector<1x8x8xf32>
    %127 = vector.shape_cast %126 : vector<1x8x8xf32> to vector<8x8xf32>
    %cst_42 = arith.constant dense<0.000000e+00> : vector<256x8xf32>
    %128 = tpu.matmul %125, %127, %cst_42 {dimension_numbers = #tpu.dot_dimension_numbers<[1], [0], [0], [1], [0, 0, 1, 1], [], []>} : vector<256x8xf32>, vector<8x8xf32>, vector<256x8xf32> -> vector<256x8xf32>
    %129 = arith.addf %120, %128 : vector<256x8xf32>
    %130 = vector.extract_strided_slice %107 {offsets = [23, 0], sizes = [256, 8], strides = [1, 1]} : vector<304x8xf32> to vector<256x8xf32>
    %cst_43 = arith.constant 0.000000e+00 : f32
    %131 = vector.shape_cast %18 : vector<256x1xi1> to vector<256x1xi1>
    %132 = vector.broadcast %131 : vector<256x1xi1> to vector<256x8xi1>
    %133 = vector.broadcast %cst_43 : f32 to vector<256x8xf32>
    %134 = arith.select %132, %130, %133 : vector<256x8xi1>, vector<256x8xf32>
    %135 = vector.extract_strided_slice %103 {offsets = [3, 0, 0], sizes = [1, 8, 8], strides = [1, 1, 1]} : vector<9x8x8xf32> to vector<1x8x8xf32>
    %136 = vector.shape_cast %135 : vector<1x8x8xf32> to vector<8x8xf32>
    %cst_44 = arith.constant dense<0.000000e+00> : vector<256x8xf32>
    %137 = tpu.matmul %134, %136, %cst_44 {dimension_numbers = #tpu.dot_dimension_numbers<[1], [0], [0], [1], [0, 0, 1, 1], [], []>} : vector<256x8xf32>, vector<8x8xf32>, vector<256x8xf32> -> vector<256x8xf32>
    %138 = arith.addf %129, %137 : vector<256x8xf32>
    %139 = vector.extract_strided_slice %107 {offsets = [24, 0], sizes = [256, 8], strides = [1, 1]} : vector<304x8xf32> to vector<256x8xf32>
    %140 = vector.extract_strided_slice %103 {offsets = [4, 0, 0], sizes = [1, 8, 8], strides = [1, 1, 1]} : vector<9x8x8xf32> to vector<1x8x8xf32>
    %141 = vector.shape_cast %140 : vector<1x8x8xf32> to vector<8x8xf32>
    %cst_45 = arith.constant dense<0.000000e+00> : vector<256x8xf32>
    %142 = tpu.matmul %139, %141, %cst_45 {dimension_numbers = #tpu.dot_dimension_numbers<[1], [0], [0], [1], [0, 0, 1, 1], [], []>} : vector<256x8xf32>, vector<8x8xf32>, vector<256x8xf32> -> vector<256x8xf32>
    %143 = arith.addf %138, %142 : vector<256x8xf32>
    %144 = vector.extract_strided_slice %107 {offsets = [25, 0], sizes = [256, 8], strides = [1, 1]} : vector<304x8xf32> to vector<256x8xf32>
    %cst_46 = arith.constant 0.000000e+00 : f32
    %145 = vector.shape_cast %20 : vector<256x1xi1> to vector<256x1xi1>
    %146 = vector.broadcast %145 : vector<256x1xi1> to vector<256x8xi1>
    %147 = vector.broadcast %cst_46 : f32 to vector<256x8xf32>
    %148 = arith.select %146, %144, %147 : vector<256x8xi1>, vector<256x8xf32>
    %149 = vector.extract_strided_slice %103 {offsets = [5, 0, 0], sizes = [1, 8, 8], strides = [1, 1, 1]} : vector<9x8x8xf32> to vector<1x8x8xf32>
    %150 = vector.shape_cast %149 : vector<1x8x8xf32> to vector<8x8xf32>
    %cst_47 = arith.constant dense<0.000000e+00> : vector<256x8xf32>
    %151 = tpu.matmul %148, %150, %cst_47 {dimension_numbers = #tpu.dot_dimension_numbers<[1], [0], [0], [1], [0, 0, 1, 1], [], []>} : vector<256x8xf32>, vector<8x8xf32>, vector<256x8xf32> -> vector<256x8xf32>
    %152 = arith.addf %143, %151 : vector<256x8xf32>
    %153 = vector.extract_strided_slice %107 {offsets = [39, 0], sizes = [256, 8], strides = [1, 1]} : vector<304x8xf32> to vector<256x8xf32>
    %cst_48 = arith.constant 0.000000e+00 : f32
    %154 = vector.shape_cast %18 : vector<256x1xi1> to vector<256x1xi1>
    %155 = vector.broadcast %154 : vector<256x1xi1> to vector<256x8xi1>
    %156 = vector.broadcast %cst_48 : f32 to vector<256x8xf32>
    %157 = arith.select %155, %153, %156 : vector<256x8xi1>, vector<256x8xf32>
    %158 = vector.extract_strided_slice %103 {offsets = [6, 0, 0], sizes = [1, 8, 8], strides = [1, 1, 1]} : vector<9x8x8xf32> to vector<1x8x8xf32>
    %159 = vector.shape_cast %158 : vector<1x8x8xf32> to vector<8x8xf32>
    %cst_49 = arith.constant dense<0.000000e+00> : vector<256x8xf32>
    %160 = tpu.matmul %157, %159, %cst_49 {dimension_numbers = #tpu.dot_dimension_numbers<[1], [0], [0], [1], [0, 0, 1, 1], [], []>} : vector<256x8xf32>, vector<8x8xf32>, vector<256x8xf32> -> vector<256x8xf32>
    %161 = arith.addf %152, %160 : vector<256x8xf32>
    %162 = vector.extract_strided_slice %107 {offsets = [40, 0], sizes = [256, 8], strides = [1, 1]} : vector<304x8xf32> to vector<256x8xf32>
    %163 = vector.extract_strided_slice %103 {offsets = [7, 0, 0], sizes = [1, 8, 8], strides = [1, 1, 1]} : vector<9x8x8xf32> to vector<1x8x8xf32>
    %164 = vector.shape_cast %163 : vector<1x8x8xf32> to vector<8x8xf32>
    %cst_50 = arith.constant dense<0.000000e+00> : vector<256x8xf32>
    %165 = tpu.matmul %162, %164, %cst_50 {dimension_numbers = #tpu.dot_dimension_numbers<[1], [0], [0], [1], [0, 0, 1, 1], [], []>} : vector<256x8xf32>, vector<8x8xf32>, vector<256x8xf32> -> vector<256x8xf32>
    %166 = arith.addf %161, %165 : vector<256x8xf32>
    %167 = vector.extract_strided_slice %107 {offsets = [41, 0], sizes = [256, 8], strides = [1, 1]} : vector<304x8xf32> to vector<256x8xf32>
    %cst_51 = arith.constant 0.000000e+00 : f32
    %168 = vector.shape_cast %20 : vector<256x1xi1> to vector<256x1xi1>
    %169 = vector.broadcast %168 : vector<256x1xi1> to vector<256x8xi1>
    %170 = vector.broadcast %cst_51 : f32 to vector<256x8xf32>
    %171 = arith.select %169, %167, %170 : vector<256x8xi1>, vector<256x8xf32>
    %172 = vector.extract_strided_slice %103 {offsets = [8, 0, 0], sizes = [1, 8, 8], strides = [1, 1, 1]} : vector<9x8x8xf32> to vector<1x8x8xf32>
    %173 = vector.shape_cast %172 : vector<1x8x8xf32> to vector<8x8xf32>
    %cst_52 = arith.constant dense<0.000000e+00> : vector<256x8xf32>
    %174 = tpu.matmul %171, %173, %cst_52 {dimension_numbers = #tpu.dot_dimension_numbers<[1], [0], [0], [1], [0, 0, 1, 1], [], []>} : vector<256x8xf32>, vector<8x8xf32>, vector<256x8xf32> -> vector<256x8xf32>
    %175 = arith.addf %166, %174 : vector<256x8xf32>
    %176 = vector.broadcast %105 : vector<1x8xf32> to vector<256x8xf32>
    %177 = arith.addf %175, %176 : vector<256x8xf32>
    %cst_53 = arith.constant 0.000000e+00 : f32
    %178 = vector.broadcast %cst_53 : f32 to vector<256x8xf32>
    %179 = arith.maximumf %177, %178 : vector<256x8xf32>
    %180 = vector.extract_strided_slice %24 {offsets = [1, 0, 0, 0], sizes = [1, 9, 8, 8], strides = [1, 1, 1, 1]} : vector<2x9x8x8xf32> to vector<1x9x8x8xf32>
    %181 = vector.shape_cast %180 : vector<1x9x8x8xf32> to vector<9x8x8xf32>
    %182 = vector.extract_strided_slice %25 {offsets = [1, 0, 0], sizes = [1, 1, 8], strides = [1, 1, 1]} : vector<2x1x8xf32> to vector<1x1x8xf32>
    %183 = vector.shape_cast %182 : vector<1x1x8xf32> to vector<1x8xf32>
    %cst_54 = arith.constant 0.000000e+00 : f32
    %184 = vector.broadcast %cst_54 : f32 to vector<24x8xf32>
    %185 = tpu.concatenate %184, %179, %184 in 0 : vector<24x8xf32>, vector<256x8xf32>, vector<24x8xf32> -> vector<304x8xf32>
    %186 = vector.extract_strided_slice %185 {offsets = [7, 0], sizes = [256, 8], strides = [1, 1]} : vector<304x8xf32> to vector<256x8xf32>
    %cst_55 = arith.constant 0.000000e+00 : f32
    %187 = vector.shape_cast %18 : vector<256x1xi1> to vector<256x1xi1>
    %188 = vector.broadcast %187 : vector<256x1xi1> to vector<256x8xi1>
    %189 = vector.broadcast %cst_55 : f32 to vector<256x8xf32>
    %190 = arith.select %188, %186, %189 : vector<256x8xi1>, vector<256x8xf32>
    %191 = vector.extract_strided_slice %181 {offsets = [0, 0, 0], sizes = [1, 8, 8], strides = [1, 1, 1]} : vector<9x8x8xf32> to vector<1x8x8xf32>
    %192 = vector.shape_cast %191 : vector<1x8x8xf32> to vector<8x8xf32>
    %cst_56 = arith.constant dense<0.000000e+00> : vector<256x8xf32>
    %193 = tpu.matmul %190, %192, %cst_56 {dimension_numbers = #tpu.dot_dimension_numbers<[1], [0], [0], [1], [0, 0, 1, 1], [], []>} : vector<256x8xf32>, vector<8x8xf32>, vector<256x8xf32> -> vector<256x8xf32>
    %194 = vector.extract_strided_slice %185 {offsets = [8, 0], sizes = [256, 8], strides = [1, 1]} : vector<304x8xf32> to vector<256x8xf32>
    %195 = vector.extract_strided_slice %181 {offsets = [1, 0, 0], sizes = [1, 8, 8], strides = [1, 1, 1]} : vector<9x8x8xf32> to vector<1x8x8xf32>
    %196 = vector.shape_cast %195 : vector<1x8x8xf32> to vector<8x8xf32>
    %cst_57 = arith.constant dense<0.000000e+00> : vector<256x8xf32>
    %197 = tpu.matmul %194, %196, %cst_57 {dimension_numbers = #tpu.dot_dimension_numbers<[1], [0], [0], [1], [0, 0, 1, 1], [], []>} : vector<256x8xf32>, vector<8x8xf32>, vector<256x8xf32> -> vector<256x8xf32>
    %198 = arith.addf %193, %197 : vector<256x8xf32>
    %199 = vector.extract_strided_slice %185 {offsets = [9, 0], sizes = [256, 8], strides = [1, 1]} : vector<304x8xf32> to vector<256x8xf32>
    %cst_58 = arith.constant 0.000000e+00 : f32
    %200 = vector.shape_cast %20 : vector<256x1xi1> to vector<256x1xi1>
    %201 = vector.broadcast %200 : vector<256x1xi1> to vector<256x8xi1>
    %202 = vector.broadcast %cst_58 : f32 to vector<256x8xf32>
    %203 = arith.select %201, %199, %202 : vector<256x8xi1>, vector<256x8xf32>
    %204 = vector.extract_strided_slice %181 {offsets = [2, 0, 0], sizes = [1, 8, 8], strides = [1, 1, 1]} : vector<9x8x8xf32> to vector<1x8x8xf32>
    %205 = vector.shape_cast %204 : vector<1x8x8xf32> to vector<8x8xf32>
    %cst_59 = arith.constant dense<0.000000e+00> : vector<256x8xf32>
    %206 = tpu.matmul %203, %205, %cst_59 {dimension_numbers = #tpu.dot_dimension_numbers<[1], [0], [0], [1], [0, 0, 1, 1], [], []>} : vector<256x8xf32>, vector<8x8xf32>, vector<256x8xf32> -> vector<256x8xf32>
    %207 = arith.addf %198, %206 : vector<256x8xf32>
    %208 = vector.extract_strided_slice %185 {offsets = [23, 0], sizes = [256, 8], strides = [1, 1]} : vector<304x8xf32> to vector<256x8xf32>
    %cst_60 = arith.constant 0.000000e+00 : f32
    %209 = vector.shape_cast %18 : vector<256x1xi1> to vector<256x1xi1>
    %210 = vector.broadcast %209 : vector<256x1xi1> to vector<256x8xi1>
    %211 = vector.broadcast %cst_60 : f32 to vector<256x8xf32>
    %212 = arith.select %210, %208, %211 : vector<256x8xi1>, vector<256x8xf32>
    %213 = vector.extract_strided_slice %181 {offsets = [3, 0, 0], sizes = [1, 8, 8], strides = [1, 1, 1]} : vector<9x8x8xf32> to vector<1x8x8xf32>
    %214 = vector.shape_cast %213 : vector<1x8x8xf32> to vector<8x8xf32>
    %cst_61 = arith.constant dense<0.000000e+00> : vector<256x8xf32>
    %215 = tpu.matmul %212, %214, %cst_61 {dimension_numbers = #tpu.dot_dimension_numbers<[1], [0], [0], [1], [0, 0, 1, 1], [], []>} : vector<256x8xf32>, vector<8x8xf32>, vector<256x8xf32> -> vector<256x8xf32>
    %216 = arith.addf %207, %215 : vector<256x8xf32>
    %217 = vector.extract_strided_slice %185 {offsets = [24, 0], sizes = [256, 8], strides = [1, 1]} : vector<304x8xf32> to vector<256x8xf32>
    %218 = vector.extract_strided_slice %181 {offsets = [4, 0, 0], sizes = [1, 8, 8], strides = [1, 1, 1]} : vector<9x8x8xf32> to vector<1x8x8xf32>
    %219 = vector.shape_cast %218 : vector<1x8x8xf32> to vector<8x8xf32>
    %cst_62 = arith.constant dense<0.000000e+00> : vector<256x8xf32>
    %220 = tpu.matmul %217, %219, %cst_62 {dimension_numbers = #tpu.dot_dimension_numbers<[1], [0], [0], [1], [0, 0, 1, 1], [], []>} : vector<256x8xf32>, vector<8x8xf32>, vector<256x8xf32> -> vector<256x8xf32>
    %221 = arith.addf %216, %220 : vector<256x8xf32>
    %222 = vector.extract_strided_slice %185 {offsets = [25, 0], sizes = [256, 8], strides = [1, 1]} : vector<304x8xf32> to vector<256x8xf32>
    %cst_63 = arith.constant 0.000000e+00 : f32
    %223 = vector.shape_cast %20 : vector<256x1xi1> to vector<256x1xi1>
    %224 = vector.broadcast %223 : vector<256x1xi1> to vector<256x8xi1>
    %225 = vector.broadcast %cst_63 : f32 to vector<256x8xf32>
    %226 = arith.select %224, %222, %225 : vector<256x8xi1>, vector<256x8xf32>
    %227 = vector.extract_strided_slice %181 {offsets = [5, 0, 0], sizes = [1, 8, 8], strides = [1, 1, 1]} : vector<9x8x8xf32> to vector<1x8x8xf32>
    %228 = vector.shape_cast %227 : vector<1x8x8xf32> to vector<8x8xf32>
    %cst_64 = arith.constant dense<0.000000e+00> : vector<256x8xf32>
    %229 = tpu.matmul %226, %228, %cst_64 {dimension_numbers = #tpu.dot_dimension_numbers<[1], [0], [0], [1], [0, 0, 1, 1], [], []>} : vector<256x8xf32>, vector<8x8xf32>, vector<256x8xf32> -> vector<256x8xf32>
    %230 = arith.addf %221, %229 : vector<256x8xf32>
    %231 = vector.extract_strided_slice %185 {offsets = [39, 0], sizes = [256, 8], strides = [1, 1]} : vector<304x8xf32> to vector<256x8xf32>
    %cst_65 = arith.constant 0.000000e+00 : f32
    %232 = vector.shape_cast %18 : vector<256x1xi1> to vector<256x1xi1>
    %233 = vector.broadcast %232 : vector<256x1xi1> to vector<256x8xi1>
    %234 = vector.broadcast %cst_65 : f32 to vector<256x8xf32>
    %235 = arith.select %233, %231, %234 : vector<256x8xi1>, vector<256x8xf32>
    %236 = vector.extract_strided_slice %181 {offsets = [6, 0, 0], sizes = [1, 8, 8], strides = [1, 1, 1]} : vector<9x8x8xf32> to vector<1x8x8xf32>
    %237 = vector.shape_cast %236 : vector<1x8x8xf32> to vector<8x8xf32>
    %cst_66 = arith.constant dense<0.000000e+00> : vector<256x8xf32>
    %238 = tpu.matmul %235, %237, %cst_66 {dimension_numbers = #tpu.dot_dimension_numbers<[1], [0], [0], [1], [0, 0, 1, 1], [], []>} : vector<256x8xf32>, vector<8x8xf32>, vector<256x8xf32> -> vector<256x8xf32>
    %239 = arith.addf %230, %238 : vector<256x8xf32>
    %240 = vector.extract_strided_slice %185 {offsets = [40, 0], sizes = [256, 8], strides = [1, 1]} : vector<304x8xf32> to vector<256x8xf32>
    %241 = vector.extract_strided_slice %181 {offsets = [7, 0, 0], sizes = [1, 8, 8], strides = [1, 1, 1]} : vector<9x8x8xf32> to vector<1x8x8xf32>
    %242 = vector.shape_cast %241 : vector<1x8x8xf32> to vector<8x8xf32>
    %cst_67 = arith.constant dense<0.000000e+00> : vector<256x8xf32>
    %243 = tpu.matmul %240, %242, %cst_67 {dimension_numbers = #tpu.dot_dimension_numbers<[1], [0], [0], [1], [0, 0, 1, 1], [], []>} : vector<256x8xf32>, vector<8x8xf32>, vector<256x8xf32> -> vector<256x8xf32>
    %244 = arith.addf %239, %243 : vector<256x8xf32>
    %245 = vector.extract_strided_slice %185 {offsets = [41, 0], sizes = [256, 8], strides = [1, 1]} : vector<304x8xf32> to vector<256x8xf32>
    %cst_68 = arith.constant 0.000000e+00 : f32
    %246 = vector.shape_cast %20 : vector<256x1xi1> to vector<256x1xi1>
    %247 = vector.broadcast %246 : vector<256x1xi1> to vector<256x8xi1>
    %248 = vector.broadcast %cst_68 : f32 to vector<256x8xf32>
    %249 = arith.select %247, %245, %248 : vector<256x8xi1>, vector<256x8xf32>
    %250 = vector.extract_strided_slice %181 {offsets = [8, 0, 0], sizes = [1, 8, 8], strides = [1, 1, 1]} : vector<9x8x8xf32> to vector<1x8x8xf32>
    %251 = vector.shape_cast %250 : vector<1x8x8xf32> to vector<8x8xf32>
    %cst_69 = arith.constant dense<0.000000e+00> : vector<256x8xf32>
    %252 = tpu.matmul %249, %251, %cst_69 {dimension_numbers = #tpu.dot_dimension_numbers<[1], [0], [0], [1], [0, 0, 1, 1], [], []>} : vector<256x8xf32>, vector<8x8xf32>, vector<256x8xf32> -> vector<256x8xf32>
    %253 = arith.addf %244, %252 : vector<256x8xf32>
    %254 = vector.broadcast %183 : vector<1x8xf32> to vector<256x8xf32>
    %255 = arith.addf %253, %254 : vector<256x8xf32>
    %cst_70 = arith.constant 0.000000e+00 : f32
    %256 = vector.broadcast %cst_70 : f32 to vector<256x8xf32>
    %257 = arith.maximumf %255, %256 : vector<256x8xf32>
    %c0_71 = arith.constant 0 : index
    %c0_72 = arith.constant 0 : index
    %258 = vector.load %arg6[%c0_71, %c0_72] : memref<4x16xf32, #tpu.memory_space<vmem>>, vector<4x16xf32>
    %cst_73 = arith.constant dense<0.000000e+00> : vector<256x16xf32>
    %259 = tpu.matmul %22, %258, %cst_73 {dimension_numbers = #tpu.dot_dimension_numbers<[1], [0], [0], [1], [0, 0, 1, 1], [], []>} : vector<256x4xf32>, vector<4x16xf32>, vector<256x16xf32> -> vector<256x16xf32>
    %260 = vector.extract_strided_slice %26 {offsets = [0, 0, 0], sizes = [1, 8, 16], strides = [1, 1, 1]} : vector<3x8x16xf32> to vector<1x8x16xf32>
    %261 = vector.shape_cast %260 : vector<1x8x16xf32> to vector<8x16xf32>
    %cst_74 = arith.constant dense<0.000000e+00> : vector<256x16xf32>
    %262 = tpu.matmul %101, %261, %cst_74 {dimension_numbers = #tpu.dot_dimension_numbers<[1], [0], [0], [1], [0, 0, 1, 1], [], []>} : vector<256x8xf32>, vector<8x16xf32>, vector<256x16xf32> -> vector<256x16xf32>
    %263 = arith.addf %259, %262 : vector<256x16xf32>
    %264 = vector.extract_strided_slice %26 {offsets = [1, 0, 0], sizes = [1, 8, 16], strides = [1, 1, 1]} : vector<3x8x16xf32> to vector<1x8x16xf32>
    %265 = vector.shape_cast %264 : vector<1x8x16xf32> to vector<8x16xf32>
    %cst_75 = arith.constant dense<0.000000e+00> : vector<256x16xf32>
    %266 = tpu.matmul %179, %265, %cst_75 {dimension_numbers = #tpu.dot_dimension_numbers<[1], [0], [0], [1], [0, 0, 1, 1], [], []>} : vector<256x8xf32>, vector<8x16xf32>, vector<256x16xf32> -> vector<256x16xf32>
    %267 = arith.addf %263, %266 : vector<256x16xf32>
    %268 = vector.extract_strided_slice %26 {offsets = [2, 0, 0], sizes = [1, 8, 16], strides = [1, 1, 1]} : vector<3x8x16xf32> to vector<1x8x16xf32>
    %269 = vector.shape_cast %268 : vector<1x8x16xf32> to vector<8x16xf32>
    %cst_76 = arith.constant dense<0.000000e+00> : vector<256x16xf32>
    %270 = tpu.matmul %257, %269, %cst_76 {dimension_numbers = #tpu.dot_dimension_numbers<[1], [0], [0], [1], [0, 0, 1, 1], [], []>} : vector<256x8xf32>, vector<8x16xf32>, vector<256x16xf32> -> vector<256x16xf32>
    %271 = arith.addf %267, %270 : vector<256x16xf32>
    %c0_77 = arith.constant 0 : index
    %c0_78 = arith.constant 0 : index
    %272 = vector.load %arg8[%c0_77, %c0_78] : memref<1x16xf32, #tpu.memory_space<vmem>>, vector<1x16xf32>
    %273 = vector.broadcast %272 : vector<1x16xf32> to vector<256x16xf32>
    %274 = arith.addf %271, %273 : vector<256x16xf32>
    %cst_79 = arith.constant 0.000000e+00 : f32
    %275 = vector.broadcast %cst_79 : f32 to vector<256x16xf32>
    %276 = arith.maximumf %274, %275 : vector<256x16xf32>
    %cst_80 = arith.constant dense<0.000000e+00> : vector<16xf32>
    %277 = vector.multi_reduction <add>, %276, %cst_80 [0] : vector<256x16xf32> to vector<16xf32>
    %278 = vector.shape_cast %277 : vector<16xf32> to vector<1x16xf32>
    %cst_81 = arith.constant 3.906250e-03 : f32
    %279 = vector.broadcast %cst_81 : f32 to vector<1x16xf32>
    %280 = arith.mulf %278, %279 : vector<1x16xf32>
    %c0_82 = arith.constant 0 : index
    %c0_83 = arith.constant 0 : index
    %281 = vector.load %arg9[%c0_82, %c0_83] : memref<16x16xf32, #tpu.memory_space<vmem>>, vector<16x16xf32>
    %cst_84 = arith.constant dense<0.000000e+00> : vector<1x16xf32>
    %282 = tpu.matmul %280, %281, %cst_84 {dimension_numbers = #tpu.dot_dimension_numbers<[1], [0], [0], [1], [0, 0, 1, 1], [], []>} : vector<1x16xf32>, vector<16x16xf32>, vector<1x16xf32> -> vector<1x16xf32>
    %c0_85 = arith.constant 0 : index
    %c0_86 = arith.constant 0 : index
    %283 = vector.load %arg10[%c0_85, %c0_86] : memref<1x16xf32, #tpu.memory_space<vmem>>, vector<1x16xf32>
    %284 = arith.addf %282, %283 : vector<1x16xf32>
    %cst_87 = arith.constant 3.000000e+00 : f32
    %285 = vector.broadcast %cst_87 : f32 to vector<1x16xf32>
    %286 = arith.addf %284, %285 : vector<1x16xf32>
    %cst_88 = arith.constant 0.000000e+00 : f32
    %cst_89 = arith.constant 6.000000e+00 : f32
    %287 = vector.broadcast %cst_88 : f32 to vector<1x16xf32>
    %288 = arith.maximumf %287, %286 : vector<1x16xf32>
    %289 = vector.broadcast %cst_89 : f32 to vector<1x16xf32>
    %290 = arith.minimumf %289, %288 : vector<1x16xf32>
    %cst_90 = arith.constant 0.166666672 : f32
    %291 = vector.broadcast %cst_90 : f32 to vector<1x16xf32>
    %292 = arith.mulf %290, %291 : vector<1x16xf32>
    %293 = vector.broadcast %292 : vector<1x16xf32> to vector<256x16xf32>
    %294 = arith.mulf %276, %293 : vector<256x16xf32>
    %295 = vector.shape_cast %294 : vector<256x16xf32> to vector<1x256x16xf32>
    %c0_91 = arith.constant 0 : index
    %c0_92 = arith.constant 0 : index
    %c0_93 = arith.constant 0 : index
    %296 = vector.load %arg11[%c0_91, %c0_92, %c0_93] : memref<1x256x16xf32, #tpu.memory_space<vmem>>, vector<1x256x16xf32>
    tpu.vector_store %arg11[%c0_91, %c0_92, %c0_93], %295 {strides = array<i32>} : memref<1x256x16xf32, #tpu.memory_space<vmem>>, vector<1x256x16xf32>,
    return
  }
  func.func @transform_0(%arg0: i32) -> (i32, i32, i32) {
    %c0_i32 = arith.constant 0 : i32
    %c0_i32_0 = arith.constant 0 : i32
    %c0_i32_1 = arith.constant 0 : i32
    return %arg0, %c0_i32, %c0_i32_0 : i32, i32, i32
  }
  func.func @transform_1(%arg0: i32) -> (i32, i32, i32) {
    %c0_i32 = arith.constant 0 : i32
    %c0_i32_0 = arith.constant 0 : i32
    %c0_i32_1 = arith.constant 0 : i32
    %c0_i32_2 = arith.constant 0 : i32
    return %c0_i32, %c0_i32_0, %c0_i32_1 : i32, i32, i32
  }
  func.func @transform_2(%arg0: i32) -> (i32, i32) {
    %c0_i32 = arith.constant 0 : i32
    %c0_i32_0 = arith.constant 0 : i32
    %c0_i32_1 = arith.constant 0 : i32
    return %c0_i32, %c0_i32_0 : i32, i32
  }
  func.func @transform_3(%arg0: i32) -> (i32, i32, i32, i32) {
    %c0_i32 = arith.constant 0 : i32
    %c0_i32_0 = arith.constant 0 : i32
    %c0_i32_1 = arith.constant 0 : i32
    %c0_i32_2 = arith.constant 0 : i32
    %c0_i32_3 = arith.constant 0 : i32
    return %c0_i32, %c0_i32_0, %c0_i32_1, %c0_i32_2 : i32, i32, i32, i32
  }
  func.func @transform_4(%arg0: i32) -> (i32, i32, i32) {
    %c0_i32 = arith.constant 0 : i32
    %c0_i32_0 = arith.constant 0 : i32
    %c0_i32_1 = arith.constant 0 : i32
    %c0_i32_2 = arith.constant 0 : i32
    return %c0_i32, %c0_i32_0, %c0_i32_1 : i32, i32, i32
  }
  func.func @transform_5(%arg0: i32) -> (i32, i32) {
    %c0_i32 = arith.constant 0 : i32
    %c0_i32_0 = arith.constant 0 : i32
    %c0_i32_1 = arith.constant 0 : i32
    return %c0_i32, %c0_i32_0 : i32, i32
  }
  func.func @transform_6(%arg0: i32) -> (i32, i32, i32) {
    %c0_i32 = arith.constant 0 : i32
    %c0_i32_0 = arith.constant 0 : i32
    %c0_i32_1 = arith.constant 0 : i32
    %c0_i32_2 = arith.constant 0 : i32
    return %c0_i32, %c0_i32_0, %c0_i32_1 : i32, i32, i32
  }
  func.func @transform_7(%arg0: i32) -> (i32, i32) {
    %c0_i32 = arith.constant 0 : i32
    %c0_i32_0 = arith.constant 0 : i32
    %c0_i32_1 = arith.constant 0 : i32
    return %c0_i32, %c0_i32_0 : i32, i32
  }
  func.func @transform_8(%arg0: i32) -> (i32, i32) {
    %c0_i32 = arith.constant 0 : i32
    %c0_i32_0 = arith.constant 0 : i32
    %c0_i32_1 = arith.constant 0 : i32
    return %c0_i32, %c0_i32_0 : i32, i32
  }
  func.func @transform_9(%arg0: i32) -> (i32, i32) {
    %c0_i32 = arith.constant 0 : i32
    %c0_i32_0 = arith.constant 0 : i32
    %c0_i32_1 = arith.constant 0 : i32
    return %c0_i32, %c0_i32_0 : i32, i32
  }
  func.func @transform_10(%arg0: i32) -> (i32, i32, i32) {
    %c0_i32 = arith.constant 0 : i32
    %c0_i32_0 = arith.constant 0 : i32
    %c0_i32_1 = arith.constant 0 : i32
    return %arg0, %c0_i32, %c0_i32_0 : i32, i32, i32
  }
}

</mosaic_0001>

<llo_original>
// kernel: tpu_custom_call.1
$region0: #{tpu_custom_call.1}
  #allocation0 [shape = 'u32[]', space=smem, size = 0x4, offset = 0x4, fixed_abs, tag = 'smem constant byte address 0x4 - core index']
  #allocation1 [shape = 'u32[144,128]{1,0:T(1,128)}', space=vmem, size = 0x12000, scoped, tag = 'internal scratch']
  %s0 = inlined_call_operand.vmem [shape: f32[2,256,4], index: 0, kind: input, shape index: {}]
  %s1 = inlined_call_operand.vmem [shape: f32[9,4,8], index: 1, kind: input, shape index: {}]
  %s2 = inlined_call_operand.vmem [shape: f32[1,8], index: 2, kind: input, shape index: {}]
  %s3 = inlined_call_operand.vmem [shape: f32[2,9,8,8], index: 3, kind: input, shape index: {}]
  %s4 = inlined_call_operand.vmem [shape: f32[2,1,8], index: 4, kind: input, shape index: {}]
  %s5 = inlined_call_operand.vmem [shape: f32[4,16], index: 5, kind: input, shape index: {}]
  %s6 = inlined_call_operand.vmem [shape: f32[3,8,16], index: 6, kind: input, shape index: {}]
  %s7 = inlined_call_operand.vmem [shape: f32[1,16], index: 7, kind: input, shape index: {}]
  %s8 = inlined_call_operand.vmem [shape: f32[16,16], index: 8, kind: input, shape index: {}]
  %s9 = inlined_call_operand.vmem [shape: f32[1,16], index: 9, kind: input, shape index: {}]
  %s10 = inlined_call_operand.vmem [shape: f32[2,256,16], index: 10, kind: output, shape index: {}]
  %s11 = sld [smem:[#allocation0]]
  $region73: #{tpu_custom_call.1} parent=0
    _
  %s13 = ssub.s32 1, %s11
  %s14 = scalar_select 0, %s13, %s11
  loop: start=0, step=1, limit=4
  $region2: #{tpu_custom_call.1} parent=0 // loop_pre_header
    _
  $region3: #{tpu_custom_call.1} parent=0 // loop_header
    %s16 = sphi 0, %s20
    %p17 = scmp.ge.s32.totalorder %s16, 4
    %s26 = sphi 0, %s28
    %s29 = sphi 0, %s26
    %s30 = sphi 0, %s29
    %s46 = sphi 0, %s30
    %s50 = sphi 0, %s50
    %s52 = sphi 0, %s50
    %s53 = sphi 0, %s52
    %s67 = sphi 0, %s53
    %s71 = sphi 0, %s71
    %s73 = sphi 0, %s71
    %s74 = sphi 0, %s73
    %s88 = sphi 0, %s74
    %s92 = sphi 0, %s92
    %s94 = sphi 0, %s92
    %s95 = sphi 0, %s94
    %s109 = sphi 0, %s95
    %s113 = sphi 0, %s113
    %s115 = sphi 0, %s113
    %s116 = sphi 0, %s115
    %s130 = sphi 0, %s116
    %s134 = sphi 0, %s134
    %s136 = sphi 0, %s134
    %s137 = sphi 0, %s136
    %s151 = sphi 0, %s137
    %s155 = sphi 0, %s155
    %s157 = sphi 0, %s155
    %s158 = sphi 0, %s157
    %s172 = sphi 0, %s158
    %s176 = sphi 0, %s176
    %s178 = sphi 0, %s176
    %s179 = sphi 0, %s178
    %s193 = sphi 0, %s179
    %s197 = sphi 0, %s197
    %s199 = sphi 0, %s197
    %s200 = sphi 0, %s199
    %s214 = sphi 0, %s200
    %s218 = sphi 0, %s218
    %s220 = sphi 0, %s218
    %s221 = sphi 0, %s220
    %s235 = sphi 0, %s221
    %s241 = sphi 0, %s243
    %s244 = sphi 0, %s241
    %s245 = sphi 0, %s244
    %s261 = sphi 0, %s245
  $region4: #{tpu_custom_call.1} parent=0 // loop_header_branch
    %19 = sbr.rel (%p17) target = $region8
  $region5: #{tpu_custom_call.1} parent=0 // loop_body
    %s21 = ssub.s32 %s16, 1
    %s22 = ssub.s32 %s16, 2
    %s23 = sadd.s32 %s16, 1
    %s24 = ssub.s32 %s16, %s23
    %p25 = scmp.eq.s32.totalorder %s24, 0
    %s27 = sadd.s32 %s26, 1
    %s28 = scalar_select %p25, %s26, %s27
    %p31 = pneg %p25
    %p32 = scmp.eq.s32.totalorder %s16, 1
    %p33 = por %p31, %p32
    %p34 = scmp.ne.s32.totalorder %s26, %s29
    %p35 = scmp.eq.s32.totalorder %s16, 0
    %p36 = por %p34, %p35
    %p37 = scmp.ne.s32.totalorder %s26, %s29
    %p38 = scmp.eq.s32.totalorder %s21, 1
    %p39 = por %p37, %p38
    %p40 = scmp.ne.s32.totalorder %s29, %s30
    %p41 = scmp.eq.s32.totalorder %s21, 0
    %p42 = por %p40, %p41
    %p43 = scmp.ne.s32.totalorder %s29, %s30
    %p44 = scmp.eq.s32.totalorder %s22, 1
    %p45 = por %p43, %p44
    %p47 = scmp.ne.s32.totalorder %s30, %s46
    %p48 = scmp.eq.s32.totalorder %s22, 0
    %p49 = por %p47, %p48
    %s51 = sadd.s32 %s50, 1
    %p54 = scmp.eq.s32.totalorder %s16, 1
    %p55 = scmp.ne.s32.totalorder %s50, %s52
    %p56 = scmp.eq.s32.totalorder %s16, 0
    %p57 = por %p55, %p56
    %p58 = scmp.ne.s32.totalorder %s50, %s52
    %p59 = scmp.eq.s32.totalorder %s21, 1
    %p60 = por %p58, %p59
    %p61 = scmp.ne.s32.totalorder %s52, %s53
    %p62 = scmp.eq.s32.totalorder %s21, 0
    %p63 = por %p61, %p62
    %p64 = scmp.ne.s32.totalorder %s52, %s53
    %p65 = scmp.eq.s32.totalorder %s22, 1
    %p66 = por %p64, %p65
    %p68 = scmp.ne.s32.totalorder %s53, %s67
    %p69 = scmp.eq.s32.totalorder %s22, 0
    %p70 = por %p68, %p69
    %s72 = sadd.s32 %s71, 1
    %p75 = scmp.eq.s32.totalorder %s16, 1
    %p76 = scmp.ne.s32.totalorder %s71, %s73
    %p77 = scmp.eq.s32.totalorder %s16, 0
    %p78 = por %p76, %p77
    %p79 = scmp.ne.s32.totalorder %s71, %s73
    %p80 = scmp.eq.s32.totalorder %s21, 1
    %p81 = por %p79, %p80
    %p82 = scmp.ne.s32.totalorder %s73, %s74
    %p83 = scmp.eq.s32.totalorder %s21, 0
    %p84 = por %p82, %p83
    %p85 = scmp.ne.s32.totalorder %s73, %s74
    %p86 = scmp.eq.s32.totalorder %s22, 1
    %p87 = por %p85, %p86
    %p89 = scmp.ne.s32.totalorder %s74, %s88
    %p90 = scmp.eq.s32.totalorder %s22, 0
    %p91 = por %p89, %p90
    %s93 = sadd.s32 %s92, 1
    %p96 = scmp.eq.s32.totalorder %s16, 1
    %p97 = scmp.ne.s32.totalorder %s92, %s94
    %p98 = scmp.eq.s32.totalorder %s16, 0
    %p99 = por %p97, %p98
    %p100 = scmp.ne.s32.totalorder %s92, %s94
    %p101 = scmp.eq.s32.totalorder %s21, 1
    %p102 = por %p100, %p101
    %p103 = scmp.ne.s32.totalorder %s94, %s95
    %p104 = scmp.eq.s32.totalorder %s21, 0
    %p105 = por %p103, %p104
    %p106 = scmp.ne.s32.totalorder %s94, %s95
    %p107 = scmp.eq.s32.totalorder %s22, 1
    %p108 = por %p106, %p107
    %p110 = scmp.ne.s32.totalorder %s95, %s109
    %p111 = scmp.eq.s32.totalorder %s22, 0
    %p112 = por %p110, %p111
    %s114 = sadd.s32 %s113, 1
    %p117 = scmp.eq.s32.totalorder %s16, 1
    %p118 = scmp.ne.s32.totalorder %s113, %s115
    %p119 = scmp.eq.s32.totalorder %s16, 0
    %p120 = por %p118, %p119
    %p121 = scmp.ne.s32.totalorder %s113, %s115
    %p122 = scmp.eq.s32.totalorder %s21, 1
    %p123 = por %p121, %p122
    %p124 = scmp.ne.s32.totalorder %s115, %s116
    %p125 = scmp.eq.s32.totalorder %s21, 0
    %p126 = por %p124, %p125
    %p127 = scmp.ne.s32.totalorder %s115, %s116
    %p128 = scmp.eq.s32.totalorder %s22, 1
    %p129 = por %p127, %p128
    %p131 = scmp.ne.s32.totalorder %s116, %s130
    %p132 = scmp.eq.s32.totalorder %s22, 0
    %p133 = por %p131, %p132
    %s135 = sadd.s32 %s134, 1
    %p138 = scmp.eq.s32.totalorder %s16, 1
    %p139 = scmp.ne.s32.totalorder %s134, %s136
    %p140 = scmp.eq.s32.totalorder %s16, 0
    %p141 = por %p139, %p140
    %p142 = scmp.ne.s32.totalorder %s134, %s136
    %p143 = scmp.eq.s32.totalorder %s21, 1
    %p144 = por %p142, %p143
    %p145 = scmp.ne.s32.totalorder %s136, %s137
    %p146 = scmp.eq.s32.totalorder %s21, 0
    %p147 = por %p145, %p146
    %p148 = scmp.ne.s32.totalorder %s136, %s137
    %p149 = scmp.eq.s32.totalorder %s22, 1
    %p150 = por %p148, %p149
    %p152 = scmp.ne.s32.totalorder %s137, %s151
    %p153 = scmp.eq.s32.totalorder %s22, 0
    %p154 = por %p152, %p153
    %s156 = sadd.s32 %s155, 1
    %p159 = scmp.eq.s32.totalorder %s16, 1
    %p160 = scmp.ne.s32.totalorder %s155, %s157
    %p161 = scmp.eq.s32.totalorder %s16, 0
    %p162 = por %p160, %p161
    %p163 = scmp.ne.s32.totalorder %s155, %s157
    %p164 = scmp.eq.s32.totalorder %s21, 1
    %p165 = por %p163, %p164
    %p166 = scmp.ne.s32.totalorder %s157, %s158
    %p167 = scmp.eq.s32.totalorder %s21, 0
    %p168 = por %p166, %p167
    %p169 = scmp.ne.s32.totalorder %s157, %s158
    %p170 = scmp.eq.s32.totalorder %s22, 1
    %p171 = por %p169, %p170
    %p173 = scmp.ne.s32.totalorder %s158, %s172
    %p174 = scmp.eq.s32.totalorder %s22, 0
    %p175 = por %p173, %p174
    %s177 = sadd.s32 %s176, 1
    %p180 = scmp.eq.s32.totalorder %s16, 1
    %p181 = scmp.ne.s32.totalorder %s176, %s178
    %p182 = scmp.eq.s32.totalorder %s16, 0
    %p183 = por %p181, %p182
    %p184 = scmp.ne.s32.totalorder %s176, %s178
    %p185 = scmp.eq.s32.totalorder %s21, 1
    %p186 = por %p184, %p185
    %p187 = scmp.ne.s32.totalorder %s178, %s179
    %p188 = scmp.eq.s32.totalorder %s21, 0
    %p189 = por %p187, %p188
    %p190 = scmp.ne.s32.totalorder %s178, %s179
    %p191 = scmp.eq.s32.totalorder %s22, 1
    %p192 = por %p190, %p191
    %p194 = scmp.ne.s32.totalorder %s179, %s193
    %p195 = scmp.eq.s32.totalorder %s22, 0
    %p196 = por %p194, %p195
    %s198 = sadd.s32 %s197, 1
    %p201 = scmp.eq.s32.totalorder %s16, 1
    %p202 = scmp.ne.s32.totalorder %s197, %s199
    %p203 = scmp.eq.s32.totalorder %s16, 0
    %p204 = por %p202, %p203
    %p205 = scmp.ne.s32.totalorder %s197, %s199
    %p206 = scmp.eq.s32.totalorder %s21, 1
    %p207 = por %p205, %p206
    %p208 = scmp.ne.s32.totalorder %s199, %s200
    %p209 = scmp.eq.s32.totalorder %s21, 0
    %p210 = por %p208, %p209
    %p211 = scmp.ne.s32.totalorder %s199, %s200
    %p212 = scmp.eq.s32.totalorder %s22, 1
    %p213 = por %p211, %p212
    %p215 = scmp.ne.s32.totalorder %s200, %s214
    %p216 = scmp.eq.s32.totalorder %s22, 0
    %p217 = por %p215, %p216
    %s219 = sadd.s32 %s218, 1
    %p222 = scmp.eq.s32.totalorder %s16, 1
    %p223 = scmp.ne.s32.totalorder %s218, %s220
    %p224 = scmp.eq.s32.totalorder %s16, 0
    %p225 = por %p223, %p224
    %p226 = scmp.ne.s32.totalorder %s218, %s220
    %p227 = scmp.eq.s32.totalorder %s21, 1
    %p228 = por %p226, %p227
    %p229 = scmp.ne.s32.totalorder %s220, %s221
    %p230 = scmp.eq.s32.totalorder %s21, 0
    %p231 = por %p229, %p230
    %p232 = scmp.ne.s32.totalorder %s220, %s221
    %p233 = scmp.eq.s32.totalorder %s22, 1
    %p234 = por %p232, %p233
    %p236 = scmp.ne.s32.totalorder %s221, %s235
    %p237 = scmp.eq.s32.totalorder %s22, 0
    %p238 = por %p236, %p237
    %s239 = ssub.s32 %s16, %s23
    %p240 = scmp.eq.s32.totalorder %s239, 0
    %s242 = sadd.s32 %s241, 1
    %s243 = scalar_select %p240, %s241, %s242
    %p246 = pneg %p240
    %p247 = scmp.eq.s32.totalorder %s16, 1
    %p248 = por %p246, %p247
    %p249 = scmp.ne.s32.totalorder %s241, %s244
    %p250 = scmp.eq.s32.totalorder %s16, 0
    %p251 = por %p249, %p250
    %p252 = scmp.ne.s32.totalorder %s241, %s244
    %p253 = scmp.eq.s32.totalorder %s21, 1
    %p254 = por %p252, %p253
    %p255 = scmp.ne.s32.totalorder %s244, %s245
    %p256 = scmp.eq.s32.totalorder %s21, 0
    %p257 = por %p255, %p256
    %p258 = scmp.ne.s32.totalorder %s244, %s245
    %p259 = scmp.eq.s32.totalorder %s22, 1
    %p260 = por %p258, %p259
    %p262 = scmp.ne.s32.totalorder %s245, %s261
    %p263 = scmp.eq.s32.totalorder %s22, 0
    %p264 = por %p262, %p263
    %p265 = scmp.le.s32.totalorder 1, %s16
    %p266 = scmp.lt.s32.totalorder %s16, 3
    %p267 = pnand %p265, %p266
    %p268 = pneg %p267
    // Predicated region
    $region9: #{tpu_custom_call.1} parent=5 // pred_check
      _
    $region10: #{tpu_custom_call.1} parent=5 // pred_check_branch
      %270 = sbr.rel (%p267) target = $region12
    $region11: #{tpu_custom_call.1} parent=5 // pred_region
      %s271 = ssub.s32 %s16, 1
      // Predicated region
      $region13: #{tpu_custom_call.1} parent=11 // pred_check
        %p272 = pneg %p63
      $region14: #{tpu_custom_call.1} parent=11 // pred_check_branch
        %274 = sbr.rel (%p272) target = $region16
      $region15: #{tpu_custom_call.1} parent=11 // pred_region
        _
      $region16: #{tpu_custom_call.1} parent=11 // pred_fallthru
        _
      // Predicated region
      $region17: #{tpu_custom_call.1} parent=11 // pred_check
        %p275 = pneg %p84
      $region18: #{tpu_custom_call.1} parent=11 // pred_check_branch
        %277 = sbr.rel (%p275) target = $region20
      $region19: #{tpu_custom_call.1} parent=11 // pred_region
        _
      $region20: #{tpu_custom_call.1} parent=11 // pred_fallthru
        _
      // Predicated region
      $region21: #{tpu_custom_call.1} parent=11 // pred_check
        %p278 = pneg %p105
      $region22: #{tpu_custom_call.1} parent=11 // pred_check_branch
        %280 = sbr.rel (%p278) target = $region24
      $region23: #{tpu_custom_call.1} parent=11 // pred_region
        _
      $region24: #{tpu_custom_call.1} parent=11 // pred_fallthru
        _
      // Predicated region
      $region25: #{tpu_custom_call.1} parent=11 // pred_check
        %p281 = pneg %p126
      $region26: #{tpu_custom_call.1} parent=11 // pred_check_branch
        %283 = sbr.rel (%p281) target = $region28
      $region27: #{tpu_custom_call.1} parent=11 // pred_region
        _
      $region28: #{tpu_custom_call.1} parent=11 // pred_fallthru
        _
      // Predicated region
      $region29: #{tpu_custom_call.1} parent=11 // pred_check
        %p284 = pneg %p147
      $region30: #{tpu_custom_call.1} parent=11 // pred_check_branch
        %286 = sbr.rel (%p284) target = $region32
      $region31: #{tpu_custom_call.1} parent=11 // pred_region
        _
      $region32: #{tpu_custom_call.1} parent=11 // pred_fallthru
        _
      // Predicated region
      $region33: #{tpu_custom_call.1} parent=11 // pred_check
        %p287 = pneg %p168
      $region34: #{tpu_custom_call.1} parent=11 // pred_check_branch
        %289 = sbr.rel (%p287) target = $region36
      $region35: #{tpu_custom_call.1} parent=11 // pred_region
        _
      $region36: #{tpu_custom_call.1} parent=11 // pred_fallthru
        _
      // Predicated region
      $region37: #{tpu_custom_call.1} parent=11 // pred_check
        %p290 = pneg %p189
      $region38: #{tpu_custom_call.1} parent=11 // pred_check_branch
        %292 = sbr.rel (%p290) target = $region40
      $region39: #{tpu_custom_call.1} parent=11 // pred_region
        _
      $region40: #{tpu_custom_call.1} parent=11 // pred_fallthru
        _
      // Predicated region
      $region41: #{tpu_custom_call.1} parent=11 // pred_check
        %p293 = pneg %p210
      $region42: #{tpu_custom_call.1} parent=11 // pred_check_branch
        %295 = sbr.rel (%p293) target = $region44
      $region43: #{tpu_custom_call.1} parent=11 // pred_region
        _
      $region44: #{tpu_custom_call.1} parent=11 // pred_fallthru
        _
      // Predicated region
      $region45: #{tpu_custom_call.1} parent=11 // pred_check
        %p296 = pneg %p231
      $region46: #{tpu_custom_call.1} parent=11 // pred_check_branch
        %298 = sbr.rel (%p296) target = $region48
      $region47: #{tpu_custom_call.1} parent=11 // pred_region
        _
      $region48: #{tpu_custom_call.1} parent=11 // pred_fallthru
        _
    $region12: #{tpu_custom_call.1} parent=5 // pred_fallthru
      _
    %p299 = scmp.lt.s32.totalorder %s16, 2
    // Predicated region
    $region49: #{tpu_custom_call.1} parent=5 // pred_check
      %p300 = pneg %p299
    $region50: #{tpu_custom_call.1} parent=5 // pred_check_branch
      %302 = sbr.rel (%p300) target = $region52
    $region51: #{tpu_custom_call.1} parent=5 // pred_region
      // Predicated region
      $region53: #{tpu_custom_call.1} parent=51 // pred_check
        %p303 = pneg %p36
      $region54: #{tpu_custom_call.1} parent=51 // pred_check_branch
        %305 = sbr.rel (%p303) target = $region56
      $region55: #{tpu_custom_call.1} parent=51 // pred_region
        %p306 = scmp.lt.s32.totalorder %s16, 1
        %s307 = scalar_select %p306, %s16, 1
        %s308 = smul.addr %s307, 32
        %s309 = smul.addr %s308, 8
        %s310 = scalar_lea.vmem %s0, %s309
      $region56: #{tpu_custom_call.1} parent=51 // pred_fallthru
        _
    $region52: #{tpu_custom_call.1} parent=5 // pred_fallthru
      _
    %p311 = scmp.le.s32.totalorder 1, %s16
    %p312 = scmp.lt.s32.totalorder %s16, 3
    %p313 = pnand %p311, %p312
    %p314 = pneg %p313
    // Predicated region
    $region57: #{tpu_custom_call.1} parent=5 // pred_check
      _
    $region58: #{tpu_custom_call.1} parent=5 // pred_check_branch
      %316 = sbr.rel (%p313) target = $region60
    $region59: #{tpu_custom_call.1} parent=5 // pred_region
      %s317 = ssub.s32 %s16, 1
      %p318 = scmp.lt.s32.totalorder %s21, 1
      %s319 = scalar_select %p318, %s21, 1
      %s320 = smul.addr %s319, 32
      %s321 = smul.addr %s320, 8
      %s322 = scalar_lea.vmem %s0, %s321
      %p323 = pneg %p42
      %p324 = pneg %p39
      %p325 = pneg %p63
      %p326 = pneg %p60
      %p327 = pneg %p84
      %p328 = pneg %p81
      %p329 = pneg %p105
      %p330 = pneg %p102
      %p331 = pneg %p126
      %p332 = pneg %p123
      %p333 = pneg %p147
      %p334 = pneg %p144
      %p335 = pneg %p168
      %p336 = pneg %p165
      %p337 = pneg %p189
      %p338 = pneg %p186
      %p339 = pneg %p210
      %p340 = pneg %p207
      %p341 = pneg %p231
      %p342 = pneg %p228
      %p343 = pneg %p257
      %p344 = pneg %p254
      %p345 = scmp.lt.s32.totalorder %s21, 1
      %s346 = scalar_select %p345, %s21, 1
      %s347 = smul.addr %s346, 32
      %s348 = smul.addr %s347, 8
      %s349 = scalar_lea.vmem %s10, %s348
      %p350 = scmp.lt.s32.totalorder %s21, 1
      %s351 = scalar_select %p350, %s21, 1
      %s352 = smul.addr %s351, 32
      %s353 = smul.addr %s352, 8
      %s354 = scalar_lea.vmem %s0, %s353
      %p355 = scmp.lt.s32.totalorder %s21, 1
      %s356 = scalar_select %p355, %s21, 1
      %s357 = smul.addr %s356, 32
      %s358 = smul.addr %s357, 8
      %s359 = scalar_lea.vmem %s10, %s358
      %v360 = vlaneseq
      %v361 = vshrl.u32 %v360, 7
      %v362 = vadd.s32 %v361, 8
      %v363 = vadd.s32 %v361, 16
      %v364 = vadd.s32 %v361, 24
      %v365 = vadd.s32 %v361, 32
      %v366 = vadd.s32 %v361, 40
      %v367 = vadd.s32 %v361, 48
      %v368 = vadd.s32 %v361, 56
      %v369 = vadd.s32 %v361, 64
      %v370 = vadd.s32 %v361, 72
      %v371 = vadd.s32 %v361, 80
      %v372 = vadd.s32 %v361, 88
      %v373 = vadd.s32 %v361, 96
      %v374 = vadd.s32 %v361, 104
      %v375 = vadd.s32 %v361, 112
      %v376 = vadd.s32 %v361, 120
      %v377 = vadd.s32 %v361, 128
      %v378 = vadd.s32 %v361, 136
      %v379 = vadd.s32 %v361, 144
      %v380 = vadd.s32 %v361, 152
      %v381 = vadd.s32 %v361, 160
      %v382 = vadd.s32 %v361, 168
      %v383 = vadd.s32 %v361, 176
      %v384 = vadd.s32 %v361, 184
      %v385 = vadd.s32 %v361, 192
      %v386 = vadd.s32 %v361, 200
      %v387 = vadd.s32 %v361, 208
      %v388 = vadd.s32 %v361, 216
      %v389 = vadd.s32 %v361, 224
      %v390 = vadd.s32 %v361, 232
      %v391 = vadd.s32 %v361, 240
      %v392 = vadd.s32 %v361, 248
      %vm393 = vcmp.lt.s32.totalorder %v361, 0
      %v394 = vsub.s32 0, %v361
      %v395 = vsel %vm393, %v394, %v361
      %v396 = vshrl.u32 %v395, 4
      %v397 = vand.u32 %v395, 15
      %v398 = vsub.s32 0, %v397
      %v399 = vsel %vm393, %v398, %v397
      %vm400 = vcmp.lt.s32.totalorder %v362, 0
      %v401 = vsub.s32 0, %v362
      %v402 = vsel %vm400, %v401, %v362
      %v403 = vshrl.u32 %v402, 4
      %v404 = vand.u32 %v402, 15
      %v405 = vsub.s32 0, %v404
      %v406 = vsel %vm400, %v405, %v404
      %vm407 = vcmp.lt.s32.totalorder %v363, 0
      %v408 = vsub.s32 0, %v363
      %v409 = vsel %vm407, %v408, %v363
      %v410 = vshrl.u32 %v409, 4
      %v411 = vand.u32 %v409, 15
      %v412 = vsub.s32 0, %v411
      %v413 = vsel %vm407, %v412, %v411
      %vm414 = vcmp.lt.s32.totalorder %v364, 0
      %v415 = vsub.s32 0, %v364
      %v416 = vsel %vm414, %v415, %v364
      %v417 = vshrl.u32 %v416, 4
      %v418 = vand.u32 %v416, 15
      %v419 = vsub.s32 0, %v418
      %v420 = vsel %vm414, %v419, %v418
      %vm421 = vcmp.lt.s32.totalorder %v365, 0
      %v422 = vsub.s32 0, %v365
      %v423 = vsel %vm421, %v422, %v365
      %v424 = vshrl.u32 %v423, 4
      %v425 = vand.u32 %v423, 15
      %v426 = vsub.s32 0, %v425
      %v427 = vsel %vm421, %v426, %v425
      %vm428 = vcmp.lt.s32.totalorder %v366, 0
      %v429 = vsub.s32 0, %v366
      %v430 = vsel %vm428, %v429, %v366
      %v431 = vshrl.u32 %v430, 4
      %v432 = vand.u32 %v430, 15
      %v433 = vsub.s32 0, %v432
      %v434 = vsel %vm428, %v433, %v432
      %vm435 = vcmp.lt.s32.totalorder %v367, 0
      %v436 = vsub.s32 0, %v367
      %v437 = vsel %vm435, %v436, %v367
      %v438 = vshrl.u32 %v437, 4
      %v439 = vand.u32 %v437, 15
      %v440 = vsub.s32 0, %v439
      %v441 = vsel %vm435, %v440, %v439
      %vm442 = vcmp.lt.s32.totalorder %v368, 0
      %v443 = vsub.s32 0, %v368
      %v444 = vsel %vm442, %v443, %v368
      %v445 = vshrl.u32 %v444, 4
      %v446 = vand.u32 %v444, 15
      %v447 = vsub.s32 0, %v446
      %v448 = vsel %vm442, %v447, %v446
      %vm449 = vcmp.lt.s32.totalorder %v369, 0
      %v450 = vsub.s32 0, %v369
      %v451 = vsel %vm449, %v450, %v369
      %v452 = vshrl.u32 %v451, 4
      %v453 = vand.u32 %v451, 15
      %v454 = vsub.s32 0, %v453
      %v455 = vsel %vm449, %v454, %v453
      %vm456 = vcmp.lt.s32.totalorder %v370, 0
      %v457 = vsub.s32 0, %v370
      %v458 = vsel %vm456, %v457, %v370
      %v459 = vshrl.u32 %v458, 4
      %v460 = vand.u32 %v458, 15
      %v461 = vsub.s32 0, %v460
      %v462 = vsel %vm456, %v461, %v460
      %vm463 = vcmp.lt.s32.totalorder %v371, 0
      %v464 = vsub.s32 0, %v371
      %v465 = vsel %vm463, %v464, %v371
      %v466 = vshrl.u32 %v465, 4
      %v467 = vand.u32 %v465, 15
      %v468 = vsub.s32 0, %v467
      %v469 = vsel %vm463, %v468, %v467
      %vm470 = vcmp.lt.s32.totalorder %v372, 0
      %v471 = vsub.s32 0, %v372
      %v472 = vsel %vm470, %v471, %v372
      %v473 = vshrl.u32 %v472, 4
      %v474 = vand.u32 %v472, 15
      %v475 = vsub.s32 0, %v474
      %v476 = vsel %vm470, %v475, %v474
      %vm477 = vcmp.lt.s32.totalorder %v373, 0
      %v478 = vsub.s32 0, %v373
      %v479 = vsel %vm477, %v478, %v373
      %v480 = vshrl.u32 %v479, 4
      %v481 = vand.u32 %v479, 15
      %v482 = vsub.s32 0, %v481
      %v483 = vsel %vm477, %v482, %v481
      %vm484 = vcmp.lt.s32.totalorder %v374, 0
      %v485 = vsub.s32 0, %v374
      %v486 = vsel %vm484, %v485, %v374
      %v487 = vshrl.u32 %v486, 4
      %v488 = vand.u32 %v486, 15
      %v489 = vsub.s32 0, %v488
      %v490 = vsel %vm484, %v489, %v488
      %vm491 = vcmp.lt.s32.totalorder %v375, 0
      %v492 = vsub.s32 0, %v375
      %v493 = vsel %vm491, %v492, %v375
      %v494 = vshrl.u32 %v493, 4
      %v495 = vand.u32 %v493, 15
      %v496 = vsub.s32 0, %v495
      %v497 = vsel %vm491, %v496, %v495
      %vm498 = vcmp.lt.s32.totalorder %v376, 0
      %v499 = vsub.s32 0, %v376
      %v500 = vsel %vm498, %v499, %v376
      %v501 = vshrl.u32 %v500, 4
      %v502 = vand.u32 %v500, 15
      %v503 = vsub.s32 0, %v502
      %v504 = vsel %vm498, %v503, %v502
      %vm505 = vcmp.lt.s32.totalorder %v377, 0
      %v506 = vsub.s32 0, %v377
      %v507 = vsel %vm505, %v506, %v377
      %v508 = vshrl.u32 %v507, 4
      %v509 = vand.u32 %v507, 15
      %v510 = vsub.s32 0, %v509
      %v511 = vsel %vm505, %v510, %v509
      %vm512 = vcmp.lt.s32.totalorder %v378, 0
      %v513 = vsub.s32 0, %v378
      %v514 = vsel %vm512, %v513, %v378
      %v515 = vshrl.u32 %v514, 4
      %v516 = vand.u32 %v514, 15
      %v517 = vsub.s32 0, %v516
      %v518 = vsel %vm512, %v517, %v516
      %vm519 = vcmp.lt.s32.totalorder %v379, 0
      %v520 = vsub.s32 0, %v379
      %v521 = vsel %vm519, %v520, %v379
      %v522 = vshrl.u32 %v521, 4
      %v523 = vand.u32 %v521, 15
      %v524 = vsub.s32 0, %v523
      %v525 = vsel %vm519, %v524, %v523
      %vm526 = vcmp.lt.s32.totalorder %v380, 0
      %v527 = vsub.s32 0, %v380
      %v528 = vsel %vm526, %v527, %v380
      %v529 = vshrl.u32 %v528, 4
      %v530 = vand.u32 %v528, 15
      %v531 = vsub.s32 0, %v530
      %v532 = vsel %vm526, %v531, %v530
      %vm533 = vcmp.lt.s32.totalorder %v381, 0
      %v534 = vsub.s32 0, %v381
      %v535 = vsel %vm533, %v534, %v381
      %v536 = vshrl.u32 %v535, 4
      %v537 = vand.u32 %v535, 15
      %v538 = vsub.s32 0, %v537
      %v539 = vsel %vm533, %v538, %v537
      %vm540 = vcmp.lt.s32.totalorder %v382, 0
      %v541 = vsub.s32 0, %v382
      %v542 = vsel %vm540, %v541, %v382
      %v543 = vshrl.u32 %v542, 4
      %v544 = vand.u32 %v542, 15
      %v545 = vsub.s32 0, %v544
      %v546 = vsel %vm540, %v545, %v544
      %vm547 = vcmp.lt.s32.totalorder %v383, 0
      %v548 = vsub.s32 0, %v383
      %v549 = vsel %vm547, %v548, %v383
      %v550 = vshrl.u32 %v549, 4
      %v551 = vand.u32 %v549, 15
      %v552 = vsub.s32 0, %v551
      %v553 = vsel %vm547, %v552, %v551
      %vm554 = vcmp.lt.s32.totalorder %v384, 0
      %v555 = vsub.s32 0, %v384
      %v556 = vsel %vm554, %v555, %v384
      %v557 = vshrl.u32 %v556, 4
      %v558 = vand.u32 %v556, 15
      %v559 = vsub.s32 0, %v558
      %v560 = vsel %vm554, %v559, %v558
      %vm561 = vcmp.lt.s32.totalorder %v385, 0
      %v562 = vsub.s32 0, %v385
      %v563 = vsel %vm561, %v562, %v385
      %v564 = vshrl.u32 %v563, 4
      %v565 = vand.u32 %v563, 15
      %v566 = vsub.s32 0, %v565
      %v567 = vsel %vm561, %v566, %v565
      %vm568 = vcmp.lt.s32.totalorder %v386, 0
      %v569 = vsub.s32 0, %v386
      %v570 = vsel %vm568, %v569, %v386
      %v571 = vshrl.u32 %v570, 4
      %v572 = vand.u32 %v570, 15
      %v573 = vsub.s32 0, %v572
      %v574 = vsel %vm568, %v573, %v572
      %vm575 = vcmp.lt.s32.totalorder %v387, 0
      %v576 = vsub.s32 0, %v387
      %v577 = vsel %vm575, %v576, %v387
      %v578 = vshrl.u32 %v577, 4
      %v579 = vand.u32 %v577, 15
      %v580 = vsub.s32 0, %v579
      %v581 = vsel %vm575, %v580, %v579
      %vm582 = vcmp.lt.s32.totalorder %v388, 0
      %v583 = vsub.s32 0, %v388
      %v584 = vsel %vm582, %v583, %v388
      %v585 = vshrl.u32 %v584, 4
      %v586 = vand.u32 %v584, 15
      %v587 = vsub.s32 0, %v586
      %v588 = vsel %vm582, %v587, %v586
      %vm589 = vcmp.lt.s32.totalorder %v389, 0
      %v590 = vsub.s32 0, %v389
      %v591 = vsel %vm589, %v590, %v389
      %v592 = vshrl.u32 %v591, 4
      %v593 = vand.u32 %v591, 15
      %v594 = vsub.s32 0, %v593
      %v595 = vsel %vm589, %v594, %v593
      %vm596 = vcmp.lt.s32.totalorder %v390, 0
      %v597 = vsub.s32 0, %v390
      %v598 = vsel %vm596, %v597, %v390
      %v599 = vshrl.u32 %v598, 4
      %v600 = vand.u32 %v598, 15
      %v601 = vsub.s32 0, %v600
      %v602 = vsel %vm596, %v601, %v600
      %vm603 = vcmp.lt.s32.totalorder %v391, 0
      %v604 = vsub.s32 0, %v391
      %v605 = vsel %vm603, %v604, %v391
      %v606 = vshrl.u32 %v605, 4
      %v607 = vand.u32 %v605, 15
      %v608 = vsub.s32 0, %v607
      %v609 = vsel %vm603, %v608, %v607
      %vm610 = vcmp.lt.s32.totalorder %v392, 0
      %v611 = vsub.s32 0, %v392
      %v612 = vsel %vm610, %v611, %v392
      %v613 = vshrl.u32 %v612, 4
      %v614 = vand.u32 %v612, 15
      %v615 = vsub.s32 0, %v614
      %v616 = vsel %vm610, %v615, %v614
      %vm617 = vcmp.ne.s32.totalorder %v399, 0
      %vm618 = vcmp.ne.s32.totalorder %v406, 0
      %vm619 = vcmp.ne.s32.totalorder %v413, 0
      %vm620 = vcmp.ne.s32.totalorder %v420, 0
      %vm621 = vcmp.ne.s32.totalorder %v427, 0
      %vm622 = vcmp.ne.s32.totalorder %v434, 0
      %vm623 = vcmp.ne.s32.totalorder %v441, 0
      %vm624 = vcmp.ne.s32.totalorder %v448, 0
      %vm625 = vcmp.ne.s32.totalorder %v455, 0
      %vm626 = vcmp.ne.s32.totalorder %v462, 0
      %vm627 = vcmp.ne.s32.totalorder %v469, 0
      %vm628 = vcmp.ne.s32.totalorder %v476, 0
      %vm629 = vcmp.ne.s32.totalorder %v483, 0
      %vm630 = vcmp.ne.s32.totalorder %v490, 0
      %vm631 = vcmp.ne.s32.totalorder %v497, 0
      %vm632 = vcmp.ne.s32.totalorder %v504, 0
      %vm633 = vcmp.ne.s32.totalorder %v511, 0
      %vm634 = vcmp.ne.s32.totalorder %v518, 0
      %vm635 = vcmp.ne.s32.totalorder %v525, 0
      %vm636 = vcmp.ne.s32.totalorder %v532, 0
      %vm637 = vcmp.ne.s32.totalorder %v539, 0
      %vm638 = vcmp.ne.s32.totalorder %v546, 0
      %vm639 = vcmp.ne.s32.totalorder %v553, 0
      %vm640 = vcmp.ne.s32.totalorder %v560, 0
      %vm641 = vcmp.ne.s32.totalorder %v567, 0
      %vm642 = vcmp.ne.s32.totalorder %v574, 0
      %vm643 = vcmp.ne.s32.totalorder %v581, 0
      %vm644 = vcmp.ne.s32.totalorder %v588, 0
      %vm645 = vcmp.ne.s32.totalorder %v595, 0
      %vm646 = vcmp.ne.s32.totalorder %v602, 0
      %vm647 = vcmp.ne.s32.totalorder %v609, 0
      %vm648 = vcmp.ne.s32.totalorder %v616, 0
      %vm649 = vcmp.lt.s32.totalorder %v399, 0
      %vm650 = vcmp.lt.s32.totalorder %v406, 0
      %vm651 = vcmp.lt.s32.totalorder %v413, 0
      %vm652 = vcmp.lt.s32.totalorder %v420, 0
      %vm653 = vcmp.lt.s32.totalorder %v427, 0
      %vm654 = vcmp.lt.s32.totalorder %v434, 0
      %vm655 = vcmp.lt.s32.totalorder %v441, 0
      %vm656 = vcmp.lt.s32.totalorder %v448, 0
      %vm657 = vcmp.lt.s32.totalorder %v455, 0
      %vm658 = vcmp.lt.s32.totalorder %v462, 0
      %vm659 = vcmp.lt.s32.totalorder %v469, 0
      %vm660 = vcmp.lt.s32.totalorder %v476, 0
      %vm661 = vcmp.lt.s32.totalorder %v483, 0
      %vm662 = vcmp.lt.s32.totalorder %v490, 0
      %vm663 = vcmp.lt.s32.totalorder %v497, 0
      %vm664 = vcmp.lt.s32.totalorder %v504, 0
      %vm665 = vcmp.lt.s32.totalorder %v511, 0
      %vm666 = vcmp.lt.s32.totalorder %v518, 0
      %vm667 = vcmp.lt.s32.totalorder %v525, 0
      %vm668 = vcmp.lt.s32.totalorder %v532, 0
      %vm669 = vcmp.lt.s32.totalorder %v539, 0
      %vm670 = vcmp.lt.s32.totalorder %v546, 0
      %vm671 = vcmp.lt.s32.totalorder %v553, 0
      %vm672 = vcmp.lt.s32.totalorder %v560, 0
      %vm673 = vcmp.lt.s32.totalorder %v567, 0
      %vm674 = vcmp.lt.s32.totalorder %v574, 0
      %vm675 = vcmp.lt.s32.totalorder %v581, 0
      %vm676 = vcmp.lt.s32.totalorder %v588, 0
      %vm677 = vcmp.lt.s32.totalorder %v595, 0
      %vm678 = vcmp.lt.s32.totalorder %v602, 0
      %vm679 = vcmp.lt.s32.totalorder %v609, 0
      %vm680 = vcmp.lt.s32.totalorder %v616, 0
      %vm681 = vmand %vm649, %vm617
      %vm682 = vmand %vm650, %vm618
      %vm683 = vmand %vm651, %vm619
      %vm684 = vmand %vm652, %vm620
      %vm685 = vmand %vm653, %vm621
      %vm686 = vmand %vm654, %vm622
      %vm687 = vmand %vm655, %vm623
      %vm688 = vmand %vm656, %vm624
      %vm689 = vmand %vm657, %vm625
      %vm690 = vmand %vm658, %vm626
      %vm691 = vmand %vm659, %vm627
      %vm692 = vmand %vm660, %vm628
      %vm693 = vmand %vm661, %vm629
      %vm694 = vmand %vm662, %vm630
      %vm695 = vmand %vm663, %vm631
      %vm696 = vmand %vm664, %vm632
      %vm697 = vmand %vm665, %vm633
      %vm698 = vmand %vm666, %vm634
      %vm699 = vmand %vm667, %vm635
      %vm700 = vmand %vm668, %vm636
      %vm701 = vmand %vm669, %vm637
      %vm702 = vmand %vm670, %vm638
      %vm703 = vmand %vm671, %vm639
      %vm704 = vmand %vm672, %vm640
      %vm705 = vmand %vm673, %vm641
      %vm706 = vmand %vm674, %vm642
      %vm707 = vmand %vm675, %vm643
      %vm708 = vmand %vm676, %vm644
      %vm709 = vmand %vm677, %vm645
      %vm710 = vmand %vm678, %vm646
      %vm711 = vmand %vm679, %vm647
      %vm712 = vmand %vm680, %vm648
      %v713 = vadd.s32 %v399, 16
      %v714 = vadd.s32 %v406, 16
      %v715 = vadd.s32 %v413, 16
      %v716 = vadd.s32 %v420, 16
      %v717 = vadd.s32 %v427, 16
      %v718 = vadd.s32 %v434, 16
      %v719 = vadd.s32 %v441, 16
      %v720 = vadd.s32 %v448, 16
      %v721 = vadd.s32 %v455, 16
      %v722 = vadd.s32 %v462, 16
      %v723 = vadd.s32 %v469, 16
      %v724 = vadd.s32 %v476, 16
      %v725 = vadd.s32 %v483, 16
      %v726 = vadd.s32 %v490, 16
      %v727 = vadd.s32 %v497, 16
      %v728 = vadd.s32 %v504, 16
      %v729 = vadd.s32 %v511, 16
      %v730 = vadd.s32 %v518, 16
      %v731 = vadd.s32 %v525, 16
      %v732 = vadd.s32 %v532, 16
      %v733 = vadd.s32 %v539, 16
      %v734 = vadd.s32 %v546, 16
      %v735 = vadd.s32 %v553, 16
      %v736 = vadd.s32 %v560, 16
      %v737 = vadd.s32 %v567, 16
      %v738 = vadd.s32 %v574, 16
      %v739 = vadd.s32 %v581, 16
      %v740 = vadd.s32 %v588, 16
      %v741 = vadd.s32 %v595, 16
      %v742 = vadd.s32 %v602, 16
      %v743 = vadd.s32 %v609, 16
      %v744 = vadd.s32 %v616, 16
      %v745 = vsel %vm681, %v713, %v399
      %v746 = vsel %vm682, %v714, %v406
      %v747 = vsel %vm683, %v715, %v413
      %v748 = vsel %vm684, %v716, %v420
      %v749 = vsel %vm685, %v717, %v427
      %v750 = vsel %vm686, %v718, %v434
      %v751 = vsel %vm687, %v719, %v441
      %v752 = vsel %vm688, %v720, %v448
      %v753 = vsel %vm689, %v721, %v455
      %v754 = vsel %vm690, %v722, %v462
      %v755 = vsel %vm691, %v723, %v469
      %v756 = vsel %vm692, %v724, %v476
      %v757 = vsel %vm693, %v725, %v483
      %v758 = vsel %vm694, %v726, %v490
      %v759 = vsel %vm695, %v727, %v497
      %v760 = vsel %vm696, %v728, %v504
      %v761 = vsel %vm697, %v729, %v511
      %v762 = vsel %vm698, %v730, %v518
      %v763 = vsel %vm699, %v731, %v525
      %v764 = vsel %vm700, %v732, %v532
      %v765 = vsel %vm701, %v733, %v539
      %v766 = vsel %vm702, %v734, %v546
      %v767 = vsel %vm703, %v735, %v553
      %v768 = vsel %vm704, %v736, %v560
      %v769 = vsel %vm705, %v737, %v567
      %v770 = vsel %vm706, %v738, %v574
      %v771 = vsel %vm707, %v739, %v581
      %v772 = vsel %vm708, %v740, %v588
      %v773 = vsel %vm709, %v741, %v595
      %v774 = vsel %vm710, %v742, %v602
      %v775 = vsel %vm711, %v743, %v609
      %v776 = vsel %vm712, %v744, %v616
      %vm777 = vcmp.ge.s32.totalorder %v745, 1
      %vm778 = vcmp.ge.s32.totalorder %v746, 1
      %vm779 = vcmp.ge.s32.totalorder %v747, 1
      %vm780 = vcmp.ge.s32.totalorder %v748, 1
      %vm781 = vcmp.ge.s32.totalorder %v749, 1
      %vm782 = vcmp.ge.s32.totalorder %v750, 1
      %vm783 = vcmp.ge.s32.totalorder %v751, 1
      %vm784 = vcmp.ge.s32.totalorder %v752, 1
      %vm785 = vcmp.ge.s32.totalorder %v753, 1
      %vm786 = vcmp.ge.s32.totalorder %v754, 1
      %vm787 = vcmp.ge.s32.totalorder %v755, 1
      %vm788 = vcmp.ge.s32.totalorder %v756, 1
      %vm789 = vcmp.ge.s32.totalorder %v757, 1
      %vm790 = vcmp.ge.s32.totalorder %v758, 1
      %vm791 = vcmp.ge.s32.totalorder %v759, 1
      %vm792 = vcmp.ge.s32.totalorder %v760, 1
      %vm793 = vcmp.ge.s32.totalorder %v761, 1
      %vm794 = vcmp.ge.s32.totalorder %v762, 1
      %vm795 = vcmp.ge.s32.totalorder %v763, 1
      %vm796 = vcmp.ge.s32.totalorder %v764, 1
      %vm797 = vcmp.ge.s32.totalorder %v765, 1
      %vm798 = vcmp.ge.s32.totalorder %v766, 1
      %vm799 = vcmp.ge.s32.totalorder %v767, 1
      %vm800 = vcmp.ge.s32.totalorder %v768, 1
      %vm801 = vcmp.ge.s32.totalorder %v769, 1
      %vm802 = vcmp.ge.s32.totalorder %v770, 1
      %vm803 = vcmp.ge.s32.totalorder %v771, 1
      %vm804 = vcmp.ge.s32.totalorder %v772, 1
      %vm805 = vcmp.ge.s32.totalorder %v773, 1
      %vm806 = vcmp.ge.s32.totalorder %v774, 1
      %vm807 = vcmp.ge.s32.totalorder %v775, 1
      %vm808 = vcmp.ge.s32.totalorder %v776, 1
      %vm809 = vcmp.le.s32.totalorder %v745, 14
      %vm810 = vcmp.le.s32.totalorder %v746, 14
      %vm811 = vcmp.le.s32.totalorder %v747, 14
      %vm812 = vcmp.le.s32.totalorder %v748, 14
      %vm813 = vcmp.le.s32.totalorder %v749, 14
      %vm814 = vcmp.le.s32.totalorder %v750, 14
      %vm815 = vcmp.le.s32.totalorder %v751, 14
      %vm816 = vcmp.le.s32.totalorder %v752, 14
      %vm817 = vcmp.le.s32.totalorder %v753, 14
      %vm818 = vcmp.le.s32.totalorder %v754, 14
      %vm819 = vcmp.le.s32.totalorder %v755, 14
      %vm820 = vcmp.le.s32.totalorder %v756, 14
      %vm821 = vcmp.le.s32.totalorder %v757, 14
      %vm822 = vcmp.le.s32.totalorder %v758, 14
      %vm823 = vcmp.le.s32.totalorder %v759, 14
      %vm824 = vcmp.le.s32.totalorder %v760, 14
      %vm825 = vcmp.le.s32.totalorder %v761, 14
      %vm826 = vcmp.le.s32.totalorder %v762, 14
      %vm827 = vcmp.le.s32.totalorder %v763, 14
      %vm828 = vcmp.le.s32.totalorder %v764, 14
      %vm829 = vcmp.le.s32.totalorder %v765, 14
      %vm830 = vcmp.le.s32.totalorder %v766, 14
      %vm831 = vcmp.le.s32.totalorder %v767, 14
      %vm832 = vcmp.le.s32.totalorder %v768, 14
      %vm833 = vcmp.le.s32.totalorder %v769, 14
      %vm834 = vcmp.le.s32.totalorder %v770, 14
      %vm835 = vcmp.le.s32.totalorder %v771, 14
      %vm836 = vcmp.le.s32.totalorder %v772, 14
      %vm837 = vcmp.le.s32.totalorder %v773, 14
      %vm838 = vcmp.le.s32.totalorder %v774, 14
      %vm839 = vcmp.le.s32.totalorder %v775, 14
      %vm840 = vcmp.le.s32.totalorder %v776, 14
      %v841 = vld [vmem:[%s354] sm:$0xff]
      %v842 = vld [vmem:[%s354 + $0x8] sm:$0xff]
      %v843 = vld [vmem:[%s354 + $0x10] sm:$0xff]
      %v844 = vld [vmem:[%s354 + $0x18] sm:$0xff]
      %v845 = vld [vmem:[%s354 + $0x20] sm:$0xff]
      %v846 = vld [vmem:[%s354 + $0x28] sm:$0xff]
      %v847 = vld [vmem:[%s354 + $0x30] sm:$0xff]
      %v848 = vld [vmem:[%s354 + $0x38] sm:$0xff]
      %v849 = vld [vmem:[%s354 + $0x40] sm:$0xff]
      %v850 = vld [vmem:[%s354 + $0x48] sm:$0xff]
      %v851 = vld [vmem:[%s354 + $0x50] sm:$0xff]
      %v852 = vld [vmem:[%s354 + $0x58] sm:$0xff]
      %v853 = vld [vmem:[%s354 + $0x60] sm:$0xff]
      %v854 = vld [vmem:[%s354 + $0x68] sm:$0xff]
      %v855 = vld [vmem:[%s354 + $0x70] sm:$0xff]
      %v856 = vld [vmem:[%s354 + $0x78] sm:$0xff]
      %v857 = vld [vmem:[%s354 + $0x80] sm:$0xff]
      %v858 = vld [vmem:[%s354 + $0x88] sm:$0xff]
      %v859 = vld [vmem:[%s354 + $0x90] sm:$0xff]
      %v860 = vld [vmem:[%s354 + $0x98] sm:$0xff]
      %v861 = vld [vmem:[%s354 + $0xa0] sm:$0xff]
      %v862 = vld [vmem:[%s354 + $0xa8] sm:$0xff]
      %v863 = vld [vmem:[%s354 + $0xb0] sm:$0xff]
      %v864 = vld [vmem:[%s354 + $0xb8] sm:$0xff]
      %v865 = vld [vmem:[%s354 + $0xc0] sm:$0xff]
      %v866 = vld [vmem:[%s354 + $0xc8] sm:$0xff]
      %v867 = vld [vmem:[%s354 + $0xd0] sm:$0xff]
      %v868 = vld [vmem:[%s354 + $0xd8] sm:$0xff]
      %v869 = vld [vmem:[%s354 + $0xe0] sm:$0xff]
      %v870 = vld [vmem:[%s354 + $0xe8] sm:$0xff]
      %v871 = vld [vmem:[%s354 + $0xf0] sm:$0xff]
      %v872 = vld [vmem:[%s354 + $0xf8] sm:$0xff]
      %v873 = vld [vmem:[%s1] sm:$0xf]
      %v874 = vld [vmem:[%s1 + $0x4] sm:$0xf]
      %v875 = vld [vmem:[%s1 + $0x8] sm:$0xf]
      %v876 = vld [vmem:[%s1 + $0xc] sm:$0xf]
      %v877 = vld [vmem:[%s1 + $0x10] sm:$0xf]
      %v878 = vld [vmem:[%s1 + $0x14] sm:$0xf]
      %v879 = vld [vmem:[%s1 + $0x18] sm:$0xf]
      %v880 = vld [vmem:[%s1 + $0x1c] sm:$0xf]
      %v881 = vld [vmem:[%s1 + $0x20] sm:$0xf]
      %v882 = vld [vmem:[%s3] sm:$0xff]
      %v883 = vld [vmem:[%s3 + $0x8] sm:$0xff]
      %v884 = vld [vmem:[%s3 + $0x10] sm:$0xff]
      %v885 = vld [vmem:[%s3 + $0x18] sm:$0xff]
      %v886 = vld [vmem:[%s3 + $0x20] sm:$0xff]
      %v887 = vld [vmem:[%s3 + $0x28] sm:$0xff]
      %v888 = vld [vmem:[%s3 + $0x30] sm:$0xff]
      %v889 = vld [vmem:[%s3 + $0x38] sm:$0xff]
      %v890 = vld [vmem:[%s3 + $0x40] sm:$0xff]
      %v891 = vld [vmem:[%s3 + $0x48] sm:$0xff]
      %v892 = vld [vmem:[%s3 + $0x50] sm:$0xff]
      %v893 = vld [vmem:[%s3 + $0x58] sm:$0xff]
      %v894 = vld [vmem:[%s3 + $0x60] sm:$0xff]
      %v895 = vld [vmem:[%s3 + $0x68] sm:$0xff]
      %v896 = vld [vmem:[%s3 + $0x70] sm:$0xff]
      %v897 = vld [vmem:[%s3 + $0x78] sm:$0xff]
      %v898 = vld [vmem:[%s3 + $0x80] sm:$0xff]
      %v899 = vld [vmem:[%s3 + $0x88] sm:$0xff]
      %v900 = vld [vmem:[%s4] sm:$0x1]
      %v901 = vld [vmem:[%s4 + $0x1] sm:$0x1]
      %v902 = vld [vmem:[%s6] sm:$0xff]
      %v903 = vld [vmem:[%s6 + $0x8] sm:$0xff]
      %v904 = vld [vmem:[%s6 + $0x10] sm:$0xff]
      %v905 = vld [vmem:[%s2] sm:$0x1]
      %v906 = vsel %vm777, 1, 0
      %v907 = vsel %vm778, 1, 0
      %v908 = vsel %vm779, 1, 0
      %v909 = vsel %vm780, 1, 0
      %v910 = vsel %vm781, 1, 0
      %v911 = vsel %vm782, 1, 0
      %v912 = vsel %vm783, 1, 0
      %v913 = vsel %vm784, 1, 0
      %v914 = vsel %vm785, 1, 0
      %v915 = vsel %vm786, 1, 0
      %v916 = vsel %vm787, 1, 0
      %v917 = vsel %vm788, 1, 0
      %v918 = vsel %vm789, 1, 0
      %v919 = vsel %vm790, 1, 0
      %v920 = vsel %vm791, 1, 0
      %v921 = vsel %vm792, 1, 0
      %v922 = vsel %vm793, 1, 0
      %v923 = vsel %vm794, 1, 0
      %v924 = vsel %vm795, 1, 0
      %v925 = vsel %vm796, 1, 0
      %v926 = vsel %vm797, 1, 0
      %v927 = vsel %vm798, 1, 0
      %v928 = vsel %vm799, 1, 0
      %v929 = vsel %vm800, 1, 0
      %v930 = vsel %vm801, 1, 0
      %v931 = vsel %vm802, 1, 0
      %v932 = vsel %vm803, 1, 0
      %v933 = vsel %vm804, 1, 0
      %v934 = vsel %vm805, 1, 0
      %v935 = vsel %vm806, 1, 0
      %v936 = vsel %vm807, 1, 0
      %v937 = vsel %vm808, 1, 0
      %vm938 = vcmp.eq.s32.totalorder %v906, 1
      %vm939 = vcmp.eq.s32.totalorder %v907, 1
      %vm940 = vcmp.eq.s32.totalorder %v908, 1
      %vm941 = vcmp.eq.s32.totalorder %v909, 1
      %vm942 = vcmp.eq.s32.totalorder %v910, 1
      %vm943 = vcmp.eq.s32.totalorder %v911, 1
      %vm944 = vcmp.eq.s32.totalorder %v912, 1
      %vm945 = vcmp.eq.s32.totalorder %v913, 1
      %vm946 = vcmp.eq.s32.totalorder %v914, 1
      %vm947 = vcmp.eq.s32.totalorder %v915, 1
      %vm948 = vcmp.eq.s32.totalorder %v916, 1
      %vm949 = vcmp.eq.s32.totalorder %v917, 1
      %vm950 = vcmp.eq.s32.totalorder %v918, 1
      %vm951 = vcmp.eq.s32.totalorder %v919, 1
      %vm952 = vcmp.eq.s32.totalorder %v920, 1
      %vm953 = vcmp.eq.s32.totalorder %v921, 1
      %vm954 = vcmp.eq.s32.totalorder %v922, 1
      %vm955 = vcmp.eq.s32.totalorder %v923, 1
      %vm956 = vcmp.eq.s32.totalorder %v924, 1
      %vm957 = vcmp.eq.s32.totalorder %v925, 1
      %vm958 = vcmp.eq.s32.totalorder %v926, 1
      %vm959 = vcmp.eq.s32.totalorder %v927, 1
      %vm960 = vcmp.eq.s32.totalorder %v928, 1
      %vm961 = vcmp.eq.s32.totalorder %v929, 1
      %vm962 = vcmp.eq.s32.totalorder %v930, 1
      %vm963 = vcmp.eq.s32.totalorder %v931, 1
      %vm964 = vcmp.eq.s32.totalorder %v932, 1
      %vm965 = vcmp.eq.s32.totalorder %v933, 1
      %vm966 = vcmp.eq.s32.totalorder %v934, 1
      %vm967 = vcmp.eq.s32.totalorder %v935, 1
      %vm968 = vcmp.eq.s32.totalorder %v936, 1
      %vm969 = vcmp.eq.s32.totalorder %v937, 1
      %vm1001 = vcmask 1040384
      %v1002 = vrot.slane 0.0, 7
      %v1003 = vsel %vm1001, %v1002, %v1002
      %v1004 = vrot.slane %v841, 7
      %v1005 = vsel %vm1001, %v1002, %v1004
      %v1006 = vrot.slane %v842, 7
      %v1007 = vsel %vm1001, %v1004, %v1006
      %v1008 = vrot.slane %v843, 7
      %v1009 = vsel %vm1001, %v1006, %v1008
      %v1010 = vrot.slane %v844, 7
      %v1011 = vsel %vm1001, %v1008, %v1010
      %v1012 = vrot.slane %v845, 7
      %v1013 = vsel %vm1001, %v1010, %v1012
      %v1014 = vrot.slane %v846, 7
      %v1015 = vsel %vm1001, %v1012, %v1014
      %v1016 = vrot.slane %v847, 7
      %v1017 = vsel %vm1001, %v1014, %v1016
      %v1018 = vrot.slane %v848, 7
      %v1019 = vsel %vm1001, %v1016, %v1018
      %v1020 = vrot.slane %v849, 7
      %v1021 = vsel %vm1001, %v1018, %v1020
      %v1022 = vrot.slane %v850, 7
      %v1023 = vsel %vm1001, %v1020, %v1022
      %v1024 = vrot.slane %v851, 7
      %v1025 = vsel %vm1001, %v1022, %v1024
      %v1026 = vrot.slane %v852, 7
      %v1027 = vsel %vm1001, %v1024, %v1026
      %v1028 = vrot.slane %v853, 7
      %v1029 = vsel %vm1001, %v1026, %v1028
      %v1030 = vrot.slane %v854, 7
      %v1031 = vsel %vm1001, %v1028, %v1030
      %v1032 = vrot.slane %v855, 7
      %v1033 = vsel %vm1001, %v1030, %v1032
      %v1034 = vrot.slane %v856, 7
      %v1035 = vsel %vm1001, %v1032, %v1034
      %v1036 = vrot.slane %v857, 7
      %v1037 = vsel %vm1001, %v1034, %v1036
      %v1038 = vrot.slane %v858, 7
      %v1039 = vsel %vm1001, %v1036, %v1038
      %v1040 = vrot.slane %v859, 7
      %v1041 = vsel %vm1001, %v1038, %v1040
      %v1042 = vrot.slane %v860, 7
      %v1043 = vsel %vm1001, %v1040, %v1042
      %v1044 = vrot.slane %v861, 7
      %v1045 = vsel %vm1001, %v1042, %v1044
      %v1046 = vrot.slane %v862, 7
      %v1047 = vsel %vm1001, %v1044, %v1046
      %v1048 = vrot.slane %v863, 7
      %v1049 = vsel %vm1001, %v1046, %v1048
      %v1050 = vrot.slane %v864, 7
      %v1051 = vsel %vm1001, %v1048, %v1050
      %v1052 = vrot.slane %v865, 7
      %v1053 = vsel %vm1001, %v1050, %v1052
      %v1054 = vrot.slane %v866, 7
      %v1055 = vsel %vm1001, %v1052, %v1054
      %v1056 = vrot.slane %v867, 7
      %v1057 = vsel %vm1001, %v1054, %v1056
      %v1058 = vrot.slane %v868, 7
      %v1059 = vsel %vm1001, %v1056, %v1058
      %v1060 = vrot.slane %v869, 7
      %v1061 = vsel %vm1001, %v1058, %v1060
      %v1062 = vrot.slane %v870, 7
      %v1063 = vsel %vm1001, %v1060, %v1062
      %v1095 = vsel %vm938, %v1003, 0.0
      %v1096 = vsel %vm939, %v1003, 0.0
      %v1097 = vsel %vm940, %v1005, 0.0
      %v1098 = vsel %vm941, %v1007, 0.0
      %v1099 = vsel %vm942, %v1009, 0.0
      %v1100 = vsel %vm943, %v1011, 0.0
      %v1101 = vsel %vm944, %v1013, 0.0
      %v1102 = vsel %vm945, %v1015, 0.0
      %v1103 = vsel %vm946, %v1017, 0.0
      %v1104 = vsel %vm947, %v1019, 0.0
      %v1105 = vsel %vm948, %v1021, 0.0
      %v1106 = vsel %vm949, %v1023, 0.0
      %v1107 = vsel %vm950, %v1025, 0.0
      %v1108 = vsel %vm951, %v1027, 0.0
      %v1109 = vsel %vm952, %v1029, 0.0
      %v1110 = vsel %vm953, %v1031, 0.0
      %v1111 = vsel %vm954, %v1033, 0.0
      %v1112 = vsel %vm955, %v1035, 0.0
      %v1113 = vsel %vm956, %v1037, 0.0
      %v1114 = vsel %vm957, %v1039, 0.0
      %v1115 = vsel %vm958, %v1041, 0.0
      %v1116 = vsel %vm959, %v1043, 0.0
      %v1117 = vsel %vm960, %v1045, 0.0
      %v1118 = vsel %vm961, %v1047, 0.0
      %v1119 = vsel %vm962, %v1049, 0.0
      %v1120 = vsel %vm963, %v1051, 0.0
      %v1121 = vsel %vm964, %v1053, 0.0
      %v1122 = vsel %vm965, %v1055, 0.0
      %v1123 = vsel %vm966, %v1057, 0.0
      %v1124 = vsel %vm967, %v1059, 0.0
      %v1125 = vsel %vm968, %v1061, 0.0
      %v1126 = vsel %vm969, %v1063, 0.0
      %vm1127 = vcmask 31744
      %v1128 = vsel %vm1127, 0.0, 0
      %v1130 = vsel %vm1127, %v841, 0
      %v1132 = vsel %vm1127, %v842, 0
      %v1134 = vsel %vm1127, %v843, 0
      %v1136 = vsel %vm1127, %v844, 0
      %v1138 = vsel %vm1127, %v845, 0
      %v1140 = vsel %vm1127, %v846, 0
      %v1142 = vsel %vm1127, %v847, 0
      %v1144 = vsel %vm1127, %v848, 0
      %v1146 = vsel %vm1127, %v849, 0
      %v1148 = vsel %vm1127, %v850, 0
      %v1150 = vsel %vm1127, %v851, 0
      %v1152 = vsel %vm1127, %v852, 0
      %v1154 = vsel %vm1127, %v853, 0
      %v1156 = vsel %vm1127, %v854, 0
      %v1158 = vsel %vm1127, %v855, 0
      %v1160 = vsel %vm1127, %v856, 0
      %v1162 = vsel %vm1127, %v857, 0
      %v1164 = vsel %vm1127, %v858, 0
      %v1166 = vsel %vm1127, %v859, 0
      %v1168 = vsel %vm1127, %v860, 0
      %v1170 = vsel %vm1127, %v861, 0
      %v1172 = vsel %vm1127, %v862, 0
      %v1174 = vsel %vm1127, %v863, 0
      %v1176 = vsel %vm1127, %v864, 0
      %v1178 = vsel %vm1127, %v865, 0
      %v1180 = vsel %vm1127, %v866, 0
      %v1182 = vsel %vm1127, %v867, 0
      %v1184 = vsel %vm1127, %v868, 0
      %v1186 = vsel %vm1127, %v869, 0
      %v1188 = vsel %vm1127, %v870, 0
      %vm1190 = vcmask 1043456
      %v1192 = vsel %vm1190, %v874, 0
      %1194 = vmatprep.subr.mxu0 0.0
      %1195 = vmatpush1.msra.mxu0 %v1192
      %1196 = vmatprep.subr.mxu0 0.0
      %1197 = vmatpush1.msra.mxu0 0.0
      %1198 = vmatprep.subr.mxu0 0.0
      %1199 = vmatpush1.msra.mxu0 0.0
      %1200 = vmatprep.subr.mxu0 0.0
      %1201 = vmatpush1.msra.mxu0 0.0
      %1202 = vmatprep.subr.mxu0 0.0
      %1203 = vmatpush1.msra.mxu0 0.0
      %1204 = vmatprep.subr.mxu0 0.0
      %1205 = vmatpush1.msra.mxu0 0.0
      %1206 = vmatprep.subr.mxu0 0.0
      %1207 = vmatpush1.msra.mxu0 0.0
      %1208 = vmatprep.subr.mxu0 0.0
      %1209 = vmatpush1.msra.mxu0 0.0
      %1210 = vmatprep.subr.mxu0 0.0
      %1211 = vmatpush1.msra.mxu0 0.0
      %1212 = vmatprep.subr.mxu0 0.0
      %1213 = vmatpush1.msra.mxu0 0.0
      %1214 = vmatprep.subr.mxu0 0.0
      %1215 = vmatpush1.msra.mxu0 0.0
      %1216 = vmatprep.subr.mxu0 0.0
      %1217 = vmatpush1.msra.mxu0 0.0
      %1218 = vmatprep.subr.mxu0 0.0
      %1219 = vmatpush1.msra.mxu0 0.0
      %1220 = vmatprep.subr.mxu0 0.0
      %1221 = vmatpush1.msra.mxu0 0.0
      %1222 = vmatprep.subr.mxu0 0.0
      %1223 = vmatpush1.msra.mxu0 0.0
      %1224 = vmatprep.subr.mxu0 0.0
      %1225 = vmatpush1.msra.mxu0 0.0
      %1226 = vmatprep.subr.mxu0 0.0
      %1227 = vmatpush1.msra.mxu0 0.0
      %1228 = vmatprep.subr.mxu0 0.0
      %1229 = vmatpush1.msra.mxu0 0.0
      %1230 = vmatprep.subr.mxu0 0.0
      %1231 = vmatpush1.msra.mxu0 0.0
      %1232 = vmatprep.subr.mxu0 0.0
      %1233 = vmatpush1.msra.mxu0 0.0
      %1234 = vmatprep.subr.mxu0 0.0
      %1235 = vmatpush1.msra.mxu0 0.0
      %1236 = vmatprep.subr.mxu0 0.0
      %1237 = vmatpush1.msra.mxu0 0.0
      %1238 = vmatprep.subr.mxu0 0.0
      %1239 = vmatpush1.msra.mxu0 0.0
      %1240 = vmatprep.subr.mxu0 0.0
      %1241 = vmatpush1.msra.mxu0 0.0
      %1242 = vmatprep.subr.mxu0 0.0
      %1243 = vmatpush1.msra.mxu0 0.0
      %1244 = vmatprep.subr.mxu0 0.0
      %1245 = vmatpush1.msra.mxu0 0.0
      %1246 = vmatprep.subr.mxu0 0.0
      %1247 = vmatpush1.msra.mxu0 0.0
      %1248 = vmatprep.subr.mxu0 0.0
      %1249 = vmatpush1.msra.mxu0 0.0
      %1250 = vmatprep.subr.mxu0 0.0
      %1251 = vmatpush1.msra.mxu0 0.0
      %1252 = vmatprep.subr.mxu0 0.0
      %1253 = vmatpush1.msra.mxu0 0.0
      %1254 = vmatprep.subr.mxu0 0.0
      %1255 = vmatpush1.msra.mxu0 0.0
      %1256 = vmatprep.subr.mxu0 0.0
      %1257 = vmatpush1.msra.mxu0 0.0
      %1258 = vmatprep.mubr.f32.mxu0 0.0
      %1259 = vmatmul.mubr.f32.gmra.mrb[0].mxu0 %v1128
      %v1260 = vpop.f32.mrb[0].mxu0
      %v1261 = vadd.f32 0.0, %v1260
      %v1262 = vpop.f32.mrb[0].mxu0
      %1263 = vmatprep.mubr.f32.mxu0 0.0
      %1264 = vmatmul.mubr.f32.gmra.mrb[0].mxu0 %v1128
      %v1265 = vpop.f32.mrb[0].mxu0
      %v1266 = vadd.f32 0.0, %v1265
      %v1267 = vpop.f32.mrb[0].mxu0
      %1268 = vmatprep.mubr.f32.mxu0 0.0
      %1269 = vmatmul.mubr.f32.gmra.mrb[0].mxu0 %v1130
      %v1270 = vpop.f32.mrb[0].mxu0
      %v1271 = vadd.f32 0.0, %v1270
      %v1272 = vpop.f32.mrb[0].mxu0
      %1273 = vmatprep.mubr.f32.mxu0 0.0
      %1274 = vmatmul.mubr.f32.gmra.mrb[0].mxu0 %v1132
      %v1275 = vpop.f32.mrb[0].mxu0
      %v1276 = vadd.f32 0.0, %v1275
      %v1277 = vpop.f32.mrb[0].mxu0
      %1278 = vmatprep.mubr.f32.mxu0 0.0
      %1279 = vmatmul.mubr.f32.gmra.mrb[0].mxu0 %v1134
      %v1280 = vpop.f32.mrb[0].mxu0
      %v1281 = vadd.f32 0.0, %v1280
      %v1282 = vpop.f32.mrb[0].mxu0
      %1283 = vmatprep.mubr.f32.mxu0 0.0
      %1284 = vmatmul.mubr.f32.gmra.mrb[0].mxu0 %v1136
      %v1285 = vpop.f32.mrb[0].mxu0
      %v1286 = vadd.f32 0.0, %v1285
      %v1287 = vpop.f32.mrb[0].mxu0
      %1288 = vmatprep.mubr.f32.mxu0 0.0
      %1289 = vmatmul.mubr.f32.gmra.mrb[0].mxu0 %v1138
      %v1290 = vpop.f32.mrb[0].mxu0
      %v1291 = vadd.f32 0.0, %v1290
      %v1292 = vpop.f32.mrb[0].mxu0
      %1293 = vmatprep.mubr.f32.mxu0 0.0
      %1294 = vmatmul.mubr.f32.gmra.mrb[0].mxu0 %v1140
      %v1295 = vpop.f32.mrb[0].mxu0
      %v1296 = vadd.f32 0.0, %v1295
      %v1297 = vpop.f32.mrb[0].mxu0
      %1298 = vmatprep.mubr.f32.mxu0 0.0
      %1299 = vmatmul.mubr.f32.gmra.mrb[0].mxu0 %v1142
      %v1300 = vpop.f32.mrb[0].mxu0
      %v1301 = vadd.f32 0.0, %v1300
      %v1302 = vpop.f32.mrb[0].mxu0
      %1303 = vmatprep.mubr.f32.mxu0 0.0
      %1304 = vmatmul.mubr.f32.gmra.mrb[0].mxu0 %v1144
      %v1305 = vpop.f32.mrb[0].mxu0
      %v1306 = vadd.f32 0.0, %v1305
      %v1307 = vpop.f32.mrb[0].mxu0
      %1308 = vmatprep.mubr.f32.mxu0 0.0
      %1309 = vmatmul.mubr.f32.gmra.mrb[0].mxu0 %v1146
      %v1310 = vpop.f32.mrb[0].mxu0
      %v1311 = vadd.f32 0.0, %v1310
      %v1312 = vpop.f32.mrb[0].mxu0
      %1313 = vmatprep.mubr.f32.mxu0 0.0
      %1314 = vmatmul.mubr.f32.gmra.mrb[0].mxu0 %v1148
      %v1315 = vpop.f32.mrb[0].mxu0
      %v1316 = vadd.f32 0.0, %v1315
      %v1317 = vpop.f32.mrb[0].mxu0
      %1318 = vmatprep.mubr.f32.mxu0 0.0
      %1319 = vmatmul.mubr.f32.gmra.mrb[0].mxu0 %v1150
      %v1320 = vpop.f32.mrb[0].mxu0
      %v1321 = vadd.f32 0.0, %v1320
      %v1322 = vpop.f32.mrb[0].mxu0
      %1323 = vmatprep.mubr.f32.mxu0 0.0
      %1324 = vmatmul.mubr.f32.gmra.mrb[0].mxu0 %v1152
      %v1325 = vpop.f32.mrb[0].mxu0
      %v1326 = vadd.f32 0.0, %v1325
      %v1327 = vpop.f32.mrb[0].mxu0
      %1328 = vmatprep.mubr.f32.mxu0 0.0
      %1329 = vmatmul.mubr.f32.gmra.mrb[0].mxu0 %v1154
      %v1330 = vpop.f32.mrb[0].mxu0
      %v1331 = vadd.f32 0.0, %v1330
      %v1332 = vpop.f32.mrb[0].mxu0
      %1333 = vmatprep.mubr.f32.mxu0 0.0
      %1334 = vmatmul.mubr.f32.gmra.mrb[0].mxu0 %v1156
      %v1335 = vpop.f32.mrb[0].mxu0
      %v1336 = vadd.f32 0.0, %v1335
      %v1337 = vpop.f32.mrb[0].mxu0
      %1338 = vmatprep.mubr.f32.mxu0 0.0
      %1339 = vmatmul.mubr.f32.gmra.mrb[0].mxu0 %v1158
      %v1340 = vpop.f32.mrb[0].mxu0
      %v1341 = vadd.f32 0.0, %v1340
      %v1342 = vpop.f32.mrb[0].mxu0
      %1343 = vmatprep.mubr.f32.mxu0 0.0
      %1344 = vmatmul.mubr.f32.gmra.mrb[0].mxu0 %v1160
      %v1345 = vpop.f32.mrb[0].mxu0
      %v1346 = vadd.f32 0.0, %v1345
      %v1347 = vpop.f32.mrb[0].mxu0
      %1348 = vmatprep.mubr.f32.mxu0 0.0
      %1349 = vmatmul.mubr.f32.gmra.mrb[0].mxu0 %v1162
      %v1350 = vpop.f32.mrb[0].mxu0
      %v1351 = vadd.f32 0.0, %v1350
      %v1352 = vpop.f32.mrb[0].mxu0
      %1353 = vmatprep.mubr.f32.mxu0 0.0
      %1354 = vmatmul.mubr.f32.gmra.mrb[0].mxu0 %v1164
      %v1355 = vpop.f32.mrb[0].mxu0
      %v1356 = vadd.f32 0.0, %v1355
      %v1357 = vpop.f32.mrb[0].mxu0
      %1358 = vmatprep.mubr.f32.mxu0 0.0
      %1359 = vmatmul.mubr.f32.gmra.mrb[0].mxu0 %v1166
      %v1360 = vpop.f32.mrb[0].mxu0
      %v1361 = vadd.f32 0.0, %v1360
      %v1362 = vpop.f32.mrb[0].mxu0
      %1363 = vmatprep.mubr.f32.mxu0 0.0
      %1364 = vmatmul.mubr.f32.gmra.mrb[0].mxu0 %v1168
      %v1365 = vpop.f32.mrb[0].mxu0
      %v1366 = vadd.f32 0.0, %v1365
      %v1367 = vpop.f32.mrb[0].mxu0
      %1368 = vmatprep.mubr.f32.mxu0 0.0
      %1369 = vmatmul.mubr.f32.gmra.mrb[0].mxu0 %v1170
      %v1370 = vpop.f32.mrb[0].mxu0
      %v1371 = vadd.f32 0.0, %v1370
      %v1372 = vpop.f32.mrb[0].mxu0
      %1373 = vmatprep.mubr.f32.mxu0 0.0
      %1374 = vmatmul.mubr.f32.gmra.mrb[0].mxu0 %v1172
      %v1375 = vpop.f32.mrb[0].mxu0
      %v1376 = vadd.f32 0.0, %v1375
      %v1377 = vpop.f32.mrb[0].mxu0
      %1378 = vmatprep.mubr.f32.mxu0 0.0
      %1379 = vmatmul.mubr.f32.gmra.mrb[0].mxu0 %v1174
      %v1380 = vpop.f32.mrb[0].mxu0
      %v1381 = vadd.f32 0.0, %v1380
      %v1382 = vpop.f32.mrb[0].mxu0
      %1383 = vmatprep.mubr.f32.mxu0 0.0
      %1384 = vmatmul.mubr.f32.gmra.mrb[0].mxu0 %v1176
      %v1385 = vpop.f32.mrb[0].mxu0
      %v1386 = vadd.f32 0.0, %v1385
      %v1387 = vpop.f32.mrb[0].mxu0
      %1388 = vmatprep.mubr.f32.mxu0 0.0
      %1389 = vmatmul.mubr.f32.gmra.mrb[0].mxu0 %v1178
      %v1390 = vpop.f32.mrb[0].mxu0
      %v1391 = vadd.f32 0.0, %v1390
      %v1392 = vpop.f32.mrb[0].mxu0
      %1393 = vmatprep.mubr.f32.mxu0 0.0
      %1394 = vmatmul.mubr.f32.gmra.mrb[0].mxu0 %v1180
      %v1395 = vpop.f32.mrb[0].mxu0
      %v1396 = vadd.f32 0.0, %v1395
      %v1397 = vpop.f32.mrb[0].mxu0
      %1398 = vmatprep.mubr.f32.mxu0 0.0
      %1399 = vmatmul.mubr.f32.gmra.mrb[0].mxu0 %v1182
      %v1400 = vpop.f32.mrb[0].mxu0
      %v1401 = vadd.f32 0.0, %v1400
      %v1402 = vpop.f32.mrb[0].mxu0
      %1403 = vmatprep.mubr.f32.mxu0 0.0
      %1404 = vmatmul.mubr.f32.gmra.mrb[0].mxu0 %v1184
      %v1405 = vpop.f32.mrb[0].mxu0
      %v1406 = vadd.f32 0.0, %v1405
      %v1407 = vpop.f32.mrb[0].mxu0
      %1408 = vmatprep.mubr.f32.mxu0 0.0
      %1409 = vmatmul.mubr.f32.gmra.mrb[0].mxu0 %v1186
      %v1410 = vpop.f32.mrb[0].mxu0
      %v1411 = vadd.f32 0.0, %v1410
      %v1412 = vpop.f32.mrb[0].mxu0
      %1413 = vmatprep.mubr.f32.mxu0 0.0
      %1414 = vmatmul.mubr.f32.gmra.mrb[0].mxu0 %v1188
      %v1415 = vpop.f32.mrb[0].mxu0
      %v1416 = vadd.f32 0.0, %v1415
      %v1417 = vpop.f32.mrb[0].mxu0
      %1418 = vdwg.mxu0
      %v1420 = vsel %vm1127, %v1095, 0
      %v1423 = vsel %vm1127, %v1096, 0
      %v1426 = vsel %vm1127, %v1097, 0
      %v1429 = vsel %vm1127, %v1098, 0
      %v1432 = vsel %vm1127, %v1099, 0
      %v1435 = vsel %vm1127, %v1100, 0
      %v1438 = vsel %vm1127, %v1101, 0
      %v1441 = vsel %vm1127, %v1102, 0
      %v1444 = vsel %vm1127, %v1103, 0
      %v1447 = vsel %vm1127, %v1104, 0
      %v1450 = vsel %vm1127, %v1105, 0
      %v1453 = vsel %vm1127, %v1106, 0
      %v1456 = vsel %vm1127, %v1107, 0
      %v1459 = vsel %vm1127, %v1108, 0
      %v1462 = vsel %vm1127, %v1109, 0
      %v1465 = vsel %vm1127, %v1110, 0
      %v1468 = vsel %vm1127, %v1111, 0
      %v1471 = vsel %vm1127, %v1112, 0
      %v1474 = vsel %vm1127, %v1113, 0
      %v1477 = vsel %vm1127, %v1114, 0
      %v1480 = vsel %vm1127, %v1115, 0
      %v1483 = vsel %vm1127, %v1116, 0
      %v1486 = vsel %vm1127, %v1117, 0
      %v1489 = vsel %vm1127, %v1118, 0
      %v1492 = vsel %vm1127, %v1119, 0
      %v1495 = vsel %vm1127, %v1120, 0
      %v1498 = vsel %vm1127, %v1121, 0
      %v1501 = vsel %vm1127, %v1122, 0
      %v1504 = vsel %vm1127, %v1123, 0
      %v1507 = vsel %vm1127, %v1124, 0
      %v1510 = vsel %vm1127, %v1125, 0
      %v1513 = vsel %vm1127, %v1126, 0
      %v1516 = vsel %vm1190, %v873, 0
      %1518 = vmatprep.subr.mxu0 0.0
      %1519 = vmatpush1.msra.mxu0 %v1516
      %1520 = vmatprep.subr.mxu0 0.0
      %1521 = vmatpush1.msra.mxu0 0.0
      %1522 = vmatprep.subr.mxu0 0.0
      %1523 = vmatpush1.msra.mxu0 0.0
      %1524 = vmatprep.subr.mxu0 0.0
      %1525 = vmatpush1.msra.mxu0 0.0
      %1526 = vmatprep.subr.mxu0 0.0
      %1527 = vmatpush1.msra.mxu0 0.0
      %1528 = vmatprep.subr.mxu0 0.0
      %1529 = vmatpush1.msra.mxu0 0.0
      %1530 = vmatprep.subr.mxu0 0.0
      %1531 = vmatpush1.msra.mxu0 0.0
      %1532 = vmatprep.subr.mxu0 0.0
      %1533 = vmatpush1.msra.mxu0 0.0
      %1534 = vmatprep.subr.mxu0 0.0
      %1535 = vmatpush1.msra.mxu0 0.0
      %1536 = vmatprep.subr.mxu0 0.0
      %1537 = vmatpush1.msra.mxu0 0.0
      %1538 = vmatprep.subr.mxu0 0.0
      %1539 = vmatpush1.msra.mxu0 0.0
      %1540 = vmatprep.subr.mxu0 0.0
      %1541 = vmatpush1.msra.mxu0 0.0
      %1542 = vmatprep.subr.mxu0 0.0
      %1543 = vmatpush1.msra.mxu0 0.0
      %1544 = vmatprep.subr.mxu0 0.0
      %1545 = vmatpush1.msra.mxu0 0.0
      %1546 = vmatprep.subr.mxu0 0.0
      %1547 = vmatpush1.msra.mxu0 0.0
      %1548 = vmatprep.subr.mxu0 0.0
      %1549 = vmatpush1.msra.mxu0 0.0
      %1550 = vmatprep.subr.mxu0 0.0
      %1551 = vmatpush1.msra.mxu0 0.0
      %1552 = vmatprep.subr.mxu0 0.0
      %1553 = vmatpush1.msra.mxu0 0.0
      %1554 = vmatprep.subr.mxu0 0.0
      %1555 = vmatpush1.msra.mxu0 0.0
      %1556 = vmatprep.subr.mxu0 0.0
      %1557 = vmatpush1.msra.mxu0 0.0
      %1558 = vmatprep.subr.mxu0 0.0
      %1559 = vmatpush1.msra.mxu0 0.0
      %1560 = vmatprep.subr.mxu0 0.0
      %1561 = vmatpush1.msra.mxu0 0.0
      %1562 = vmatprep.subr.mxu0 0.0
      %1563 = vmatpush1.msra.mxu0 0.0
      %1564 = vmatprep.subr.mxu0 0.0
      %1565 = vmatpush1.msra.mxu0 0.0
      %1566 = vmatprep.subr.mxu0 0.0
      %1567 = vmatpush1.msra.mxu0 0.0
      %1568 = vmatprep.subr.mxu0 0.0
      %1569 = vmatpush1.msra.mxu0 0.0
      %1570 = vmatprep.subr.mxu0 0.0
      %1571 = vmatpush1.msra.mxu0 0.0
      %1572 = vmatprep.subr.mxu0 0.0
      %1573 = vmatpush1.msra.mxu0 0.0
      %1574 = vmatprep.subr.mxu0 0.0
      %1575 = vmatpush1.msra.mxu0 0.0
      %1576 = vmatprep.subr.mxu0 0.0
      %1577 = vmatpush1.msra.mxu0 0.0
      %1578 = vmatprep.subr.mxu0 0.0
      %1579 = vmatpush1.msra.mxu0 0.0
      %1580 = vmatprep.subr.mxu0 0.0
      %1581 = vmatpush1.msra.mxu0 0.0
      %1582 = vmatprep.mubr.f32.mxu0 0.0
      %1583 = vmatmul.mubr.f32.gmra.mrb[0].mxu0 %v1420
      %v1584 = vpop.f32.mrb[0].mxu0
      %v1585 = vadd.f32 %v1261, %v1584
      %v1586 = vpop.f32.mrb[0].mxu0
      %1587 = vmatprep.mubr.f32.mxu0 0.0
      %1588 = vmatmul.mubr.f32.gmra.mrb[0].mxu0 %v1423
      %v1589 = vpop.f32.mrb[0].mxu0
      %v1590 = vadd.f32 %v1266, %v1589
      %v1591 = vpop.f32.mrb[0].mxu0
      %1592 = vmatprep.mubr.f32.mxu0 0.0
      %1593 = vmatmul.mubr.f32.gmra.mrb[0].mxu0 %v1426
      %v1594 = vpop.f32.mrb[0].mxu0
      %v1595 = vadd.f32 %v1271, %v1594
      %v1596 = vpop.f32.mrb[0].mxu0
      %1597 = vmatprep.mubr.f32.mxu0 0.0
      %1598 = vmatmul.mubr.f32.gmra.mrb[0].mxu0 %v1429
      %v1599 = vpop.f32.mrb[0].mxu0
      %v1600 = vadd.f32 %v1276, %v1599
      %v1601 = vpop.f32.mrb[0].mxu0
      %1602 = vmatprep.mubr.f32.mxu0 0.0
      %1603 = vmatmul.mubr.f32.gmra.mrb[0].mxu0 %v1432
      %v1604 = vpop.f32.mrb[0].mxu0
      %v1605 = vadd.f32 %v1281, %v1604
      %v1606 = vpop.f32.mrb[0].mxu0
      %1607 = vmatprep.mubr.f32.mxu0 0.0
      %1608 = vmatmul.mubr.f32.gmra.mrb[0].mxu0 %v1435
      %v1609 = vpop.f32.mrb[0].mxu0
      %v1610 = vadd.f32 %v1286, %v1609
      %v1611 = vpop.f32.mrb[0].mxu0
      %1612 = vmatprep.mubr.f32.mxu0 0.0
      %1613 = vmatmul.mubr.f32.gmra.mrb[0].mxu0 %v1438
      %v1614 = vpop.f32.mrb[0].mxu0
      %v1615 = vadd.f32 %v1291, %v1614
      %v1616 = vpop.f32.mrb[0].mxu0
      %1617 = vmatprep.mubr.f32.mxu0 0.0
      %1618 = vmatmul.mubr.f32.gmra.mrb[0].mxu0 %v1441
      %v1619 = vpop.f32.mrb[0].mxu0
      %v1620 = vadd.f32 %v1296, %v1619
      %v1621 = vpop.f32.mrb[0].mxu0
      %1622 = vmatprep.mubr.f32.mxu0 0.0
      %1623 = vmatmul.mubr.f32.gmra.mrb[0].mxu0 %v1444
      %v1624 = vpop.f32.mrb[0].mxu0
      %v1625 = vadd.f32 %v1301, %v1624
      %v1626 = vpop.f32.mrb[0].mxu0
      %1627 = vmatprep.mubr.f32.mxu0 0.0
      %1628 = vmatmul.mubr.f32.gmra.mrb[0].mxu0 %v1447
      %v1629 = vpop.f32.mrb[0].mxu0
      %v1630 = vadd.f32 %v1306, %v1629
      %v1631 = vpop.f32.mrb[0].mxu0
      %1632 = vmatprep.mubr.f32.mxu0 0.0
      %1633 = vmatmul.mubr.f32.gmra.mrb[0].mxu0 %v1450
      %v1634 = vpop.f32.mrb[0].mxu0
      %v1635 = vadd.f32 %v1311, %v1634
      %v1636 = vpop.f32.mrb[0].mxu0
      %1637 = vmatprep.mubr.f32.mxu0 0.0
      %1638 = vmatmul.mubr.f32.gmra.mrb[0].mxu0 %v1453
      %v1639 = vpop.f32.mrb[0].mxu0
      %v1640 = vadd.f32 %v1316, %v1639
      %v1641 = vpop.f32.mrb[0].mxu0
      %1642 = vmatprep.mubr.f32.mxu0 0.0
      %1643 = vmatmul.mubr.f32.gmra.mrb[0].mxu0 %v1456
      %v1644 = vpop.f32.mrb[0].mxu0
      %v1645 = vadd.f32 %v1321, %v1644
      %v1646 = vpop.f32.mrb[0].mxu0
      %1647 = vmatprep.mubr.f32.mxu0 0.0
      %1648 = vmatmul.mubr.f32.gmra.mrb[0].mxu0 %v1459
      %v1649 = vpop.f32.mrb[0].mxu0
      %v1650 = vadd.f32 %v1326, %v1649
      %v1651 = vpop.f32.mrb[0].mxu0
      %1652 = vmatprep.mubr.f32.mxu0 0.0
      %1653 = vmatmul.mubr.f32.gmra.mrb[0].mxu0 %v1462
      %v1654 = vpop.f32.mrb[0].mxu0
      %v1655 = vadd.f32 %v1331, %v1654
      %v1656 = vpop.f32.mrb[0].mxu0
      %1657 = vmatprep.mubr.f32.mxu0 0.0
      %1658 = vmatmul.mubr.f32.gmra.mrb[0].mxu0 %v1465
      %v1659 = vpop.f32.mrb[0].mxu0
      %v1660 = vadd.f32 %v1336, %v1659
      %v1661 = vpop.f32.mrb[0].mxu0
      %1662 = vmatprep.mubr.f32.mxu0 0.0
      %1663 = vmatmul.mubr.f32.gmra.mrb[0].mxu0 %v1468
      %v1664 = vpop.f32.mrb[0].mxu0
      %v1665 = vadd.f32 %v1341, %v1664
      %v1666 = vpop.f32.mrb[0].mxu0
      %1667 = vmatprep.mubr.f32.mxu0 0.0
      %1668 = vmatmul.mubr.f32.gmra.mrb[0].mxu0 %v1471
      %v1669 = vpop.f32.mrb[0].mxu0
      %v1670 = vadd.f32 %v1346, %v1669
      %v1671 = vpop.f32.mrb[0].mxu0
      %1672 = vmatprep.mubr.f32.mxu0 0.0
      %1673 = vmatmul.mubr.f32.gmra.mrb[0].mxu0 %v1474
      %v1674 = vpop.f32.mrb[0].mxu0
      %v1675 = vadd.f32 %v1351, %v1674
      %v1676 = vpop.f32.mrb[0].mxu0
      %1677 = vmatprep.mubr.f32.mxu0 0.0
      %1678 = vmatmul.mubr.f32.gmra.mrb[0].mxu0 %v1477
      %v1679 = vpop.f32.mrb[0].mxu0
      %v1680 = vadd.f32 %v1356, %v1679
      %v1681 = vpop.f32.mrb[0].mxu0
      %1682 = vmatprep.mubr.f32.mxu0 0.0
      %1683 = vmatmul.mubr.f32.gmra.mrb[0].mxu0 %v1480
      %v1684 = vpop.f32.mrb[0].mxu0
      %v1685 = vadd.f32 %v1361, %v1684
      %v1686 = vpop.f32.mrb[0].mxu0
      %1687 = vmatprep.mubr.f32.mxu0 0.0
      %1688 = vmatmul.mubr.f32.gmra.mrb[0].mxu0 %v1483
      %v1689 = vpop.f32.mrb[0].mxu0
      %v1690 = vadd.f32 %v1366, %v1689
      %v1691 = vpop.f32.mrb[0].mxu0
      %1692 = vmatprep.mubr.f32.mxu0 0.0
      %1693 = vmatmul.mubr.f32.gmra.mrb[0].mxu0 %v1486
      %v1694 = vpop.f32.mrb[0].mxu0
      %v1695 = vadd.f32 %v1371, %v1694
      %v1696 = vpop.f32.mrb[0].mxu0
      %1697 = vmatprep.mubr.f32.mxu0 0.0
      %1698 = vmatmul.mubr.f32.gmra.mrb[0].mxu0 %v1489
      %v1699 = vpop.f32.mrb[0].mxu0
      %v1700 = vadd.f32 %v1376, %v1699
      %v1701 = vpop.f32.mrb[0].mxu0
      %1702 = vmatprep.mubr.f32.mxu0 0.0
      %1703 = vmatmul.mubr.f32.gmra.mrb[0].mxu0 %v1492
      %v1704 = vpop.f32.mrb[0].mxu0
      %v1705 = vadd.f32 %v1381, %v1704
      %v1706 = vpop.f32.mrb[0].mxu0
      %1707 = vmatprep.mubr.f32.mxu0 0.0
      %1708 = vmatmul.mubr.f32.gmra.mrb[0].mxu0 %v1495
      %v1709 = vpop.f32.mrb[0].mxu0
      %v1710 = vadd.f32 %v1386, %v1709
      %v1711 = vpop.f32.mrb[0].mxu0
      %1712 = vmatprep.mubr.f32.mxu0 0.0
      %1713 = vmatmul.mubr.f32.gmra.mrb[0].mxu0 %v1498
      %v1714 = vpop.f32.mrb[0].mxu0
      %v1715 = vadd.f32 %v1391, %v1714
      %v1716 = vpop.f32.mrb[0].mxu0
      %1717 = vmatprep.mubr.f32.mxu0 0.0
      %1718 = vmatmul.mubr.f32.gmra.mrb[0].mxu0 %v1501
      %v1719 = vpop.f32.mrb[0].mxu0
      %v1720 = vadd.f32 %v1396, %v1719
      %v1721 = vpop.f32.mrb[0].mxu0
      %1722 = vmatprep.mubr.f32.mxu0 0.0
      %1723 = vmatmul.mubr.f32.gmra.mrb[0].mxu0 %v1504
      %v1724 = vpop.f32.mrb[0].mxu0
      %v1725 = vadd.f32 %v1401, %v1724
      %v1726 = vpop.f32.mrb[0].mxu0
      %1727 = vmatprep.mubr.f32.mxu0 0.0
      %1728 = vmatmul.mubr.f32.gmra.mrb[0].mxu0 %v1507
      %v1729 = vpop.f32.mrb[0].mxu0
      %v1730 = vadd.f32 %v1406, %v1729
      %v1731 = vpop.f32.mrb[0].mxu0
      %1732 = vmatprep.mubr.f32.mxu0 0.0
      %1733 = vmatmul.mubr.f32.gmra.mrb[0].mxu0 %v1510
      %v1734 = vpop.f32.mrb[0].mxu0
      %v1735 = vadd.f32 %v1411, %v1734
      %v1736 = vpop.f32.mrb[0].mxu0
      %1737 = vmatprep.mubr.f32.mxu0 0.0
      %1738 = vmatmul.mubr.f32.gmra.mrb[0].mxu0 %v1513
      %v1739 = vpop.f32.mrb[0].mxu0
      %v1740 = vadd.f32 %v1416, %v1739
      %v1741 = vpop.f32.mrb[0].mxu0
      %1742 = vdwg.mxu0
      %v1743 = vsel %vm809, 1, 0
      %v1744 = vsel %vm810, 1, 0
      %v1745 = vsel %vm811, 1, 0
      %v1746 = vsel %vm812, 1, 0
      %v1747 = vsel %vm813, 1, 0
      %v1748 = vsel %vm814, 1, 0
      %v1749 = vsel %vm815, 1, 0
      %v1750 = vsel %vm816, 1, 0
      %v1751 = vsel %vm817, 1, 0
      %v1752 = vsel %vm818, 1, 0
      %v1753 = vsel %vm819, 1, 0
      %v1754 = vsel %vm820, 1, 0
      %v1755 = vsel %vm821, 1, 0
      %v1756 = vsel %vm822, 1, 0
      %v1757 = vsel %vm823, 1, 0
      %v1758 = vsel %vm824, 1, 0
      %v1759 = vsel %vm825, 1, 0
      %v1760 = vsel %vm826, 1, 0
      %v1761 = vsel %vm827, 1, 0
      %v1762 = vsel %vm828, 1, 0
      %v1763 = vsel %vm829, 1, 0
      %v1764 = vsel %vm830, 1, 0
      %v1765 = vsel %vm831, 1, 0
      %v1766 = vsel %vm832, 1, 0
      %v1767 = vsel %vm833, 1, 0
      %v1768 = vsel %vm834, 1, 0
      %v1769 = vsel %vm835, 1, 0
      %v1770 = vsel %vm836, 1, 0
      %v1771 = vsel %vm837, 1, 0
      %v1772 = vsel %vm838, 1, 0
      %v1773 = vsel %vm839, 1, 0
      %v1774 = vsel %vm840, 1, 0
      %vm1775 = vcmp.eq.s32.totalorder %v1743, 1
      %vm1776 = vcmp.eq.s32.totalorder %v1744, 1
      %vm1777 = vcmp.eq.s32.totalorder %v1745, 1
      %vm1778 = vcmp.eq.s32.totalorder %v1746, 1
      %vm1779 = vcmp.eq.s32.totalorder %v1747, 1
      %vm1780 = vcmp.eq.s32.totalorder %v1748, 1
      %vm1781 = vcmp.eq.s32.totalorder %v1749, 1
      %vm1782 = vcmp.eq.s32.totalorder %v1750, 1
      %vm1783 = vcmp.eq.s32.totalorder %v1751, 1
      %vm1784 = vcmp.eq.s32.totalorder %v1752, 1
      %vm1785 = vcmp.eq.s32.totalorder %v1753, 1
      %vm1786 = vcmp.eq.s32.totalorder %v1754, 1
      %vm1787 = vcmp.eq.s32.totalorder %v1755, 1
      %vm1788 = vcmp.eq.s32.totalorder %v1756, 1
      %vm1789 = vcmp.eq.s32.totalorder %v1757, 1
      %vm1790 = vcmp.eq.s32.totalorder %v1758, 1
      %vm1791 = vcmp.eq.s32.totalorder %v1759, 1
      %vm1792 = vcmp.eq.s32.totalorder %v1760, 1
      %vm1793 = vcmp.eq.s32.totalorder %v1761, 1
      %vm1794 = vcmp.eq.s32.totalorder %v1762, 1
      %vm1795 = vcmp.eq.s32.totalorder %v1763, 1
      %vm1796 = vcmp.eq.s32.totalorder %v1764, 1
      %vm1797 = vcmp.eq.s32.totalorder %v1765, 1
      %vm1798 = vcmp.eq.s32.totalorder %v1766, 1
      %vm1799 = vcmp.eq.s32.totalorder %v1767, 1
      %vm1800 = vcmp.eq.s32.totalorder %v1768, 1
      %vm1801 = vcmp.eq.s32.totalorder %v1769, 1
      %vm1802 = vcmp.eq.s32.totalorder %v1770, 1
      %vm1803 = vcmp.eq.s32.totalorder %v1771, 1
      %vm1804 = vcmp.eq.s32.totalorder %v1772, 1
      %vm1805 = vcmp.eq.s32.totalorder %v1773, 1
      %vm1806 = vcmp.eq.s32.totalorder %v1774, 1
      %vm1808 = vcmask 1046528
      %v1809 = vrot.slane 0.0, 1
      %v1810 = vsel %vm1808, %v1809, %v1809
      %v1811 = vrot.slane %v841, 1
      %v1812 = vsel %vm1808, %v1809, %v1811
      %v1813 = vrot.slane %v842, 1
      %v1814 = vsel %vm1808, %v1811, %v1813
      %v1815 = vrot.slane %v843, 1
      %v1816 = vsel %vm1808, %v1813, %v1815
      %v1817 = vrot.slane %v844, 1
      %v1818 = vsel %vm1808, %v1815, %v1817
      %v1819 = vrot.slane %v845, 1
      %v1820 = vsel %vm1808, %v1817, %v1819
      %v1821 = vrot.slane %v846, 1
      %v1822 = vsel %vm1808, %v1819, %v1821
      %v1823 = vrot.slane %v847, 1
      %v1824 = vsel %vm1808, %v1821, %v1823
      %v1825 = vrot.slane %v848, 1
      %v1826 = vsel %vm1808, %v1823, %v1825
      %v1827 = vrot.slane %v849, 1
      %v1828 = vsel %vm1808, %v1825, %v1827
      %v1829 = vrot.slane %v850, 1
      %v1830 = vsel %vm1808, %v1827, %v1829
      %v1831 = vrot.slane %v851, 1
      %v1832 = vsel %vm1808, %v1829, %v1831
      %v1833 = vrot.slane %v852, 1
      %v1834 = vsel %vm1808, %v1831, %v1833
      %v1835 = vrot.slane %v853, 1
      %v1836 = vsel %vm1808, %v1833, %v1835
      %v1837 = vrot.slane %v854, 1
      %v1838 = vsel %vm1808, %v1835, %v1837
      %v1839 = vrot.slane %v855, 1
      %v1840 = vsel %vm1808, %v1837, %v1839
      %v1841 = vrot.slane %v856, 1
      %v1842 = vsel %vm1808, %v1839, %v1841
      %v1843 = vrot.slane %v857, 1
      %v1844 = vsel %vm1808, %v1841, %v1843
      %v1845 = vrot.slane %v858, 1
      %v1846 = vsel %vm1808, %v1843, %v1845
      %v1847 = vrot.slane %v859, 1
      %v1848 = vsel %vm1808, %v1845, %v1847
      %v1849 = vrot.slane %v860, 1
      %v1850 = vsel %vm1808, %v1847, %v1849
      %v1851 = vrot.slane %v861, 1
      %v1852 = vsel %vm1808, %v1849, %v1851
      %v1853 = vrot.slane %v862, 1
      %v1854 = vsel %vm1808, %v1851, %v1853
      %v1855 = vrot.slane %v863, 1
      %v1856 = vsel %vm1808, %v1853, %v1855
      %v1857 = vrot.slane %v864, 1
      %v1858 = vsel %vm1808, %v1855, %v1857
      %v1859 = vrot.slane %v865, 1
      %v1860 = vsel %vm1808, %v1857, %v1859
      %v1861 = vrot.slane %v866, 1
      %v1862 = vsel %vm1808, %v1859, %v1861
      %v1863 = vrot.slane %v867, 1
      %v1864 = vsel %vm1808, %v1861, %v1863
      %v1865 = vrot.slane %v868, 1
      %v1866 = vsel %vm1808, %v1863, %v1865
      %v1867 = vrot.slane %v869, 1
      %v1868 = vsel %vm1808, %v1865, %v1867
      %v1869 = vrot.slane %v870, 1
      %v1870 = vsel %vm1808, %v1867, %v1869
      %v1871 = vrot.slane %v871, 1
      %v1872 = vsel %vm1808, %v1869, %v1871
      %v1905 = vsel %vm1775, %v1810, 0.0
      %v1906 = vsel %vm1776, %v1812, 0.0
      %v1907 = vsel %vm1777, %v1814, 0.0
      %v1908 = vsel %vm1778, %v1816, 0.0
      %v1909 = vsel %vm1779, %v1818, 0.0
      %v1910 = vsel %vm1780, %v1820, 0.0
      %v1911 = vsel %vm1781, %v1822, 0.0
      %v1912 = vsel %vm1782, %v1824, 0.0
      %v1913 = vsel %vm1783, %v1826, 0.0
      %v1914 = vsel %vm1784, %v1828, 0.0
      %v1915 = vsel %vm1785, %v1830, 0.0
      %v1916 = vsel %vm1786, %v1832, 0.0
      %v1917 = vsel %vm1787, %v1834, 0.0
      %v1918 = vsel %vm1788, %v1836, 0.0
      %v1919 = vsel %vm1789, %v1838, 0.0
      %v1920 = vsel %vm1790, %v1840, 0.0
      %v1921 = vsel %vm1791, %v1842, 0.0
      %v1922 = vsel %vm1792, %v1844, 0.0
      %v1923 = vsel %vm1793, %v1846, 0.0
      %v1924 = vsel %vm1794, %v1848, 0.0
      %v1925 = vsel %vm1795, %v1850, 0.0
      %v1926 = vsel %vm1796, %v1852, 0.0
      %v1927 = vsel %vm1797, %v1854, 0.0
      %v1928 = vsel %vm1798, %v1856, 0.0
      %v1929 = vsel %vm1799, %v1858, 0.0
      %v1930 = vsel %vm1800, %v1860, 0.0
      %v1931 = vsel %vm1801, %v1862, 0.0
      %v1932 = vsel %vm1802, %v1864, 0.0
      %v1933 = vsel %vm1803, %v1866, 0.0
      %v1934 = vsel %vm1804, %v1868, 0.0
      %v1935 = vsel %vm1805, %v1870, 0.0
      %v1936 = vsel %vm1806, %v1872, 0.0
      %v1938 = vsel %vm1127, %v1905, 0
      %v1941 = vsel %vm1127, %v1906, 0
      %v1944 = vsel %vm1127, %v1907, 0
      %v1947 = vsel %vm1127, %v1908, 0
      %v1950 = vsel %vm1127, %v1909, 0
      %v1953 = vsel %vm1127, %v1910, 0
      %v1956 = vsel %vm1127, %v1911, 0
      %v1959 = vsel %vm1127, %v1912, 0
      %v1962 = vsel %vm1127, %v1913, 0
      %v1965 = vsel %vm1127, %v1914, 0
      %v1968 = vsel %vm1127, %v1915, 0
      %v1971 = vsel %vm1127, %v1916, 0
      %v1974 = vsel %vm1127, %v1917, 0
      %v1977 = vsel %vm1127, %v1918, 0
      %v1980 = vsel %vm1127, %v1919, 0
      %v1983 = vsel %vm1127, %v1920, 0
      %v1986 = vsel %vm1127, %v1921, 0
      %v1989 = vsel %vm1127, %v1922, 0
      %v1992 = vsel %vm1127, %v1923, 0
      %v1995 = vsel %vm1127, %v1924, 0
      %v1998 = vsel %vm1127, %v1925, 0
      %v2001 = vsel %vm1127, %v1926, 0
      %v2004 = vsel %vm1127, %v1927, 0
      %v2007 = vsel %vm1127, %v1928, 0
      %v2010 = vsel %vm1127, %v1929, 0
      %v2013 = vsel %vm1127, %v1930, 0
      %v2016 = vsel %vm1127, %v1931, 0
      %v2019 = vsel %vm1127, %v1932, 0
      %v2022 = vsel %vm1127, %v1933, 0
      %v2025 = vsel %vm1127, %v1934, 0
      %v2028 = vsel %vm1127, %v1935, 0
      %v2031 = vsel %vm1127, %v1936, 0
      %v2034 = vsel %vm1190, %v875, 0
      %2036 = vmatprep.subr.mxu0 0.0
      %2037 = vmatpush1.msra.mxu0 %v2034
      %2038 = vmatprep.subr.mxu0 0.0
      %2039 = vmatpush1.msra.mxu0 0.0
      %2040 = vmatprep.subr.mxu0 0.0
      %2041 = vmatpush1.msra.mxu0 0.0
      %2042 = vmatprep.subr.mxu0 0.0
      %2043 = vmatpush1.msra.mxu0 0.0
      %2044 = vmatprep.subr.mxu0 0.0
      %2045 = vmatpush1.msra.mxu0 0.0
      %2046 = vmatprep.subr.mxu0 0.0
      %2047 = vmatpush1.msra.mxu0 0.0
      %2048 = vmatprep.subr.mxu0 0.0
      %2049 = vmatpush1.msra.mxu0 0.0
      %2050 = vmatprep.subr.mxu0 0.0
      %2051 = vmatpush1.msra.mxu0 0.0
      %2052 = vmatprep.subr.mxu0 0.0
      %2053 = vmatpush1.msra.mxu0 0.0
      %2054 = vmatprep.subr.mxu0 0.0
      %2055 = vmatpush1.msra.mxu0 0.0
      %2056 = vmatprep.subr.mxu0 0.0
      %2057 = vmatpush1.msra.mxu0 0.0
      %2058 = vmatprep.subr.mxu0 0.0
      %2059 = vmatpush1.msra.mxu0 0.0
      %2060 = vmatprep.subr.mxu0 0.0
      %2061 = vmatpush1.msra.mxu0 0.0
      %2062 = vmatprep.subr.mxu0 0.0
      %2063 = vmatpush1.msra.mxu0 0.0
      %2064 = vmatprep.subr.mxu0 0.0
      %2065 = vmatpush1.msra.mxu0 0.0
      %2066 = vmatprep.subr.mxu0 0.0
      %2067 = vmatpush1.msra.mxu0 0.0
      %2068 = vmatprep.subr.mxu0 0.0
      %2069 = vmatpush1.msra.mxu0 0.0
      %2070 = vmatprep.subr.mxu0 0.0
      %2071 = vmatpush1.msra.mxu0 0.0
      %2072 = vmatprep.subr.mxu0 0.0
      %2073 = vmatpush1.msra.mxu0 0.0
      %2074 = vmatprep.subr.mxu0 0.0
      %2075 = vmatpush1.msra.mxu0 0.0
      %2076 = vmatprep.subr.mxu0 0.0
      %2077 = vmatpush1.msra.mxu0 0.0
      %2078 = vmatprep.subr.mxu0 0.0
      %2079 = vmatpush1.msra.mxu0 0.0
      %2080 = vmatprep.subr.mxu0 0.0
      %2081 = vmatpush1.msra.mxu0 0.0
      %2082 = vmatprep.subr.mxu0 0.0
      %2083 = vmatpush1.msra.mxu0 0.0
      %2084 = vmatprep.subr.mxu0 0.0
      %2085 = vmatpush1.msra.mxu0 0.0
      %2086 = vmatprep.subr.mxu0 0.0
      %2087 = vmatpush1.msra.mxu0 0.0
      %2088 = vmatprep.subr.mxu0 0.0
      %2089 = vmatpush1.msra.mxu0 0.0
      %2090 = vmatprep.subr.mxu0 0.0
      %2091 = vmatpush1.msra.mxu0 0.0
      %2092 = vmatprep.subr.mxu0 0.0
      %2093 = vmatpush1.msra.mxu0 0.0
      %2094 = vmatprep.subr.mxu0 0.0
      %2095 = vmatpush1.msra.mxu0 0.0
      %2096 = vmatprep.subr.mxu0 0.0
      %2097 = vmatpush1.msra.mxu0 0.0
      %2098 = vmatprep.subr.mxu0 0.0
      %2099 = vmatpush1.msra.mxu0 0.0
      %2100 = vmatprep.mubr.f32.mxu0 0.0
      %2101 = vmatmul.mubr.f32.gmra.mrb[0].mxu0 %v1938
      %v2102 = vpop.f32.mrb[0].mxu0
      %v2103 = vadd.f32 0.0, %v2102
      %v2104 = vpop.f32.mrb[0].mxu0
      %2105 = vmatprep.mubr.f32.mxu0 0.0
      %2106 = vmatmul.mubr.f32.gmra.mrb[0].mxu0 %v1941
      %v2107 = vpop.f32.mrb[0].mxu0
      %v2108 = vadd.f32 0.0, %v2107
      %v2109 = vpop.f32.mrb[0].mxu0
      %2110 = vmatprep.mubr.f32.mxu0 0.0
      %2111 = vmatmul.mubr.f32.gmra.mrb[0].mxu0 %v1944
      %v2112 = vpop.f32.mrb[0].mxu0
      %v2113 = vadd.f32 0.0, %v2112
      %v2114 = vpop.f32.mrb[0].mxu0
      %2115 = vmatprep.mubr.f32.mxu0 0.0
      %2116 = vmatmul.mubr.f32.gmra.mrb[0].mxu0 %v1947
      %v2117 = vpop.f32.mrb[0].mxu0
      %v2118 = vadd.f32 0.0, %v2117
      %v2119 = vpop.f32.mrb[0].mxu0
      %2120 = vmatprep.mubr.f32.mxu0 0.0
      %2121 = vmatmul.mubr.f32.gmra.mrb[0].mxu0 %v1950
      %v2122 = vpop.f32.mrb[0].mxu0
      %v2123 = vadd.f32 0.0, %v2122
      %v2124 = vpop.f32.mrb[0].mxu0
      %2125 = vmatprep.mubr.f32.mxu0 0.0
      %2126 = vmatmul.mubr.f32.gmra.mrb[0].mxu0 %v1953
      %v2127 = vpop.f32.mrb[0].mxu0
      %v2128 = vadd.f32 0.0, %v2127
      %v2129 = vpop.f32.mrb[0].mxu0
      %2130 = vmatprep.mubr.f32.mxu0 0.0
      %2131 = vmatmul.mubr.f32.gmra.mrb[0].mxu0 %v1956
      %v2132 = vpop.f32.mrb[0].mxu0
      %v2133 = vadd.f32 0.0, %v2132
      %v2134 = vpop.f32.mrb[0].mxu0
      %2135 = vmatprep.mubr.f32.mxu0 0.0
      %2136 = vmatmul.mubr.f32.gmra.mrb[0].mxu0 %v1959
      %v2137 = vpop.f32.mrb[0].mxu0
      %v2138 = vadd.f32 0.0, %v2137
      %v2139 = vpop.f32.mrb[0].mxu0
      %2140 = vmatprep.mubr.f32.mxu0 0.0
      %2141 = vmatmul.mubr.f32.gmra.mrb[0].mxu0 %v1962
      %v2142 = vpop.f32.mrb[0].mxu0
      %v2143 = vadd.f32 0.0, %v2142
      %v2144 = vpop.f32.mrb[0].mxu0
      %2145 = vmatprep.mubr.f32.mxu0 0.0
      %2146 = vmatmul.mubr.f32.gmra.mrb[0].mxu0 %v1965
      %v2147 = vpop.f32.mrb[0].mxu0
      %v2148 = vadd.f32 0.0, %v2147
      %v2149 = vpop.f32.mrb[0].mxu0
      %2150 = vmatprep.mubr.f32.mxu0 0.0
      %2151 = vmatmul.mubr.f32.gmra.mrb[0].mxu0 %v1968
      %v2152 = vpop.f32.mrb[0].mxu0
      %v2153 = vadd.f32 0.0, %v2152
      %v2154 = vpop.f32.mrb[0].mxu0
      %2155 = vmatprep.mubr.f32.mxu0 0.0
      %2156 = vmatmul.mubr.f32.gmra.mrb[0].mxu0 %v1971
      %v2157 = vpop.f32.mrb[0].mxu0
      %v2158 = vadd.f32 0.0, %v2157
      %v2159 = vpop.f32.mrb[0].mxu0
      %2160 = vmatprep.mubr.f32.mxu0 0.0
      %2161 = vmatmul.mubr.f32.gmra.mrb[0].mxu0 %v1974
      %v2162 = vpop.f32.mrb[0].mxu0
      %v2163 = vadd.f32 0.0, %v2162
      %v2164 = vpop.f32.mrb[0].mxu0
      %2165 = vmatprep.mubr.f32.mxu0 0.0
      %2166 = vmatmul.mubr.f32.gmra.mrb[0].mxu0 %v1977
      %v2167 = vpop.f32.mrb[0].mxu0
      %v2168 = vadd.f32 0.0, %v2167
      %v2169 = vpop.f32.mrb[0].mxu0
      %2170 = vmatprep.mubr.f32.mxu0 0.0
      %2171 = vmatmul.mubr.f32.gmra.mrb[0].mxu0 %v1980
      %v2172 = vpop.f32.mrb[0].mxu0
      %v2173 = vadd.f32 0.0, %v2172
      %v2174 = vpop.f32.mrb[0].mxu0
      %2175 = vmatprep.mubr.f32.mxu0 0.0
      %2176 = vmatmul.mubr.f32.gmra.mrb[0].mxu0 %v1983
      %v2177 = vpop.f32.mrb[0].mxu0
      %v2178 = vadd.f32 0.0, %v2177
      %v2179 = vpop.f32.mrb[0].mxu0
      %2180 = vmatprep.mubr.f32.mxu0 0.0
      %2181 = vmatmul.mubr.f32.gmra.mrb[0].mxu0 %v1986
      %v2182 = vpop.f32.mrb[0].mxu0
      %v2183 = vadd.f32 0.0, %v2182
      %v2184 = vpop.f32.mrb[0].mxu0
      %2185 = vmatprep.mubr.f32.mxu0 0.0
      %2186 = vmatmul.mubr.f32.gmra.mrb[0].mxu0 %v1989
      %v2187 = vpop.f32.mrb[0].mxu0
      %v2188 = vadd.f32 0.0, %v2187
      %v2189 = vpop.f32.mrb[0].mxu0
      %2190 = vmatprep.mubr.f32.mxu0 0.0
      %2191 = vmatmul.mubr.f32.gmra.mrb[0].mxu0 %v1992
      %v2192 = vpop.f32.mrb[0].mxu0
      %v2193 = vadd.f32 0.0, %v2192
      %v2194 = vpop.f32.mrb[0].mxu0
      %2195 = vmatprep.mubr.f32.mxu0 0.0
      %2196 = vmatmul.mubr.f32.gmra.mrb[0].mxu0 %v1995
      %v2197 = vpop.f32.mrb[0].mxu0
      %v2198 = vadd.f32 0.0, %v2197
      %v2199 = vpop.f32.mrb[0].mxu0
      %2200 = vmatprep.mubr.f32.mxu0 0.0
      %2201 = vmatmul.mubr.f32.gmra.mrb[0].mxu0 %v1998
      %v2202 = vpop.f32.mrb[0].mxu0
      %v2203 = vadd.f32 0.0, %v2202
      %v2204 = vpop.f32.mrb[0].mxu0
      %2205 = vmatprep.mubr.f32.mxu0 0.0
      %2206 = vmatmul.mubr.f32.gmra.mrb[0].mxu0 %v2001
      %v2207 = vpop.f32.mrb[0].mxu0
      %v2208 = vadd.f32 0.0, %v2207
      %v2209 = vpop.f32.mrb[0].mxu0
      %2210 = vmatprep.mubr.f32.mxu0 0.0
      %2211 = vmatmul.mubr.f32.gmra.mrb[0].mxu0 %v2004
      %v2212 = vpop.f32.mrb[0].mxu0
      %v2213 = vadd.f32 0.0, %v2212
      %v2214 = vpop.f32.mrb[0].mxu0
      %2215 = vmatprep.mubr.f32.mxu0 0.0
      %2216 = vmatmul.mubr.f32.gmra.mrb[0].mxu0 %v2007
      %v2217 = vpop.f32.mrb[0].mxu0
      %v2218 = vadd.f32 0.0, %v2217
      %v2219 = vpop.f32.mrb[0].mxu0
      %2220 = vmatprep.mubr.f32.mxu0 0.0
      %2221 = vmatmul.mubr.f32.gmra.mrb[0].mxu0 %v2010
      %v2222 = vpop.f32.mrb[0].mxu0
      %v2223 = vadd.f32 0.0, %v2222
      %v2224 = vpop.f32.mrb[0].mxu0
      %2225 = vmatprep.mubr.f32.mxu0 0.0
      %2226 = vmatmul.mubr.f32.gmra.mrb[0].mxu0 %v2013
      %v2227 = vpop.f32.mrb[0].mxu0
      %v2228 = vadd.f32 0.0, %v2227
      %v2229 = vpop.f32.mrb[0].mxu0
      %2230 = vmatprep.mubr.f32.mxu0 0.0
      %2231 = vmatmul.mubr.f32.gmra.mrb[0].mxu0 %v2016
      %v2232 = vpop.f32.mrb[0].mxu0
      %v2233 = vadd.f32 0.0, %v2232
      %v2234 = vpop.f32.mrb[0].mxu0
      %2235 = vmatprep.mubr.f32.mxu0 0.0
      %2236 = vmatmul.mubr.f32.gmra.mrb[0].mxu0 %v2019
      %v2237 = vpop.f32.mrb[0].mxu0
      %v2238 = vadd.f32 0.0, %v2237
      %v2239 = vpop.f32.mrb[0].mxu0
      %2240 = vmatprep.mubr.f32.mxu0 0.0
      %2241 = vmatmul.mubr.f32.gmra.mrb[0].mxu0 %v2022
      %v2242 = vpop.f32.mrb[0].mxu0
      %v2243 = vadd.f32 0.0, %v2242
      %v2244 = vpop.f32.mrb[0].mxu0
      %2245 = vmatprep.mubr.f32.mxu0 0.0
      %2246 = vmatmul.mubr.f32.gmra.mrb[0].mxu0 %v2025
      %v2247 = vpop.f32.mrb[0].mxu0
      %v2248 = vadd.f32 0.0, %v2247
      %v2249 = vpop.f32.mrb[0].mxu0
      %2250 = vmatprep.mubr.f32.mxu0 0.0
      %2251 = vmatmul.mubr.f32.gmra.mrb[0].mxu0 %v2028
      %v2252 = vpop.f32.mrb[0].mxu0
      %v2253 = vadd.f32 0.0, %v2252
      %v2254 = vpop.f32.mrb[0].mxu0
      %2255 = vmatprep.mubr.f32.mxu0 0.0
      %2256 = vmatmul.mubr.f32.gmra.mrb[0].mxu0 %v2031
      %v2257 = vpop.f32.mrb[0].mxu0
      %v2258 = vadd.f32 0.0, %v2257
      %v2259 = vpop.f32.mrb[0].mxu0
      %2260 = vdwg.mxu0
      %v2261 = vadd.f32 %v1585, %v2103
      %v2262 = vadd.f32 %v1590, %v2108
      %v2263 = vadd.f32 %v1595, %v2113
      %v2264 = vadd.f32 %v1600, %v2118
      %v2265 = vadd.f32 %v1605, %v2123
      %v2266 = vadd.f32 %v1610, %v2128
      %v2267 = vadd.f32 %v1615, %v2133
      %v2268 = vadd.f32 %v1620, %v2138
      %v2269 = vadd.f32 %v1625, %v2143
      %v2270 = vadd.f32 %v1630, %v2148
      %v2271 = vadd.f32 %v1635, %v2153
      %v2272 = vadd.f32 %v1640, %v2158
      %v2273 = vadd.f32 %v1645, %v2163
      %v2274 = vadd.f32 %v1650, %v2168
      %v2275 = vadd.f32 %v1655, %v2173
      %v2276 = vadd.f32 %v1660, %v2178
      %v2277 = vadd.f32 %v1665, %v2183
      %v2278 = vadd.f32 %v1670, %v2188
      %v2279 = vadd.f32 %v1675, %v2193
      %v2280 = vadd.f32 %v1680, %v2198
      %v2281 = vadd.f32 %v1685, %v2203
      %v2282 = vadd.f32 %v1690, %v2208
      %v2283 = vadd.f32 %v1695, %v2213
      %v2284 = vadd.f32 %v1700, %v2218
      %v2285 = vadd.f32 %v1705, %v2223
      %v2286 = vadd.f32 %v1710, %v2228
      %v2287 = vadd.f32 %v1715, %v2233
      %v2288 = vadd.f32 %v1720, %v2238
      %v2289 = vadd.f32 %v1725, %v2243
      %v2290 = vadd.f32 %v1730, %v2248
      %v2291 = vadd.f32 %v1735, %v2253
      %v2292 = vadd.f32 %v1740, %v2258
      %v2294 = vrot.slane %v871, 7
      %v2295 = vsel %vm1001, %v1062, %v2294
      %v2296 = vrot.slane %v872, 7
      %v2297 = vsel %vm1001, %v2294, %v2296
      %v2300 = vsel %vm938, %v1005, 0.0
      %v2301 = vsel %vm939, %v1007, 0.0
      %v2302 = vsel %vm940, %v1009, 0.0
      %v2303 = vsel %vm941, %v1011, 0.0
      %v2304 = vsel %vm942, %v1013, 0.0
      %v2305 = vsel %vm943, %v1015, 0.0
      %v2306 = vsel %vm944, %v1017, 0.0
      %v2307 = vsel %vm945, %v1019, 0.0
      %v2308 = vsel %vm946, %v1021, 0.0
      %v2309 = vsel %vm947, %v1023, 0.0
      %v2310 = vsel %vm948, %v1025, 0.0
      %v2311 = vsel %vm949, %v1027, 0.0
      %v2312 = vsel %vm950, %v1029, 0.0
      %v2313 = vsel %vm951, %v1031, 0.0
      %v2314 = vsel %vm952, %v1033, 0.0
      %v2315 = vsel %vm953, %v1035, 0.0
      %v2316 = vsel %vm954, %v1037, 0.0
      %v2317 = vsel %vm955, %v1039, 0.0
      %v2318 = vsel %vm956, %v1041, 0.0
      %v2319 = vsel %vm957, %v1043, 0.0
      %v2320 = vsel %vm958, %v1045, 0.0
      %v2321 = vsel %vm959, %v1047, 0.0
      %v2322 = vsel %vm960, %v1049, 0.0
      %v2323 = vsel %vm961, %v1051, 0.0
      %v2324 = vsel %vm962, %v1053, 0.0
      %v2325 = vsel %vm963, %v1055, 0.0
      %v2326 = vsel %vm964, %v1057, 0.0
      %v2327 = vsel %vm965, %v1059, 0.0
      %v2328 = vsel %vm966, %v1061, 0.0
      %v2329 = vsel %vm967, %v1063, 0.0
      %v2330 = vsel %vm968, %v2295, 0.0
      %v2331 = vsel %vm969, %v2297, 0.0
      %v2333 = vsel %vm1127, %v2300, 0
      %v2336 = vsel %vm1127, %v2301, 0
      %v2339 = vsel %vm1127, %v2302, 0
      %v2342 = vsel %vm1127, %v2303, 0
      %v2345 = vsel %vm1127, %v2304, 0
      %v2348 = vsel %vm1127, %v2305, 0
      %v2351 = vsel %vm1127, %v2306, 0
      %v2354 = vsel %vm1127, %v2307, 0
      %v2357 = vsel %vm1127, %v2308, 0
      %v2360 = vsel %vm1127, %v2309, 0
      %v2363 = vsel %vm1127, %v2310, 0
      %v2366 = vsel %vm1127, %v2311, 0
      %v2369 = vsel %vm1127, %v2312, 0
      %v2372 = vsel %vm1127, %v2313, 0
      %v2375 = vsel %vm1127, %v2314, 0
      %v2378 = vsel %vm1127, %v2315, 0
      %v2381 = vsel %vm1127, %v2316, 0
      %v2384 = vsel %vm1127, %v2317, 0
      %v2387 = vsel %vm1127, %v2318, 0
      %v2390 = vsel %vm1127, %v2319, 0
      %v2393 = vsel %vm1127, %v2320, 0
      %v2396 = vsel %vm1127, %v2321, 0
      %v2399 = vsel %vm1127, %v2322, 0
      %v2402 = vsel %vm1127, %v2323, 0
      %v2405 = vsel %vm1127, %v2324, 0
      %v2408 = vsel %vm1127, %v2325, 0
      %v2411 = vsel %vm1127, %v2326, 0
      %v2414 = vsel %vm1127, %v2327, 0
      %v2417 = vsel %vm1127, %v2328, 0
      %v2420 = vsel %vm1127, %v2329, 0
      %v2423 = vsel %vm1127, %v2330, 0
      %v2426 = vsel %vm1127, %v2331, 0
      %v2429 = vsel %vm1190, %v876, 0
      %2431 = vmatprep.subr.mxu0 0.0
      %2432 = vmatpush1.msra.mxu0 %v2429
      %2433 = vmatprep.subr.mxu0 0.0
      %2434 = vmatpush1.msra.mxu0 0.0
      %2435 = vmatprep.subr.mxu0 0.0
      %2436 = vmatpush1.msra.mxu0 0.0
      %2437 = vmatprep.subr.mxu0 0.0
      %2438 = vmatpush1.msra.mxu0 0.0
      %2439 = vmatprep.subr.mxu0 0.0
      %2440 = vmatpush1.msra.mxu0 0.0
      %2441 = vmatprep.subr.mxu0 0.0
      %2442 = vmatpush1.msra.mxu0 0.0
      %2443 = vmatprep.subr.mxu0 0.0
      %2444 = vmatpush1.msra.mxu0 0.0
      %2445 = vmatprep.subr.mxu0 0.0
      %2446 = vmatpush1.msra.mxu0 0.0
      %2447 = vmatprep.subr.mxu0 0.0
      %2448 = vmatpush1.msra.mxu0 0.0
      %2449 = vmatprep.subr.mxu0 0.0
      %2450 = vmatpush1.msra.mxu0 0.0
      %2451 = vmatprep.subr.mxu0 0.0
      %2452 = vmatpush1.msra.mxu0 0.0
      %2453 = vmatprep.subr.mxu0 0.0
      %2454 = vmatpush1.msra.mxu0 0.0
      %2455 = vmatprep.subr.mxu0 0.0
      %2456 = vmatpush1.msra.mxu0 0.0
      %2457 = vmatprep.subr.mxu0 0.0
      %2458 = vmatpush1.msra.mxu0 0.0
      %2459 = vmatprep.subr.mxu0 0.0
      %2460 = vmatpush1.msra.mxu0 0.0
      %2461 = vmatprep.subr.mxu0 0.0
      %2462 = vmatpush1.msra.mxu0 0.0
      %2463 = vmatprep.subr.mxu0 0.0
      %2464 = vmatpush1.msra.mxu0 0.0
      %2465 = vmatprep.subr.mxu0 0.0
      %2466 = vmatpush1.msra.mxu0 0.0
      %2467 = vmatprep.subr.mxu0 0.0
      %2468 = vmatpush1.msra.mxu0 0.0
      %2469 = vmatprep.subr.mxu0 0.0
      %2470 = vmatpush1.msra.mxu0 0.0
      %2471 = vmatprep.subr.mxu0 0.0
      %2472 = vmatpush1.msra.mxu0 0.0
      %2473 = vmatprep.subr.mxu0 0.0
      %2474 = vmatpush1.msra.mxu0 0.0
      %2475 = vmatprep.subr.mxu0 0.0
      %2476 = vmatpush1.msra.mxu0 0.0
      %2477 = vmatprep.subr.mxu0 0.0
      %2478 = vmatpush1.msra.mxu0 0.0
      %2479 = vmatprep.subr.mxu0 0.0
      %2480 = vmatpush1.msra.mxu0 0.0
      %2481 = vmatprep.subr.mxu0 0.0
      %2482 = vmatpush1.msra.mxu0 0.0
      %2483 = vmatprep.subr.mxu0 0.0
      %2484 = vmatpush1.msra.mxu0 0.0
      %2485 = vmatprep.subr.mxu0 0.0
      %2486 = vmatpush1.msra.mxu0 0.0
      %2487 = vmatprep.subr.mxu0 0.0
      %2488 = vmatpush1.msra.mxu0 0.0
      %2489 = vmatprep.subr.mxu0 0.0
      %2490 = vmatpush1.msra.mxu0 0.0
      %2491 = vmatprep.subr.mxu0 0.0
      %2492 = vmatpush1.msra.mxu0 0.0
      %2493 = vmatprep.subr.mxu0 0.0
      %2494 = vmatpush1.msra.mxu0 0.0
      %2495 = vmatprep.mubr.f32.mxu0 0.0
      %2496 = vmatmul.mubr.f32.gmra.mrb[0].mxu0 %v2333
      %v2497 = vpop.f32.mrb[0].mxu0
      %v2498 = vadd.f32 0.0, %v2497
      %v2499 = vpop.f32.mrb[0].mxu0
      %2500 = vmatprep.mubr.f32.mxu0 0.0
      %2501 = vmatmul.mubr.f32.gmra.mrb[0].mxu0 %v2336
      %v2502 = vpop.f32.mrb[0].mxu0
      %v2503 = vadd.f32 0.0, %v2502
      %v2504 = vpop.f32.mrb[0].mxu0
      %2505 = vmatprep.mubr.f32.mxu0 0.0
      %2506 = vmatmul.mubr.f32.gmra.mrb[0].mxu0 %v2339
      %v2507 = vpop.f32.mrb[0].mxu0
      %v2508 = vadd.f32 0.0, %v2507
      %v2509 = vpop.f32.mrb[0].mxu0
      %2510 = vmatprep.mubr.f32.mxu0 0.0
      %2511 = vmatmul.mubr.f32.gmra.mrb[0].mxu0 %v2342
      %v2512 = vpop.f32.mrb[0].mxu0
      %v2513 = vadd.f32 0.0, %v2512
      %v2514 = vpop.f32.mrb[0].mxu0
      %2515 = vmatprep.mubr.f32.mxu0 0.0
      %2516 = vmatmul.mubr.f32.gmra.mrb[0].mxu0 %v2345
      %v2517 = vpop.f32.mrb[0].mxu0
      %v2518 = vadd.f32 0.0, %v2517
      %v2519 = vpop.f32.mrb[0].mxu0
      %2520 = vmatprep.mubr.f32.mxu0 0.0
      %2521 = vmatmul.mubr.f32.gmra.mrb[0].mxu0 %v2348
      %v2522 = vpop.f32.mrb[0].mxu0
      %v2523 = vadd.f32 0.0, %v2522
      %v2524 = vpop.f32.mrb[0].mxu0
      %2525 = vmatprep.mubr.f32.mxu0 0.0
      %2526 = vmatmul.mubr.f32.gmra.mrb[0].mxu0 %v2351
      %v2527 = vpop.f32.mrb[0].mxu0
      %v2528 = vadd.f32 0.0, %v2527
      %v2529 = vpop.f32.mrb[0].mxu0
      %2530 = vmatprep.mubr.f32.mxu0 0.0
      %2531 = vmatmul.mubr.f32.gmra.mrb[0].mxu0 %v2354
      %v2532 = vpop.f32.mrb[0].mxu0
      %v2533 = vadd.f32 0.0, %v2532
      %v2534 = vpop.f32.mrb[0].mxu0
      %2535 = vmatprep.mubr.f32.mxu0 0.0
      %2536 = vmatmul.mubr.f32.gmra.mrb[0].mxu0 %v2357
      %v2537 = vpop.f32.mrb[0].mxu0
      %v2538 = vadd.f32 0.0, %v2537
      %v2539 = vpop.f32.mrb[0].mxu0
      %2540 = vmatprep.mubr.f32.mxu0 0.0
      %2541 = vmatmul.mubr.f32.gmra.mrb[0].mxu0 %v2360
      %v2542 = vpop.f32.mrb[0].mxu0
      %v2543 = vadd.f32 0.0, %v2542
      %v2544 = vpop.f32.mrb[0].mxu0
      %2545 = vmatprep.mubr.f32.mxu0 0.0
      %2546 = vmatmul.mubr.f32.gmra.mrb[0].mxu0 %v2363
      %v2547 = vpop.f32.mrb[0].mxu0
      %v2548 = vadd.f32 0.0, %v2547
      %v2549 = vpop.f32.mrb[0].mxu0
      %2550 = vmatprep.mubr.f32.mxu0 0.0
      %2551 = vmatmul.mubr.f32.gmra.mrb[0].mxu0 %v2366
      %v2552 = vpop.f32.mrb[0].mxu0
      %v2553 = vadd.f32 0.0, %v2552
      %v2554 = vpop.f32.mrb[0].mxu0
      %2555 = vmatprep.mubr.f32.mxu0 0.0
      %2556 = vmatmul.mubr.f32.gmra.mrb[0].mxu0 %v2369
      %v2557 = vpop.f32.mrb[0].mxu0
      %v2558 = vadd.f32 0.0, %v2557
      %v2559 = vpop.f32.mrb[0].mxu0
      %2560 = vmatprep.mubr.f32.mxu0 0.0
      %2561 = vmatmul.mubr.f32.gmra.mrb[0].mxu0 %v2372
      %v2562 = vpop.f32.mrb[0].mxu0
      %v2563 = vadd.f32 0.0, %v2562
      %v2564 = vpop.f32.mrb[0].mxu0
      %2565 = vmatprep.mubr.f32.mxu0 0.0
      %2566 = vmatmul.mubr.f32.gmra.mrb[0].mxu0 %v2375
      %v2567 = vpop.f32.mrb[0].mxu0
      %v2568 = vadd.f32 0.0, %v2567
      %v2569 = vpop.f32.mrb[0].mxu0
      %2570 = vmatprep.mubr.f32.mxu0 0.0
      %2571 = vmatmul.mubr.f32.gmra.mrb[0].mxu0 %v2378
      %v2572 = vpop.f32.mrb[0].mxu0
      %v2573 = vadd.f32 0.0, %v2572
      %v2574 = vpop.f32.mrb[0].mxu0
      %2575 = vmatprep.mubr.f32.mxu0 0.0
      %2576 = vmatmul.mubr.f32.gmra.mrb[0].mxu0 %v2381
      %v2577 = vpop.f32.mrb[0].mxu0
      %v2578 = vadd.f32 0.0, %v2577
      %v2579 = vpop.f32.mrb[0].mxu0
      %2580 = vmatprep.mubr.f32.mxu0 0.0
      %2581 = vmatmul.mubr.f32.gmra.mrb[0].mxu0 %v2384
      %v2582 = vpop.f32.mrb[0].mxu0
      %v2583 = vadd.f32 0.0, %v2582
      %v2584 = vpop.f32.mrb[0].mxu0
      %2585 = vmatprep.mubr.f32.mxu0 0.0
      %2586 = vmatmul.mubr.f32.gmra.mrb[0].mxu0 %v2387
      %v2587 = vpop.f32.mrb[0].mxu0
      %v2588 = vadd.f32 0.0, %v2587
      %v2589 = vpop.f32.mrb[0].mxu0
      %2590 = vmatprep.mubr.f32.mxu0 0.0
      %2591 = vmatmul.mubr.f32.gmra.mrb[0].mxu0 %v2390
      %v2592 = vpop.f32.mrb[0].mxu0
      %v2593 = vadd.f32 0.0, %v2592
      %v2594 = vpop.f32.mrb[0].mxu0
      %2595 = vmatprep.mubr.f32.mxu0 0.0
      %2596 = vmatmul.mubr.f32.gmra.mrb[0].mxu0 %v2393
      %v2597 = vpop.f32.mrb[0].mxu0
      %v2598 = vadd.f32 0.0, %v2597
      %v2599 = vpop.f32.mrb[0].mxu0
      %2600 = vmatprep.mubr.f32.mxu0 0.0
      %2601 = vmatmul.mubr.f32.gmra.mrb[0].mxu0 %v2396
      %v2602 = vpop.f32.mrb[0].mxu0
      %v2603 = vadd.f32 0.0, %v2602
      %v2604 = vpop.f32.mrb[0].mxu0
      %2605 = vmatprep.mubr.f32.mxu0 0.0
      %2606 = vmatmul.mubr.f32.gmra.mrb[0].mxu0 %v2399
      %v2607 = vpop.f32.mrb[0].mxu0
      %v2608 = vadd.f32 0.0, %v2607
      %v2609 = vpop.f32.mrb[0].mxu0
      %2610 = vmatprep.mubr.f32.mxu0 0.0
      %2611 = vmatmul.mubr.f32.gmra.mrb[0].mxu0 %v2402
      %v2612 = vpop.f32.mrb[0].mxu0
      %v2613 = vadd.f32 0.0, %v2612
      %v2614 = vpop.f32.mrb[0].mxu0
      %2615 = vmatprep.mubr.f32.mxu0 0.0
      %2616 = vmatmul.mubr.f32.gmra.mrb[0].mxu0 %v2405
      %v2617 = vpop.f32.mrb[0].mxu0
      %v2618 = vadd.f32 0.0, %v2617
      %v2619 = vpop.f32.mrb[0].mxu0
      %2620 = vmatprep.mubr.f32.mxu0 0.0
      %2621 = vmatmul.mubr.f32.gmra.mrb[0].mxu0 %v2408
      %v2622 = vpop.f32.mrb[0].mxu0
      %v2623 = vadd.f32 0.0, %v2622
      %v2624 = vpop.f32.mrb[0].mxu0
      %2625 = vmatprep.mubr.f32.mxu0 0.0
      %2626 = vmatmul.mubr.f32.gmra.mrb[0].mxu0 %v2411
      %v2627 = vpop.f32.mrb[0].mxu0
      %v2628 = vadd.f32 0.0, %v2627
      %v2629 = vpop.f32.mrb[0].mxu0
      %2630 = vmatprep.mubr.f32.mxu0 0.0
      %2631 = vmatmul.mubr.f32.gmra.mrb[0].mxu0 %v2414
      %v2632 = vpop.f32.mrb[0].mxu0
      %v2633 = vadd.f32 0.0, %v2632
      %v2634 = vpop.f32.mrb[0].mxu0
      %2635 = vmatprep.mubr.f32.mxu0 0.0
      %2636 = vmatmul.mubr.f32.gmra.mrb[0].mxu0 %v2417
      %v2637 = vpop.f32.mrb[0].mxu0
      %v2638 = vadd.f32 0.0, %v2637
      %v2639 = vpop.f32.mrb[0].mxu0
      %2640 = vmatprep.mubr.f32.mxu0 0.0
      %2641 = vmatmul.mubr.f32.gmra.mrb[0].mxu0 %v2420
      %v2642 = vpop.f32.mrb[0].mxu0
      %v2643 = vadd.f32 0.0, %v2642
      %v2644 = vpop.f32.mrb[0].mxu0
      %2645 = vmatprep.mubr.f32.mxu0 0.0
      %2646 = vmatmul.mubr.f32.gmra.mrb[0].mxu0 %v2423
      %v2647 = vpop.f32.mrb[0].mxu0
      %v2648 = vadd.f32 0.0, %v2647
      %v2649 = vpop.f32.mrb[0].mxu0
      %2650 = vmatprep.mubr.f32.mxu0 0.0
      %2651 = vmatmul.mubr.f32.gmra.mrb[0].mxu0 %v2426
      %v2652 = vpop.f32.mrb[0].mxu0
      %v2653 = vadd.f32 0.0, %v2652
      %v2654 = vpop.f32.mrb[0].mxu0
      %2655 = vdwg.mxu0
      %v2656 = vadd.f32 %v2261, %v2498
      %v2657 = vadd.f32 %v2262, %v2503
      %v2658 = vadd.f32 %v2263, %v2508
      %v2659 = vadd.f32 %v2264, %v2513
      %v2660 = vadd.f32 %v2265, %v2518
      %v2661 = vadd.f32 %v2266, %v2523
      %v2662 = vadd.f32 %v2267, %v2528
      %v2663 = vadd.f32 %v2268, %v2533
      %v2664 = vadd.f32 %v2269, %v2538
      %v2665 = vadd.f32 %v2270, %v2543
      %v2666 = vadd.f32 %v2271, %v2548
      %v2667 = vadd.f32 %v2272, %v2553
      %v2668 = vadd.f32 %v2273, %v2558
      %v2669 = vadd.f32 %v2274, %v2563
      %v2670 = vadd.f32 %v2275, %v2568
      %v2671 = vadd.f32 %v2276, %v2573
      %v2672 = vadd.f32 %v2277, %v2578
      %v2673 = vadd.f32 %v2278, %v2583
      %v2674 = vadd.f32 %v2279, %v2588
      %v2675 = vadd.f32 %v2280, %v2593
      %v2676 = vadd.f32 %v2281, %v2598
      %v2677 = vadd.f32 %v2282, %v2603
      %v2678 = vadd.f32 %v2283, %v2608
      %v2679 = vadd.f32 %v2284, %v2613
      %v2680 = vadd.f32 %v2285, %v2618
      %v2681 = vadd.f32 %v2286, %v2623
      %v2682 = vadd.f32 %v2287, %v2628
      %v2683 = vadd.f32 %v2288, %v2633
      %v2684 = vadd.f32 %v2289, %v2638
      %v2685 = vadd.f32 %v2290, %v2643
      %v2686 = vadd.f32 %v2291, %v2648
      %v2687 = vadd.f32 %v2292, %v2653
      %v2688 = vsel %vm1127, %v871, 0
      %v2690 = vsel %vm1127, %v872, 0
      %v2693 = vsel %vm1190, %v877, 0
      %2695 = vmatprep.subr.mxu0 0.0
      %2696 = vmatpush1.msra.mxu0 %v2693
      %2697 = vmatprep.subr.mxu0 0.0
      %2698 = vmatpush1.msra.mxu0 0.0
      %2699 = vmatprep.subr.mxu0 0.0
      %2700 = vmatpush1.msra.mxu0 0.0
      %2701 = vmatprep.subr.mxu0 0.0
      %2702 = vmatpush1.msra.mxu0 0.0
      %2703 = vmatprep.subr.mxu0 0.0
      %2704 = vmatpush1.msra.mxu0 0.0
      %2705 = vmatprep.subr.mxu0 0.0
      %2706 = vmatpush1.msra.mxu0 0.0
      %2707 = vmatprep.subr.mxu0 0.0
      %2708 = vmatpush1.msra.mxu0 0.0
      %2709 = vmatprep.subr.mxu0 0.0
      %2710 = vmatpush1.msra.mxu0 0.0
      %2711 = vmatprep.subr.mxu0 0.0
      %2712 = vmatpush1.msra.mxu0 0.0
      %2713 = vmatprep.subr.mxu0 0.0
      %2714 = vmatpush1.msra.mxu0 0.0
      %2715 = vmatprep.subr.mxu0 0.0
      %2716 = vmatpush1.msra.mxu0 0.0
      %2717 = vmatprep.subr.mxu0 0.0
      %2718 = vmatpush1.msra.mxu0 0.0
      %2719 = vmatprep.subr.mxu0 0.0
      %2720 = vmatpush1.msra.mxu0 0.0
      %2721 = vmatprep.subr.mxu0 0.0
      %2722 = vmatpush1.msra.mxu0 0.0
      %2723 = vmatprep.subr.mxu0 0.0
      %2724 = vmatpush1.msra.mxu0 0.0
      %2725 = vmatprep.subr.mxu0 0.0
      %2726 = vmatpush1.msra.mxu0 0.0
      %2727 = vmatprep.subr.mxu0 0.0
      %2728 = vmatpush1.msra.mxu0 0.0
      %2729 = vmatprep.subr.mxu0 0.0
      %2730 = vmatpush1.msra.mxu0 0.0
      %2731 = vmatprep.subr.mxu0 0.0
      %2732 = vmatpush1.msra.mxu0 0.0
      %2733 = vmatprep.subr.mxu0 0.0
      %2734 = vmatpush1.msra.mxu0 0.0
      %2735 = vmatprep.subr.mxu0 0.0
      %2736 = vmatpush1.msra.mxu0 0.0
      %2737 = vmatprep.subr.mxu0 0.0
      %2738 = vmatpush1.msra.mxu0 0.0
      %2739 = vmatprep.subr.mxu0 0.0
      %2740 = vmatpush1.msra.mxu0 0.0
      %2741 = vmatprep.subr.mxu0 0.0
      %2742 = vmatpush1.msra.mxu0 0.0
      %2743 = vmatprep.subr.mxu0 0.0
      %2744 = vmatpush1.msra.mxu0 0.0
      %2745 = vmatprep.subr.mxu0 0.0
      %2746 = vmatpush1.msra.mxu0 0.0
      %2747 = vmatprep.subr.mxu0 0.0
      %2748 = vmatpush1.msra.mxu0 0.0
      %2749 = vmatprep.subr.mxu0 0.0
      %2750 = vmatpush1.msra.mxu0 0.0
      %2751 = vmatprep.subr.mxu0 0.0
      %2752 = vmatpush1.msra.mxu0 0.0
      %2753 = vmatprep.subr.mxu0 0.0
      %2754 = vmatpush1.msra.mxu0 0.0
      %2755 = vmatprep.subr.mxu0 0.0
      %2756 = vmatpush1.msra.mxu0 0.0
      %2757 = vmatprep.subr.mxu0 0.0
      %2758 = vmatpush1.msra.mxu0 0.0
      %2759 = vmatprep.mubr.f32.mxu0 0.0
      %2760 = vmatmul.mubr.f32.gmra.mrb[0].mxu0 %v1130
      %v2761 = vpop.f32.mrb[0].mxu0
      %v2762 = vadd.f32 0.0, %v2761
      %v2763 = vpop.f32.mrb[0].mxu0
      %2764 = vmatprep.mubr.f32.mxu0 0.0
      %2765 = vmatmul.mubr.f32.gmra.mrb[0].mxu0 %v1132
      %v2766 = vpop.f32.mrb[0].mxu0
      %v2767 = vadd.f32 0.0, %v2766
      %v2768 = vpop.f32.mrb[0].mxu0
      %2769 = vmatprep.mubr.f32.mxu0 0.0
      %2770 = vmatmul.mubr.f32.gmra.mrb[0].mxu0 %v1134
      %v2771 = vpop.f32.mrb[0].mxu0
      %v2772 = vadd.f32 0.0, %v2771
      %v2773 = vpop.f32.mrb[0].mxu0
      %2774 = vmatprep.mubr.f32.mxu0 0.0
      %2775 = vmatmul.mubr.f32.gmra.mrb[0].mxu0 %v1136
      %v2776 = vpop.f32.mrb[0].mxu0
      %v2777 = vadd.f32 0.0, %v2776
      %v2778 = vpop.f32.mrb[0].mxu0
      %2779 = vmatprep.mubr.f32.mxu0 0.0
      %2780 = vmatmul.mubr.f32.gmra.mrb[0].mxu0 %v1138
      %v2781 = vpop.f32.mrb[0].mxu0
      %v2782 = vadd.f32 0.0, %v2781
      %v2783 = vpop.f32.mrb[0].mxu0
      %2784 = vmatprep.mubr.f32.mxu0 0.0
      %2785 = vmatmul.mubr.f32.gmra.mrb[0].mxu0 %v1140
      %v2786 = vpop.f32.mrb[0].mxu0
      %v2787 = vadd.f32 0.0, %v2786
      %v2788 = vpop.f32.mrb[0].mxu0
      %2789 = vmatprep.mubr.f32.mxu0 0.0
      %2790 = vmatmul.mubr.f32.gmra.mrb[0].mxu0 %v1142
      %v2791 = vpop.f32.mrb[0].mxu0
      %v2792 = vadd.f32 0.0, %v2791
      %v2793 = vpop.f32.mrb[0].mxu0
      %2794 = vmatprep.mubr.f32.mxu0 0.0
      %2795 = vmatmul.mubr.f32.gmra.mrb[0].mxu0 %v1144
      %v2796 = vpop.f32.mrb[0].mxu0
      %v2797 = vadd.f32 0.0, %v2796
      %v2798 = vpop.f32.mrb[0].mxu0
      %2799 = vmatprep.mubr.f32.mxu0 0.0
      %2800 = vmatmul.mubr.f32.gmra.mrb[0].mxu0 %v1146
      %v2801 = vpop.f32.mrb[0].mxu0
      %v2802 = vadd.f32 0.0, %v2801
      %v2803 = vpop.f32.mrb[0].mxu0
      %2804 = vmatprep.mubr.f32.mxu0 0.0
      %2805 = vmatmul.mubr.f32.gmra.mrb[0].mxu0 %v1148
      %v2806 = vpop.f32.mrb[0].mxu0
      %v2807 = vadd.f32 0.0, %v2806
      %v2808 = vpop.f32.mrb[0].mxu0
      %2809 = vmatprep.mubr.f32.mxu0 0.0
      %2810 = vmatmul.mubr.f32.gmra.mrb[0].mxu0 %v1150
      %v2811 = vpop.f32.mrb[0].mxu0
      %v2812 = vadd.f32 0.0, %v2811
      %v2813 = vpop.f32.mrb[0].mxu0
      %2814 = vmatprep.mubr.f32.mxu0 0.0
      %2815 = vmatmul.mubr.f32.gmra.mrb[0].mxu0 %v1152
      %v2816 = vpop.f32.mrb[0].mxu0
      %v2817 = vadd.f32 0.0, %v2816
      %v2818 = vpop.f32.mrb[0].mxu0
      %2819 = vmatprep.mubr.f32.mxu0 0.0
      %2820 = vmatmul.mubr.f32.gmra.mrb[0].mxu0 %v1154
      %v2821 = vpop.f32.mrb[0].mxu0
      %v2822 = vadd.f32 0.0, %v2821
      %v2823 = vpop.f32.mrb[0].mxu0
      %2824 = vmatprep.mubr.f32.mxu0 0.0
      %2825 = vmatmul.mubr.f32.gmra.mrb[0].mxu0 %v1156
      %v2826 = vpop.f32.mrb[0].mxu0
      %v2827 = vadd.f32 0.0, %v2826
      %v2828 = vpop.f32.mrb[0].mxu0
      %2829 = vmatprep.mubr.f32.mxu0 0.0
      %2830 = vmatmul.mubr.f32.gmra.mrb[0].mxu0 %v1158
      %v2831 = vpop.f32.mrb[0].mxu0
      %v2832 = vadd.f32 0.0, %v2831
      %v2833 = vpop.f32.mrb[0].mxu0
      %2834 = vmatprep.mubr.f32.mxu0 0.0
      %2835 = vmatmul.mubr.f32.gmra.mrb[0].mxu0 %v1160
      %v2836 = vpop.f32.mrb[0].mxu0
      %v2837 = vadd.f32 0.0, %v2836
      %v2838 = vpop.f32.mrb[0].mxu0
      %2839 = vmatprep.mubr.f32.mxu0 0.0
      %2840 = vmatmul.mubr.f32.gmra.mrb[0].mxu0 %v1162
      %v2841 = vpop.f32.mrb[0].mxu0
      %v2842 = vadd.f32 0.0, %v2841
      %v2843 = vpop.f32.mrb[0].mxu0
      %2844 = vmatprep.mubr.f32.mxu0 0.0
      %2845 = vmatmul.mubr.f32.gmra.mrb[0].mxu0 %v1164
      %v2846 = vpop.f32.mrb[0].mxu0
      %v2847 = vadd.f32 0.0, %v2846
      %v2848 = vpop.f32.mrb[0].mxu0
      %2849 = vmatprep.mubr.f32.mxu0 0.0
      %2850 = vmatmul.mubr.f32.gmra.mrb[0].mxu0 %v1166
      %v2851 = vpop.f32.mrb[0].mxu0
      %v2852 = vadd.f32 0.0, %v2851
      %v2853 = vpop.f32.mrb[0].mxu0
      %2854 = vmatprep.mubr.f32.mxu0 0.0
      %2855 = vmatmul.mubr.f32.gmra.mrb[0].mxu0 %v1168
      %v2856 = vpop.f32.mrb[0].mxu0
      %v2857 = vadd.f32 0.0, %v2856
      %v2858 = vpop.f32.mrb[0].mxu0
      %2859 = vmatprep.mubr.f32.mxu0 0.0
      %2860 = vmatmul.mubr.f32.gmra.mrb[0].mxu0 %v1170
      %v2861 = vpop.f32.mrb[0].mxu0
      %v2862 = vadd.f32 0.0, %v2861
      %v2863 = vpop.f32.mrb[0].mxu0
      %2864 = vmatprep.mubr.f32.mxu0 0.0
      %2865 = vmatmul.mubr.f32.gmra.mrb[0].mxu0 %v1172
      %v2866 = vpop.f32.mrb[0].mxu0
      %v2867 = vadd.f32 0.0, %v2866
      %v2868 = vpop.f32.mrb[0].mxu0
      %2869 = vmatprep.mubr.f32.mxu0 0.0
      %2870 = vmatmul.mubr.f32.gmra.mrb[0].mxu0 %v1174
      %v2871 = vpop.f32.mrb[0].mxu0
      %v2872 = vadd.f32 0.0, %v2871
      %v2873 = vpop.f32.mrb[0].mxu0
      %2874 = vmatprep.mubr.f32.mxu0 0.0
      %2875 = vmatmul.mubr.f32.gmra.mrb[0].mxu0 %v1176
      %v2876 = vpop.f32.mrb[0].mxu0
      %v2877 = vadd.f32 0.0, %v2876
      %v2878 = vpop.f32.mrb[0].mxu0
      %2879 = vmatprep.mubr.f32.mxu0 0.0
      %2880 = vmatmul.mubr.f32.gmra.mrb[0].mxu0 %v1178
      %v2881 = vpop.f32.mrb[0].mxu0
      %v2882 = vadd.f32 0.0, %v2881
      %v2883 = vpop.f32.mrb[0].mxu0
      %2884 = vmatprep.mubr.f32.mxu0 0.0
      %2885 = vmatmul.mubr.f32.gmra.mrb[0].mxu0 %v1180
      %v2886 = vpop.f32.mrb[0].mxu0
      %v2887 = vadd.f32 0.0, %v2886
      %v2888 = vpop.f32.mrb[0].mxu0
      %2889 = vmatprep.mubr.f32.mxu0 0.0
      %2890 = vmatmul.mubr.f32.gmra.mrb[0].mxu0 %v1182
      %v2891 = vpop.f32.mrb[0].mxu0
      %v2892 = vadd.f32 0.0, %v2891
      %v2893 = vpop.f32.mrb[0].mxu0
      %2894 = vmatprep.mubr.f32.mxu0 0.0
      %2895 = vmatmul.mubr.f32.gmra.mrb[0].mxu0 %v1184
      %v2896 = vpop.f32.mrb[0].mxu0
      %v2897 = vadd.f32 0.0, %v2896
      %v2898 = vpop.f32.mrb[0].mxu0
      %2899 = vmatprep.mubr.f32.mxu0 0.0
      %2900 = vmatmul.mubr.f32.gmra.mrb[0].mxu0 %v1186
      %v2901 = vpop.f32.mrb[0].mxu0
      %v2902 = vadd.f32 0.0, %v2901
      %v2903 = vpop.f32.mrb[0].mxu0
      %2904 = vmatprep.mubr.f32.mxu0 0.0
      %2905 = vmatmul.mubr.f32.gmra.mrb[0].mxu0 %v1188
      %v2906 = vpop.f32.mrb[0].mxu0
      %v2907 = vadd.f32 0.0, %v2906
      %v2908 = vpop.f32.mrb[0].mxu0
      %2909 = vmatprep.mubr.f32.mxu0 0.0
      %2910 = vmatmul.mubr.f32.gmra.mrb[0].mxu0 %v2688
      %v2911 = vpop.f32.mrb[0].mxu0
      %v2912 = vadd.f32 0.0, %v2911
      %v2913 = vpop.f32.mrb[0].mxu0
      %2914 = vmatprep.mubr.f32.mxu0 0.0
      %2915 = vmatmul.mubr.f32.gmra.mrb[0].mxu0 %v2690
      %v2916 = vpop.f32.mrb[0].mxu0
      %v2917 = vadd.f32 0.0, %v2916
      %v2918 = vpop.f32.mrb[0].mxu0
      %2919 = vdwg.mxu0
      %v2920 = vadd.f32 %v2656, %v2762
      %v2921 = vadd.f32 %v2657, %v2767
      %v2922 = vadd.f32 %v2658, %v2772
      %v2923 = vadd.f32 %v2659, %v2777
      %v2924 = vadd.f32 %v2660, %v2782
      %v2925 = vadd.f32 %v2661, %v2787
      %v2926 = vadd.f32 %v2662, %v2792
      %v2927 = vadd.f32 %v2663, %v2797
      %v2928 = vadd.f32 %v2664, %v2802
      %v2929 = vadd.f32 %v2665, %v2807
      %v2930 = vadd.f32 %v2666, %v2812
      %v2931 = vadd.f32 %v2667, %v2817
      %v2932 = vadd.f32 %v2668, %v2822
      %v2933 = vadd.f32 %v2669, %v2827
      %v2934 = vadd.f32 %v2670, %v2832
      %v2935 = vadd.f32 %v2671, %v2837
      %v2936 = vadd.f32 %v2672, %v2842
      %v2937 = vadd.f32 %v2673, %v2847
      %v2938 = vadd.f32 %v2674, %v2852
      %v2939 = vadd.f32 %v2675, %v2857
      %v2940 = vadd.f32 %v2676, %v2862
      %v2941 = vadd.f32 %v2677, %v2867
      %v2942 = vadd.f32 %v2678, %v2872
      %v2943 = vadd.f32 %v2679, %v2877
      %v2944 = vadd.f32 %v2680, %v2882
      %v2945 = vadd.f32 %v2681, %v2887
      %v2946 = vadd.f32 %v2682, %v2892
      %v2947 = vadd.f32 %v2683, %v2897
      %v2948 = vadd.f32 %v2684, %v2902
      %v2949 = vadd.f32 %v2685, %v2907
      %v2950 = vadd.f32 %v2686, %v2912
      %v2951 = vadd.f32 %v2687, %v2917
      %v2952 = vrot.slane %v872, 1
      %v2953 = vsel %vm1808, %v1871, %v2952
      %v2954 = vsel %vm1808, %v2952, %v1809
      %v2957 = vsel %vm1775, %v1814, 0.0
      %v2958 = vsel %vm1776, %v1816, 0.0
      %v2959 = vsel %vm1777, %v1818, 0.0
      %v2960 = vsel %vm1778, %v1820, 0.0
      %v2961 = vsel %vm1779, %v1822, 0.0
      %v2962 = vsel %vm1780, %v1824, 0.0
      %v2963 = vsel %vm1781, %v1826, 0.0
      %v2964 = vsel %vm1782, %v1828, 0.0
      %v2965 = vsel %vm1783, %v1830, 0.0
      %v2966 = vsel %vm1784, %v1832, 0.0
      %v2967 = vsel %vm1785, %v1834, 0.0
      %v2968 = vsel %vm1786, %v1836, 0.0
      %v2969 = vsel %vm1787, %v1838, 0.0
      %v2970 = vsel %vm1788, %v1840, 0.0
      %v2971 = vsel %vm1789, %v1842, 0.0
      %v2972 = vsel %vm1790, %v1844, 0.0
      %v2973 = vsel %vm1791, %v1846, 0.0
      %v2974 = vsel %vm1792, %v1848, 0.0
      %v2975 = vsel %vm1793, %v1850, 0.0
      %v2976 = vsel %vm1794, %v1852, 0.0
      %v2977 = vsel %vm1795, %v1854, 0.0
      %v2978 = vsel %vm1796, %v1856, 0.0
      %v2979 = vsel %vm1797, %v1858, 0.0
      %v2980 = vsel %vm1798, %v1860, 0.0
      %v2981 = vsel %vm1799, %v1862, 0.0
      %v2982 = vsel %vm1800, %v1864, 0.0
      %v2983 = vsel %vm1801, %v1866, 0.0
      %v2984 = vsel %vm1802, %v1868, 0.0
      %v2985 = vsel %vm1803, %v1870, 0.0
      %v2986 = vsel %vm1804, %v1872, 0.0
      %v2987 = vsel %vm1805, %v2953, 0.0
      %v2988 = vsel %vm1806, %v2954, 0.0
      %v2990 = vsel %vm1127, %v2957, 0
      %v2993 = vsel %vm1127, %v2958, 0
      %v2996 = vsel %vm1127, %v2959, 0
      %v2999 = vsel %vm1127, %v2960, 0
      %v3002 = vsel %vm1127, %v2961, 0
      %v3005 = vsel %vm1127, %v2962, 0
      %v3008 = vsel %vm1127, %v2963, 0
      %v3011 = vsel %vm1127, %v2964, 0
      %v3014 = vsel %vm1127, %v2965, 0
      %v3017 = vsel %vm1127, %v2966, 0
      %v3020 = vsel %vm1127, %v2967, 0
      %v3023 = vsel %vm1127, %v2968, 0
      %v3026 = vsel %vm1127, %v2969, 0
      %v3029 = vsel %vm1127, %v2970, 0
      %v3032 = vsel %vm1127, %v2971, 0
      %v3035 = vsel %vm1127, %v2972, 0
      %v3038 = vsel %vm1127, %v2973, 0
      %v3041 = vsel %vm1127, %v2974, 0
      %v3044 = vsel %vm1127, %v2975, 0
      %v3047 = vsel %vm1127, %v2976, 0
      %v3050 = vsel %vm1127, %v2977, 0
      %v3053 = vsel %vm1127, %v2978, 0
      %v3056 = vsel %vm1127, %v2979, 0
      %v3059 = vsel %vm1127, %v2980, 0
      %v3062 = vsel %vm1127, %v2981, 0
      %v3065 = vsel %vm1127, %v2982, 0
      %v3068 = vsel %vm1127, %v2983, 0
      %v3071 = vsel %vm1127, %v2984, 0
      %v3074 = vsel %vm1127, %v2985, 0
      %v3077 = vsel %vm1127, %v2986, 0
      %v3080 = vsel %vm1127, %v2987, 0
      %v3083 = vsel %vm1127, %v2988, 0
      %v3086 = vsel %vm1190, %v878, 0
      %3088 = vmatprep.subr.mxu0 0.0
      %3089 = vmatpush1.msra.mxu0 %v3086
      %3090 = vmatprep.subr.mxu0 0.0
      %3091 = vmatpush1.msra.mxu0 0.0
      %3092 = vmatprep.subr.mxu0 0.0
      %3093 = vmatpush1.msra.mxu0 0.0
      %3094 = vmatprep.subr.mxu0 0.0
      %3095 = vmatpush1.msra.mxu0 0.0
      %3096 = vmatprep.subr.mxu0 0.0
      %3097 = vmatpush1.msra.mxu0 0.0
      %3098 = vmatprep.subr.mxu0 0.0
      %3099 = vmatpush1.msra.mxu0 0.0
      %3100 = vmatprep.subr.mxu0 0.0
      %3101 = vmatpush1.msra.mxu0 0.0
      %3102 = vmatprep.subr.mxu0 0.0
      %3103 = vmatpush1.msra.mxu0 0.0
      %3104 = vmatprep.subr.mxu0 0.0
      %3105 = vmatpush1.msra.mxu0 0.0
      %3106 = vmatprep.subr.mxu0 0.0
      %3107 = vmatpush1.msra.mxu0 0.0
      %3108 = vmatprep.subr.mxu0 0.0
      %3109 = vmatpush1.msra.mxu0 0.0
      %3110 = vmatprep.subr.mxu0 0.0
      %3111 = vmatpush1.msra.mxu0 0.0
      %3112 = vmatprep.subr.mxu0 0.0
      %3113 = vmatpush1.msra.mxu0 0.0
      %3114 = vmatprep.subr.mxu0 0.0
      %3115 = vmatpush1.msra.mxu0 0.0
      %3116 = vmatprep.subr.mxu0 0.0
      %3117 = vmatpush1.msra.mxu0 0.0
      %3118 = vmatprep.subr.mxu0 0.0
      %3119 = vmatpush1.msra.mxu0 0.0
      %3120 = vmatprep.subr.mxu0 0.0
      %3121 = vmatpush1.msra.mxu0 0.0
      %3122 = vmatprep.subr.mxu0 0.0
      %3123 = vmatpush1.msra.mxu0 0.0
      %3124 = vmatprep.subr.mxu0 0.0
      %3125 = vmatpush1.msra.mxu0 0.0
      %3126 = vmatprep.subr.mxu0 0.0
      %3127 = vmatpush1.msra.mxu0 0.0
      %3128 = vmatprep.subr.mxu0 0.0
      %3129 = vmatpush1.msra.mxu0 0.0
      %3130 = vmatprep.subr.mxu0 0.0
      %3131 = vmatpush1.msra.mxu0 0.0
      %3132 = vmatprep.subr.mxu0 0.0
      %3133 = vmatpush1.msra.mxu0 0.0
      %3134 = vmatprep.subr.mxu0 0.0
      %3135 = vmatpush1.msra.mxu0 0.0
      %3136 = vmatprep.subr.mxu0 0.0
      %3137 = vmatpush1.msra.mxu0 0.0
      %3138 = vmatprep.subr.mxu0 0.0
      %3139 = vmatpush1.msra.mxu0 0.0
      %3140 = vmatprep.subr.mxu0 0.0
      %3141 = vmatpush1.msra.mxu0 0.0
      %3142 = vmatprep.subr.mxu0 0.0
      %3143 = vmatpush1.msra.mxu0 0.0
      %3144 = vmatprep.subr.mxu0 0.0
      %3145 = vmatpush1.msra.mxu0 0.0
      %3146 = vmatprep.subr.mxu0 0.0
      %3147 = vmatpush1.msra.mxu0 0.0
      %3148 = vmatprep.subr.mxu0 0.0
      %3149 = vmatpush1.msra.mxu0 0.0
      %3150 = vmatprep.subr.mxu0 0.0
      %3151 = vmatpush1.msra.mxu0 0.0
      %3152 = vmatprep.mubr.f32.mxu0 0.0
      %3153 = vmatmul.mubr.f32.gmra.mrb[0].mxu0 %v2990
      %v3154 = vpop.f32.mrb[0].mxu0
      %v3155 = vadd.f32 0.0, %v3154
      %v3156 = vpop.f32.mrb[0].mxu0
      %3157 = vmatprep.mubr.f32.mxu0 0.0
      %3158 = vmatmul.mubr.f32.gmra.mrb[0].mxu0 %v2993
      %v3159 = vpop.f32.mrb[0].mxu0
      %v3160 = vadd.f32 0.0, %v3159
      %v3161 = vpop.f32.mrb[0].mxu0
      %3162 = vmatprep.mubr.f32.mxu0 0.0
      %3163 = vmatmul.mubr.f32.gmra.mrb[0].mxu0 %v2996
      %v3164 = vpop.f32.mrb[0].mxu0
      %v3165 = vadd.f32 0.0, %v3164
      %v3166 = vpop.f32.mrb[0].mxu0
      %3167 = vmatprep.mubr.f32.mxu0 0.0
      %3168 = vmatmul.mubr.f32.gmra.mrb[0].mxu0 %v2999
      %v3169 = vpop.f32.mrb[0].mxu0
      %v3170 = vadd.f32 0.0, %v3169
      %v3171 = vpop.f32.mrb[0].mxu0
      %3172 = vmatprep.mubr.f32.mxu0 0.0
      %3173 = vmatmul.mubr.f32.gmra.mrb[0].mxu0 %v3002
      %v3174 = vpop.f32.mrb[0].mxu0
      %v3175 = vadd.f32 0.0, %v3174
      %v3176 = vpop.f32.mrb[0].mxu0
      %3177 = vmatprep.mubr.f32.mxu0 0.0
      %3178 = vmatmul.mubr.f32.gmra.mrb[0].mxu0 %v3005
      %v3179 = vpop.f32.mrb[0].mxu0
      %v3180 = vadd.f32 0.0, %v3179
      %v3181 = vpop.f32.mrb[0].mxu0
      %3182 = vmatprep.mubr.f32.mxu0 0.0
      %3183 = vmatmul.mubr.f32.gmra.mrb[0].mxu0 %v3008
      %v3184 = vpop.f32.mrb[0].mxu0
      %v3185 = vadd.f32 0.0, %v3184
      %v3186 = vpop.f32.mrb[0].mxu0
      %3187 = vmatprep.mubr.f32.mxu0 0.0
      %3188 = vmatmul.mubr.f32.gmra.mrb[0].mxu0 %v3011
      %v3189 = vpop.f32.mrb[0].mxu0
      %v3190 = vadd.f32 0.0, %v3189
      %v3191 = vpop.f32.mrb[0].mxu0
      %3192 = vmatprep.mubr.f32.mxu0 0.0
      %3193 = vmatmul.mubr.f32.gmra.mrb[0].mxu0 %v3014
      %v3194 = vpop.f32.mrb[0].mxu0
      %v3195 = vadd.f32 0.0, %v3194
      %v3196 = vpop.f32.mrb[0].mxu0
      %3197 = vmatprep.mubr.f32.mxu0 0.0
      %3198 = vmatmul.mubr.f32.gmra.mrb[0].mxu0 %v3017
      %v3199 = vpop.f32.mrb[0].mxu0
      %v3200 = vadd.f32 0.0, %v3199
      %v3201 = vpop.f32.mrb[0].mxu0
      %3202 = vmatprep.mubr.f32.mxu0 0.0
      %3203 = vmatmul.mubr.f32.gmra.mrb[0].mxu0 %v3020
      %v3204 = vpop.f32.mrb[0].mxu0
      %v3205 = vadd.f32 0.0, %v3204
      %v3206 = vpop.f32.mrb[0].mxu0
      %3207 = vmatprep.mubr.f32.mxu0 0.0
      %3208 = vmatmul.mubr.f32.gmra.mrb[0].mxu0 %v3023
      %v3209 = vpop.f32.mrb[0].mxu0
      %v3210 = vadd.f32 0.0, %v3209
      %v3211 = vpop.f32.mrb[0].mxu0
      %3212 = vmatprep.mubr.f32.mxu0 0.0
      %3213 = vmatmul.mubr.f32.gmra.mrb[0].mxu0 %v3026
      %v3214 = vpop.f32.mrb[0].mxu0
      %v3215 = vadd.f32 0.0, %v3214
      %v3216 = vpop.f32.mrb[0].mxu0
      %3217 = vmatprep.mubr.f32.mxu0 0.0
      %3218 = vmatmul.mubr.f32.gmra.mrb[0].mxu0 %v3029
      %v3219 = vpop.f32.mrb[0].mxu0
      %v3220 = vadd.f32 0.0, %v3219
      %v3221 = vpop.f32.mrb[0].mxu0
      %3222 = vmatprep.mubr.f32.mxu0 0.0
      %3223 = vmatmul.mubr.f32.gmra.mrb[0].mxu0 %v3032
      %v3224 = vpop.f32.mrb[0].mxu0
      %v3225 = vadd.f32 0.0, %v3224
      %v3226 = vpop.f32.mrb[0].mxu0
      %3227 = vmatprep.mubr.f32.mxu0 0.0
      %3228 = vmatmul.mubr.f32.gmra.mrb[0].mxu0 %v3035
      %v3229 = vpop.f32.mrb[0].mxu0
      %v3230 = vadd.f32 0.0, %v3229
      %v3231 = vpop.f32.mrb[0].mxu0
      %3232 = vmatprep.mubr.f32.mxu0 0.0
      %3233 = vmatmul.mubr.f32.gmra.mrb[0].mxu0 %v3038
      %v3234 = vpop.f32.mrb[0].mxu0
      %v3235 = vadd.f32 0.0, %v3234
      %v3236 = vpop.f32.mrb[0].mxu0
      %3237 = vmatprep.mubr.f32.mxu0 0.0
      %3238 = vmatmul.mubr.f32.gmra.mrb[0].mxu0 %v3041
      %v3239 = vpop.f32.mrb[0].mxu0
      %v3240 = vadd.f32 0.0, %v3239
      %v3241 = vpop.f32.mrb[0].mxu0
      %3242 = vmatprep.mubr.f32.mxu0 0.0
      %3243 = vmatmul.mubr.f32.gmra.mrb[0].mxu0 %v3044
      %v3244 = vpop.f32.mrb[0].mxu0
      %v3245 = vadd.f32 0.0, %v3244
      %v3246 = vpop.f32.mrb[0].mxu0
      %3247 = vmatprep.mubr.f32.mxu0 0.0
      %3248 = vmatmul.mubr.f32.gmra.mrb[0].mxu0 %v3047
      %v3249 = vpop.f32.mrb[0].mxu0
      %v3250 = vadd.f32 0.0, %v3249
      %v3251 = vpop.f32.mrb[0].mxu0
      %3252 = vmatprep.mubr.f32.mxu0 0.0
      %3253 = vmatmul.mubr.f32.gmra.mrb[0].mxu0 %v3050
      %v3254 = vpop.f32.mrb[0].mxu0
      %v3255 = vadd.f32 0.0, %v3254
      %v3256 = vpop.f32.mrb[0].mxu0
      %3257 = vmatprep.mubr.f32.mxu0 0.0
      %3258 = vmatmul.mubr.f32.gmra.mrb[0].mxu0 %v3053
      %v3259 = vpop.f32.mrb[0].mxu0
      %v3260 = vadd.f32 0.0, %v3259
      %v3261 = vpop.f32.mrb[0].mxu0
      %3262 = vmatprep.mubr.f32.mxu0 0.0
      %3263 = vmatmul.mubr.f32.gmra.mrb[0].mxu0 %v3056
      %v3264 = vpop.f32.mrb[0].mxu0
      %v3265 = vadd.f32 0.0, %v3264
      %v3266 = vpop.f32.mrb[0].mxu0
      %3267 = vmatprep.mubr.f32.mxu0 0.0
      %3268 = vmatmul.mubr.f32.gmra.mrb[0].mxu0 %v3059
      %v3269 = vpop.f32.mrb[0].mxu0
      %v3270 = vadd.f32 0.0, %v3269
      %v3271 = vpop.f32.mrb[0].mxu0
      %3272 = vmatprep.mubr.f32.mxu0 0.0
      %3273 = vmatmul.mubr.f32.gmra.mrb[0].mxu0 %v3062
      %v3274 = vpop.f32.mrb[0].mxu0
      %v3275 = vadd.f32 0.0, %v3274
      %v3276 = vpop.f32.mrb[0].mxu0
      %3277 = vmatprep.mubr.f32.mxu0 0.0
      %3278 = vmatmul.mubr.f32.gmra.mrb[0].mxu0 %v3065
      %v3279 = vpop.f32.mrb[0].mxu0
      %v3280 = vadd.f32 0.0, %v3279
      %v3281 = vpop.f32.mrb[0].mxu0
      %3282 = vmatprep.mubr.f32.mxu0 0.0
      %3283 = vmatmul.mubr.f32.gmra.mrb[0].mxu0 %v3068
      %v3284 = vpop.f32.mrb[0].mxu0
      %v3285 = vadd.f32 0.0, %v3284
      %v3286 = vpop.f32.mrb[0].mxu0
      %3287 = vmatprep.mubr.f32.mxu0 0.0
      %3288 = vmatmul.mubr.f32.gmra.mrb[0].mxu0 %v3071
      %v3289 = vpop.f32.mrb[0].mxu0
      %v3290 = vadd.f32 0.0, %v3289
      %v3291 = vpop.f32.mrb[0].mxu0
      %3292 = vmatprep.mubr.f32.mxu0 0.0
      %3293 = vmatmul.mubr.f32.gmra.mrb[0].mxu0 %v3074
      %v3294 = vpop.f32.mrb[0].mxu0
      %v3295 = vadd.f32 0.0, %v3294
      %v3296 = vpop.f32.mrb[0].mxu0
      %3297 = vmatprep.mubr.f32.mxu0 0.0
      %3298 = vmatmul.mubr.f32.gmra.mrb[0].mxu0 %v3077
      %v3299 = vpop.f32.mrb[0].mxu0
      %v3300 = vadd.f32 0.0, %v3299
      %v3301 = vpop.f32.mrb[0].mxu0
      %3302 = vmatprep.mubr.f32.mxu0 0.0
      %3303 = vmatmul.mubr.f32.gmra.mrb[0].mxu0 %v3080
      %v3304 = vpop.f32.mrb[0].mxu0
      %v3305 = vadd.f32 0.0, %v3304
      %v3306 = vpop.f32.mrb[0].mxu0
      %3307 = vmatprep.mubr.f32.mxu0 0.0
      %3308 = vmatmul.mubr.f32.gmra.mrb[0].mxu0 %v3083
      %v3309 = vpop.f32.mrb[0].mxu0
      %v3310 = vadd.f32 0.0, %v3309
      %v3311 = vpop.f32.mrb[0].mxu0
      %3312 = vdwg.mxu0
      %v3313 = vadd.f32 %v2920, %v3155
      %v3314 = vadd.f32 %v2921, %v3160
      %v3315 = vadd.f32 %v2922, %v3165
      %v3316 = vadd.f32 %v2923, %v3170
      %v3317 = vadd.f32 %v2924, %v3175
      %v3318 = vadd.f32 %v2925, %v3180
      %v3319 = vadd.f32 %v2926, %v3185
      %v3320 = vadd.f32 %v2927, %v3190
      %v3321 = vadd.f32 %v2928, %v3195
      %v3322 = vadd.f32 %v2929, %v3200
      %v3323 = vadd.f32 %v2930, %v3205
      %v3324 = vadd.f32 %v2931, %v3210
      %v3325 = vadd.f32 %v2932, %v3215
      %v3326 = vadd.f32 %v2933, %v3220
      %v3327 = vadd.f32 %v2934, %v3225
      %v3328 = vadd.f32 %v2935, %v3230
      %v3329 = vadd.f32 %v2936, %v3235
      %v3330 = vadd.f32 %v2937, %v3240
      %v3331 = vadd.f32 %v2938, %v3245
      %v3332 = vadd.f32 %v2939, %v3250
      %v3333 = vadd.f32 %v2940, %v3255
      %v3334 = vadd.f32 %v2941, %v3260
      %v3335 = vadd.f32 %v2942, %v3265
      %v3336 = vadd.f32 %v2943, %v3270
      %v3337 = vadd.f32 %v2944, %v3275
      %v3338 = vadd.f32 %v2945, %v3280
      %v3339 = vadd.f32 %v2946, %v3285
      %v3340 = vadd.f32 %v2947, %v3290
      %v3341 = vadd.f32 %v2948, %v3295
      %v3342 = vadd.f32 %v2949, %v3300
      %v3343 = vadd.f32 %v2950, %v3305
      %v3344 = vadd.f32 %v2951, %v3310
      %v3345 = vsel %vm1001, %v2296, %v1002
      %v3347 = vsel %vm938, %v1009, 0.0
      %v3348 = vsel %vm939, %v1011, 0.0
      %v3349 = vsel %vm940, %v1013, 0.0
      %v3350 = vsel %vm941, %v1015, 0.0
      %v3351 = vsel %vm942, %v1017, 0.0
      %v3352 = vsel %vm943, %v1019, 0.0
      %v3353 = vsel %vm944, %v1021, 0.0
      %v3354 = vsel %vm945, %v1023, 0.0
      %v3355 = vsel %vm946, %v1025, 0.0
      %v3356 = vsel %vm947, %v1027, 0.0
      %v3357 = vsel %vm948, %v1029, 0.0
      %v3358 = vsel %vm949, %v1031, 0.0
      %v3359 = vsel %vm950, %v1033, 0.0
      %v3360 = vsel %vm951, %v1035, 0.0
      %v3361 = vsel %vm952, %v1037, 0.0
      %v3362 = vsel %vm953, %v1039, 0.0
      %v3363 = vsel %vm954, %v1041, 0.0
      %v3364 = vsel %vm955, %v1043, 0.0
      %v3365 = vsel %vm956, %v1045, 0.0
      %v3366 = vsel %vm957, %v1047, 0.0
      %v3367 = vsel %vm958, %v1049, 0.0
      %v3368 = vsel %vm959, %v1051, 0.0
      %v3369 = vsel %vm960, %v1053, 0.0
      %v3370 = vsel %vm961, %v1055, 0.0
      %v3371 = vsel %vm962, %v1057, 0.0
      %v3372 = vsel %vm963, %v1059, 0.0
      %v3373 = vsel %vm964, %v1061, 0.0
      %v3374 = vsel %vm965, %v1063, 0.0
      %v3375 = vsel %vm966, %v2295, 0.0
      %v3376 = vsel %vm967, %v2297, 0.0
      %v3377 = vsel %vm968, %v3345, 0.0
      %v3378 = vsel %vm969, %v1003, 0.0
      %v3380 = vsel %vm1127, %v3347, 0
      %v3383 = vsel %vm1127, %v3348, 0
      %v3386 = vsel %vm1127, %v3349, 0
      %v3389 = vsel %vm1127, %v3350, 0
      %v3392 = vsel %vm1127, %v3351, 0
      %v3395 = vsel %vm1127, %v3352, 0
      %v3398 = vsel %vm1127, %v3353, 0
      %v3401 = vsel %vm1127, %v3354, 0
      %v3404 = vsel %vm1127, %v3355, 0
      %v3407 = vsel %vm1127, %v3356, 0
      %v3410 = vsel %vm1127, %v3357, 0
      %v3413 = vsel %vm1127, %v3358, 0
      %v3416 = vsel %vm1127, %v3359, 0
      %v3419 = vsel %vm1127, %v3360, 0
      %v3422 = vsel %vm1127, %v3361, 0
      %v3425 = vsel %vm1127, %v3362, 0
      %v3428 = vsel %vm1127, %v3363, 0
      %v3431 = vsel %vm1127, %v3364, 0
      %v3434 = vsel %vm1127, %v3365, 0
      %v3437 = vsel %vm1127, %v3366, 0
      %v3440 = vsel %vm1127, %v3367, 0
      %v3443 = vsel %vm1127, %v3368, 0
      %v3446 = vsel %vm1127, %v3369, 0
      %v3449 = vsel %vm1127, %v3370, 0
      %v3452 = vsel %vm1127, %v3371, 0
      %v3455 = vsel %vm1127, %v3372, 0
      %v3458 = vsel %vm1127, %v3373, 0
      %v3461 = vsel %vm1127, %v3374, 0
      %v3464 = vsel %vm1127, %v3375, 0
      %v3467 = vsel %vm1127, %v3376, 0
      %v3470 = vsel %vm1127, %v3377, 0
      %v3473 = vsel %vm1127, %v3378, 0
      %v3476 = vsel %vm1190, %v879, 0
      %3478 = vmatprep.subr.mxu0 0.0
      %3479 = vmatpush1.msra.mxu0 %v3476
      %3480 = vmatprep.subr.mxu0 0.0
      %3481 = vmatpush1.msra.mxu0 0.0
      %3482 = vmatprep.subr.mxu0 0.0
      %3483 = vmatpush1.msra.mxu0 0.0
      %3484 = vmatprep.subr.mxu0 0.0
      %3485 = vmatpush1.msra.mxu0 0.0
      %3486 = vmatprep.subr.mxu0 0.0
      %3487 = vmatpush1.msra.mxu0 0.0
      %3488 = vmatprep.subr.mxu0 0.0
      %3489 = vmatpush1.msra.mxu0 0.0
      %3490 = vmatprep.subr.mxu0 0.0
      %3491 = vmatpush1.msra.mxu0 0.0
      %3492 = vmatprep.subr.mxu0 0.0
      %3493 = vmatpush1.msra.mxu0 0.0
      %3494 = vmatprep.subr.mxu0 0.0
      %3495 = vmatpush1.msra.mxu0 0.0
      %3496 = vmatprep.subr.mxu0 0.0
      %3497 = vmatpush1.msra.mxu0 0.0
      %3498 = vmatprep.subr.mxu0 0.0
      %3499 = vmatpush1.msra.mxu0 0.0
      %3500 = vmatprep.subr.mxu0 0.0
      %3501 = vmatpush1.msra.mxu0 0.0
      %3502 = vmatprep.subr.mxu0 0.0
      %3503 = vmatpush1.msra.mxu0 0.0
      %3504 = vmatprep.subr.mxu0 0.0
      %3505 = vmatpush1.msra.mxu0 0.0
      %3506 = vmatprep.subr.mxu0 0.0
      %3507 = vmatpush1.msra.mxu0 0.0
      %3508 = vmatprep.subr.mxu0 0.0
      %3509 = vmatpush1.msra.mxu0 0.0
      %3510 = vmatprep.subr.mxu0 0.0
      %3511 = vmatpush1.msra.mxu0 0.0
      %3512 = vmatprep.subr.mxu0 0.0
      %3513 = vmatpush1.msra.mxu0 0.0
      %3514 = vmatprep.subr.mxu0 0.0
      %3515 = vmatpush1.msra.mxu0 0.0
      %3516 = vmatprep.subr.mxu0 0.0
      %3517 = vmatpush1.msra.mxu0 0.0
      %3518 = vmatprep.subr.mxu0 0.0
      %3519 = vmatpush1.msra.mxu0 0.0
      %3520 = vmatprep.subr.mxu0 0.0
      %3521 = vmatpush1.msra.mxu0 0.0
      %3522 = vmatprep.subr.mxu0 0.0
      %3523 = vmatpush1.msra.mxu0 0.0
      %3524 = vmatprep.subr.mxu0 0.0
      %3525 = vmatpush1.msra.mxu0 0.0
      %3526 = vmatprep.subr.mxu0 0.0
      %3527 = vmatpush1.msra.mxu0 0.0
      %3528 = vmatprep.subr.mxu0 0.0
      %3529 = vmatpush1.msra.mxu0 0.0
      %3530 = vmatprep.subr.mxu0 0.0
      %3531 = vmatpush1.msra.mxu0 0.0
      %3532 = vmatprep.subr.mxu0 0.0
      %3533 = vmatpush1.msra.mxu0 0.0
      %3534 = vmatprep.subr.mxu0 0.0
      %3535 = vmatpush1.msra.mxu0 0.0
      %3536 = vmatprep.subr.mxu0 0.0
      %3537 = vmatpush1.msra.mxu0 0.0
      %3538 = vmatprep.subr.mxu0 0.0
      %3539 = vmatpush1.msra.mxu0 0.0
      %3540 = vmatprep.subr.mxu0 0.0
      %3541 = vmatpush1.msra.mxu0 0.0
      %3542 = vmatprep.mubr.f32.mxu0 0.0
      %3543 = vmatmul.mubr.f32.gmra.mrb[0].mxu0 %v3380
      %v3544 = vpop.f32.mrb[0].mxu0
      %v3545 = vadd.f32 0.0, %v3544
      %v3546 = vpop.f32.mrb[0].mxu0
      %3547 = vmatprep.mubr.f32.mxu0 0.0
      %3548 = vmatmul.mubr.f32.gmra.mrb[0].mxu0 %v3383
      %v3549 = vpop.f32.mrb[0].mxu0
      %v3550 = vadd.f32 0.0, %v3549
      %v3551 = vpop.f32.mrb[0].mxu0
      %3552 = vmatprep.mubr.f32.mxu0 0.0
      %3553 = vmatmul.mubr.f32.gmra.mrb[0].mxu0 %v3386
      %v3554 = vpop.f32.mrb[0].mxu0
      %v3555 = vadd.f32 0.0, %v3554
      %v3556 = vpop.f32.mrb[0].mxu0
      %3557 = vmatprep.mubr.f32.mxu0 0.0
      %3558 = vmatmul.mubr.f32.gmra.mrb[0].mxu0 %v3389
      %v3559 = vpop.f32.mrb[0].mxu0
      %v3560 = vadd.f32 0.0, %v3559
      %v3561 = vpop.f32.mrb[0].mxu0
      %3562 = vmatprep.mubr.f32.mxu0 0.0
      %3563 = vmatmul.mubr.f32.gmra.mrb[0].mxu0 %v3392
      %v3564 = vpop.f32.mrb[0].mxu0
      %v3565 = vadd.f32 0.0, %v3564
      %v3566 = vpop.f32.mrb[0].mxu0
      %3567 = vmatprep.mubr.f32.mxu0 0.0
      %3568 = vmatmul.mubr.f32.gmra.mrb[0].mxu0 %v3395
      %v3569 = vpop.f32.mrb[0].mxu0
      %v3570 = vadd.f32 0.0, %v3569
      %v3571 = vpop.f32.mrb[0].mxu0
      %3572 = vmatprep.mubr.f32.mxu0 0.0
      %3573 = vmatmul.mubr.f32.gmra.mrb[0].mxu0 %v3398
      %v3574 = vpop.f32.mrb[0].mxu0
      %v3575 = vadd.f32 0.0, %v3574
      %v3576 = vpop.f32.mrb[0].mxu0
      %3577 = vmatprep.mubr.f32.mxu0 0.0
      %3578 = vmatmul.mubr.f32.gmra.mrb[0].mxu0 %v3401
      %v3579 = vpop.f32.mrb[0].mxu0
      %v3580 = vadd.f32 0.0, %v3579
      %v3581 = vpop.f32.mrb[0].mxu0
      %3582 = vmatprep.mubr.f32.mxu0 0.0
      %3583 = vmatmul.mubr.f32.gmra.mrb[0].mxu0 %v3404
      %v3584 = vpop.f32.mrb[0].mxu0
      %v3585 = vadd.f32 0.0, %v3584
      %v3586 = vpop.f32.mrb[0].mxu0
      %3587 = vmatprep.mubr.f32.mxu0 0.0
      %3588 = vmatmul.mubr.f32.gmra.mrb[0].mxu0 %v3407
      %v3589 = vpop.f32.mrb[0].mxu0
      %v3590 = vadd.f32 0.0, %v3589
      %v3591 = vpop.f32.mrb[0].mxu0
      %3592 = vmatprep.mubr.f32.mxu0 0.0
      %3593 = vmatmul.mubr.f32.gmra.mrb[0].mxu0 %v3410
      %v3594 = vpop.f32.mrb[0].mxu0
      %v3595 = vadd.f32 0.0, %v3594
      %v3596 = vpop.f32.mrb[0].mxu0
      %3597 = vmatprep.mubr.f32.mxu0 0.0
      %3598 = vmatmul.mubr.f32.gmra.mrb[0].mxu0 %v3413
      %v3599 = vpop.f32.mrb[0].mxu0
      %v3600 = vadd.f32 0.0, %v3599
      %v3601 = vpop.f32.mrb[0].mxu0
      %3602 = vmatprep.mubr.f32.mxu0 0.0
      %3603 = vmatmul.mubr.f32.gmra.mrb[0].mxu0 %v3416
      %v3604 = vpop.f32.mrb[0].mxu0
      %v3605 = vadd.f32 0.0, %v3604
      %v3606 = vpop.f32.mrb[0].mxu0
      %3607 = vmatprep.mubr.f32.mxu0 0.0
      %3608 = vmatmul.mubr.f32.gmra.mrb[0].mxu0 %v3419
      %v3609 = vpop.f32.mrb[0].mxu0
      %v3610 = vadd.f32 0.0, %v3609
      %v3611 = vpop.f32.mrb[0].mxu0
      %3612 = vmatprep.mubr.f32.mxu0 0.0
      %3613 = vmatmul.mubr.f32.gmra.mrb[0].mxu0 %v3422
      %v3614 = vpop.f32.mrb[0].mxu0
      %v3615 = vadd.f32 0.0, %v3614
      %v3616 = vpop.f32.mrb[0].mxu0
      %3617 = vmatprep.mubr.f32.mxu0 0.0
      %3618 = vmatmul.mubr.f32.gmra.mrb[0].mxu0 %v3425
      %v3619 = vpop.f32.mrb[0].mxu0
      %v3620 = vadd.f32 0.0, %v3619
      %v3621 = vpop.f32.mrb[0].mxu0
      %3622 = vmatprep.mubr.f32.mxu0 0.0
      %3623 = vmatmul.mubr.f32.gmra.mrb[0].mxu0 %v3428
      %v3624 = vpop.f32.mrb[0].mxu0
      %v3625 = vadd.f32 0.0, %v3624
      %v3626 = vpop.f32.mrb[0].mxu0
      %3627 = vmatprep.mubr.f32.mxu0 0.0
      %3628 = vmatmul.mubr.f32.gmra.mrb[0].mxu0 %v3431
      %v3629 = vpop.f32.mrb[0].mxu0
      %v3630 = vadd.f32 0.0, %v3629
      %v3631 = vpop.f32.mrb[0].mxu0
      %3632 = vmatprep.mubr.f32.mxu0 0.0
      %3633 = vmatmul.mubr.f32.gmra.mrb[0].mxu0 %v3434
      %v3634 = vpop.f32.mrb[0].mxu0
      %v3635 = vadd.f32 0.0, %v3634
      %v3636 = vpop.f32.mrb[0].mxu0
      %3637 = vmatprep.mubr.f32.mxu0 0.0
      %3638 = vmatmul.mubr.f32.gmra.mrb[0].mxu0 %v3437
      %v3639 = vpop.f32.mrb[0].mxu0
      %v3640 = vadd.f32 0.0, %v3639
      %v3641 = vpop.f32.mrb[0].mxu0
      %3642 = vmatprep.mubr.f32.mxu0 0.0
      %3643 = vmatmul.mubr.f32.gmra.mrb[0].mxu0 %v3440
      %v3644 = vpop.f32.mrb[0].mxu0
      %v3645 = vadd.f32 0.0, %v3644
      %v3646 = vpop.f32.mrb[0].mxu0
      %3647 = vmatprep.mubr.f32.mxu0 0.0
      %3648 = vmatmul.mubr.f32.gmra.mrb[0].mxu0 %v3443
      %v3649 = vpop.f32.mrb[0].mxu0
      %v3650 = vadd.f32 0.0, %v3649
      %v3651 = vpop.f32.mrb[0].mxu0
      %3652 = vmatprep.mubr.f32.mxu0 0.0
      %3653 = vmatmul.mubr.f32.gmra.mrb[0].mxu0 %v3446
      %v3654 = vpop.f32.mrb[0].mxu0
      %v3655 = vadd.f32 0.0, %v3654
      %v3656 = vpop.f32.mrb[0].mxu0
      %3657 = vmatprep.mubr.f32.mxu0 0.0
      %3658 = vmatmul.mubr.f32.gmra.mrb[0].mxu0 %v3449
      %v3659 = vpop.f32.mrb[0].mxu0
      %v3660 = vadd.f32 0.0, %v3659
      %v3661 = vpop.f32.mrb[0].mxu0
      %3662 = vmatprep.mubr.f32.mxu0 0.0
      %3663 = vmatmul.mubr.f32.gmra.mrb[0].mxu0 %v3452
      %v3664 = vpop.f32.mrb[0].mxu0
      %v3665 = vadd.f32 0.0, %v3664
      %v3666 = vpop.f32.mrb[0].mxu0
      %3667 = vmatprep.mubr.f32.mxu0 0.0
      %3668 = vmatmul.mubr.f32.gmra.mrb[0].mxu0 %v3455
      %v3669 = vpop.f32.mrb[0].mxu0
      %v3670 = vadd.f32 0.0, %v3669
      %v3671 = vpop.f32.mrb[0].mxu0
      %3672 = vmatprep.mubr.f32.mxu0 0.0
      %3673 = vmatmul.mubr.f32.gmra.mrb[0].mxu0 %v3458
      %v3674 = vpop.f32.mrb[0].mxu0
      %v3675 = vadd.f32 0.0, %v3674
      %v3676 = vpop.f32.mrb[0].mxu0
      %3677 = vmatprep.mubr.f32.mxu0 0.0
      %3678 = vmatmul.mubr.f32.gmra.mrb[0].mxu0 %v3461
      %v3679 = vpop.f32.mrb[0].mxu0
      %v3680 = vadd.f32 0.0, %v3679
      %v3681 = vpop.f32.mrb[0].mxu0
      %3682 = vmatprep.mubr.f32.mxu0 0.0
      %3683 = vmatmul.mubr.f32.gmra.mrb[0].mxu0 %v3464
      %v3684 = vpop.f32.mrb[0].mxu0
      %v3685 = vadd.f32 0.0, %v3684
      %v3686 = vpop.f32.mrb[0].mxu0
      %3687 = vmatprep.mubr.f32.mxu0 0.0
      %3688 = vmatmul.mubr.f32.gmra.mrb[0].mxu0 %v3467
      %v3689 = vpop.f32.mrb[0].mxu0
      %v3690 = vadd.f32 0.0, %v3689
      %v3691 = vpop.f32.mrb[0].mxu0
      %3692 = vmatprep.mubr.f32.mxu0 0.0
      %3693 = vmatmul.mubr.f32.gmra.mrb[0].mxu0 %v3470
      %v3694 = vpop.f32.mrb[0].mxu0
      %v3695 = vadd.f32 0.0, %v3694
      %v3696 = vpop.f32.mrb[0].mxu0
      %3697 = vmatprep.mubr.f32.mxu0 0.0
      %3698 = vmatmul.mubr.f32.gmra.mrb[0].mxu0 %v3473
      %v3699 = vpop.f32.mrb[0].mxu0
      %v3700 = vadd.f32 0.0, %v3699
      %v3701 = vpop.f32.mrb[0].mxu0
      %3702 = vdwg.mxu0
      %v3703 = vadd.f32 %v3313, %v3545
      %v3704 = vadd.f32 %v3314, %v3550
      %v3705 = vadd.f32 %v3315, %v3555
      %v3706 = vadd.f32 %v3316, %v3560
      %v3707 = vadd.f32 %v3317, %v3565
      %v3708 = vadd.f32 %v3318, %v3570
      %v3709 = vadd.f32 %v3319, %v3575
      %v3710 = vadd.f32 %v3320, %v3580
      %v3711 = vadd.f32 %v3321, %v3585
      %v3712 = vadd.f32 %v3322, %v3590
      %v3713 = vadd.f32 %v3323, %v3595
      %v3714 = vadd.f32 %v3324, %v3600
      %v3715 = vadd.f32 %v3325, %v3605
      %v3716 = vadd.f32 %v3326, %v3610
      %v3717 = vadd.f32 %v3327, %v3615
      %v3718 = vadd.f32 %v3328, %v3620
      %v3719 = vadd.f32 %v3329, %v3625
      %v3720 = vadd.f32 %v3330, %v3630
      %v3721 = vadd.f32 %v3331, %v3635
      %v3722 = vadd.f32 %v3332, %v3640
      %v3723 = vadd.f32 %v3333, %v3645
      %v3724 = vadd.f32 %v3334, %v3650
      %v3725 = vadd.f32 %v3335, %v3655
      %v3726 = vadd.f32 %v3336, %v3660
      %v3727 = vadd.f32 %v3337, %v3665
      %v3728 = vadd.f32 %v3338, %v3670
      %v3729 = vadd.f32 %v3339, %v3675
      %v3730 = vadd.f32 %v3340, %v3680
      %v3731 = vadd.f32 %v3341, %v3685
      %v3732 = vadd.f32 %v3342, %v3690
      %v3733 = vadd.f32 %v3343, %v3695
      %v3734 = vadd.f32 %v3344, %v3700
      %v3736 = vsel %vm1190, %v880, 0
      %3738 = vmatprep.subr.mxu0 0.0
      %3739 = vmatpush1.msra.mxu0 %v3736
      %3740 = vmatprep.subr.mxu0 0.0
      %3741 = vmatpush1.msra.mxu0 0.0
      %3742 = vmatprep.subr.mxu0 0.0
      %3743 = vmatpush1.msra.mxu0 0.0
      %3744 = vmatprep.subr.mxu0 0.0
      %3745 = vmatpush1.msra.mxu0 0.0
      %3746 = vmatprep.subr.mxu0 0.0
      %3747 = vmatpush1.msra.mxu0 0.0
      %3748 = vmatprep.subr.mxu0 0.0
      %3749 = vmatpush1.msra.mxu0 0.0
      %3750 = vmatprep.subr.mxu0 0.0
      %3751 = vmatpush1.msra.mxu0 0.0
      %3752 = vmatprep.subr.mxu0 0.0
      %3753 = vmatpush1.msra.mxu0 0.0
      %3754 = vmatprep.subr.mxu0 0.0
      %3755 = vmatpush1.msra.mxu0 0.0
      %3756 = vmatprep.subr.mxu0 0.0
      %3757 = vmatpush1.msra.mxu0 0.0
      %3758 = vmatprep.subr.mxu0 0.0
      %3759 = vmatpush1.msra.mxu0 0.0
      %3760 = vmatprep.subr.mxu0 0.0
      %3761 = vmatpush1.msra.mxu0 0.0
      %3762 = vmatprep.subr.mxu0 0.0
      %3763 = vmatpush1.msra.mxu0 0.0
      %3764 = vmatprep.subr.mxu0 0.0
      %3765 = vmatpush1.msra.mxu0 0.0
      %3766 = vmatprep.subr.mxu0 0.0
      %3767 = vmatpush1.msra.mxu0 0.0
      %3768 = vmatprep.subr.mxu0 0.0
      %3769 = vmatpush1.msra.mxu0 0.0
      %3770 = vmatprep.subr.mxu0 0.0
      %3771 = vmatpush1.msra.mxu0 0.0
      %3772 = vmatprep.subr.mxu0 0.0
      %3773 = vmatpush1.msra.mxu0 0.0
      %3774 = vmatprep.subr.mxu0 0.0
      %3775 = vmatpush1.msra.mxu0 0.0
      %3776 = vmatprep.subr.mxu0 0.0
      %3777 = vmatpush1.msra.mxu0 0.0
      %3778 = vmatprep.subr.mxu0 0.0
      %3779 = vmatpush1.msra.mxu0 0.0
      %3780 = vmatprep.subr.mxu0 0.0
      %3781 = vmatpush1.msra.mxu0 0.0
      %3782 = vmatprep.subr.mxu0 0.0
      %3783 = vmatpush1.msra.mxu0 0.0
      %3784 = vmatprep.subr.mxu0 0.0
      %3785 = vmatpush1.msra.mxu0 0.0
      %3786 = vmatprep.subr.mxu0 0.0
      %3787 = vmatpush1.msra.mxu0 0.0
      %3788 = vmatprep.subr.mxu0 0.0
      %3789 = vmatpush1.msra.mxu0 0.0
      %3790 = vmatprep.subr.mxu0 0.0
      %3791 = vmatpush1.msra.mxu0 0.0
      %3792 = vmatprep.subr.mxu0 0.0
      %3793 = vmatpush1.msra.mxu0 0.0
      %3794 = vmatprep.subr.mxu0 0.0
      %3795 = vmatpush1.msra.mxu0 0.0
      %3796 = vmatprep.subr.mxu0 0.0
      %3797 = vmatpush1.msra.mxu0 0.0
      %3798 = vmatprep.subr.mxu0 0.0
      %3799 = vmatpush1.msra.mxu0 0.0
      %3800 = vmatprep.subr.mxu0 0.0
      %3801 = vmatpush1.msra.mxu0 0.0
      %3802 = vmatprep.mubr.f32.mxu0 0.0
      %3803 = vmatmul.mubr.f32.gmra.mrb[0].mxu0 %v1134
      %v3804 = vpop.f32.mrb[0].mxu0
      %v3805 = vadd.f32 0.0, %v3804
      %v3806 = vpop.f32.mrb[0].mxu0
      %3807 = vmatprep.mubr.f32.mxu0 0.0
      %3808 = vmatmul.mubr.f32.gmra.mrb[0].mxu0 %v1136
      %v3809 = vpop.f32.mrb[0].mxu0
      %v3810 = vadd.f32 0.0, %v3809
      %v3811 = vpop.f32.mrb[0].mxu0
      %3812 = vmatprep.mubr.f32.mxu0 0.0
      %3813 = vmatmul.mubr.f32.gmra.mrb[0].mxu0 %v1138
      %v3814 = vpop.f32.mrb[0].mxu0
      %v3815 = vadd.f32 0.0, %v3814
      %v3816 = vpop.f32.mrb[0].mxu0
      %3817 = vmatprep.mubr.f32.mxu0 0.0
      %3818 = vmatmul.mubr.f32.gmra.mrb[0].mxu0 %v1140
      %v3819 = vpop.f32.mrb[0].mxu0
      %v3820 = vadd.f32 0.0, %v3819
      %v3821 = vpop.f32.mrb[0].mxu0
      %3822 = vmatprep.mubr.f32.mxu0 0.0
      %3823 = vmatmul.mubr.f32.gmra.mrb[0].mxu0 %v1142
      %v3824 = vpop.f32.mrb[0].mxu0
      %v3825 = vadd.f32 0.0, %v3824
      %v3826 = vpop.f32.mrb[0].mxu0
      %3827 = vmatprep.mubr.f32.mxu0 0.0
      %3828 = vmatmul.mubr.f32.gmra.mrb[0].mxu0 %v1144
      %v3829 = vpop.f32.mrb[0].mxu0
      %v3830 = vadd.f32 0.0, %v3829
      %v3831 = vpop.f32.mrb[0].mxu0
      %3832 = vmatprep.mubr.f32.mxu0 0.0
      %3833 = vmatmul.mubr.f32.gmra.mrb[0].mxu0 %v1146
      %v3834 = vpop.f32.mrb[0].mxu0
      %v3835 = vadd.f32 0.0, %v3834
      %v3836 = vpop.f32.mrb[0].mxu0
      %3837 = vmatprep.mubr.f32.mxu0 0.0
      %3838 = vmatmul.mubr.f32.gmra.mrb[0].mxu0 %v1148
      %v3839 = vpop.f32.mrb[0].mxu0
      %v3840 = vadd.f32 0.0, %v3839
      %v3841 = vpop.f32.mrb[0].mxu0
      %3842 = vmatprep.mubr.f32.mxu0 0.0
      %3843 = vmatmul.mubr.f32.gmra.mrb[0].mxu0 %v1150
      %v3844 = vpop.f32.mrb[0].mxu0
      %v3845 = vadd.f32 0.0, %v3844
      %v3846 = vpop.f32.mrb[0].mxu0
      %3847 = vmatprep.mubr.f32.mxu0 0.0
      %3848 = vmatmul.mubr.f32.gmra.mrb[0].mxu0 %v1152
      %v3849 = vpop.f32.mrb[0].mxu0
      %v3850 = vadd.f32 0.0, %v3849
      %v3851 = vpop.f32.mrb[0].mxu0
      %3852 = vmatprep.mubr.f32.mxu0 0.0
      %3853 = vmatmul.mubr.f32.gmra.mrb[0].mxu0 %v1154
      %v3854 = vpop.f32.mrb[0].mxu0
      %v3855 = vadd.f32 0.0, %v3854
      %v3856 = vpop.f32.mrb[0].mxu0
      %3857 = vmatprep.mubr.f32.mxu0 0.0
      %3858 = vmatmul.mubr.f32.gmra.mrb[0].mxu0 %v1156
      %v3859 = vpop.f32.mrb[0].mxu0
      %v3860 = vadd.f32 0.0, %v3859
      %v3861 = vpop.f32.mrb[0].mxu0
      %3862 = vmatprep.mubr.f32.mxu0 0.0
      %3863 = vmatmul.mubr.f32.gmra.mrb[0].mxu0 %v1158
      %v3864 = vpop.f32.mrb[0].mxu0
      %v3865 = vadd.f32 0.0, %v3864
      %v3866 = vpop.f32.mrb[0].mxu0
      %3867 = vmatprep.mubr.f32.mxu0 0.0
      %3868 = vmatmul.mubr.f32.gmra.mrb[0].mxu0 %v1160
      %v3869 = vpop.f32.mrb[0].mxu0
      %v3870 = vadd.f32 0.0, %v3869
      %v3871 = vpop.f32.mrb[0].mxu0
      %3872 = vmatprep.mubr.f32.mxu0 0.0
      %3873 = vmatmul.mubr.f32.gmra.mrb[0].mxu0 %v1162
      %v3874 = vpop.f32.mrb[0].mxu0
      %v3875 = vadd.f32 0.0, %v3874
      %v3876 = vpop.f32.mrb[0].mxu0
      %3877 = vmatprep.mubr.f32.mxu0 0.0
      %3878 = vmatmul.mubr.f32.gmra.mrb[0].mxu0 %v1164
      %v3879 = vpop.f32.mrb[0].mxu0
      %v3880 = vadd.f32 0.0, %v3879
      %v3881 = vpop.f32.mrb[0].mxu0
      %3882 = vmatprep.mubr.f32.mxu0 0.0
      %3883 = vmatmul.mubr.f32.gmra.mrb[0].mxu0 %v1166
      %v3884 = vpop.f32.mrb[0].mxu0
      %v3885 = vadd.f32 0.0, %v3884
      %v3886 = vpop.f32.mrb[0].mxu0
      %3887 = vmatprep.mubr.f32.mxu0 0.0
      %3888 = vmatmul.mubr.f32.gmra.mrb[0].mxu0 %v1168
      %v3889 = vpop.f32.mrb[0].mxu0
      %v3890 = vadd.f32 0.0, %v3889
      %v3891 = vpop.f32.mrb[0].mxu0
      %3892 = vmatprep.mubr.f32.mxu0 0.0
      %3893 = vmatmul.mubr.f32.gmra.mrb[0].mxu0 %v1170
      %v3894 = vpop.f32.mrb[0].mxu0
      %v3895 = vadd.f32 0.0, %v3894
      %v3896 = vpop.f32.mrb[0].mxu0
      %3897 = vmatprep.mubr.f32.mxu0 0.0
      %3898 = vmatmul.mubr.f32.gmra.mrb[0].mxu0 %v1172
      %v3899 = vpop.f32.mrb[0].mxu0
      %v3900 = vadd.f32 0.0, %v3899
      %v3901 = vpop.f32.mrb[0].mxu0
      %3902 = vmatprep.mubr.f32.mxu0 0.0
      %3903 = vmatmul.mubr.f32.gmra.mrb[0].mxu0 %v1174
      %v3904 = vpop.f32.mrb[0].mxu0
      %v3905 = vadd.f32 0.0, %v3904
      %v3906 = vpop.f32.mrb[0].mxu0
      %3907 = vmatprep.mubr.f32.mxu0 0.0
      %3908 = vmatmul.mubr.f32.gmra.mrb[0].mxu0 %v1176
      %v3909 = vpop.f32.mrb[0].mxu0
      %v3910 = vadd.f32 0.0, %v3909
      %v3911 = vpop.f32.mrb[0].mxu0
      %3912 = vmatprep.mubr.f32.mxu0 0.0
      %3913 = vmatmul.mubr.f32.gmra.mrb[0].mxu0 %v1178
      %v3914 = vpop.f32.mrb[0].mxu0
      %v3915 = vadd.f32 0.0, %v3914
      %v3916 = vpop.f32.mrb[0].mxu0
      %3917 = vmatprep.mubr.f32.mxu0 0.0
      %3918 = vmatmul.mubr.f32.gmra.mrb[0].mxu0 %v1180
      %v3919 = vpop.f32.mrb[0].mxu0
      %v3920 = vadd.f32 0.0, %v3919
      %v3921 = vpop.f32.mrb[0].mxu0
      %3922 = vmatprep.mubr.f32.mxu0 0.0
      %3923 = vmatmul.mubr.f32.gmra.mrb[0].mxu0 %v1182
      %v3924 = vpop.f32.mrb[0].mxu0
      %v3925 = vadd.f32 0.0, %v3924
      %v3926 = vpop.f32.mrb[0].mxu0
      %3927 = vmatprep.mubr.f32.mxu0 0.0
      %3928 = vmatmul.mubr.f32.gmra.mrb[0].mxu0 %v1184
      %v3929 = vpop.f32.mrb[0].mxu0
      %v3930 = vadd.f32 0.0, %v3929
      %v3931 = vpop.f32.mrb[0].mxu0
      %3932 = vmatprep.mubr.f32.mxu0 0.0
      %3933 = vmatmul.mubr.f32.gmra.mrb[0].mxu0 %v1186
      %v3934 = vpop.f32.mrb[0].mxu0
      %v3935 = vadd.f32 0.0, %v3934
      %v3936 = vpop.f32.mrb[0].mxu0
      %3937 = vmatprep.mubr.f32.mxu0 0.0
      %3938 = vmatmul.mubr.f32.gmra.mrb[0].mxu0 %v1188
      %v3939 = vpop.f32.mrb[0].mxu0
      %v3940 = vadd.f32 0.0, %v3939
      %v3941 = vpop.f32.mrb[0].mxu0
      %3942 = vmatprep.mubr.f32.mxu0 0.0
      %3943 = vmatmul.mubr.f32.gmra.mrb[0].mxu0 %v2688
      %v3944 = vpop.f32.mrb[0].mxu0
      %v3945 = vadd.f32 0.0, %v3944
      %v3946 = vpop.f32.mrb[0].mxu0
      %3947 = vmatprep.mubr.f32.mxu0 0.0
      %3948 = vmatmul.mubr.f32.gmra.mrb[0].mxu0 %v2690
      %v3949 = vpop.f32.mrb[0].mxu0
      %v3950 = vadd.f32 0.0, %v3949
      %v3951 = vpop.f32.mrb[0].mxu0
      %3952 = vmatprep.mubr.f32.mxu0 0.0
      %3953 = vmatmul.mubr.f32.gmra.mrb[0].mxu0 %v1128
      %v3954 = vpop.f32.mrb[0].mxu0
      %v3955 = vadd.f32 0.0, %v3954
      %v3956 = vpop.f32.mrb[0].mxu0
      %3957 = vmatprep.mubr.f32.mxu0 0.0
      %3958 = vmatmul.mubr.f32.gmra.mrb[0].mxu0 %v1128
      %v3959 = vpop.f32.mrb[0].mxu0
      %v3960 = vadd.f32 0.0, %v3959
      %v3961 = vpop.f32.mrb[0].mxu0
      %3962 = vdwg.mxu0
      %v3963 = vadd.f32 %v3703, %v3805
      %v3964 = vadd.f32 %v3704, %v3810
      %v3965 = vadd.f32 %v3705, %v3815
      %v3966 = vadd.f32 %v3706, %v3820
      %v3967 = vadd.f32 %v3707, %v3825
      %v3968 = vadd.f32 %v3708, %v3830
      %v3969 = vadd.f32 %v3709, %v3835
      %v3970 = vadd.f32 %v3710, %v3840
      %v3971 = vadd.f32 %v3711, %v3845
      %v3972 = vadd.f32 %v3712, %v3850
      %v3973 = vadd.f32 %v3713, %v3855
      %v3974 = vadd.f32 %v3714, %v3860
      %v3975 = vadd.f32 %v3715, %v3865
      %v3976 = vadd.f32 %v3716, %v3870
      %v3977 = vadd.f32 %v3717, %v3875
      %v3978 = vadd.f32 %v3718, %v3880
      %v3979 = vadd.f32 %v3719, %v3885
      %v3980 = vadd.f32 %v3720, %v3890
      %v3981 = vadd.f32 %v3721, %v3895
      %v3982 = vadd.f32 %v3722, %v3900
      %v3983 = vadd.f32 %v3723, %v3905
      %v3984 = vadd.f32 %v3724, %v3910
      %v3985 = vadd.f32 %v3725, %v3915
      %v3986 = vadd.f32 %v3726, %v3920
      %v3987 = vadd.f32 %v3727, %v3925
      %v3988 = vadd.f32 %v3728, %v3930
      %v3989 = vadd.f32 %v3729, %v3935
      %v3990 = vadd.f32 %v3730, %v3940
      %v3991 = vadd.f32 %v3731, %v3945
      %v3992 = vadd.f32 %v3732, %v3950
      %v3993 = vadd.f32 %v3733, %v3955
      %v3994 = vadd.f32 %v3734, %v3960
      %v3995 = vsel %vm1775, %v1818, 0.0
      %v3996 = vsel %vm1776, %v1820, 0.0
      %v3997 = vsel %vm1777, %v1822, 0.0
      %v3998 = vsel %vm1778, %v1824, 0.0
      %v3999 = vsel %vm1779, %v1826, 0.0
      %v4000 = vsel %vm1780, %v1828, 0.0
      %v4001 = vsel %vm1781, %v1830, 0.0
      %v4002 = vsel %vm1782, %v1832, 0.0
      %v4003 = vsel %vm1783, %v1834, 0.0
      %v4004 = vsel %vm1784, %v1836, 0.0
      %v4005 = vsel %vm1785, %v1838, 0.0
      %v4006 = vsel %vm1786, %v1840, 0.0
      %v4007 = vsel %vm1787, %v1842, 0.0
      %v4008 = vsel %vm1788, %v1844, 0.0
      %v4009 = vsel %vm1789, %v1846, 0.0
      %v4010 = vsel %vm1790, %v1848, 0.0
      %v4011 = vsel %vm1791, %v1850, 0.0
      %v4012 = vsel %vm1792, %v1852, 0.0
      %v4013 = vsel %vm1793, %v1854, 0.0
      %v4014 = vsel %vm1794, %v1856, 0.0
      %v4015 = vsel %vm1795, %v1858, 0.0
      %v4016 = vsel %vm1796, %v1860, 0.0
      %v4017 = vsel %vm1797, %v1862, 0.0
      %v4018 = vsel %vm1798, %v1864, 0.0
      %v4019 = vsel %vm1799, %v1866, 0.0
      %v4020 = vsel %vm1800, %v1868, 0.0
      %v4021 = vsel %vm1801, %v1870, 0.0
      %v4022 = vsel %vm1802, %v1872, 0.0
      %v4023 = vsel %vm1803, %v2953, 0.0
      %v4024 = vsel %vm1804, %v2954, 0.0
      %v4025 = vsel %vm1805, %v1810, 0.0
      %v4026 = vsel %vm1806, %v1810, 0.0
      %v4028 = vsel %vm1127, %v3995, 0
      %v4031 = vsel %vm1127, %v3996, 0
      %v4034 = vsel %vm1127, %v3997, 0
      %v4037 = vsel %vm1127, %v3998, 0
      %v4040 = vsel %vm1127, %v3999, 0
      %v4043 = vsel %vm1127, %v4000, 0
      %v4046 = vsel %vm1127, %v4001, 0
      %v4049 = vsel %vm1127, %v4002, 0
      %v4052 = vsel %vm1127, %v4003, 0
      %v4055 = vsel %vm1127, %v4004, 0
      %v4058 = vsel %vm1127, %v4005, 0
      %v4061 = vsel %vm1127, %v4006, 0
      %v4064 = vsel %vm1127, %v4007, 0
      %v4067 = vsel %vm1127, %v4008, 0
      %v4070 = vsel %vm1127, %v4009, 0
      %v4073 = vsel %vm1127, %v4010, 0
      %v4076 = vsel %vm1127, %v4011, 0
      %v4079 = vsel %vm1127, %v4012, 0
      %v4082 = vsel %vm1127, %v4013, 0
      %v4085 = vsel %vm1127, %v4014, 0
      %v4088 = vsel %vm1127, %v4015, 0
      %v4091 = vsel %vm1127, %v4016, 0
      %v4094 = vsel %vm1127, %v4017, 0
      %v4097 = vsel %vm1127, %v4018, 0
      %v4100 = vsel %vm1127, %v4019, 0
      %v4103 = vsel %vm1127, %v4020, 0
      %v4106 = vsel %vm1127, %v4021, 0
      %v4109 = vsel %vm1127, %v4022, 0
      %v4112 = vsel %vm1127, %v4023, 0
      %v4115 = vsel %vm1127, %v4024, 0
      %v4118 = vsel %vm1127, %v4025, 0
      %v4121 = vsel %vm1127, %v4026, 0
      %v4124 = vsel %vm1190, %v881, 0
      %4126 = vmatprep.subr.mxu0 0.0
      %4127 = vmatpush1.msra.mxu0 %v4124
      %4128 = vmatprep.subr.mxu0 0.0
      %4129 = vmatpush1.msra.mxu0 0.0
      %4130 = vmatprep.subr.mxu0 0.0
      %4131 = vmatpush1.msra.mxu0 0.0
      %4132 = vmatprep.subr.mxu0 0.0
      %4133 = vmatpush1.msra.mxu0 0.0
      %4134 = vmatprep.subr.mxu0 0.0
      %4135 = vmatpush1.msra.mxu0 0.0
      %4136 = vmatprep.subr.mxu0 0.0
      %4137 = vmatpush1.msra.mxu0 0.0
      %4138 = vmatprep.subr.mxu0 0.0
      %4139 = vmatpush1.msra.mxu0 0.0
      %4140 = vmatprep.subr.mxu0 0.0
      %4141 = vmatpush1.msra.mxu0 0.0
      %4142 = vmatprep.subr.mxu0 0.0
      %4143 = vmatpush1.msra.mxu0 0.0
      %4144 = vmatprep.subr.mxu0 0.0
      %4145 = vmatpush1.msra.mxu0 0.0
      %4146 = vmatprep.subr.mxu0 0.0
      %4147 = vmatpush1.msra.mxu0 0.0
      %4148 = vmatprep.subr.mxu0 0.0
      %4149 = vmatpush1.msra.mxu0 0.0
      %4150 = vmatprep.subr.mxu0 0.0
      %4151 = vmatpush1.msra.mxu0 0.0
      %4152 = vmatprep.subr.mxu0 0.0
      %4153 = vmatpush1.msra.mxu0 0.0
      %4154 = vmatprep.subr.mxu0 0.0
      %4155 = vmatpush1.msra.mxu0 0.0
      %4156 = vmatprep.subr.mxu0 0.0
      %4157 = vmatpush1.msra.mxu0 0.0
      %4158 = vmatprep.subr.mxu0 0.0
      %4159 = vmatpush1.msra.mxu0 0.0
      %4160 = vmatprep.subr.mxu0 0.0
      %4161 = vmatpush1.msra.mxu0 0.0
      %4162 = vmatprep.subr.mxu0 0.0
      %4163 = vmatpush1.msra.mxu0 0.0
      %4164 = vmatprep.subr.mxu0 0.0
      %4165 = vmatpush1.msra.mxu0 0.0
      %4166 = vmatprep.subr.mxu0 0.0
      %4167 = vmatpush1.msra.mxu0 0.0
      %4168 = vmatprep.subr.mxu0 0.0
      %4169 = vmatpush1.msra.mxu0 0.0
      %4170 = vmatprep.subr.mxu0 0.0
      %4171 = vmatpush1.msra.mxu0 0.0
      %4172 = vmatprep.subr.mxu0 0.0
      %4173 = vmatpush1.msra.mxu0 0.0
      %4174 = vmatprep.subr.mxu0 0.0
      %4175 = vmatpush1.msra.mxu0 0.0
      %4176 = vmatprep.subr.mxu0 0.0
      %4177 = vmatpush1.msra.mxu0 0.0
      %4178 = vmatprep.subr.mxu0 0.0
      %4179 = vmatpush1.msra.mxu0 0.0
      %4180 = vmatprep.subr.mxu0 0.0
      %4181 = vmatpush1.msra.mxu0 0.0
      %4182 = vmatprep.subr.mxu0 0.0
      %4183 = vmatpush1.msra.mxu0 0.0
      %4184 = vmatprep.subr.mxu0 0.0
      %4185 = vmatpush1.msra.mxu0 0.0
      %4186 = vmatprep.subr.mxu0 0.0
      %4187 = vmatpush1.msra.mxu0 0.0
      %4188 = vmatprep.subr.mxu0 0.0
      %4189 = vmatpush1.msra.mxu0 0.0
      %4190 = vmatprep.mubr.f32.mxu0 0.0
      %4191 = vmatmul.mubr.f32.gmra.mrb[0].mxu0 %v4028
      %v4192 = vpop.f32.mrb[0].mxu0
      %v4193 = vadd.f32 0.0, %v4192
      %v4194 = vpop.f32.mrb[0].mxu0
      %4195 = vmatprep.mubr.f32.mxu0 0.0
      %4196 = vmatmul.mubr.f32.gmra.mrb[0].mxu0 %v4031
      %v4197 = vpop.f32.mrb[0].mxu0
      %v4198 = vadd.f32 0.0, %v4197
      %v4199 = vpop.f32.mrb[0].mxu0
      %4200 = vmatprep.mubr.f32.mxu0 0.0
      %4201 = vmatmul.mubr.f32.gmra.mrb[0].mxu0 %v4034
      %v4202 = vpop.f32.mrb[0].mxu0
      %v4203 = vadd.f32 0.0, %v4202
      %v4204 = vpop.f32.mrb[0].mxu0
      %4205 = vmatprep.mubr.f32.mxu0 0.0
      %4206 = vmatmul.mubr.f32.gmra.mrb[0].mxu0 %v4037
      %v4207 = vpop.f32.mrb[0].mxu0
      %v4208 = vadd.f32 0.0, %v4207
      %v4209 = vpop.f32.mrb[0].mxu0
      %4210 = vmatprep.mubr.f32.mxu0 0.0
      %4211 = vmatmul.mubr.f32.gmra.mrb[0].mxu0 %v4040
      %v4212 = vpop.f32.mrb[0].mxu0
      %v4213 = vadd.f32 0.0, %v4212
      %v4214 = vpop.f32.mrb[0].mxu0
      %4215 = vmatprep.mubr.f32.mxu0 0.0
      %4216 = vmatmul.mubr.f32.gmra.mrb[0].mxu0 %v4043
      %v4217 = vpop.f32.mrb[0].mxu0
      %v4218 = vadd.f32 0.0, %v4217
      %v4219 = vpop.f32.mrb[0].mxu0
      %4220 = vmatprep.mubr.f32.mxu0 0.0
      %4221 = vmatmul.mubr.f32.gmra.mrb[0].mxu0 %v4046
      %v4222 = vpop.f32.mrb[0].mxu0
      %v4223 = vadd.f32 0.0, %v4222
      %v4224 = vpop.f32.mrb[0].mxu0
      %4225 = vmatprep.mubr.f32.mxu0 0.0
      %4226 = vmatmul.mubr.f32.gmra.mrb[0].mxu0 %v4049
      %v4227 = vpop.f32.mrb[0].mxu0
      %v4228 = vadd.f32 0.0, %v4227
      %v4229 = vpop.f32.mrb[0].mxu0
      %4230 = vmatprep.mubr.f32.mxu0 0.0
      %4231 = vmatmul.mubr.f32.gmra.mrb[0].mxu0 %v4052
      %v4232 = vpop.f32.mrb[0].mxu0
      %v4233 = vadd.f32 0.0, %v4232
      %v4234 = vpop.f32.mrb[0].mxu0
      %4235 = vmatprep.mubr.f32.mxu0 0.0
      %4236 = vmatmul.mubr.f32.gmra.mrb[0].mxu0 %v4055
      %v4237 = vpop.f32.mrb[0].mxu0
      %v4238 = vadd.f32 0.0, %v4237
      %v4239 = vpop.f32.mrb[0].mxu0
      %4240 = vmatprep.mubr.f32.mxu0 0.0
      %4241 = vmatmul.mubr.f32.gmra.mrb[0].mxu0 %v4058
      %v4242 = vpop.f32.mrb[0].mxu0
      %v4243 = vadd.f32 0.0, %v4242
      %v4244 = vpop.f32.mrb[0].mxu0
      %4245 = vmatprep.mubr.f32.mxu0 0.0
      %4246 = vmatmul.mubr.f32.gmra.mrb[0].mxu0 %v4061
      %v4247 = vpop.f32.mrb[0].mxu0
      %v4248 = vadd.f32 0.0, %v4247
      %v4249 = vpop.f32.mrb[0].mxu0
      %4250 = vmatprep.mubr.f32.mxu0 0.0
      %4251 = vmatmul.mubr.f32.gmra.mrb[0].mxu0 %v4064
      %v4252 = vpop.f32.mrb[0].mxu0
      %v4253 = vadd.f32 0.0, %v4252
      %v4254 = vpop.f32.mrb[0].mxu0
      %4255 = vmatprep.mubr.f32.mxu0 0.0
      %4256 = vmatmul.mubr.f32.gmra.mrb[0].mxu0 %v4067
      %v4257 = vpop.f32.mrb[0].mxu0
      %v4258 = vadd.f32 0.0, %v4257
      %v4259 = vpop.f32.mrb[0].mxu0
      %4260 = vmatprep.mubr.f32.mxu0 0.0
      %4261 = vmatmul.mubr.f32.gmra.mrb[0].mxu0 %v4070
      %v4262 = vpop.f32.mrb[0].mxu0
      %v4263 = vadd.f32 0.0, %v4262
      %v4264 = vpop.f32.mrb[0].mxu0
      %4265 = vmatprep.mubr.f32.mxu0 0.0
      %4266 = vmatmul.mubr.f32.gmra.mrb[0].mxu0 %v4073
      %v4267 = vpop.f32.mrb[0].mxu0
      %v4268 = vadd.f32 0.0, %v4267
      %v4269 = vpop.f32.mrb[0].mxu0
      %4270 = vmatprep.mubr.f32.mxu0 0.0
      %4271 = vmatmul.mubr.f32.gmra.mrb[0].mxu0 %v4076
      %v4272 = vpop.f32.mrb[0].mxu0
      %v4273 = vadd.f32 0.0, %v4272
      %v4274 = vpop.f32.mrb[0].mxu0
      %4275 = vmatprep.mubr.f32.mxu0 0.0
      %4276 = vmatmul.mubr.f32.gmra.mrb[0].mxu0 %v4079
      %v4277 = vpop.f32.mrb[0].mxu0
      %v4278 = vadd.f32 0.0, %v4277
      %v4279 = vpop.f32.mrb[0].mxu0
      %4280 = vmatprep.mubr.f32.mxu0 0.0
      %4281 = vmatmul.mubr.f32.gmra.mrb[0].mxu0 %v4082
      %v4282 = vpop.f32.mrb[0].mxu0
      %v4283 = vadd.f32 0.0, %v4282
      %v4284 = vpop.f32.mrb[0].mxu0
      %4285 = vmatprep.mubr.f32.mxu0 0.0
      %4286 = vmatmul.mubr.f32.gmra.mrb[0].mxu0 %v4085
      %v4287 = vpop.f32.mrb[0].mxu0
      %v4288 = vadd.f32 0.0, %v4287
      %v4289 = vpop.f32.mrb[0].mxu0
      %4290 = vmatprep.mubr.f32.mxu0 0.0
      %4291 = vmatmul.mubr.f32.gmra.mrb[0].mxu0 %v4088
      %v4292 = vpop.f32.mrb[0].mxu0
      %v4293 = vadd.f32 0.0, %v4292
      %v4294 = vpop.f32.mrb[0].mxu0
      %4295 = vmatprep.mubr.f32.mxu0 0.0
      %4296 = vmatmul.mubr.f32.gmra.mrb[0].mxu0 %v4091
      %v4297 = vpop.f32.mrb[0].mxu0
      %v4298 = vadd.f32 0.0, %v4297
      %v4299 = vpop.f32.mrb[0].mxu0
      %4300 = vmatprep.mubr.f32.mxu0 0.0
      %4301 = vmatmul.mubr.f32.gmra.mrb[0].mxu0 %v4094
      %v4302 = vpop.f32.mrb[0].mxu0
      %v4303 = vadd.f32 0.0, %v4302
      %v4304 = vpop.f32.mrb[0].mxu0
      %4305 = vmatprep.mubr.f32.mxu0 0.0
      %4306 = vmatmul.mubr.f32.gmra.mrb[0].mxu0 %v4097
      %v4307 = vpop.f32.mrb[0].mxu0
      %v4308 = vadd.f32 0.0, %v4307
      %v4309 = vpop.f32.mrb[0].mxu0
      %4310 = vmatprep.mubr.f32.mxu0 0.0
      %4311 = vmatmul.mubr.f32.gmra.mrb[0].mxu0 %v4100
      %v4312 = vpop.f32.mrb[0].mxu0
      %v4313 = vadd.f32 0.0, %v4312
      %v4314 = vpop.f32.mrb[0].mxu0
      %4315 = vmatprep.mubr.f32.mxu0 0.0
      %4316 = vmatmul.mubr.f32.gmra.mrb[0].mxu0 %v4103
      %v4317 = vpop.f32.mrb[0].mxu0
      %v4318 = vadd.f32 0.0, %v4317
      %v4319 = vpop.f32.mrb[0].mxu0
      %4320 = vmatprep.mubr.f32.mxu0 0.0
      %4321 = vmatmul.mubr.f32.gmra.mrb[0].mxu0 %v4106
      %v4322 = vpop.f32.mrb[0].mxu0
      %v4323 = vadd.f32 0.0, %v4322
      %v4324 = vpop.f32.mrb[0].mxu0
      %4325 = vmatprep.mubr.f32.mxu0 0.0
      %4326 = vmatmul.mubr.f32.gmra.mrb[0].mxu0 %v4109
      %v4327 = vpop.f32.mrb[0].mxu0
      %v4328 = vadd.f32 0.0, %v4327
      %v4329 = vpop.f32.mrb[0].mxu0
      %4330 = vmatprep.mubr.f32.mxu0 0.0
      %4331 = vmatmul.mubr.f32.gmra.mrb[0].mxu0 %v4112
      %v4332 = vpop.f32.mrb[0].mxu0
      %v4333 = vadd.f32 0.0, %v4332
      %v4334 = vpop.f32.mrb[0].mxu0
      %4335 = vmatprep.mubr.f32.mxu0 0.0
      %4336 = vmatmul.mubr.f32.gmra.mrb[0].mxu0 %v4115
      %v4337 = vpop.f32.mrb[0].mxu0
      %v4338 = vadd.f32 0.0, %v4337
      %v4339 = vpop.f32.mrb[0].mxu0
      %4340 = vmatprep.mubr.f32.mxu0 0.0
      %4341 = vmatmul.mubr.f32.gmra.mrb[0].mxu0 %v4118
      %v4342 = vpop.f32.mrb[0].mxu0
      %v4343 = vadd.f32 0.0, %v4342
      %v4344 = vpop.f32.mrb[0].mxu0
      %4345 = vmatprep.mubr.f32.mxu0 0.0
      %4346 = vmatmul.mubr.f32.gmra.mrb[0].mxu0 %v4121
      %v4347 = vpop.f32.mrb[0].mxu0
      %v4348 = vadd.f32 0.0, %v4347
      %v4349 = vpop.f32.mrb[0].mxu0
      %4350 = vdwg.mxu0
      %v4351 = vadd.f32 %v3963, %v4193
      %v4352 = vadd.f32 %v3964, %v4198
      %v4353 = vadd.f32 %v3965, %v4203
      %v4354 = vadd.f32 %v3966, %v4208
      %v4355 = vadd.f32 %v3967, %v4213
      %v4356 = vadd.f32 %v3968, %v4218
      %v4357 = vadd.f32 %v3969, %v4223
      %v4358 = vadd.f32 %v3970, %v4228
      %v4359 = vadd.f32 %v3971, %v4233
      %v4360 = vadd.f32 %v3972, %v4238
      %v4361 = vadd.f32 %v3973, %v4243
      %v4362 = vadd.f32 %v3974, %v4248
      %v4363 = vadd.f32 %v3975, %v4253
      %v4364 = vadd.f32 %v3976, %v4258
      %v4365 = vadd.f32 %v3977, %v4263
      %v4366 = vadd.f32 %v3978, %v4268
      %v4367 = vadd.f32 %v3979, %v4273
      %v4368 = vadd.f32 %v3980, %v4278
      %v4369 = vadd.f32 %v3981, %v4283
      %v4370 = vadd.f32 %v3982, %v4288
      %v4371 = vadd.f32 %v3983, %v4293
      %v4372 = vadd.f32 %v3984, %v4298
      %v4373 = vadd.f32 %v3985, %v4303
      %v4374 = vadd.f32 %v3986, %v4308
      %v4375 = vadd.f32 %v3987, %v4313
      %v4376 = vadd.f32 %v3988, %v4318
      %v4377 = vadd.f32 %v3989, %v4323
      %v4378 = vadd.f32 %v3990, %v4328
      %v4379 = vadd.f32 %v3991, %v4333
      %v4380 = vadd.f32 %v3992, %v4338
      %v4381 = vadd.f32 %v3993, %v4343
      %v4382 = vadd.f32 %v3994, %v4348
      %v4384 = vlaneseq
      %v4385 = vshrl.u32 %v4384, 7
      %v4386 = vsub.s32 0, %v4385
      %v4387 = vrot.slane %v905, %v4386
      %v4389 = vadd.f32 %v4351, %v4387
      %v4390 = vadd.f32 %v4352, %v4387
      %v4391 = vadd.f32 %v4353, %v4387
      %v4392 = vadd.f32 %v4354, %v4387
      %v4393 = vadd.f32 %v4355, %v4387
      %v4394 = vadd.f32 %v4356, %v4387
      %v4395 = vadd.f32 %v4357, %v4387
      %v4396 = vadd.f32 %v4358, %v4387
      %v4397 = vadd.f32 %v4359, %v4387
      %v4398 = vadd.f32 %v4360, %v4387
      %v4399 = vadd.f32 %v4361, %v4387
      %v4400 = vadd.f32 %v4362, %v4387
      %v4401 = vadd.f32 %v4363, %v4387
      %v4402 = vadd.f32 %v4364, %v4387
      %v4403 = vadd.f32 %v4365, %v4387
      %v4404 = vadd.f32 %v4366, %v4387
      %v4405 = vadd.f32 %v4367, %v4387
      %v4406 = vadd.f32 %v4368, %v4387
      %v4407 = vadd.f32 %v4369, %v4387
      %v4408 = vadd.f32 %v4370, %v4387
      %v4409 = vadd.f32 %v4371, %v4387
      %v4410 = vadd.f32 %v4372, %v4387
      %v4411 = vadd.f32 %v4373, %v4387
      %v4412 = vadd.f32 %v4374, %v4387
      %v4413 = vadd.f32 %v4375, %v4387
      %v4414 = vadd.f32 %v4376, %v4387
      %v4415 = vadd.f32 %v4377, %v4387
      %v4416 = vadd.f32 %v4378, %v4387
      %v4417 = vadd.f32 %v4379, %v4387
      %v4418 = vadd.f32 %v4380, %v4387
      %v4419 = vadd.f32 %v4381, %v4387
      %v4420 = vadd.f32 %v4382, %v4387
      %v4421 = vmax.f32 %v4389, 0.0
      %v4422 = vmax.f32 %v4390, 0.0
      %v4423 = vmax.f32 %v4391, 0.0
      %v4424 = vmax.f32 %v4392, 0.0
      %v4425 = vmax.f32 %v4393, 0.0
      %v4426 = vmax.f32 %v4394, 0.0
      %v4427 = vmax.f32 %v4395, 0.0
      %v4428 = vmax.f32 %v4396, 0.0
      %v4429 = vmax.f32 %v4397, 0.0
      %v4430 = vmax.f32 %v4398, 0.0
      %v4431 = vmax.f32 %v4399, 0.0
      %v4432 = vmax.f32 %v4400, 0.0
      %v4433 = vmax.f32 %v4401, 0.0
      %v4434 = vmax.f32 %v4402, 0.0
      %v4435 = vmax.f32 %v4403, 0.0
      %v4436 = vmax.f32 %v4404, 0.0
      %v4437 = vmax.f32 %v4405, 0.0
      %v4438 = vmax.f32 %v4406, 0.0
      %v4439 = vmax.f32 %v4407, 0.0
      %v4440 = vmax.f32 %v4408, 0.0
      %v4441 = vmax.f32 %v4409, 0.0
      %v4442 = vmax.f32 %v4410, 0.0
      %v4443 = vmax.f32 %v4411, 0.0
      %v4444 = vmax.f32 %v4412, 0.0
      %v4445 = vmax.f32 %v4413, 0.0
      %v4446 = vmax.f32 %v4414, 0.0
      %v4447 = vmax.f32 %v4415, 0.0
      %v4448 = vmax.f32 %v4416, 0.0
      %v4449 = vmax.f32 %v4417, 0.0
      %v4450 = vmax.f32 %v4418, 0.0
      %v4451 = vmax.f32 %v4419, 0.0
      %v4452 = vmax.f32 %v4420, 0.0
      %v4483 = vrot.slane %v4421, 7
      %v4484 = vsel %vm1001, %v1002, %v4483
      %v4485 = vrot.slane %v4422, 7
      %v4486 = vsel %vm1001, %v4483, %v4485
      %v4487 = vrot.slane %v4423, 7
      %v4488 = vsel %vm1001, %v4485, %v4487
      %v4489 = vrot.slane %v4424, 7
      %v4490 = vsel %vm1001, %v4487, %v4489
      %v4491 = vrot.slane %v4425, 7
      %v4492 = vsel %vm1001, %v4489, %v4491
      %v4493 = vrot.slane %v4426, 7
      %v4494 = vsel %vm1001, %v4491, %v4493
      %v4495 = vrot.slane %v4427, 7
      %v4496 = vsel %vm1001, %v4493, %v4495
      %v4497 = vrot.slane %v4428, 7
      %v4498 = vsel %vm1001, %v4495, %v4497
      %v4499 = vrot.slane %v4429, 7
      %v4500 = vsel %vm1001, %v4497, %v4499
      %v4501 = vrot.slane %v4430, 7
      %v4502 = vsel %vm1001, %v4499, %v4501
      %v4503 = vrot.slane %v4431, 7
      %v4504 = vsel %vm1001, %v4501, %v4503
      %v4505 = vrot.slane %v4432, 7
      %v4506 = vsel %vm1001, %v4503, %v4505
      %v4507 = vrot.slane %v4433, 7
      %v4508 = vsel %vm1001, %v4505, %v4507
      %v4509 = vrot.slane %v4434, 7
      %v4510 = vsel %vm1001, %v4507, %v4509
      %v4511 = vrot.slane %v4435, 7
      %v4512 = vsel %vm1001, %v4509, %v4511
      %v4513 = vrot.slane %v4436, 7
      %v4514 = vsel %vm1001, %v4511, %v4513
      %v4515 = vrot.slane %v4437, 7
      %v4516 = vsel %vm1001, %v4513, %v4515
      %v4517 = vrot.slane %v4438, 7
      %v4518 = vsel %vm1001, %v4515, %v4517
      %v4519 = vrot.slane %v4439, 7
      %v4520 = vsel %vm1001, %v4517, %v4519
      %v4521 = vrot.slane %v4440, 7
      %v4522 = vsel %vm1001, %v4519, %v4521
      %v4523 = vrot.slane %v4441, 7
      %v4524 = vsel %vm1001, %v4521, %v4523
      %v4525 = vrot.slane %v4442, 7
      %v4526 = vsel %vm1001, %v4523, %v4525
      %v4527 = vrot.slane %v4443, 7
      %v4528 = vsel %vm1001, %v4525, %v4527
      %v4529 = vrot.slane %v4444, 7
      %v4530 = vsel %vm1001, %v4527, %v4529
      %v4531 = vrot.slane %v4445, 7
      %v4532 = vsel %vm1001, %v4529, %v4531
      %v4533 = vrot.slane %v4446, 7
      %v4534 = vsel %vm1001, %v4531, %v4533
      %v4535 = vrot.slane %v4447, 7
      %v4536 = vsel %vm1001, %v4533, %v4535
      %v4537 = vrot.slane %v4448, 7
      %v4538 = vsel %vm1001, %v4535, %v4537
      %v4539 = vrot.slane %v4449, 7
      %v4540 = vsel %vm1001, %v4537, %v4539
      %v4541 = vrot.slane %v4450, 7
      %v4542 = vsel %vm1001, %v4539, %v4541
      %v4573 = vsel %vm940, %v4484, 0.0
      %v4574 = vsel %vm941, %v4486, 0.0
      %v4575 = vsel %vm942, %v4488, 0.0
      %v4576 = vsel %vm943, %v4490, 0.0
      %v4577 = vsel %vm944, %v4492, 0.0
      %v4578 = vsel %vm945, %v4494, 0.0
      %v4579 = vsel %vm946, %v4496, 0.0
      %v4580 = vsel %vm947, %v4498, 0.0
      %v4581 = vsel %vm948, %v4500, 0.0
      %v4582 = vsel %vm949, %v4502, 0.0
      %v4583 = vsel %vm950, %v4504, 0.0
      %v4584 = vsel %vm951, %v4506, 0.0
      %v4585 = vsel %vm952, %v4508, 0.0
      %v4586 = vsel %vm953, %v4510, 0.0
      %v4587 = vsel %vm954, %v4512, 0.0
      %v4588 = vsel %vm955, %v4514, 0.0
      %v4589 = vsel %vm956, %v4516, 0.0
      %v4590 = vsel %vm957, %v4518, 0.0
      %v4591 = vsel %vm958, %v4520, 0.0
      %v4592 = vsel %vm959, %v4522, 0.0
      %v4593 = vsel %vm960, %v4524, 0.0
      %v4594 = vsel %vm961, %v4526, 0.0
      %v4595 = vsel %vm962, %v4528, 0.0
      %v4596 = vsel %vm963, %v4530, 0.0
      %v4597 = vsel %vm964, %v4532, 0.0
      %v4598 = vsel %vm965, %v4534, 0.0
      %v4599 = vsel %vm966, %v4536, 0.0
      %v4600 = vsel %vm967, %v4538, 0.0
      %v4601 = vsel %vm968, %v4540, 0.0
      %v4602 = vsel %vm969, %v4542, 0.0
      %vm4603 = vcmask 64512
      %v4604 = vsel %vm4603, 0.0, 0
      %v4606 = vsel %vm4603, %v4421, 0
      %v4608 = vsel %vm4603, %v4422, 0
      %v4610 = vsel %vm4603, %v4423, 0
      %v4612 = vsel %vm4603, %v4424, 0
      %v4614 = vsel %vm4603, %v4425, 0
      %v4616 = vsel %vm4603, %v4426, 0
      %v4618 = vsel %vm4603, %v4427, 0
      %v4620 = vsel %vm4603, %v4428, 0
      %v4622 = vsel %vm4603, %v4429, 0
      %v4624 = vsel %vm4603, %v4430, 0
      %v4626 = vsel %vm4603, %v4431, 0
      %v4628 = vsel %vm4603, %v4432, 0
      %v4630 = vsel %vm4603, %v4433, 0
      %v4632 = vsel %vm4603, %v4434, 0
      %v4634 = vsel %vm4603, %v4435, 0
      %v4636 = vsel %vm4603, %v4436, 0
      %v4638 = vsel %vm4603, %v4437, 0
      %v4640 = vsel %vm4603, %v4438, 0
      %v4642 = vsel %vm4603, %v4439, 0
      %v4644 = vsel %vm4603, %v4440, 0
      %v4646 = vsel %vm4603, %v4441, 0
      %v4648 = vsel %vm4603, %v4442, 0
      %v4650 = vsel %vm4603, %v4443, 0
      %v4652 = vsel %vm4603, %v4444, 0
      %v4654 = vsel %vm4603, %v4445, 0
      %v4656 = vsel %vm4603, %v4446, 0
      %v4658 = vsel %vm4603, %v4447, 0
      %v4660 = vsel %vm4603, %v4448, 0
      %v4662 = vsel %vm4603, %v4449, 0
      %v4664 = vsel %vm4603, %v4450, 0
      %4666 = vmatprep.subr.mxu0 0.0
      %4667 = vmatpush1.msra.mxu0 %v883
      %4668 = vmatprep.subr.mxu0 0.0
      %4669 = vmatpush1.msra.mxu0 0.0
      %4670 = vmatprep.subr.mxu0 0.0
      %4671 = vmatpush1.msra.mxu0 0.0
      %4672 = vmatprep.subr.mxu0 0.0
      %4673 = vmatpush1.msra.mxu0 0.0
      %4674 = vmatprep.subr.mxu0 0.0
      %4675 = vmatpush1.msra.mxu0 0.0
      %4676 = vmatprep.subr.mxu0 0.0
      %4677 = vmatpush1.msra.mxu0 0.0
      %4678 = vmatprep.subr.mxu0 0.0
      %4679 = vmatpush1.msra.mxu0 0.0
      %4680 = vmatprep.subr.mxu0 0.0
      %4681 = vmatpush1.msra.mxu0 0.0
      %4682 = vmatprep.subr.mxu0 0.0
      %4683 = vmatpush1.msra.mxu0 0.0
      %4684 = vmatprep.subr.mxu0 0.0
      %4685 = vmatpush1.msra.mxu0 0.0
      %4686 = vmatprep.subr.mxu0 0.0
      %4687 = vmatpush1.msra.mxu0 0.0
      %4688 = vmatprep.subr.mxu0 0.0
      %4689 = vmatpush1.msra.mxu0 0.0
      %4690 = vmatprep.subr.mxu0 0.0
      %4691 = vmatpush1.msra.mxu0 0.0
      %4692 = vmatprep.subr.mxu0 0.0
      %4693 = vmatpush1.msra.mxu0 0.0
      %4694 = vmatprep.subr.mxu0 0.0
      %4695 = vmatpush1.msra.mxu0 0.0
      %4696 = vmatprep.subr.mxu0 0.0
      %4697 = vmatpush1.msra.mxu0 0.0
      %4698 = vmatprep.subr.mxu0 0.0
      %4699 = vmatpush1.msra.mxu0 0.0
      %4700 = vmatprep.subr.mxu0 0.0
      %4701 = vmatpush1.msra.mxu0 0.0
      %4702 = vmatprep.subr.mxu0 0.0
      %4703 = vmatpush1.msra.mxu0 0.0
      %4704 = vmatprep.subr.mxu0 0.0
      %4705 = vmatpush1.msra.mxu0 0.0
      %4706 = vmatprep.subr.mxu0 0.0
      %4707 = vmatpush1.msra.mxu0 0.0
      %4708 = vmatprep.subr.mxu0 0.0
      %4709 = vmatpush1.msra.mxu0 0.0
      %4710 = vmatprep.subr.mxu0 0.0
      %4711 = vmatpush1.msra.mxu0 0.0
      %4712 = vmatprep.subr.mxu0 0.0
      %4713 = vmatpush1.msra.mxu0 0.0
      %4714 = vmatprep.subr.mxu0 0.0
      %4715 = vmatpush1.msra.mxu0 0.0
      %4716 = vmatprep.subr.mxu0 0.0
      %4717 = vmatpush1.msra.mxu0 0.0
      %4718 = vmatprep.subr.mxu0 0.0
      %4719 = vmatpush1.msra.mxu0 0.0
      %4720 = vmatprep.subr.mxu0 0.0
      %4721 = vmatpush1.msra.mxu0 0.0
      %4722 = vmatprep.subr.mxu0 0.0
      %4723 = vmatpush1.msra.mxu0 0.0
      %4724 = vmatprep.subr.mxu0 0.0
      %4725 = vmatpush1.msra.mxu0 0.0
      %4726 = vmatprep.subr.mxu0 0.0
      %4727 = vmatpush1.msra.mxu0 0.0
      %4728 = vmatprep.subr.mxu0 0.0
      %4729 = vmatpush1.msra.mxu0 0.0
      %4730 = vmatprep.mubr.f32.mxu0 0.0
      %4731 = vmatmul.mubr.f32.gmra.mrb[0].mxu0 %v4604
      %v4732 = vpop.f32.mrb[0].mxu0
      %v4733 = vadd.f32 0.0, %v4732
      %v4734 = vpop.f32.mrb[0].mxu0
      %4735 = vmatprep.mubr.f32.mxu0 0.0
      %4736 = vmatmul.mubr.f32.gmra.mrb[0].mxu0 %v4604
      %v4737 = vpop.f32.mrb[0].mxu0
      %v4738 = vadd.f32 0.0, %v4737
      %v4739 = vpop.f32.mrb[0].mxu0
      %4740 = vmatprep.mubr.f32.mxu0 0.0
      %4741 = vmatmul.mubr.f32.gmra.mrb[0].mxu0 %v4606
      %v4742 = vpop.f32.mrb[0].mxu0
      %v4743 = vadd.f32 0.0, %v4742
      %v4744 = vpop.f32.mrb[0].mxu0
      %4745 = vmatprep.mubr.f32.mxu0 0.0
      %4746 = vmatmul.mubr.f32.gmra.mrb[0].mxu0 %v4608
      %v4747 = vpop.f32.mrb[0].mxu0
      %v4748 = vadd.f32 0.0, %v4747
      %v4749 = vpop.f32.mrb[0].mxu0
      %4750 = vmatprep.mubr.f32.mxu0 0.0
      %4751 = vmatmul.mubr.f32.gmra.mrb[0].mxu0 %v4610
      %v4752 = vpop.f32.mrb[0].mxu0
      %v4753 = vadd.f32 0.0, %v4752
      %v4754 = vpop.f32.mrb[0].mxu0
      %4755 = vmatprep.mubr.f32.mxu0 0.0
      %4756 = vmatmul.mubr.f32.gmra.mrb[0].mxu0 %v4612
      %v4757 = vpop.f32.mrb[0].mxu0
      %v4758 = vadd.f32 0.0, %v4757
      %v4759 = vpop.f32.mrb[0].mxu0
      %4760 = vmatprep.mubr.f32.mxu0 0.0
      %4761 = vmatmul.mubr.f32.gmra.mrb[0].mxu0 %v4614
      %v4762 = vpop.f32.mrb[0].mxu0
      %v4763 = vadd.f32 0.0, %v4762
      %v4764 = vpop.f32.mrb[0].mxu0
      %4765 = vmatprep.mubr.f32.mxu0 0.0
      %4766 = vmatmul.mubr.f32.gmra.mrb[0].mxu0 %v4616
      %v4767 = vpop.f32.mrb[0].mxu0
      %v4768 = vadd.f32 0.0, %v4767
      %v4769 = vpop.f32.mrb[0].mxu0
      %4770 = vmatprep.mubr.f32.mxu0 0.0
      %4771 = vmatmul.mubr.f32.gmra.mrb[0].mxu0 %v4618
      %v4772 = vpop.f32.mrb[0].mxu0
      %v4773 = vadd.f32 0.0, %v4772
      %v4774 = vpop.f32.mrb[0].mxu0
      %4775 = vmatprep.mubr.f32.mxu0 0.0
      %4776 = vmatmul.mubr.f32.gmra.mrb[0].mxu0 %v4620
      %v4777 = vpop.f32.mrb[0].mxu0
      %v4778 = vadd.f32 0.0, %v4777
      %v4779 = vpop.f32.mrb[0].mxu0
      %4780 = vmatprep.mubr.f32.mxu0 0.0
      %4781 = vmatmul.mubr.f32.gmra.mrb[0].mxu0 %v4622
      %v4782 = vpop.f32.mrb[0].mxu0
      %v4783 = vadd.f32 0.0, %v4782
      %v4784 = vpop.f32.mrb[0].mxu0
      %4785 = vmatprep.mubr.f32.mxu0 0.0
      %4786 = vmatmul.mubr.f32.gmra.mrb[0].mxu0 %v4624
      %v4787 = vpop.f32.mrb[0].mxu0
      %v4788 = vadd.f32 0.0, %v4787
      %v4789 = vpop.f32.mrb[0].mxu0
      %4790 = vmatprep.mubr.f32.mxu0 0.0
      %4791 = vmatmul.mubr.f32.gmra.mrb[0].mxu0 %v4626
      %v4792 = vpop.f32.mrb[0].mxu0
      %v4793 = vadd.f32 0.0, %v4792
      %v4794 = vpop.f32.mrb[0].mxu0
      %4795 = vmatprep.mubr.f32.mxu0 0.0
      %4796 = vmatmul.mubr.f32.gmra.mrb[0].mxu0 %v4628
      %v4797 = vpop.f32.mrb[0].mxu0
      %v4798 = vadd.f32 0.0, %v4797
      %v4799 = vpop.f32.mrb[0].mxu0
      %4800 = vmatprep.mubr.f32.mxu0 0.0
      %4801 = vmatmul.mubr.f32.gmra.mrb[0].mxu0 %v4630
      %v4802 = vpop.f32.mrb[0].mxu0
      %v4803 = vadd.f32 0.0, %v4802
      %v4804 = vpop.f32.mrb[0].mxu0
      %4805 = vmatprep.mubr.f32.mxu0 0.0
      %4806 = vmatmul.mubr.f32.gmra.mrb[0].mxu0 %v4632
      %v4807 = vpop.f32.mrb[0].mxu0
      %v4808 = vadd.f32 0.0, %v4807
      %v4809 = vpop.f32.mrb[0].mxu0
      %4810 = vmatprep.mubr.f32.mxu0 0.0
      %4811 = vmatmul.mubr.f32.gmra.mrb[0].mxu0 %v4634
      %v4812 = vpop.f32.mrb[0].mxu0
      %v4813 = vadd.f32 0.0, %v4812
      %v4814 = vpop.f32.mrb[0].mxu0
      %4815 = vmatprep.mubr.f32.mxu0 0.0
      %4816 = vmatmul.mubr.f32.gmra.mrb[0].mxu0 %v4636
      %v4817 = vpop.f32.mrb[0].mxu0
      %v4818 = vadd.f32 0.0, %v4817
      %v4819 = vpop.f32.mrb[0].mxu0
      %4820 = vmatprep.mubr.f32.mxu0 0.0
      %4821 = vmatmul.mubr.f32.gmra.mrb[0].mxu0 %v4638
      %v4822 = vpop.f32.mrb[0].mxu0
      %v4823 = vadd.f32 0.0, %v4822
      %v4824 = vpop.f32.mrb[0].mxu0
      %4825 = vmatprep.mubr.f32.mxu0 0.0
      %4826 = vmatmul.mubr.f32.gmra.mrb[0].mxu0 %v4640
      %v4827 = vpop.f32.mrb[0].mxu0
      %v4828 = vadd.f32 0.0, %v4827
      %v4829 = vpop.f32.mrb[0].mxu0
      %4830 = vmatprep.mubr.f32.mxu0 0.0
      %4831 = vmatmul.mubr.f32.gmra.mrb[0].mxu0 %v4642
      %v4832 = vpop.f32.mrb[0].mxu0
      %v4833 = vadd.f32 0.0, %v4832
      %v4834 = vpop.f32.mrb[0].mxu0
      %4835 = vmatprep.mubr.f32.mxu0 0.0
      %4836 = vmatmul.mubr.f32.gmra.mrb[0].mxu0 %v4644
      %v4837 = vpop.f32.mrb[0].mxu0
      %v4838 = vadd.f32 0.0, %v4837
      %v4839 = vpop.f32.mrb[0].mxu0
      %4840 = vmatprep.mubr.f32.mxu0 0.0
      %4841 = vmatmul.mubr.f32.gmra.mrb[0].mxu0 %v4646
      %v4842 = vpop.f32.mrb[0].mxu0
      %v4843 = vadd.f32 0.0, %v4842
      %v4844 = vpop.f32.mrb[0].mxu0
      %4845 = vmatprep.mubr.f32.mxu0 0.0
      %4846 = vmatmul.mubr.f32.gmra.mrb[0].mxu0 %v4648
      %v4847 = vpop.f32.mrb[0].mxu0
      %v4848 = vadd.f32 0.0, %v4847
      %v4849 = vpop.f32.mrb[0].mxu0
      %4850 = vmatprep.mubr.f32.mxu0 0.0
      %4851 = vmatmul.mubr.f32.gmra.mrb[0].mxu0 %v4650
      %v4852 = vpop.f32.mrb[0].mxu0
      %v4853 = vadd.f32 0.0, %v4852
      %v4854 = vpop.f32.mrb[0].mxu0
      %4855 = vmatprep.mubr.f32.mxu0 0.0
      %4856 = vmatmul.mubr.f32.gmra.mrb[0].mxu0 %v4652
      %v4857 = vpop.f32.mrb[0].mxu0
      %v4858 = vadd.f32 0.0, %v4857
      %v4859 = vpop.f32.mrb[0].mxu0
      %4860 = vmatprep.mubr.f32.mxu0 0.0
      %4861 = vmatmul.mubr.f32.gmra.mrb[0].mxu0 %v4654
      %v4862 = vpop.f32.mrb[0].mxu0
      %v4863 = vadd.f32 0.0, %v4862
      %v4864 = vpop.f32.mrb[0].mxu0
      %4865 = vmatprep.mubr.f32.mxu0 0.0
      %4866 = vmatmul.mubr.f32.gmra.mrb[0].mxu0 %v4656
      %v4867 = vpop.f32.mrb[0].mxu0
      %v4868 = vadd.f32 0.0, %v4867
      %v4869 = vpop.f32.mrb[0].mxu0
      %4870 = vmatprep.mubr.f32.mxu0 0.0
      %4871 = vmatmul.mubr.f32.gmra.mrb[0].mxu0 %v4658
      %v4872 = vpop.f32.mrb[0].mxu0
      %v4873 = vadd.f32 0.0, %v4872
      %v4874 = vpop.f32.mrb[0].mxu0
      %4875 = vmatprep.mubr.f32.mxu0 0.0
      %4876 = vmatmul.mubr.f32.gmra.mrb[0].mxu0 %v4660
      %v4877 = vpop.f32.mrb[0].mxu0
      %v4878 = vadd.f32 0.0, %v4877
      %v4879 = vpop.f32.mrb[0].mxu0
      %4880 = vmatprep.mubr.f32.mxu0 0.0
      %4881 = vmatmul.mubr.f32.gmra.mrb[0].mxu0 %v4662
      %v4882 = vpop.f32.mrb[0].mxu0
      %v4883 = vadd.f32 0.0, %v4882
      %v4884 = vpop.f32.mrb[0].mxu0
      %4885 = vmatprep.mubr.f32.mxu0 0.0
      %4886 = vmatmul.mubr.f32.gmra.mrb[0].mxu0 %v4664
      %v4887 = vpop.f32.mrb[0].mxu0
      %v4888 = vadd.f32 0.0, %v4887
      %v4889 = vpop.f32.mrb[0].mxu0
      %4890 = vdwg.mxu0
      %v4891 = vsel %vm4603, %v1095, 0
      %v4893 = vsel %vm4603, %v1096, 0
      %v4896 = vsel %vm4603, %v4573, 0
      %v4899 = vsel %vm4603, %v4574, 0
      %v4902 = vsel %vm4603, %v4575, 0
      %v4905 = vsel %vm4603, %v4576, 0
      %v4908 = vsel %vm4603, %v4577, 0
      %v4911 = vsel %vm4603, %v4578, 0
      %v4914 = vsel %vm4603, %v4579, 0
      %v4917 = vsel %vm4603, %v4580, 0
      %v4920 = vsel %vm4603, %v4581, 0
      %v4923 = vsel %vm4603, %v4582, 0
      %v4926 = vsel %vm4603, %v4583, 0
      %v4929 = vsel %vm4603, %v4584, 0
      %v4932 = vsel %vm4603, %v4585, 0
      %v4935 = vsel %vm4603, %v4586, 0
      %v4938 = vsel %vm4603, %v4587, 0
      %v4941 = vsel %vm4603, %v4588, 0
      %v4944 = vsel %vm4603, %v4589, 0
      %v4947 = vsel %vm4603, %v4590, 0
      %v4950 = vsel %vm4603, %v4591, 0
      %v4953 = vsel %vm4603, %v4592, 0
      %v4956 = vsel %vm4603, %v4593, 0
      %v4959 = vsel %vm4603, %v4594, 0
      %v4962 = vsel %vm4603, %v4595, 0
      %v4965 = vsel %vm4603, %v4596, 0
      %v4968 = vsel %vm4603, %v4597, 0
      %v4971 = vsel %vm4603, %v4598, 0
      %v4974 = vsel %vm4603, %v4599, 0
      %v4977 = vsel %vm4603, %v4600, 0
      %v4980 = vsel %vm4603, %v4601, 0
      %v4983 = vsel %vm4603, %v4602, 0
      %4985 = vmatprep.subr.mxu0 0.0
      %4986 = vmatpush1.msra.mxu0 %v882
      %4987 = vmatprep.subr.mxu0 0.0
      %4988 = vmatpush1.msra.mxu0 0.0
      %4989 = vmatprep.subr.mxu0 0.0
      %4990 = vmatpush1.msra.mxu0 0.0
      %4991 = vmatprep.subr.mxu0 0.0
      %4992 = vmatpush1.msra.mxu0 0.0
      %4993 = vmatprep.subr.mxu0 0.0
      %4994 = vmatpush1.msra.mxu0 0.0
      %4995 = vmatprep.subr.mxu0 0.0
      %4996 = vmatpush1.msra.mxu0 0.0
      %4997 = vmatprep.subr.mxu0 0.0
      %4998 = vmatpush1.msra.mxu0 0.0
      %4999 = vmatprep.subr.mxu0 0.0
      %5000 = vmatpush1.msra.mxu0 0.0
      %5001 = vmatprep.subr.mxu0 0.0
      %5002 = vmatpush1.msra.mxu0 0.0
      %5003 = vmatprep.subr.mxu0 0.0
      %5004 = vmatpush1.msra.mxu0 0.0
      %5005 = vmatprep.subr.mxu0 0.0
      %5006 = vmatpush1.msra.mxu0 0.0
      %5007 = vmatprep.subr.mxu0 0.0
      %5008 = vmatpush1.msra.mxu0 0.0
      %5009 = vmatprep.subr.mxu0 0.0
      %5010 = vmatpush1.msra.mxu0 0.0
      %5011 = vmatprep.subr.mxu0 0.0
      %5012 = vmatpush1.msra.mxu0 0.0
      %5013 = vmatprep.subr.mxu0 0.0
      %5014 = vmatpush1.msra.mxu0 0.0
      %5015 = vmatprep.subr.mxu0 0.0
      %5016 = vmatpush1.msra.mxu0 0.0
      %5017 = vmatprep.subr.mxu0 0.0
      %5018 = vmatpush1.msra.mxu0 0.0
      %5019 = vmatprep.subr.mxu0 0.0
      %5020 = vmatpush1.msra.mxu0 0.0
      %5021 = vmatprep.subr.mxu0 0.0
      %5022 = vmatpush1.msra.mxu0 0.0
      %5023 = vmatprep.subr.mxu0 0.0
      %5024 = vmatpush1.msra.mxu0 0.0
      %5025 = vmatprep.subr.mxu0 0.0
      %5026 = vmatpush1.msra.mxu0 0.0
      %5027 = vmatprep.subr.mxu0 0.0
      %5028 = vmatpush1.msra.mxu0 0.0
      %5029 = vmatprep.subr.mxu0 0.0
      %5030 = vmatpush1.msra.mxu0 0.0
      %5031 = vmatprep.subr.mxu0 0.0
      %5032 = vmatpush1.msra.mxu0 0.0
      %5033 = vmatprep.subr.mxu0 0.0
      %5034 = vmatpush1.msra.mxu0 0.0
      %5035 = vmatprep.subr.mxu0 0.0
      %5036 = vmatpush1.msra.mxu0 0.0
      %5037 = vmatprep.subr.mxu0 0.0
      %5038 = vmatpush1.msra.mxu0 0.0
      %5039 = vmatprep.subr.mxu0 0.0
      %5040 = vmatpush1.msra.mxu0 0.0
      %5041 = vmatprep.subr.mxu0 0.0
      %5042 = vmatpush1.msra.mxu0 0.0
      %5043 = vmatprep.subr.mxu0 0.0
      %5044 = vmatpush1.msra.mxu0 0.0
      %5045 = vmatprep.subr.mxu0 0.0
      %5046 = vmatpush1.msra.mxu0 0.0
      %5047 = vmatprep.subr.mxu0 0.0
      %5048 = vmatpush1.msra.mxu0 0.0
      %5049 = vmatprep.mubr.f32.mxu0 0.0
      %5050 = vmatmul.mubr.f32.gmra.mrb[0].mxu0 %v4891
      %v5051 = vpop.f32.mrb[0].mxu0
      %v5052 = vadd.f32 %v4733, %v5051
      %v5053 = vpop.f32.mrb[0].mxu0
      %5054 = vmatprep.mubr.f32.mxu0 0.0
      %5055 = vmatmul.mubr.f32.gmra.mrb[0].mxu0 %v4893
      %v5056 = vpop.f32.mrb[0].mxu0
      %v5057 = vadd.f32 %v4738, %v5056
      %v5058 = vpop.f32.mrb[0].mxu0
      %5059 = vmatprep.mubr.f32.mxu0 0.0
      %5060 = vmatmul.mubr.f32.gmra.mrb[0].mxu0 %v4896
      %v5061 = vpop.f32.mrb[0].mxu0
      %v5062 = vadd.f32 %v4743, %v5061
      %v5063 = vpop.f32.mrb[0].mxu0
      %5064 = vmatprep.mubr.f32.mxu0 0.0
      %5065 = vmatmul.mubr.f32.gmra.mrb[0].mxu0 %v4899
      %v5066 = vpop.f32.mrb[0].mxu0
      %v5067 = vadd.f32 %v4748, %v5066
      %v5068 = vpop.f32.mrb[0].mxu0
      %5069 = vmatprep.mubr.f32.mxu0 0.0
      %5070 = vmatmul.mubr.f32.gmra.mrb[0].mxu0 %v4902
      %v5071 = vpop.f32.mrb[0].mxu0
      %v5072 = vadd.f32 %v4753, %v5071
      %v5073 = vpop.f32.mrb[0].mxu0
      %5074 = vmatprep.mubr.f32.mxu0 0.0
      %5075 = vmatmul.mubr.f32.gmra.mrb[0].mxu0 %v4905
      %v5076 = vpop.f32.mrb[0].mxu0
      %v5077 = vadd.f32 %v4758, %v5076
      %v5078 = vpop.f32.mrb[0].mxu0
      %5079 = vmatprep.mubr.f32.mxu0 0.0
      %5080 = vmatmul.mubr.f32.gmra.mrb[0].mxu0 %v4908
      %v5081 = vpop.f32.mrb[0].mxu0
      %v5082 = vadd.f32 %v4763, %v5081
      %v5083 = vpop.f32.mrb[0].mxu0
      %5084 = vmatprep.mubr.f32.mxu0 0.0
      %5085 = vmatmul.mubr.f32.gmra.mrb[0].mxu0 %v4911
      %v5086 = vpop.f32.mrb[0].mxu0
      %v5087 = vadd.f32 %v4768, %v5086
      %v5088 = vpop.f32.mrb[0].mxu0
      %5089 = vmatprep.mubr.f32.mxu0 0.0
      %5090 = vmatmul.mubr.f32.gmra.mrb[0].mxu0 %v4914
      %v5091 = vpop.f32.mrb[0].mxu0
      %v5092 = vadd.f32 %v4773, %v5091
      %v5093 = vpop.f32.mrb[0].mxu0
      %5094 = vmatprep.mubr.f32.mxu0 0.0
      %5095 = vmatmul.mubr.f32.gmra.mrb[0].mxu0 %v4917
      %v5096 = vpop.f32.mrb[0].mxu0
      %v5097 = vadd.f32 %v4778, %v5096
      %v5098 = vpop.f32.mrb[0].mxu0
      %5099 = vmatprep.mubr.f32.mxu0 0.0
      %5100 = vmatmul.mubr.f32.gmra.mrb[0].mxu0 %v4920
      %v5101 = vpop.f32.mrb[0].mxu0
      %v5102 = vadd.f32 %v4783, %v5101
      %v5103 = vpop.f32.mrb[0].mxu0
      %5104 = vmatprep.mubr.f32.mxu0 0.0
      %5105 = vmatmul.mubr.f32.gmra.mrb[0].mxu0 %v4923
      %v5106 = vpop.f32.mrb[0].mxu0
      %v5107 = vadd.f32 %v4788, %v5106
      %v5108 = vpop.f32.mrb[0].mxu0
      %5109 = vmatprep.mubr.f32.mxu0 0.0
      %5110 = vmatmul.mubr.f32.gmra.mrb[0].mxu0 %v4926
      %v5111 = vpop.f32.mrb[0].mxu0
      %v5112 = vadd.f32 %v4793, %v5111
      %v5113 = vpop.f32.mrb[0].mxu0
      %5114 = vmatprep.mubr.f32.mxu0 0.0
      %5115 = vmatmul.mubr.f32.gmra.mrb[0].mxu0 %v4929
      %v5116 = vpop.f32.mrb[0].mxu0
      %v5117 = vadd.f32 %v4798, %v5116
      %v5118 = vpop.f32.mrb[0].mxu0
      %5119 = vmatprep.mubr.f32.mxu0 0.0
      %5120 = vmatmul.mubr.f32.gmra.mrb[0].mxu0 %v4932
      %v5121 = vpop.f32.mrb[0].mxu0
      %v5122 = vadd.f32 %v4803, %v5121
      %v5123 = vpop.f32.mrb[0].mxu0
      %5124 = vmatprep.mubr.f32.mxu0 0.0
      %5125 = vmatmul.mubr.f32.gmra.mrb[0].mxu0 %v4935
      %v5126 = vpop.f32.mrb[0].mxu0
      %v5127 = vadd.f32 %v4808, %v5126
      %v5128 = vpop.f32.mrb[0].mxu0
      %5129 = vmatprep.mubr.f32.mxu0 0.0
      %5130 = vmatmul.mubr.f32.gmra.mrb[0].mxu0 %v4938
      %v5131 = vpop.f32.mrb[0].mxu0
      %v5132 = vadd.f32 %v4813, %v5131
      %v5133 = vpop.f32.mrb[0].mxu0
      %5134 = vmatprep.mubr.f32.mxu0 0.0
      %5135 = vmatmul.mubr.f32.gmra.mrb[0].mxu0 %v4941
      %v5136 = vpop.f32.mrb[0].mxu0
      %v5137 = vadd.f32 %v4818, %v5136
      %v5138 = vpop.f32.mrb[0].mxu0
      %5139 = vmatprep.mubr.f32.mxu0 0.0
      %5140 = vmatmul.mubr.f32.gmra.mrb[0].mxu0 %v4944
      %v5141 = vpop.f32.mrb[0].mxu0
      %v5142 = vadd.f32 %v4823, %v5141
      %v5143 = vpop.f32.mrb[0].mxu0
      %5144 = vmatprep.mubr.f32.mxu0 0.0
      %5145 = vmatmul.mubr.f32.gmra.mrb[0].mxu0 %v4947
      %v5146 = vpop.f32.mrb[0].mxu0
      %v5147 = vadd.f32 %v4828, %v5146
      %v5148 = vpop.f32.mrb[0].mxu0
      %5149 = vmatprep.mubr.f32.mxu0 0.0
      %5150 = vmatmul.mubr.f32.gmra.mrb[0].mxu0 %v4950
      %v5151 = vpop.f32.mrb[0].mxu0
      %v5152 = vadd.f32 %v4833, %v5151
      %v5153 = vpop.f32.mrb[0].mxu0
      %5154 = vmatprep.mubr.f32.mxu0 0.0
      %5155 = vmatmul.mubr.f32.gmra.mrb[0].mxu0 %v4953
      %v5156 = vpop.f32.mrb[0].mxu0
      %v5157 = vadd.f32 %v4838, %v5156
      %v5158 = vpop.f32.mrb[0].mxu0
      %5159 = vmatprep.mubr.f32.mxu0 0.0
      %5160 = vmatmul.mubr.f32.gmra.mrb[0].mxu0 %v4956
      %v5161 = vpop.f32.mrb[0].mxu0
      %v5162 = vadd.f32 %v4843, %v5161
      %v5163 = vpop.f32.mrb[0].mxu0
      %5164 = vmatprep.mubr.f32.mxu0 0.0
      %5165 = vmatmul.mubr.f32.gmra.mrb[0].mxu0 %v4959
      %v5166 = vpop.f32.mrb[0].mxu0
      %v5167 = vadd.f32 %v4848, %v5166
      %v5168 = vpop.f32.mrb[0].mxu0
      %5169 = vmatprep.mubr.f32.mxu0 0.0
      %5170 = vmatmul.mubr.f32.gmra.mrb[0].mxu0 %v4962
      %v5171 = vpop.f32.mrb[0].mxu0
      %v5172 = vadd.f32 %v4853, %v5171
      %v5173 = vpop.f32.mrb[0].mxu0
      %5174 = vmatprep.mubr.f32.mxu0 0.0
      %5175 = vmatmul.mubr.f32.gmra.mrb[0].mxu0 %v4965
      %v5176 = vpop.f32.mrb[0].mxu0
      %v5177 = vadd.f32 %v4858, %v5176
      %v5178 = vpop.f32.mrb[0].mxu0
      %5179 = vmatprep.mubr.f32.mxu0 0.0
      %5180 = vmatmul.mubr.f32.gmra.mrb[0].mxu0 %v4968
      %v5181 = vpop.f32.mrb[0].mxu0
      %v5182 = vadd.f32 %v4863, %v5181
      %v5183 = vpop.f32.mrb[0].mxu0
      %5184 = vmatprep.mubr.f32.mxu0 0.0
      %5185 = vmatmul.mubr.f32.gmra.mrb[0].mxu0 %v4971
      %v5186 = vpop.f32.mrb[0].mxu0
      %v5187 = vadd.f32 %v4868, %v5186
      %v5188 = vpop.f32.mrb[0].mxu0
      %5189 = vmatprep.mubr.f32.mxu0 0.0
      %5190 = vmatmul.mubr.f32.gmra.mrb[0].mxu0 %v4974
      %v5191 = vpop.f32.mrb[0].mxu0
      %v5192 = vadd.f32 %v4873, %v5191
      %v5193 = vpop.f32.mrb[0].mxu0
      %5194 = vmatprep.mubr.f32.mxu0 0.0
      %5195 = vmatmul.mubr.f32.gmra.mrb[0].mxu0 %v4977
      %v5196 = vpop.f32.mrb[0].mxu0
      %v5197 = vadd.f32 %v4878, %v5196
      %v5198 = vpop.f32.mrb[0].mxu0
      %5199 = vmatprep.mubr.f32.mxu0 0.0
      %5200 = vmatmul.mubr.f32.gmra.mrb[0].mxu0 %v4980
      %v5201 = vpop.f32.mrb[0].mxu0
      %v5202 = vadd.f32 %v4883, %v5201
      %v5203 = vpop.f32.mrb[0].mxu0
      %5204 = vmatprep.mubr.f32.mxu0 0.0
      %5205 = vmatmul.mubr.f32.gmra.mrb[0].mxu0 %v4983
      %v5206 = vpop.f32.mrb[0].mxu0
      %v5207 = vadd.f32 %v4888, %v5206
      %v5208 = vpop.f32.mrb[0].mxu0
      %5209 = vdwg.mxu0
      %v5211 = vrot.slane %v4421, 1
      %v5212 = vsel %vm1808, %v1809, %v5211
      %v5213 = vrot.slane %v4422, 1
      %v5214 = vsel %vm1808, %v5211, %v5213
      %v5215 = vrot.slane %v4423, 1
      %v5216 = vsel %vm1808, %v5213, %v5215
      %v5217 = vrot.slane %v4424, 1
      %v5218 = vsel %vm1808, %v5215, %v5217
      %v5219 = vrot.slane %v4425, 1
      %v5220 = vsel %vm1808, %v5217, %v5219
      %v5221 = vrot.slane %v4426, 1
      %v5222 = vsel %vm1808, %v5219, %v5221
      %v5223 = vrot.slane %v4427, 1
      %v5224 = vsel %vm1808, %v5221, %v5223
      %v5225 = vrot.slane %v4428, 1
      %v5226 = vsel %vm1808, %v5223, %v5225
      %v5227 = vrot.slane %v4429, 1
      %v5228 = vsel %vm1808, %v5225, %v5227
      %v5229 = vrot.slane %v4430, 1
      %v5230 = vsel %vm1808, %v5227, %v5229
      %v5231 = vrot.slane %v4431, 1
      %v5232 = vsel %vm1808, %v5229, %v5231
      %v5233 = vrot.slane %v4432, 1
      %v5234 = vsel %vm1808, %v5231, %v5233
      %v5235 = vrot.slane %v4433, 1
      %v5236 = vsel %vm1808, %v5233, %v5235
      %v5237 = vrot.slane %v4434, 1
      %v5238 = vsel %vm1808, %v5235, %v5237
      %v5239 = vrot.slane %v4435, 1
      %v5240 = vsel %vm1808, %v5237, %v5239
      %v5241 = vrot.slane %v4436, 1
      %v5242 = vsel %vm1808, %v5239, %v5241
      %v5243 = vrot.slane %v4437, 1
      %v5244 = vsel %vm1808, %v5241, %v5243
      %v5245 = vrot.slane %v4438, 1
      %v5246 = vsel %vm1808, %v5243, %v5245
      %v5247 = vrot.slane %v4439, 1
      %v5248 = vsel %vm1808, %v5245, %v5247
      %v5249 = vrot.slane %v4440, 1
      %v5250 = vsel %vm1808, %v5247, %v5249
      %v5251 = vrot.slane %v4441, 1
      %v5252 = vsel %vm1808, %v5249, %v5251
      %v5253 = vrot.slane %v4442, 1
      %v5254 = vsel %vm1808, %v5251, %v5253
      %v5255 = vrot.slane %v4443, 1
      %v5256 = vsel %vm1808, %v5253, %v5255
      %v5257 = vrot.slane %v4444, 1
      %v5258 = vsel %vm1808, %v5255, %v5257
      %v5259 = vrot.slane %v4445, 1
      %v5260 = vsel %vm1808, %v5257, %v5259
      %v5261 = vrot.slane %v4446, 1
      %v5262 = vsel %vm1808, %v5259, %v5261
      %v5263 = vrot.slane %v4447, 1
      %v5264 = vsel %vm1808, %v5261, %v5263
      %v5265 = vrot.slane %v4448, 1
      %v5266 = vsel %vm1808, %v5263, %v5265
      %v5267 = vrot.slane %v4449, 1
      %v5268 = vsel %vm1808, %v5265, %v5267
      %v5269 = vrot.slane %v4450, 1
      %v5270 = vsel %vm1808, %v5267, %v5269
      %v5271 = vrot.slane %v4451, 1
      %v5272 = vsel %vm1808, %v5269, %v5271
      %v5304 = vsel %vm1776, %v5212, 0.0
      %v5305 = vsel %vm1777, %v5214, 0.0
      %v5306 = vsel %vm1778, %v5216, 0.0
      %v5307 = vsel %vm1779, %v5218, 0.0
      %v5308 = vsel %vm1780, %v5220, 0.0
      %v5309 = vsel %vm1781, %v5222, 0.0
      %v5310 = vsel %vm1782, %v5224, 0.0
      %v5311 = vsel %vm1783, %v5226, 0.0
      %v5312 = vsel %vm1784, %v5228, 0.0
      %v5313 = vsel %vm1785, %v5230, 0.0
      %v5314 = vsel %vm1786, %v5232, 0.0
      %v5315 = vsel %vm1787, %v5234, 0.0
      %v5316 = vsel %vm1788, %v5236, 0.0
      %v5317 = vsel %vm1789, %v5238, 0.0
      %v5318 = vsel %vm1790, %v5240, 0.0
      %v5319 = vsel %vm1791, %v5242, 0.0
      %v5320 = vsel %vm1792, %v5244, 0.0
      %v5321 = vsel %vm1793, %v5246, 0.0
      %v5322 = vsel %vm1794, %v5248, 0.0
      %v5323 = vsel %vm1795, %v5250, 0.0
      %v5324 = vsel %vm1796, %v5252, 0.0
      %v5325 = vsel %vm1797, %v5254, 0.0
      %v5326 = vsel %vm1798, %v5256, 0.0
      %v5327 = vsel %vm1799, %v5258, 0.0
      %v5328 = vsel %vm1800, %v5260, 0.0
      %v5329 = vsel %vm1801, %v5262, 0.0
      %v5330 = vsel %vm1802, %v5264, 0.0
      %v5331 = vsel %vm1803, %v5266, 0.0
      %v5332 = vsel %vm1804, %v5268, 0.0
      %v5333 = vsel %vm1805, %v5270, 0.0
      %v5334 = vsel %vm1806, %v5272, 0.0
      %v5335 = vsel %vm4603, %v1905, 0
      %v5338 = vsel %vm4603, %v5304, 0
      %v5341 = vsel %vm4603, %v5305, 0
      %v5344 = vsel %vm4603, %v5306, 0
      %v5347 = vsel %vm4603, %v5307, 0
      %v5350 = vsel %vm4603, %v5308, 0
      %v5353 = vsel %vm4603, %v5309, 0
      %v5356 = vsel %vm4603, %v5310, 0
      %v5359 = vsel %vm4603, %v5311, 0
      %v5362 = vsel %vm4603, %v5312, 0
      %v5365 = vsel %vm4603, %v5313, 0
      %v5368 = vsel %vm4603, %v5314, 0
      %v5371 = vsel %vm4603, %v5315, 0
      %v5374 = vsel %vm4603, %v5316, 0
      %v5377 = vsel %vm4603, %v5317, 0
      %v5380 = vsel %vm4603, %v5318, 0
      %v5383 = vsel %vm4603, %v5319, 0
      %v5386 = vsel %vm4603, %v5320, 0
      %v5389 = vsel %vm4603, %v5321, 0
      %v5392 = vsel %vm4603, %v5322, 0
      %v5395 = vsel %vm4603, %v5323, 0
      %v5398 = vsel %vm4603, %v5324, 0
      %v5401 = vsel %vm4603, %v5325, 0
      %v5404 = vsel %vm4603, %v5326, 0
      %v5407 = vsel %vm4603, %v5327, 0
      %v5410 = vsel %vm4603, %v5328, 0
      %v5413 = vsel %vm4603, %v5329, 0
      %v5416 = vsel %vm4603, %v5330, 0
      %v5419 = vsel %vm4603, %v5331, 0
      %v5422 = vsel %vm4603, %v5332, 0
      %v5425 = vsel %vm4603, %v5333, 0
      %v5428 = vsel %vm4603, %v5334, 0
      %5430 = vmatprep.subr.mxu0 0.0
      %5431 = vmatpush1.msra.mxu0 %v884
      %5432 = vmatprep.subr.mxu0 0.0
      %5433 = vmatpush1.msra.mxu0 0.0
      %5434 = vmatprep.subr.mxu0 0.0
      %5435 = vmatpush1.msra.mxu0 0.0
      %5436 = vmatprep.subr.mxu0 0.0
      %5437 = vmatpush1.msra.mxu0 0.0
      %5438 = vmatprep.subr.mxu0 0.0
      %5439 = vmatpush1.msra.mxu0 0.0
      %5440 = vmatprep.subr.mxu0 0.0
      %5441 = vmatpush1.msra.mxu0 0.0
      %5442 = vmatprep.subr.mxu0 0.0
      %5443 = vmatpush1.msra.mxu0 0.0
      %5444 = vmatprep.subr.mxu0 0.0
      %5445 = vmatpush1.msra.mxu0 0.0
      %5446 = vmatprep.subr.mxu0 0.0
      %5447 = vmatpush1.msra.mxu0 0.0
      %5448 = vmatprep.subr.mxu0 0.0
      %5449 = vmatpush1.msra.mxu0 0.0
      %5450 = vmatprep.subr.mxu0 0.0
      %5451 = vmatpush1.msra.mxu0 0.0
      %5452 = vmatprep.subr.mxu0 0.0
      %5453 = vmatpush1.msra.mxu0 0.0
      %5454 = vmatprep.subr.mxu0 0.0
      %5455 = vmatpush1.msra.mxu0 0.0
      %5456 = vmatprep.subr.mxu0 0.0
      %5457 = vmatpush1.msra.mxu0 0.0
      %5458 = vmatprep.subr.mxu0 0.0
      %5459 = vmatpush1.msra.mxu0 0.0
      %5460 = vmatprep.subr.mxu0 0.0
      %5461 = vmatpush1.msra.mxu0 0.0
      %5462 = vmatprep.subr.mxu0 0.0
      %5463 = vmatpush1.msra.mxu0 0.0
      %5464 = vmatprep.subr.mxu0 0.0
      %5465 = vmatpush1.msra.mxu0 0.0
      %5466 = vmatprep.subr.mxu0 0.0
      %5467 = vmatpush1.msra.mxu0 0.0
      %5468 = vmatprep.subr.mxu0 0.0
      %5469 = vmatpush1.msra.mxu0 0.0
      %5470 = vmatprep.subr.mxu0 0.0
      %5471 = vmatpush1.msra.mxu0 0.0
      %5472 = vmatprep.subr.mxu0 0.0
      %5473 = vmatpush1.msra.mxu0 0.0
      %5474 = vmatprep.subr.mxu0 0.0
      %5475 = vmatpush1.msra.mxu0 0.0
      %5476 = vmatprep.subr.mxu0 0.0
      %5477 = vmatpush1.msra.mxu0 0.0
      %5478 = vmatprep.subr.mxu0 0.0
      %5479 = vmatpush1.msra.mxu0 0.0
      %5480 = vmatprep.subr.mxu0 0.0
      %5481 = vmatpush1.msra.mxu0 0.0
      %5482 = vmatprep.subr.mxu0 0.0
      %5483 = vmatpush1.msra.mxu0 0.0
      %5484 = vmatprep.subr.mxu0 0.0
      %5485 = vmatpush1.msra.mxu0 0.0
      %5486 = vmatprep.subr.mxu0 0.0
      %5487 = vmatpush1.msra.mxu0 0.0
      %5488 = vmatprep.subr.mxu0 0.0
      %5489 = vmatpush1.msra.mxu0 0.0
      %5490 = vmatprep.subr.mxu0 0.0
      %5491 = vmatpush1.msra.mxu0 0.0
      %5492 = vmatprep.subr.mxu0 0.0
      %5493 = vmatpush1.msra.mxu0 0.0
      %5494 = vmatprep.mubr.f32.mxu0 0.0
      %5495 = vmatmul.mubr.f32.gmra.mrb[0].mxu0 %v5335
      %v5496 = vpop.f32.mrb[0].mxu0
      %v5497 = vadd.f32 0.0, %v5496
      %v5498 = vpop.f32.mrb[0].mxu0
      %5499 = vmatprep.mubr.f32.mxu0 0.0
      %5500 = vmatmul.mubr.f32.gmra.mrb[0].mxu0 %v5338
      %v5501 = vpop.f32.mrb[0].mxu0
      %v5502 = vadd.f32 0.0, %v5501
      %v5503 = vpop.f32.mrb[0].mxu0
      %5504 = vmatprep.mubr.f32.mxu0 0.0
      %5505 = vmatmul.mubr.f32.gmra.mrb[0].mxu0 %v5341
      %v5506 = vpop.f32.mrb[0].mxu0
      %v5507 = vadd.f32 0.0, %v5506
      %v5508 = vpop.f32.mrb[0].mxu0
      %5509 = vmatprep.mubr.f32.mxu0 0.0
      %5510 = vmatmul.mubr.f32.gmra.mrb[0].mxu0 %v5344
      %v5511 = vpop.f32.mrb[0].mxu0
      %v5512 = vadd.f32 0.0, %v5511
      %v5513 = vpop.f32.mrb[0].mxu0
      %5514 = vmatprep.mubr.f32.mxu0 0.0
      %5515 = vmatmul.mubr.f32.gmra.mrb[0].mxu0 %v5347
      %v5516 = vpop.f32.mrb[0].mxu0
      %v5517 = vadd.f32 0.0, %v5516
      %v5518 = vpop.f32.mrb[0].mxu0
      %5519 = vmatprep.mubr.f32.mxu0 0.0
      %5520 = vmatmul.mubr.f32.gmra.mrb[0].mxu0 %v5350
      %v5521 = vpop.f32.mrb[0].mxu0
      %v5522 = vadd.f32 0.0, %v5521
      %v5523 = vpop.f32.mrb[0].mxu0
      %5524 = vmatprep.mubr.f32.mxu0 0.0
      %5525 = vmatmul.mubr.f32.gmra.mrb[0].mxu0 %v5353
      %v5526 = vpop.f32.mrb[0].mxu0
      %v5527 = vadd.f32 0.0, %v5526
      %v5528 = vpop.f32.mrb[0].mxu0
      %5529 = vmatprep.mubr.f32.mxu0 0.0
      %5530 = vmatmul.mubr.f32.gmra.mrb[0].mxu0 %v5356
      %v5531 = vpop.f32.mrb[0].mxu0
      %v5532 = vadd.f32 0.0, %v5531
      %v5533 = vpop.f32.mrb[0].mxu0
      %5534 = vmatprep.mubr.f32.mxu0 0.0
      %5535 = vmatmul.mubr.f32.gmra.mrb[0].mxu0 %v5359
      %v5536 = vpop.f32.mrb[0].mxu0
      %v5537 = vadd.f32 0.0, %v5536
      %v5538 = vpop.f32.mrb[0].mxu0
      %5539 = vmatprep.mubr.f32.mxu0 0.0
      %5540 = vmatmul.mubr.f32.gmra.mrb[0].mxu0 %v5362
      %v5541 = vpop.f32.mrb[0].mxu0
      %v5542 = vadd.f32 0.0, %v5541
      %v5543 = vpop.f32.mrb[0].mxu0
      %5544 = vmatprep.mubr.f32.mxu0 0.0
      %5545 = vmatmul.mubr.f32.gmra.mrb[0].mxu0 %v5365
      %v5546 = vpop.f32.mrb[0].mxu0
      %v5547 = vadd.f32 0.0, %v5546
      %v5548 = vpop.f32.mrb[0].mxu0
      %5549 = vmatprep.mubr.f32.mxu0 0.0
      %5550 = vmatmul.mubr.f32.gmra.mrb[0].mxu0 %v5368
      %v5551 = vpop.f32.mrb[0].mxu0
      %v5552 = vadd.f32 0.0, %v5551
      %v5553 = vpop.f32.mrb[0].mxu0
      %5554 = vmatprep.mubr.f32.mxu0 0.0
      %5555 = vmatmul.mubr.f32.gmra.mrb[0].mxu0 %v5371
      %v5556 = vpop.f32.mrb[0].mxu0
      %v5557 = vadd.f32 0.0, %v5556
      %v5558 = vpop.f32.mrb[0].mxu0
      %5559 = vmatprep.mubr.f32.mxu0 0.0
      %5560 = vmatmul.mubr.f32.gmra.mrb[0].mxu0 %v5374
      %v5561 = vpop.f32.mrb[0].mxu0
      %v5562 = vadd.f32 0.0, %v5561
      %v5563 = vpop.f32.mrb[0].mxu0
      %5564 = vmatprep.mubr.f32.mxu0 0.0
      %5565 = vmatmul.mubr.f32.gmra.mrb[0].mxu0 %v5377
      %v5566 = vpop.f32.mrb[0].mxu0
      %v5567 = vadd.f32 0.0, %v5566
      %v5568 = vpop.f32.mrb[0].mxu0
      %5569 = vmatprep.mubr.f32.mxu0 0.0
      %5570 = vmatmul.mubr.f32.gmra.mrb[0].mxu0 %v5380
      %v5571 = vpop.f32.mrb[0].mxu0
      %v5572 = vadd.f32 0.0, %v5571
      %v5573 = vpop.f32.mrb[0].mxu0
      %5574 = vmatprep.mubr.f32.mxu0 0.0
      %5575 = vmatmul.mubr.f32.gmra.mrb[0].mxu0 %v5383
      %v5576 = vpop.f32.mrb[0].mxu0
      %v5577 = vadd.f32 0.0, %v5576
      %v5578 = vpop.f32.mrb[0].mxu0
      %5579 = vmatprep.mubr.f32.mxu0 0.0
      %5580 = vmatmul.mubr.f32.gmra.mrb[0].mxu0 %v5386
      %v5581 = vpop.f32.mrb[0].mxu0
      %v5582 = vadd.f32 0.0, %v5581
      %v5583 = vpop.f32.mrb[0].mxu0
      %5584 = vmatprep.mubr.f32.mxu0 0.0
      %5585 = vmatmul.mubr.f32.gmra.mrb[0].mxu0 %v5389
      %v5586 = vpop.f32.mrb[0].mxu0
      %v5587 = vadd.f32 0.0, %v5586
      %v5588 = vpop.f32.mrb[0].mxu0
      %5589 = vmatprep.mubr.f32.mxu0 0.0
      %5590 = vmatmul.mubr.f32.gmra.mrb[0].mxu0 %v5392
      %v5591 = vpop.f32.mrb[0].mxu0
      %v5592 = vadd.f32 0.0, %v5591
      %v5593 = vpop.f32.mrb[0].mxu0
      %5594 = vmatprep.mubr.f32.mxu0 0.0
      %5595 = vmatmul.mubr.f32.gmra.mrb[0].mxu0 %v5395
      %v5596 = vpop.f32.mrb[0].mxu0
      %v5597 = vadd.f32 0.0, %v5596
      %v5598 = vpop.f32.mrb[0].mxu0
      %5599 = vmatprep.mubr.f32.mxu0 0.0
      %5600 = vmatmul.mubr.f32.gmra.mrb[0].mxu0 %v5398
      %v5601 = vpop.f32.mrb[0].mxu0
      %v5602 = vadd.f32 0.0, %v5601
      %v5603 = vpop.f32.mrb[0].mxu0
      %5604 = vmatprep.mubr.f32.mxu0 0.0
      %5605 = vmatmul.mubr.f32.gmra.mrb[0].mxu0 %v5401
      %v5606 = vpop.f32.mrb[0].mxu0
      %v5607 = vadd.f32 0.0, %v5606
      %v5608 = vpop.f32.mrb[0].mxu0
      %5609 = vmatprep.mubr.f32.mxu0 0.0
      %5610 = vmatmul.mubr.f32.gmra.mrb[0].mxu0 %v5404
      %v5611 = vpop.f32.mrb[0].mxu0
      %v5612 = vadd.f32 0.0, %v5611
      %v5613 = vpop.f32.mrb[0].mxu0
      %5614 = vmatprep.mubr.f32.mxu0 0.0
      %5615 = vmatmul.mubr.f32.gmra.mrb[0].mxu0 %v5407
      %v5616 = vpop.f32.mrb[0].mxu0
      %v5617 = vadd.f32 0.0, %v5616
      %v5618 = vpop.f32.mrb[0].mxu0
      %5619 = vmatprep.mubr.f32.mxu0 0.0
      %5620 = vmatmul.mubr.f32.gmra.mrb[0].mxu0 %v5410
      %v5621 = vpop.f32.mrb[0].mxu0
      %v5622 = vadd.f32 0.0, %v5621
      %v5623 = vpop.f32.mrb[0].mxu0
      %5624 = vmatprep.mubr.f32.mxu0 0.0
      %5625 = vmatmul.mubr.f32.gmra.mrb[0].mxu0 %v5413
      %v5626 = vpop.f32.mrb[0].mxu0
      %v5627 = vadd.f32 0.0, %v5626
      %v5628 = vpop.f32.mrb[0].mxu0
      %5629 = vmatprep.mubr.f32.mxu0 0.0
      %5630 = vmatmul.mubr.f32.gmra.mrb[0].mxu0 %v5416
      %v5631 = vpop.f32.mrb[0].mxu0
      %v5632 = vadd.f32 0.0, %v5631
      %v5633 = vpop.f32.mrb[0].mxu0
      %5634 = vmatprep.mubr.f32.mxu0 0.0
      %5635 = vmatmul.mubr.f32.gmra.mrb[0].mxu0 %v5419
      %v5636 = vpop.f32.mrb[0].mxu0
      %v5637 = vadd.f32 0.0, %v5636
      %v5638 = vpop.f32.mrb[0].mxu0
      %5639 = vmatprep.mubr.f32.mxu0 0.0
      %5640 = vmatmul.mubr.f32.gmra.mrb[0].mxu0 %v5422
      %v5641 = vpop.f32.mrb[0].mxu0
      %v5642 = vadd.f32 0.0, %v5641
      %v5643 = vpop.f32.mrb[0].mxu0
      %5644 = vmatprep.mubr.f32.mxu0 0.0
      %5645 = vmatmul.mubr.f32.gmra.mrb[0].mxu0 %v5425
      %v5646 = vpop.f32.mrb[0].mxu0
      %v5647 = vadd.f32 0.0, %v5646
      %v5648 = vpop.f32.mrb[0].mxu0
      %5649 = vmatprep.mubr.f32.mxu0 0.0
      %5650 = vmatmul.mubr.f32.gmra.mrb[0].mxu0 %v5428
      %v5651 = vpop.f32.mrb[0].mxu0
      %v5652 = vadd.f32 0.0, %v5651
      %v5653 = vpop.f32.mrb[0].mxu0
      %5654 = vdwg.mxu0
      %v5655 = vadd.f32 %v5052, %v5497
      %v5656 = vadd.f32 %v5057, %v5502
      %v5657 = vadd.f32 %v5062, %v5507
      %v5658 = vadd.f32 %v5067, %v5512
      %v5659 = vadd.f32 %v5072, %v5517
      %v5660 = vadd.f32 %v5077, %v5522
      %v5661 = vadd.f32 %v5082, %v5527
      %v5662 = vadd.f32 %v5087, %v5532
      %v5663 = vadd.f32 %v5092, %v5537
      %v5664 = vadd.f32 %v5097, %v5542
      %v5665 = vadd.f32 %v5102, %v5547
      %v5666 = vadd.f32 %v5107, %v5552
      %v5667 = vadd.f32 %v5112, %v5557
      %v5668 = vadd.f32 %v5117, %v5562
      %v5669 = vadd.f32 %v5122, %v5567
      %v5670 = vadd.f32 %v5127, %v5572
      %v5671 = vadd.f32 %v5132, %v5577
      %v5672 = vadd.f32 %v5137, %v5582
      %v5673 = vadd.f32 %v5142, %v5587
      %v5674 = vadd.f32 %v5147, %v5592
      %v5675 = vadd.f32 %v5152, %v5597
      %v5676 = vadd.f32 %v5157, %v5602
      %v5677 = vadd.f32 %v5162, %v5607
      %v5678 = vadd.f32 %v5167, %v5612
      %v5679 = vadd.f32 %v5172, %v5617
      %v5680 = vadd.f32 %v5177, %v5622
      %v5681 = vadd.f32 %v5182, %v5627
      %v5682 = vadd.f32 %v5187, %v5632
      %v5683 = vadd.f32 %v5192, %v5637
      %v5684 = vadd.f32 %v5197, %v5642
      %v5685 = vadd.f32 %v5202, %v5647
      %v5686 = vadd.f32 %v5207, %v5652
      %v5688 = vrot.slane %v4451, 7
      %v5689 = vsel %vm1001, %v4541, %v5688
      %v5690 = vrot.slane %v4452, 7
      %v5691 = vsel %vm1001, %v5688, %v5690
      %v5694 = vsel %vm938, %v4484, 0.0
      %v5695 = vsel %vm939, %v4486, 0.0
      %v5696 = vsel %vm940, %v4488, 0.0
      %v5697 = vsel %vm941, %v4490, 0.0
      %v5698 = vsel %vm942, %v4492, 0.0
      %v5699 = vsel %vm943, %v4494, 0.0
      %v5700 = vsel %vm944, %v4496, 0.0
      %v5701 = vsel %vm945, %v4498, 0.0
      %v5702 = vsel %vm946, %v4500, 0.0
      %v5703 = vsel %vm947, %v4502, 0.0
      %v5704 = vsel %vm948, %v4504, 0.0
      %v5705 = vsel %vm949, %v4506, 0.0
      %v5706 = vsel %vm950, %v4508, 0.0
      %v5707 = vsel %vm951, %v4510, 0.0
      %v5708 = vsel %vm952, %v4512, 0.0
      %v5709 = vsel %vm953, %v4514, 0.0
      %v5710 = vsel %vm954, %v4516, 0.0
      %v5711 = vsel %vm955, %v4518, 0.0
      %v5712 = vsel %vm956, %v4520, 0.0
      %v5713 = vsel %vm957, %v4522, 0.0
      %v5714 = vsel %vm958, %v4524, 0.0
      %v5715 = vsel %vm959, %v4526, 0.0
      %v5716 = vsel %vm960, %v4528, 0.0
      %v5717 = vsel %vm961, %v4530, 0.0
      %v5718 = vsel %vm962, %v4532, 0.0
      %v5719 = vsel %vm963, %v4534, 0.0
      %v5720 = vsel %vm964, %v4536, 0.0
      %v5721 = vsel %vm965, %v4538, 0.0
      %v5722 = vsel %vm966, %v4540, 0.0
      %v5723 = vsel %vm967, %v4542, 0.0
      %v5724 = vsel %vm968, %v5689, 0.0
      %v5725 = vsel %vm969, %v5691, 0.0
      %v5727 = vsel %vm4603, %v5694, 0
      %v5730 = vsel %vm4603, %v5695, 0
      %v5733 = vsel %vm4603, %v5696, 0
      %v5736 = vsel %vm4603, %v5697, 0
      %v5739 = vsel %vm4603, %v5698, 0
      %v5742 = vsel %vm4603, %v5699, 0
      %v5745 = vsel %vm4603, %v5700, 0
      %v5748 = vsel %vm4603, %v5701, 0
      %v5751 = vsel %vm4603, %v5702, 0
      %v5754 = vsel %vm4603, %v5703, 0
      %v5757 = vsel %vm4603, %v5704, 0
      %v5760 = vsel %vm4603, %v5705, 0
      %v5763 = vsel %vm4603, %v5706, 0
      %v5766 = vsel %vm4603, %v5707, 0
      %v5769 = vsel %vm4603, %v5708, 0
      %v5772 = vsel %vm4603, %v5709, 0
      %v5775 = vsel %vm4603, %v5710, 0
      %v5778 = vsel %vm4603, %v5711, 0
      %v5781 = vsel %vm4603, %v5712, 0
      %v5784 = vsel %vm4603, %v5713, 0
      %v5787 = vsel %vm4603, %v5714, 0
      %v5790 = vsel %vm4603, %v5715, 0
      %v5793 = vsel %vm4603, %v5716, 0
      %v5796 = vsel %vm4603, %v5717, 0
      %v5799 = vsel %vm4603, %v5718, 0
      %v5802 = vsel %vm4603, %v5719, 0
      %v5805 = vsel %vm4603, %v5720, 0
      %v5808 = vsel %vm4603, %v5721, 0
      %v5811 = vsel %vm4603, %v5722, 0
      %v5814 = vsel %vm4603, %v5723, 0
      %v5817 = vsel %vm4603, %v5724, 0
      %v5820 = vsel %vm4603, %v5725, 0
      %5822 = vmatprep.subr.mxu0 0.0
      %5823 = vmatpush1.msra.mxu0 %v885
      %5824 = vmatprep.subr.mxu0 0.0
      %5825 = vmatpush1.msra.mxu0 0.0
      %5826 = vmatprep.subr.mxu0 0.0
      %5827 = vmatpush1.msra.mxu0 0.0
      %5828 = vmatprep.subr.mxu0 0.0
      %5829 = vmatpush1.msra.mxu0 0.0
      %5830 = vmatprep.subr.mxu0 0.0
      %5831 = vmatpush1.msra.mxu0 0.0
      %5832 = vmatprep.subr.mxu0 0.0
      %5833 = vmatpush1.msra.mxu0 0.0
      %5834 = vmatprep.subr.mxu0 0.0
      %5835 = vmatpush1.msra.mxu0 0.0
      %5836 = vmatprep.subr.mxu0 0.0
      %5837 = vmatpush1.msra.mxu0 0.0
      %5838 = vmatprep.subr.mxu0 0.0
      %5839 = vmatpush1.msra.mxu0 0.0
      %5840 = vmatprep.subr.mxu0 0.0
      %5841 = vmatpush1.msra.mxu0 0.0
      %5842 = vmatprep.subr.mxu0 0.0
      %5843 = vmatpush1.msra.mxu0 0.0
      %5844 = vmatprep.subr.mxu0 0.0
      %5845 = vmatpush1.msra.mxu0 0.0
      %5846 = vmatprep.subr.mxu0 0.0
      %5847 = vmatpush1.msra.mxu0 0.0
      %5848 = vmatprep.subr.mxu0 0.0
      %5849 = vmatpush1.msra.mxu0 0.0
      %5850 = vmatprep.subr.mxu0 0.0
      %5851 = vmatpush1.msra.mxu0 0.0
      %5852 = vmatprep.subr.mxu0 0.0
      %5853 = vmatpush1.msra.mxu0 0.0
      %5854 = vmatprep.subr.mxu0 0.0
      %5855 = vmatpush1.msra.mxu0 0.0
      %5856 = vmatprep.subr.mxu0 0.0
      %5857 = vmatpush1.msra.mxu0 0.0
      %5858 = vmatprep.subr.mxu0 0.0
      %5859 = vmatpush1.msra.mxu0 0.0
      %5860 = vmatprep.subr.mxu0 0.0
      %5861 = vmatpush1.msra.mxu0 0.0
      %5862 = vmatprep.subr.mxu0 0.0
      %5863 = vmatpush1.msra.mxu0 0.0
      %5864 = vmatprep.subr.mxu0 0.0
      %5865 = vmatpush1.msra.mxu0 0.0
      %5866 = vmatprep.subr.mxu0 0.0
      %5867 = vmatpush1.msra.mxu0 0.0
      %5868 = vmatprep.subr.mxu0 0.0
      %5869 = vmatpush1.msra.mxu0 0.0
      %5870 = vmatprep.subr.mxu0 0.0
      %5871 = vmatpush1.msra.mxu0 0.0
      %5872 = vmatprep.subr.mxu0 0.0
      %5873 = vmatpush1.msra.mxu0 0.0
      %5874 = vmatprep.subr.mxu0 0.0
      %5875 = vmatpush1.msra.mxu0 0.0
      %5876 = vmatprep.subr.mxu0 0.0
      %5877 = vmatpush1.msra.mxu0 0.0
      %5878 = vmatprep.subr.mxu0 0.0
      %5879 = vmatpush1.msra.mxu0 0.0
      %5880 = vmatprep.subr.mxu0 0.0
      %5881 = vmatpush1.msra.mxu0 0.0
      %5882 = vmatprep.subr.mxu0 0.0
      %5883 = vmatpush1.msra.mxu0 0.0
      %5884 = vmatprep.subr.mxu0 0.0
      %5885 = vmatpush1.msra.mxu0 0.0
      %5886 = vmatprep.mubr.f32.mxu0 0.0
      %5887 = vmatmul.mubr.f32.gmra.mrb[0].mxu0 %v5727
      %v5888 = vpop.f32.mrb[0].mxu0
      %v5889 = vadd.f32 0.0, %v5888
      %v5890 = vpop.f32.mrb[0].mxu0
      %5891 = vmatprep.mubr.f32.mxu0 0.0
      %5892 = vmatmul.mubr.f32.gmra.mrb[0].mxu0 %v5730
      %v5893 = vpop.f32.mrb[0].mxu0
      %v5894 = vadd.f32 0.0, %v5893
      %v5895 = vpop.f32.mrb[0].mxu0
      %5896 = vmatprep.mubr.f32.mxu0 0.0
      %5897 = vmatmul.mubr.f32.gmra.mrb[0].mxu0 %v5733
      %v5898 = vpop.f32.mrb[0].mxu0
      %v5899 = vadd.f32 0.0, %v5898
      %v5900 = vpop.f32.mrb[0].mxu0
      %5901 = vmatprep.mubr.f32.mxu0 0.0
      %5902 = vmatmul.mubr.f32.gmra.mrb[0].mxu0 %v5736
      %v5903 = vpop.f32.mrb[0].mxu0
      %v5904 = vadd.f32 0.0, %v5903
      %v5905 = vpop.f32.mrb[0].mxu0
      %5906 = vmatprep.mubr.f32.mxu0 0.0
      %5907 = vmatmul.mubr.f32.gmra.mrb[0].mxu0 %v5739
      %v5908 = vpop.f32.mrb[0].mxu0
      %v5909 = vadd.f32 0.0, %v5908
      %v5910 = vpop.f32.mrb[0].mxu0
      %5911 = vmatprep.mubr.f32.mxu0 0.0
      %5912 = vmatmul.mubr.f32.gmra.mrb[0].mxu0 %v5742
      %v5913 = vpop.f32.mrb[0].mxu0
      %v5914 = vadd.f32 0.0, %v5913
      %v5915 = vpop.f32.mrb[0].mxu0
      %5916 = vmatprep.mubr.f32.mxu0 0.0
      %5917 = vmatmul.mubr.f32.gmra.mrb[0].mxu0 %v5745
      %v5918 = vpop.f32.mrb[0].mxu0
      %v5919 = vadd.f32 0.0, %v5918
      %v5920 = vpop.f32.mrb[0].mxu0
      %5921 = vmatprep.mubr.f32.mxu0 0.0
      %5922 = vmatmul.mubr.f32.gmra.mrb[0].mxu0 %v5748
      %v5923 = vpop.f32.mrb[0].mxu0
      %v5924 = vadd.f32 0.0, %v5923
      %v5925 = vpop.f32.mrb[0].mxu0
      %5926 = vmatprep.mubr.f32.mxu0 0.0
      %5927 = vmatmul.mubr.f32.gmra.mrb[0].mxu0 %v5751
      %v5928 = vpop.f32.mrb[0].mxu0
      %v5929 = vadd.f32 0.0, %v5928
      %v5930 = vpop.f32.mrb[0].mxu0
      %5931 = vmatprep.mubr.f32.mxu0 0.0
      %5932 = vmatmul.mubr.f32.gmra.mrb[0].mxu0 %v5754
      %v5933 = vpop.f32.mrb[0].mxu0
      %v5934 = vadd.f32 0.0, %v5933
      %v5935 = vpop.f32.mrb[0].mxu0
      %5936 = vmatprep.mubr.f32.mxu0 0.0
      %5937 = vmatmul.mubr.f32.gmra.mrb[0].mxu0 %v5757
      %v5938 = vpop.f32.mrb[0].mxu0
      %v5939 = vadd.f32 0.0, %v5938
      %v5940 = vpop.f32.mrb[0].mxu0
      %5941 = vmatprep.mubr.f32.mxu0 0.0
      %5942 = vmatmul.mubr.f32.gmra.mrb[0].mxu0 %v5760
      %v5943 = vpop.f32.mrb[0].mxu0
      %v5944 = vadd.f32 0.0, %v5943
      %v5945 = vpop.f32.mrb[0].mxu0
      %5946 = vmatprep.mubr.f32.mxu0 0.0
      %5947 = vmatmul.mubr.f32.gmra.mrb[0].mxu0 %v5763
      %v5948 = vpop.f32.mrb[0].mxu0
      %v5949 = vadd.f32 0.0, %v5948
      %v5950 = vpop.f32.mrb[0].mxu0
      %5951 = vmatprep.mubr.f32.mxu0 0.0
      %5952 = vmatmul.mubr.f32.gmra.mrb[0].mxu0 %v5766
      %v5953 = vpop.f32.mrb[0].mxu0
      %v5954 = vadd.f32 0.0, %v5953
      %v5955 = vpop.f32.mrb[0].mxu0
      %5956 = vmatprep.mubr.f32.mxu0 0.0
      %5957 = vmatmul.mubr.f32.gmra.mrb[0].mxu0 %v5769
      %v5958 = vpop.f32.mrb[0].mxu0
      %v5959 = vadd.f32 0.0, %v5958
      %v5960 = vpop.f32.mrb[0].mxu0
      %5961 = vmatprep.mubr.f32.mxu0 0.0
      %5962 = vmatmul.mubr.f32.gmra.mrb[0].mxu0 %v5772
      %v5963 = vpop.f32.mrb[0].mxu0
      %v5964 = vadd.f32 0.0, %v5963
      %v5965 = vpop.f32.mrb[0].mxu0
      %5966 = vmatprep.mubr.f32.mxu0 0.0
      %5967 = vmatmul.mubr.f32.gmra.mrb[0].mxu0 %v5775
      %v5968 = vpop.f32.mrb[0].mxu0
      %v5969 = vadd.f32 0.0, %v5968
      %v5970 = vpop.f32.mrb[0].mxu0
      %5971 = vmatprep.mubr.f32.mxu0 0.0
      %5972 = vmatmul.mubr.f32.gmra.mrb[0].mxu0 %v5778
      %v5973 = vpop.f32.mrb[0].mxu0
      %v5974 = vadd.f32 0.0, %v5973
      %v5975 = vpop.f32.mrb[0].mxu0
      %5976 = vmatprep.mubr.f32.mxu0 0.0
      %5977 = vmatmul.mubr.f32.gmra.mrb[0].mxu0 %v5781
      %v5978 = vpop.f32.mrb[0].mxu0
      %v5979 = vadd.f32 0.0, %v5978
      %v5980 = vpop.f32.mrb[0].mxu0
      %5981 = vmatprep.mubr.f32.mxu0 0.0
      %5982 = vmatmul.mubr.f32.gmra.mrb[0].mxu0 %v5784
      %v5983 = vpop.f32.mrb[0].mxu0
      %v5984 = vadd.f32 0.0, %v5983
      %v5985 = vpop.f32.mrb[0].mxu0
      %5986 = vmatprep.mubr.f32.mxu0 0.0
      %5987 = vmatmul.mubr.f32.gmra.mrb[0].mxu0 %v5787
      %v5988 = vpop.f32.mrb[0].mxu0
      %v5989 = vadd.f32 0.0, %v5988
      %v5990 = vpop.f32.mrb[0].mxu0
      %5991 = vmatprep.mubr.f32.mxu0 0.0
      %5992 = vmatmul.mubr.f32.gmra.mrb[0].mxu0 %v5790
      %v5993 = vpop.f32.mrb[0].mxu0
      %v5994 = vadd.f32 0.0, %v5993
      %v5995 = vpop.f32.mrb[0].mxu0
      %5996 = vmatprep.mubr.f32.mxu0 0.0
      %5997 = vmatmul.mubr.f32.gmra.mrb[0].mxu0 %v5793
      %v5998 = vpop.f32.mrb[0].mxu0
      %v5999 = vadd.f32 0.0, %v5998
      %v6000 = vpop.f32.mrb[0].mxu0
      %6001 = vmatprep.mubr.f32.mxu0 0.0
      %6002 = vmatmul.mubr.f32.gmra.mrb[0].mxu0 %v5796
      %v6003 = vpop.f32.mrb[0].mxu0
      %v6004 = vadd.f32 0.0, %v6003
      %v6005 = vpop.f32.mrb[0].mxu0
      %6006 = vmatprep.mubr.f32.mxu0 0.0
      %6007 = vmatmul.mubr.f32.gmra.mrb[0].mxu0 %v5799
      %v6008 = vpop.f32.mrb[0].mxu0
      %v6009 = vadd.f32 0.0, %v6008
      %v6010 = vpop.f32.mrb[0].mxu0
      %6011 = vmatprep.mubr.f32.mxu0 0.0
      %6012 = vmatmul.mubr.f32.gmra.mrb[0].mxu0 %v5802
      %v6013 = vpop.f32.mrb[0].mxu0
      %v6014 = vadd.f32 0.0, %v6013
      %v6015 = vpop.f32.mrb[0].mxu0
      %6016 = vmatprep.mubr.f32.mxu0 0.0
      %6017 = vmatmul.mubr.f32.gmra.mrb[0].mxu0 %v5805
      %v6018 = vpop.f32.mrb[0].mxu0
      %v6019 = vadd.f32 0.0, %v6018
      %v6020 = vpop.f32.mrb[0].mxu0
      %6021 = vmatprep.mubr.f32.mxu0 0.0
      %6022 = vmatmul.mubr.f32.gmra.mrb[0].mxu0 %v5808
      %v6023 = vpop.f32.mrb[0].mxu0
      %v6024 = vadd.f32 0.0, %v6023
      %v6025 = vpop.f32.mrb[0].mxu0
      %6026 = vmatprep.mubr.f32.mxu0 0.0
      %6027 = vmatmul.mubr.f32.gmra.mrb[0].mxu0 %v5811
      %v6028 = vpop.f32.mrb[0].mxu0
      %v6029 = vadd.f32 0.0, %v6028
      %v6030 = vpop.f32.mrb[0].mxu0
      %6031 = vmatprep.mubr.f32.mxu0 0.0
      %6032 = vmatmul.mubr.f32.gmra.mrb[0].mxu0 %v5814
      %v6033 = vpop.f32.mrb[0].mxu0
      %v6034 = vadd.f32 0.0, %v6033
      %v6035 = vpop.f32.mrb[0].mxu0
      %6036 = vmatprep.mubr.f32.mxu0 0.0
      %6037 = vmatmul.mubr.f32.gmra.mrb[0].mxu0 %v5817
      %v6038 = vpop.f32.mrb[0].mxu0
      %v6039 = vadd.f32 0.0, %v6038
      %v6040 = vpop.f32.mrb[0].mxu0
      %6041 = vmatprep.mubr.f32.mxu0 0.0
      %6042 = vmatmul.mubr.f32.gmra.mrb[0].mxu0 %v5820
      %v6043 = vpop.f32.mrb[0].mxu0
      %v6044 = vadd.f32 0.0, %v6043
      %v6045 = vpop.f32.mrb[0].mxu0
      %6046 = vdwg.mxu0
      %v6047 = vadd.f32 %v5655, %v5889
      %v6048 = vadd.f32 %v5656, %v5894
      %v6049 = vadd.f32 %v5657, %v5899
      %v6050 = vadd.f32 %v5658, %v5904
      %v6051 = vadd.f32 %v5659, %v5909
      %v6052 = vadd.f32 %v5660, %v5914
      %v6053 = vadd.f32 %v5661, %v5919
      %v6054 = vadd.f32 %v5662, %v5924
      %v6055 = vadd.f32 %v5663, %v5929
      %v6056 = vadd.f32 %v5664, %v5934
      %v6057 = vadd.f32 %v5665, %v5939
      %v6058 = vadd.f32 %v5666, %v5944
      %v6059 = vadd.f32 %v5667, %v5949
      %v6060 = vadd.f32 %v5668, %v5954
      %v6061 = vadd.f32 %v5669, %v5959
      %v6062 = vadd.f32 %v5670, %v5964
      %v6063 = vadd.f32 %v5671, %v5969
      %v6064 = vadd.f32 %v5672, %v5974
      %v6065 = vadd.f32 %v5673, %v5979
      %v6066 = vadd.f32 %v5674, %v5984
      %v6067 = vadd.f32 %v5675, %v5989
      %v6068 = vadd.f32 %v5676, %v5994
      %v6069 = vadd.f32 %v5677, %v5999
      %v6070 = vadd.f32 %v5678, %v6004
      %v6071 = vadd.f32 %v5679, %v6009
      %v6072 = vadd.f32 %v5680, %v6014
      %v6073 = vadd.f32 %v5681, %v6019
      %v6074 = vadd.f32 %v5682, %v6024
      %v6075 = vadd.f32 %v5683, %v6029
      %v6076 = vadd.f32 %v5684, %v6034
      %v6077 = vadd.f32 %v5685, %v6039
      %v6078 = vadd.f32 %v5686, %v6044
      %v6079 = vsel %vm4603, %v4451, 0
      %v6081 = vsel %vm4603, %v4452, 0
      %6083 = vmatprep.subr.mxu0 0.0
      %6084 = vmatpush1.msra.mxu0 %v886
      %6085 = vmatprep.subr.mxu0 0.0
      %6086 = vmatpush1.msra.mxu0 0.0
      %6087 = vmatprep.subr.mxu0 0.0
      %6088 = vmatpush1.msra.mxu0 0.0
      %6089 = vmatprep.subr.mxu0 0.0
      %6090 = vmatpush1.msra.mxu0 0.0
      %6091 = vmatprep.subr.mxu0 0.0
      %6092 = vmatpush1.msra.mxu0 0.0
      %6093 = vmatprep.subr.mxu0 0.0
      %6094 = vmatpush1.msra.mxu0 0.0
      %6095 = vmatprep.subr.mxu0 0.0
      %6096 = vmatpush1.msra.mxu0 0.0
      %6097 = vmatprep.subr.mxu0 0.0
      %6098 = vmatpush1.msra.mxu0 0.0
      %6099 = vmatprep.subr.mxu0 0.0
      %6100 = vmatpush1.msra.mxu0 0.0
      %6101 = vmatprep.subr.mxu0 0.0
      %6102 = vmatpush1.msra.mxu0 0.0
      %6103 = vmatprep.subr.mxu0 0.0
      %6104 = vmatpush1.msra.mxu0 0.0
      %6105 = vmatprep.subr.mxu0 0.0
      %6106 = vmatpush1.msra.mxu0 0.0
      %6107 = vmatprep.subr.mxu0 0.0
      %6108 = vmatpush1.msra.mxu0 0.0
      %6109 = vmatprep.subr.mxu0 0.0
      %6110 = vmatpush1.msra.mxu0 0.0
      %6111 = vmatprep.subr.mxu0 0.0
      %6112 = vmatpush1.msra.mxu0 0.0
      %6113 = vmatprep.subr.mxu0 0.0
      %6114 = vmatpush1.msra.mxu0 0.0
      %6115 = vmatprep.subr.mxu0 0.0
      %6116 = vmatpush1.msra.mxu0 0.0
      %6117 = vmatprep.subr.mxu0 0.0
      %6118 = vmatpush1.msra.mxu0 0.0
      %6119 = vmatprep.subr.mxu0 0.0
      %6120 = vmatpush1.msra.mxu0 0.0
      %6121 = vmatprep.subr.mxu0 0.0
      %6122 = vmatpush1.msra.mxu0 0.0
      %6123 = vmatprep.subr.mxu0 0.0
      %6124 = vmatpush1.msra.mxu0 0.0
      %6125 = vmatprep.subr.mxu0 0.0
      %6126 = vmatpush1.msra.mxu0 0.0
      %6127 = vmatprep.subr.mxu0 0.0
      %6128 = vmatpush1.msra.mxu0 0.0
      %6129 = vmatprep.subr.mxu0 0.0
      %6130 = vmatpush1.msra.mxu0 0.0
      %6131 = vmatprep.subr.mxu0 0.0
      %6132 = vmatpush1.msra.mxu0 0.0
      %6133 = vmatprep.subr.mxu0 0.0
      %6134 = vmatpush1.msra.mxu0 0.0
      %6135 = vmatprep.subr.mxu0 0.0
      %6136 = vmatpush1.msra.mxu0 0.0
      %6137 = vmatprep.subr.mxu0 0.0
      %6138 = vmatpush1.msra.mxu0 0.0
      %6139 = vmatprep.subr.mxu0 0.0
      %6140 = vmatpush1.msra.mxu0 0.0
      %6141 = vmatprep.subr.mxu0 0.0
      %6142 = vmatpush1.msra.mxu0 0.0
      %6143 = vmatprep.subr.mxu0 0.0
      %6144 = vmatpush1.msra.mxu0 0.0
      %6145 = vmatprep.subr.mxu0 0.0
      %6146 = vmatpush1.msra.mxu0 0.0
      %6147 = vmatprep.mubr.f32.mxu0 0.0
      %6148 = vmatmul.mubr.f32.gmra.mrb[0].mxu0 %v4606
      %v6149 = vpop.f32.mrb[0].mxu0
      %v6150 = vadd.f32 0.0, %v6149
      %v6151 = vpop.f32.mrb[0].mxu0
      %6152 = vmatprep.mubr.f32.mxu0 0.0
      %6153 = vmatmul.mubr.f32.gmra.mrb[0].mxu0 %v4608
      %v6154 = vpop.f32.mrb[0].mxu0
      %v6155 = vadd.f32 0.0, %v6154
      %v6156 = vpop.f32.mrb[0].mxu0
      %6157 = vmatprep.mubr.f32.mxu0 0.0
      %6158 = vmatmul.mubr.f32.gmra.mrb[0].mxu0 %v4610
      %v6159 = vpop.f32.mrb[0].mxu0
      %v6160 = vadd.f32 0.0, %v6159
      %v6161 = vpop.f32.mrb[0].mxu0
      %6162 = vmatprep.mubr.f32.mxu0 0.0
      %6163 = vmatmul.mubr.f32.gmra.mrb[0].mxu0 %v4612
      %v6164 = vpop.f32.mrb[0].mxu0
      %v6165 = vadd.f32 0.0, %v6164
      %v6166 = vpop.f32.mrb[0].mxu0
      %6167 = vmatprep.mubr.f32.mxu0 0.0
      %6168 = vmatmul.mubr.f32.gmra.mrb[0].mxu0 %v4614
      %v6169 = vpop.f32.mrb[0].mxu0
      %v6170 = vadd.f32 0.0, %v6169
      %v6171 = vpop.f32.mrb[0].mxu0
      %6172 = vmatprep.mubr.f32.mxu0 0.0
      %6173 = vmatmul.mubr.f32.gmra.mrb[0].mxu0 %v4616
      %v6174 = vpop.f32.mrb[0].mxu0
      %v6175 = vadd.f32 0.0, %v6174
      %v6176 = vpop.f32.mrb[0].mxu0
      %6177 = vmatprep.mubr.f32.mxu0 0.0
      %6178 = vmatmul.mubr.f32.gmra.mrb[0].mxu0 %v4618
      %v6179 = vpop.f32.mrb[0].mxu0
      %v6180 = vadd.f32 0.0, %v6179
      %v6181 = vpop.f32.mrb[0].mxu0
      %6182 = vmatprep.mubr.f32.mxu0 0.0
      %6183 = vmatmul.mubr.f32.gmra.mrb[0].mxu0 %v4620
      %v6184 = vpop.f32.mrb[0].mxu0
      %v6185 = vadd.f32 0.0, %v6184
      %v6186 = vpop.f32.mrb[0].mxu0
      %6187 = vmatprep.mubr.f32.mxu0 0.0
      %6188 = vmatmul.mubr.f32.gmra.mrb[0].mxu0 %v4622
      %v6189 = vpop.f32.mrb[0].mxu0
      %v6190 = vadd.f32 0.0, %v6189
      %v6191 = vpop.f32.mrb[0].mxu0
      %6192 = vmatprep.mubr.f32.mxu0 0.0
      %6193 = vmatmul.mubr.f32.gmra.mrb[0].mxu0 %v4624
      %v6194 = vpop.f32.mrb[0].mxu0
      %v6195 = vadd.f32 0.0, %v6194
      %v6196 = vpop.f32.mrb[0].mxu0
      %6197 = vmatprep.mubr.f32.mxu0 0.0
      %6198 = vmatmul.mubr.f32.gmra.mrb[0].mxu0 %v4626
      %v6199 = vpop.f32.mrb[0].mxu0
      %v6200 = vadd.f32 0.0, %v6199
      %v6201 = vpop.f32.mrb[0].mxu0
      %6202 = vmatprep.mubr.f32.mxu0 0.0
      %6203 = vmatmul.mubr.f32.gmra.mrb[0].mxu0 %v4628
      %v6204 = vpop.f32.mrb[0].mxu0
      %v6205 = vadd.f32 0.0, %v6204
      %v6206 = vpop.f32.mrb[0].mxu0
      %6207 = vmatprep.mubr.f32.mxu0 0.0
      %6208 = vmatmul.mubr.f32.gmra.mrb[0].mxu0 %v4630
      %v6209 = vpop.f32.mrb[0].mxu0
      %v6210 = vadd.f32 0.0, %v6209
      %v6211 = vpop.f32.mrb[0].mxu0
      %6212 = vmatprep.mubr.f32.mxu0 0.0
      %6213 = vmatmul.mubr.f32.gmra.mrb[0].mxu0 %v4632
      %v6214 = vpop.f32.mrb[0].mxu0
      %v6215 = vadd.f32 0.0, %v6214
      %v6216 = vpop.f32.mrb[0].mxu0
      %6217 = vmatprep.mubr.f32.mxu0 0.0
      %6218 = vmatmul.mubr.f32.gmra.mrb[0].mxu0 %v4634
      %v6219 = vpop.f32.mrb[0].mxu0
      %v6220 = vadd.f32 0.0, %v6219
      %v6221 = vpop.f32.mrb[0].mxu0
      %6222 = vmatprep.mubr.f32.mxu0 0.0
      %6223 = vmatmul.mubr.f32.gmra.mrb[0].mxu0 %v4636
      %v6224 = vpop.f32.mrb[0].mxu0
      %v6225 = vadd.f32 0.0, %v6224
      %v6226 = vpop.f32.mrb[0].mxu0
      %6227 = vmatprep.mubr.f32.mxu0 0.0
      %6228 = vmatmul.mubr.f32.gmra.mrb[0].mxu0 %v4638
      %v6229 = vpop.f32.mrb[0].mxu0
      %v6230 = vadd.f32 0.0, %v6229
      %v6231 = vpop.f32.mrb[0].mxu0
      %6232 = vmatprep.mubr.f32.mxu0 0.0
      %6233 = vmatmul.mubr.f32.gmra.mrb[0].mxu0 %v4640
      %v6234 = vpop.f32.mrb[0].mxu0
      %v6235 = vadd.f32 0.0, %v6234
      %v6236 = vpop.f32.mrb[0].mxu0
      %6237 = vmatprep.mubr.f32.mxu0 0.0
      %6238 = vmatmul.mubr.f32.gmra.mrb[0].mxu0 %v4642
      %v6239 = vpop.f32.mrb[0].mxu0
      %v6240 = vadd.f32 0.0, %v6239
      %v6241 = vpop.f32.mrb[0].mxu0
      %6242 = vmatprep.mubr.f32.mxu0 0.0
      %6243 = vmatmul.mubr.f32.gmra.mrb[0].mxu0 %v4644
      %v6244 = vpop.f32.mrb[0].mxu0
      %v6245 = vadd.f32 0.0, %v6244
      %v6246 = vpop.f32.mrb[0].mxu0
      %6247 = vmatprep.mubr.f32.mxu0 0.0
      %6248 = vmatmul.mubr.f32.gmra.mrb[0].mxu0 %v4646
      %v6249 = vpop.f32.mrb[0].mxu0
      %v6250 = vadd.f32 0.0, %v6249
      %v6251 = vpop.f32.mrb[0].mxu0
      %6252 = vmatprep.mubr.f32.mxu0 0.0
      %6253 = vmatmul.mubr.f32.gmra.mrb[0].mxu0 %v4648
      %v6254 = vpop.f32.mrb[0].mxu0
      %v6255 = vadd.f32 0.0, %v6254
      %v6256 = vpop.f32.mrb[0].mxu0
      %6257 = vmatprep.mubr.f32.mxu0 0.0
      %6258 = vmatmul.mubr.f32.gmra.mrb[0].mxu0 %v4650
      %v6259 = vpop.f32.mrb[0].mxu0
      %v6260 = vadd.f32 0.0, %v6259
      %v6261 = vpop.f32.mrb[0].mxu0
      %6262 = vmatprep.mubr.f32.mxu0 0.0
      %6263 = vmatmul.mubr.f32.gmra.mrb[0].mxu0 %v4652
      %v6264 = vpop.f32.mrb[0].mxu0
      %v6265 = vadd.f32 0.0, %v6264
      %v6266 = vpop.f32.mrb[0].mxu0
      %6267 = vmatprep.mubr.f32.mxu0 0.0
      %6268 = vmatmul.mubr.f32.gmra.mrb[0].mxu0 %v4654
      %v6269 = vpop.f32.mrb[0].mxu0
      %v6270 = vadd.f32 0.0, %v6269
      %v6271 = vpop.f32.mrb[0].mxu0
      %6272 = vmatprep.mubr.f32.mxu0 0.0
      %6273 = vmatmul.mubr.f32.gmra.mrb[0].mxu0 %v4656
      %v6274 = vpop.f32.mrb[0].mxu0
      %v6275 = vadd.f32 0.0, %v6274
      %v6276 = vpop.f32.mrb[0].mxu0
      %6277 = vmatprep.mubr.f32.mxu0 0.0
      %6278 = vmatmul.mubr.f32.gmra.mrb[0].mxu0 %v4658
      %v6279 = vpop.f32.mrb[0].mxu0
      %v6280 = vadd.f32 0.0, %v6279
      %v6281 = vpop.f32.mrb[0].mxu0
      %6282 = vmatprep.mubr.f32.mxu0 0.0
      %6283 = vmatmul.mubr.f32.gmra.mrb[0].mxu0 %v4660
      %v6284 = vpop.f32.mrb[0].mxu0
      %v6285 = vadd.f32 0.0, %v6284
      %v6286 = vpop.f32.mrb[0].mxu0
      %6287 = vmatprep.mubr.f32.mxu0 0.0
      %6288 = vmatmul.mubr.f32.gmra.mrb[0].mxu0 %v4662
      %v6289 = vpop.f32.mrb[0].mxu0
      %v6290 = vadd.f32 0.0, %v6289
      %v6291 = vpop.f32.mrb[0].mxu0
      %6292 = vmatprep.mubr.f32.mxu0 0.0
      %6293 = vmatmul.mubr.f32.gmra.mrb[0].mxu0 %v4664
      %v6294 = vpop.f32.mrb[0].mxu0
      %v6295 = vadd.f32 0.0, %v6294
      %v6296 = vpop.f32.mrb[0].mxu0
      %6297 = vmatprep.mubr.f32.mxu0 0.0
      %6298 = vmatmul.mubr.f32.gmra.mrb[0].mxu0 %v6079
      %v6299 = vpop.f32.mrb[0].mxu0
      %v6300 = vadd.f32 0.0, %v6299
      %v6301 = vpop.f32.mrb[0].mxu0
      %6302 = vmatprep.mubr.f32.mxu0 0.0
      %6303 = vmatmul.mubr.f32.gmra.mrb[0].mxu0 %v6081
      %v6304 = vpop.f32.mrb[0].mxu0
      %v6305 = vadd.f32 0.0, %v6304
      %v6306 = vpop.f32.mrb[0].mxu0
      %6307 = vdwg.mxu0
      %v6308 = vadd.f32 %v6047, %v6150
      %v6309 = vadd.f32 %v6048, %v6155
      %v6310 = vadd.f32 %v6049, %v6160
      %v6311 = vadd.f32 %v6050, %v6165
      %v6312 = vadd.f32 %v6051, %v6170
      %v6313 = vadd.f32 %v6052, %v6175
      %v6314 = vadd.f32 %v6053, %v6180
      %v6315 = vadd.f32 %v6054, %v6185
      %v6316 = vadd.f32 %v6055, %v6190
      %v6317 = vadd.f32 %v6056, %v6195
      %v6318 = vadd.f32 %v6057, %v6200
      %v6319 = vadd.f32 %v6058, %v6205
      %v6320 = vadd.f32 %v6059, %v6210
      %v6321 = vadd.f32 %v6060, %v6215
      %v6322 = vadd.f32 %v6061, %v6220
      %v6323 = vadd.f32 %v6062, %v6225
      %v6324 = vadd.f32 %v6063, %v6230
      %v6325 = vadd.f32 %v6064, %v6235
      %v6326 = vadd.f32 %v6065, %v6240
      %v6327 = vadd.f32 %v6066, %v6245
      %v6328 = vadd.f32 %v6067, %v6250
      %v6329 = vadd.f32 %v6068, %v6255
      %v6330 = vadd.f32 %v6069, %v6260
      %v6331 = vadd.f32 %v6070, %v6265
      %v6332 = vadd.f32 %v6071, %v6270
      %v6333 = vadd.f32 %v6072, %v6275
      %v6334 = vadd.f32 %v6073, %v6280
      %v6335 = vadd.f32 %v6074, %v6285
      %v6336 = vadd.f32 %v6075, %v6290
      %v6337 = vadd.f32 %v6076, %v6295
      %v6338 = vadd.f32 %v6077, %v6300
      %v6339 = vadd.f32 %v6078, %v6305
      %v6340 = vrot.slane %v4452, 1
      %v6341 = vsel %vm1808, %v5271, %v6340
      %v6342 = vsel %vm1808, %v6340, %v1809
      %v6345 = vsel %vm1775, %v5214, 0.0
      %v6346 = vsel %vm1776, %v5216, 0.0
      %v6347 = vsel %vm1777, %v5218, 0.0
      %v6348 = vsel %vm1778, %v5220, 0.0
      %v6349 = vsel %vm1779, %v5222, 0.0
      %v6350 = vsel %vm1780, %v5224, 0.0
      %v6351 = vsel %vm1781, %v5226, 0.0
      %v6352 = vsel %vm1782, %v5228, 0.0
      %v6353 = vsel %vm1783, %v5230, 0.0
      %v6354 = vsel %vm1784, %v5232, 0.0
      %v6355 = vsel %vm1785, %v5234, 0.0
      %v6356 = vsel %vm1786, %v5236, 0.0
      %v6357 = vsel %vm1787, %v5238, 0.0
      %v6358 = vsel %vm1788, %v5240, 0.0
      %v6359 = vsel %vm1789, %v5242, 0.0
      %v6360 = vsel %vm1790, %v5244, 0.0
      %v6361 = vsel %vm1791, %v5246, 0.0
      %v6362 = vsel %vm1792, %v5248, 0.0
      %v6363 = vsel %vm1793, %v5250, 0.0
      %v6364 = vsel %vm1794, %v5252, 0.0
      %v6365 = vsel %vm1795, %v5254, 0.0
      %v6366 = vsel %vm1796, %v5256, 0.0
      %v6367 = vsel %vm1797, %v5258, 0.0
      %v6368 = vsel %vm1798, %v5260, 0.0
      %v6369 = vsel %vm1799, %v5262, 0.0
      %v6370 = vsel %vm1800, %v5264, 0.0
      %v6371 = vsel %vm1801, %v5266, 0.0
      %v6372 = vsel %vm1802, %v5268, 0.0
      %v6373 = vsel %vm1803, %v5270, 0.0
      %v6374 = vsel %vm1804, %v5272, 0.0
      %v6375 = vsel %vm1805, %v6341, 0.0
      %v6376 = vsel %vm1806, %v6342, 0.0
      %v6378 = vsel %vm4603, %v6345, 0
      %v6381 = vsel %vm4603, %v6346, 0
      %v6384 = vsel %vm4603, %v6347, 0
      %v6387 = vsel %vm4603, %v6348, 0
      %v6390 = vsel %vm4603, %v6349, 0
      %v6393 = vsel %vm4603, %v6350, 0
      %v6396 = vsel %vm4603, %v6351, 0
      %v6399 = vsel %vm4603, %v6352, 0
      %v6402 = vsel %vm4603, %v6353, 0
      %v6405 = vsel %vm4603, %v6354, 0
      %v6408 = vsel %vm4603, %v6355, 0
      %v6411 = vsel %vm4603, %v6356, 0
      %v6414 = vsel %vm4603, %v6357, 0
      %v6417 = vsel %vm4603, %v6358, 0
      %v6420 = vsel %vm4603, %v6359, 0
      %v6423 = vsel %vm4603, %v6360, 0
      %v6426 = vsel %vm4603, %v6361, 0
      %v6429 = vsel %vm4603, %v6362, 0
      %v6432 = vsel %vm4603, %v6363, 0
      %v6435 = vsel %vm4603, %v6364, 0
      %v6438 = vsel %vm4603, %v6365, 0
      %v6441 = vsel %vm4603, %v6366, 0
      %v6444 = vsel %vm4603, %v6367, 0
      %v6447 = vsel %vm4603, %v6368, 0
      %v6450 = vsel %vm4603, %v6369, 0
      %v6453 = vsel %vm4603, %v6370, 0
      %v6456 = vsel %vm4603, %v6371, 0
      %v6459 = vsel %vm4603, %v6372, 0
      %v6462 = vsel %vm4603, %v6373, 0
      %v6465 = vsel %vm4603, %v6374, 0
      %v6468 = vsel %vm4603, %v6375, 0
      %v6471 = vsel %vm4603, %v6376, 0
      %6473 = vmatprep.subr.mxu0 0.0
      %6474 = vmatpush1.msra.mxu0 %v887
      %6475 = vmatprep.subr.mxu0 0.0
      %6476 = vmatpush1.msra.mxu0 0.0
      %6477 = vmatprep.subr.mxu0 0.0
      %6478 = vmatpush1.msra.mxu0 0.0
      %6479 = vmatprep.subr.mxu0 0.0
      %6480 = vmatpush1.msra.mxu0 0.0
      %6481 = vmatprep.subr.mxu0 0.0
      %6482 = vmatpush1.msra.mxu0 0.0
      %6483 = vmatprep.subr.mxu0 0.0
      %6484 = vmatpush1.msra.mxu0 0.0
      %6485 = vmatprep.subr.mxu0 0.0
      %6486 = vmatpush1.msra.mxu0 0.0
      %6487 = vmatprep.subr.mxu0 0.0
      %6488 = vmatpush1.msra.mxu0 0.0
      %6489 = vmatprep.subr.mxu0 0.0
      %6490 = vmatpush1.msra.mxu0 0.0
      %6491 = vmatprep.subr.mxu0 0.0
      %6492 = vmatpush1.msra.mxu0 0.0
      %6493 = vmatprep.subr.mxu0 0.0
      %6494 = vmatpush1.msra.mxu0 0.0
      %6495 = vmatprep.subr.mxu0 0.0
      %6496 = vmatpush1.msra.mxu0 0.0
      %6497 = vmatprep.subr.mxu0 0.0
      %6498 = vmatpush1.msra.mxu0 0.0
      %6499 = vmatprep.subr.mxu0 0.0
      %6500 = vmatpush1.msra.mxu0 0.0
      %6501 = vmatprep.subr.mxu0 0.0
      %6502 = vmatpush1.msra.mxu0 0.0
      %6503 = vmatprep.subr.mxu0 0.0
      %6504 = vmatpush1.msra.mxu0 0.0
      %6505 = vmatprep.subr.mxu0 0.0
      %6506 = vmatpush1.msra.mxu0 0.0
      %6507 = vmatprep.subr.mxu0 0.0
      %6508 = vmatpush1.msra.mxu0 0.0
      %6509 = vmatprep.subr.mxu0 0.0
      %6510 = vmatpush1.msra.mxu0 0.0
      %6511 = vmatprep.subr.mxu0 0.0
      %6512 = vmatpush1.msra.mxu0 0.0
      %6513 = vmatprep.subr.mxu0 0.0
      %6514 = vmatpush1.msra.mxu0 0.0
      %6515 = vmatprep.subr.mxu0 0.0
      %6516 = vmatpush1.msra.mxu0 0.0
      %6517 = vmatprep.subr.mxu0 0.0
      %6518 = vmatpush1.msra.mxu0 0.0
      %6519 = vmatprep.subr.mxu0 0.0
      %6520 = vmatpush1.msra.mxu0 0.0
      %6521 = vmatprep.subr.mxu0 0.0
      %6522 = vmatpush1.msra.mxu0 0.0
      %6523 = vmatprep.subr.mxu0 0.0
      %6524 = vmatpush1.msra.mxu0 0.0
      %6525 = vmatprep.subr.mxu0 0.0
      %6526 = vmatpush1.msra.mxu0 0.0
      %6527 = vmatprep.subr.mxu0 0.0
      %6528 = vmatpush1.msra.mxu0 0.0
      %6529 = vmatprep.subr.mxu0 0.0
      %6530 = vmatpush1.msra.mxu0 0.0
      %6531 = vmatprep.subr.mxu0 0.0
      %6532 = vmatpush1.msra.mxu0 0.0
      %6533 = vmatprep.subr.mxu0 0.0
      %6534 = vmatpush1.msra.mxu0 0.0
      %6535 = vmatprep.subr.mxu0 0.0
      %6536 = vmatpush1.msra.mxu0 0.0
      %6537 = vmatprep.mubr.f32.mxu0 0.0
      %6538 = vmatmul.mubr.f32.gmra.mrb[0].mxu0 %v6378
      %v6539 = vpop.f32.mrb[0].mxu0
      %v6540 = vadd.f32 0.0, %v6539
      %v6541 = vpop.f32.mrb[0].mxu0
      %6542 = vmatprep.mubr.f32.mxu0 0.0
      %6543 = vmatmul.mubr.f32.gmra.mrb[0].mxu0 %v6381
      %v6544 = vpop.f32.mrb[0].mxu0
      %v6545 = vadd.f32 0.0, %v6544
      %v6546 = vpop.f32.mrb[0].mxu0
      %6547 = vmatprep.mubr.f32.mxu0 0.0
      %6548 = vmatmul.mubr.f32.gmra.mrb[0].mxu0 %v6384
      %v6549 = vpop.f32.mrb[0].mxu0
      %v6550 = vadd.f32 0.0, %v6549
      %v6551 = vpop.f32.mrb[0].mxu0
      %6552 = vmatprep.mubr.f32.mxu0 0.0
      %6553 = vmatmul.mubr.f32.gmra.mrb[0].mxu0 %v6387
      %v6554 = vpop.f32.mrb[0].mxu0
      %v6555 = vadd.f32 0.0, %v6554
      %v6556 = vpop.f32.mrb[0].mxu0
      %6557 = vmatprep.mubr.f32.mxu0 0.0
      %6558 = vmatmul.mubr.f32.gmra.mrb[0].mxu0 %v6390
      %v6559 = vpop.f32.mrb[0].mxu0
      %v6560 = vadd.f32 0.0, %v6559
      %v6561 = vpop.f32.mrb[0].mxu0
      %6562 = vmatprep.mubr.f32.mxu0 0.0
      %6563 = vmatmul.mubr.f32.gmra.mrb[0].mxu0 %v6393
      %v6564 = vpop.f32.mrb[0].mxu0
      %v6565 = vadd.f32 0.0, %v6564
      %v6566 = vpop.f32.mrb[0].mxu0
      %6567 = vmatprep.mubr.f32.mxu0 0.0
      %6568 = vmatmul.mubr.f32.gmra.mrb[0].mxu0 %v6396
      %v6569 = vpop.f32.mrb[0].mxu0
      %v6570 = vadd.f32 0.0, %v6569
      %v6571 = vpop.f32.mrb[0].mxu0
      %6572 = vmatprep.mubr.f32.mxu0 0.0
      %6573 = vmatmul.mubr.f32.gmra.mrb[0].mxu0 %v6399
      %v6574 = vpop.f32.mrb[0].mxu0
      %v6575 = vadd.f32 0.0, %v6574
      %v6576 = vpop.f32.mrb[0].mxu0
      %6577 = vmatprep.mubr.f32.mxu0 0.0
      %6578 = vmatmul.mubr.f32.gmra.mrb[0].mxu0 %v6402
      %v6579 = vpop.f32.mrb[0].mxu0
      %v6580 = vadd.f32 0.0, %v6579
      %v6581 = vpop.f32.mrb[0].mxu0
      %6582 = vmatprep.mubr.f32.mxu0 0.0
      %6583 = vmatmul.mubr.f32.gmra.mrb[0].mxu0 %v6405
      %v6584 = vpop.f32.mrb[0].mxu0
      %v6585 = vadd.f32 0.0, %v6584
      %v6586 = vpop.f32.mrb[0].mxu0
      %6587 = vmatprep.mubr.f32.mxu0 0.0
      %6588 = vmatmul.mubr.f32.gmra.mrb[0].mxu0 %v6408
      %v6589 = vpop.f32.mrb[0].mxu0
      %v6590 = vadd.f32 0.0, %v6589
      %v6591 = vpop.f32.mrb[0].mxu0
      %6592 = vmatprep.mubr.f32.mxu0 0.0
      %6593 = vmatmul.mubr.f32.gmra.mrb[0].mxu0 %v6411
      %v6594 = vpop.f32.mrb[0].mxu0
      %v6595 = vadd.f32 0.0, %v6594
      %v6596 = vpop.f32.mrb[0].mxu0
      %6597 = vmatprep.mubr.f32.mxu0 0.0
      %6598 = vmatmul.mubr.f32.gmra.mrb[0].mxu0 %v6414
      %v6599 = vpop.f32.mrb[0].mxu0
      %v6600 = vadd.f32 0.0, %v6599
      %v6601 = vpop.f32.mrb[0].mxu0
      %6602 = vmatprep.mubr.f32.mxu0 0.0
      %6603 = vmatmul.mubr.f32.gmra.mrb[0].mxu0 %v6417
      %v6604 = vpop.f32.mrb[0].mxu0
      %v6605 = vadd.f32 0.0, %v6604
      %v6606 = vpop.f32.mrb[0].mxu0
      %6607 = vmatprep.mubr.f32.mxu0 0.0
      %6608 = vmatmul.mubr.f32.gmra.mrb[0].mxu0 %v6420
      %v6609 = vpop.f32.mrb[0].mxu0
      %v6610 = vadd.f32 0.0, %v6609
      %v6611 = vpop.f32.mrb[0].mxu0
      %6612 = vmatprep.mubr.f32.mxu0 0.0
      %6613 = vmatmul.mubr.f32.gmra.mrb[0].mxu0 %v6423
      %v6614 = vpop.f32.mrb[0].mxu0
      %v6615 = vadd.f32 0.0, %v6614
      %v6616 = vpop.f32.mrb[0].mxu0
      %6617 = vmatprep.mubr.f32.mxu0 0.0
      %6618 = vmatmul.mubr.f32.gmra.mrb[0].mxu0 %v6426
      %v6619 = vpop.f32.mrb[0].mxu0
      %v6620 = vadd.f32 0.0, %v6619
      %v6621 = vpop.f32.mrb[0].mxu0
      %6622 = vmatprep.mubr.f32.mxu0 0.0
      %6623 = vmatmul.mubr.f32.gmra.mrb[0].mxu0 %v6429
      %v6624 = vpop.f32.mrb[0].mxu0
      %v6625 = vadd.f32 0.0, %v6624
      %v6626 = vpop.f32.mrb[0].mxu0
      %6627 = vmatprep.mubr.f32.mxu0 0.0
      %6628 = vmatmul.mubr.f32.gmra.mrb[0].mxu0 %v6432
      %v6629 = vpop.f32.mrb[0].mxu0
      %v6630 = vadd.f32 0.0, %v6629
      %v6631 = vpop.f32.mrb[0].mxu0
      %6632 = vmatprep.mubr.f32.mxu0 0.0
      %6633 = vmatmul.mubr.f32.gmra.mrb[0].mxu0 %v6435
      %v6634 = vpop.f32.mrb[0].mxu0
      %v6635 = vadd.f32 0.0, %v6634
      %v6636 = vpop.f32.mrb[0].mxu0
      %6637 = vmatprep.mubr.f32.mxu0 0.0
      %6638 = vmatmul.mubr.f32.gmra.mrb[0].mxu0 %v6438
      %v6639 = vpop.f32.mrb[0].mxu0
      %v6640 = vadd.f32 0.0, %v6639
      %v6641 = vpop.f32.mrb[0].mxu0
      %6642 = vmatprep.mubr.f32.mxu0 0.0
      %6643 = vmatmul.mubr.f32.gmra.mrb[0].mxu0 %v6441
      %v6644 = vpop.f32.mrb[0].mxu0
      %v6645 = vadd.f32 0.0, %v6644
      %v6646 = vpop.f32.mrb[0].mxu0
      %6647 = vmatprep.mubr.f32.mxu0 0.0
      %6648 = vmatmul.mubr.f32.gmra.mrb[0].mxu0 %v6444
      %v6649 = vpop.f32.mrb[0].mxu0
      %v6650 = vadd.f32 0.0, %v6649
      %v6651 = vpop.f32.mrb[0].mxu0
      %6652 = vmatprep.mubr.f32.mxu0 0.0
      %6653 = vmatmul.mubr.f32.gmra.mrb[0].mxu0 %v6447
      %v6654 = vpop.f32.mrb[0].mxu0
      %v6655 = vadd.f32 0.0, %v6654
      %v6656 = vpop.f32.mrb[0].mxu0
      %6657 = vmatprep.mubr.f32.mxu0 0.0
      %6658 = vmatmul.mubr.f32.gmra.mrb[0].mxu0 %v6450
      %v6659 = vpop.f32.mrb[0].mxu0
      %v6660 = vadd.f32 0.0, %v6659
      %v6661 = vpop.f32.mrb[0].mxu0
      %6662 = vmatprep.mubr.f32.mxu0 0.0
      %6663 = vmatmul.mubr.f32.gmra.mrb[0].mxu0 %v6453
      %v6664 = vpop.f32.mrb[0].mxu0
      %v6665 = vadd.f32 0.0, %v6664
      %v6666 = vpop.f32.mrb[0].mxu0
      %6667 = vmatprep.mubr.f32.mxu0 0.0
      %6668 = vmatmul.mubr.f32.gmra.mrb[0].mxu0 %v6456
      %v6669 = vpop.f32.mrb[0].mxu0
      %v6670 = vadd.f32 0.0, %v6669
      %v6671 = vpop.f32.mrb[0].mxu0
      %6672 = vmatprep.mubr.f32.mxu0 0.0
      %6673 = vmatmul.mubr.f32.gmra.mrb[0].mxu0 %v6459
      %v6674 = vpop.f32.mrb[0].mxu0
      %v6675 = vadd.f32 0.0, %v6674
      %v6676 = vpop.f32.mrb[0].mxu0
      %6677 = vmatprep.mubr.f32.mxu0 0.0
      %6678 = vmatmul.mubr.f32.gmra.mrb[0].mxu0 %v6462
      %v6679 = vpop.f32.mrb[0].mxu0
      %v6680 = vadd.f32 0.0, %v6679
      %v6681 = vpop.f32.mrb[0].mxu0
      %6682 = vmatprep.mubr.f32.mxu0 0.0
      %6683 = vmatmul.mubr.f32.gmra.mrb[0].mxu0 %v6465
      %v6684 = vpop.f32.mrb[0].mxu0
      %v6685 = vadd.f32 0.0, %v6684
      %v6686 = vpop.f32.mrb[0].mxu0
      %6687 = vmatprep.mubr.f32.mxu0 0.0
      %6688 = vmatmul.mubr.f32.gmra.mrb[0].mxu0 %v6468
      %v6689 = vpop.f32.mrb[0].mxu0
      %v6690 = vadd.f32 0.0, %v6689
      %v6691 = vpop.f32.mrb[0].mxu0
      %6692 = vmatprep.mubr.f32.mxu0 0.0
      %6693 = vmatmul.mubr.f32.gmra.mrb[0].mxu0 %v6471
      %v6694 = vpop.f32.mrb[0].mxu0
      %v6695 = vadd.f32 0.0, %v6694
      %v6696 = vpop.f32.mrb[0].mxu0
      %6697 = vdwg.mxu0
      %v6698 = vadd.f32 %v6308, %v6540
      %v6699 = vadd.f32 %v6309, %v6545
      %v6700 = vadd.f32 %v6310, %v6550
      %v6701 = vadd.f32 %v6311, %v6555
      %v6702 = vadd.f32 %v6312, %v6560
      %v6703 = vadd.f32 %v6313, %v6565
      %v6704 = vadd.f32 %v6314, %v6570
      %v6705 = vadd.f32 %v6315, %v6575
      %v6706 = vadd.f32 %v6316, %v6580
      %v6707 = vadd.f32 %v6317, %v6585
      %v6708 = vadd.f32 %v6318, %v6590
      %v6709 = vadd.f32 %v6319, %v6595
      %v6710 = vadd.f32 %v6320, %v6600
      %v6711 = vadd.f32 %v6321, %v6605
      %v6712 = vadd.f32 %v6322, %v6610
      %v6713 = vadd.f32 %v6323, %v6615
      %v6714 = vadd.f32 %v6324, %v6620
      %v6715 = vadd.f32 %v6325, %v6625
      %v6716 = vadd.f32 %v6326, %v6630
      %v6717 = vadd.f32 %v6327, %v6635
      %v6718 = vadd.f32 %v6328, %v6640
      %v6719 = vadd.f32 %v6329, %v6645
      %v6720 = vadd.f32 %v6330, %v6650
      %v6721 = vadd.f32 %v6331, %v6655
      %v6722 = vadd.f32 %v6332, %v6660
      %v6723 = vadd.f32 %v6333, %v6665
      %v6724 = vadd.f32 %v6334, %v6670
      %v6725 = vadd.f32 %v6335, %v6675
      %v6726 = vadd.f32 %v6336, %v6680
      %v6727 = vadd.f32 %v6337, %v6685
      %v6728 = vadd.f32 %v6338, %v6690
      %v6729 = vadd.f32 %v6339, %v6695
      %v6730 = vsel %vm1001, %v5690, %v1002
      %v6732 = vsel %vm938, %v4488, 0.0
      %v6733 = vsel %vm939, %v4490, 0.0
      %v6734 = vsel %vm940, %v4492, 0.0
      %v6735 = vsel %vm941, %v4494, 0.0
      %v6736 = vsel %vm942, %v4496, 0.0
      %v6737 = vsel %vm943, %v4498, 0.0
      %v6738 = vsel %vm944, %v4500, 0.0
      %v6739 = vsel %vm945, %v4502, 0.0
      %v6740 = vsel %vm946, %v4504, 0.0
      %v6741 = vsel %vm947, %v4506, 0.0
      %v6742 = vsel %vm948, %v4508, 0.0
      %v6743 = vsel %vm949, %v4510, 0.0
      %v6744 = vsel %vm950, %v4512, 0.0
      %v6745 = vsel %vm951, %v4514, 0.0
      %v6746 = vsel %vm952, %v4516, 0.0
      %v6747 = vsel %vm953, %v4518, 0.0
      %v6748 = vsel %vm954, %v4520, 0.0
      %v6749 = vsel %vm955, %v4522, 0.0
      %v6750 = vsel %vm956, %v4524, 0.0
      %v6751 = vsel %vm957, %v4526, 0.0
      %v6752 = vsel %vm958, %v4528, 0.0
      %v6753 = vsel %vm959, %v4530, 0.0
      %v6754 = vsel %vm960, %v4532, 0.0
      %v6755 = vsel %vm961, %v4534, 0.0
      %v6756 = vsel %vm962, %v4536, 0.0
      %v6757 = vsel %vm963, %v4538, 0.0
      %v6758 = vsel %vm964, %v4540, 0.0
      %v6759 = vsel %vm965, %v4542, 0.0
      %v6760 = vsel %vm966, %v5689, 0.0
      %v6761 = vsel %vm967, %v5691, 0.0
      %v6762 = vsel %vm968, %v6730, 0.0
      %v6764 = vsel %vm4603, %v6732, 0
      %v6767 = vsel %vm4603, %v6733, 0
      %v6770 = vsel %vm4603, %v6734, 0
      %v6773 = vsel %vm4603, %v6735, 0
      %v6776 = vsel %vm4603, %v6736, 0
      %v6779 = vsel %vm4603, %v6737, 0
      %v6782 = vsel %vm4603, %v6738, 0
      %v6785 = vsel %vm4603, %v6739, 0
      %v6788 = vsel %vm4603, %v6740, 0
      %v6791 = vsel %vm4603, %v6741, 0
      %v6794 = vsel %vm4603, %v6742, 0
      %v6797 = vsel %vm4603, %v6743, 0
      %v6800 = vsel %vm4603, %v6744, 0
      %v6803 = vsel %vm4603, %v6745, 0
      %v6806 = vsel %vm4603, %v6746, 0
      %v6809 = vsel %vm4603, %v6747, 0
      %v6812 = vsel %vm4603, %v6748, 0
      %v6815 = vsel %vm4603, %v6749, 0
      %v6818 = vsel %vm4603, %v6750, 0
      %v6821 = vsel %vm4603, %v6751, 0
      %v6824 = vsel %vm4603, %v6752, 0
      %v6827 = vsel %vm4603, %v6753, 0
      %v6830 = vsel %vm4603, %v6754, 0
      %v6833 = vsel %vm4603, %v6755, 0
      %v6836 = vsel %vm4603, %v6756, 0
      %v6839 = vsel %vm4603, %v6757, 0
      %v6842 = vsel %vm4603, %v6758, 0
      %v6845 = vsel %vm4603, %v6759, 0
      %v6848 = vsel %vm4603, %v6760, 0
      %v6851 = vsel %vm4603, %v6761, 0
      %v6854 = vsel %vm4603, %v6762, 0
      %v6856 = vsel %vm4603, %v3378, 0
      %6858 = vmatprep.subr.mxu0 0.0
      %6859 = vmatpush1.msra.mxu0 %v888
      %6860 = vmatprep.subr.mxu0 0.0
      %6861 = vmatpush1.msra.mxu0 0.0
      %6862 = vmatprep.subr.mxu0 0.0
      %6863 = vmatpush1.msra.mxu0 0.0
      %6864 = vmatprep.subr.mxu0 0.0
      %6865 = vmatpush1.msra.mxu0 0.0
      %6866 = vmatprep.subr.mxu0 0.0
      %6867 = vmatpush1.msra.mxu0 0.0
      %6868 = vmatprep.subr.mxu0 0.0
      %6869 = vmatpush1.msra.mxu0 0.0
      %6870 = vmatprep.subr.mxu0 0.0
      %6871 = vmatpush1.msra.mxu0 0.0
      %6872 = vmatprep.subr.mxu0 0.0
      %6873 = vmatpush1.msra.mxu0 0.0
      %6874 = vmatprep.subr.mxu0 0.0
      %6875 = vmatpush1.msra.mxu0 0.0
      %6876 = vmatprep.subr.mxu0 0.0
      %6877 = vmatpush1.msra.mxu0 0.0
      %6878 = vmatprep.subr.mxu0 0.0
      %6879 = vmatpush1.msra.mxu0 0.0
      %6880 = vmatprep.subr.mxu0 0.0
      %6881 = vmatpush1.msra.mxu0 0.0
      %6882 = vmatprep.subr.mxu0 0.0
      %6883 = vmatpush1.msra.mxu0 0.0
      %6884 = vmatprep.subr.mxu0 0.0
      %6885 = vmatpush1.msra.mxu0 0.0
      %6886 = vmatprep.subr.mxu0 0.0
      %6887 = vmatpush1.msra.mxu0 0.0
      %6888 = vmatprep.subr.mxu0 0.0
      %6889 = vmatpush1.msra.mxu0 0.0
      %6890 = vmatprep.subr.mxu0 0.0
      %6891 = vmatpush1.msra.mxu0 0.0
      %6892 = vmatprep.subr.mxu0 0.0
      %6893 = vmatpush1.msra.mxu0 0.0
      %6894 = vmatprep.subr.mxu0 0.0
      %6895 = vmatpush1.msra.mxu0 0.0
      %6896 = vmatprep.subr.mxu0 0.0
      %6897 = vmatpush1.msra.mxu0 0.0
      %6898 = vmatprep.subr.mxu0 0.0
      %6899 = vmatpush1.msra.mxu0 0.0
      %6900 = vmatprep.subr.mxu0 0.0
      %6901 = vmatpush1.msra.mxu0 0.0
      %6902 = vmatprep.subr.mxu0 0.0
      %6903 = vmatpush1.msra.mxu0 0.0
      %6904 = vmatprep.subr.mxu0 0.0
      %6905 = vmatpush1.msra.mxu0 0.0
      %6906 = vmatprep.subr.mxu0 0.0
      %6907 = vmatpush1.msra.mxu0 0.0
      %6908 = vmatprep.subr.mxu0 0.0
      %6909 = vmatpush1.msra.mxu0 0.0
      %6910 = vmatprep.subr.mxu0 0.0
      %6911 = vmatpush1.msra.mxu0 0.0
      %6912 = vmatprep.subr.mxu0 0.0
      %6913 = vmatpush1.msra.mxu0 0.0
      %6914 = vmatprep.subr.mxu0 0.0
      %6915 = vmatpush1.msra.mxu0 0.0
      %6916 = vmatprep.subr.mxu0 0.0
      %6917 = vmatpush1.msra.mxu0 0.0
      %6918 = vmatprep.subr.mxu0 0.0
      %6919 = vmatpush1.msra.mxu0 0.0
      %6920 = vmatprep.subr.mxu0 0.0
      %6921 = vmatpush1.msra.mxu0 0.0
      %6922 = vmatprep.mubr.f32.mxu0 0.0
      %6923 = vmatmul.mubr.f32.gmra.mrb[0].mxu0 %v6764
      %v6924 = vpop.f32.mrb[0].mxu0
      %v6925 = vadd.f32 0.0, %v6924
      %v6926 = vpop.f32.mrb[0].mxu0
      %6927 = vmatprep.mubr.f32.mxu0 0.0
      %6928 = vmatmul.mubr.f32.gmra.mrb[0].mxu0 %v6767
      %v6929 = vpop.f32.mrb[0].mxu0
      %v6930 = vadd.f32 0.0, %v6929
      %v6931 = vpop.f32.mrb[0].mxu0
      %6932 = vmatprep.mubr.f32.mxu0 0.0
      %6933 = vmatmul.mubr.f32.gmra.mrb[0].mxu0 %v6770
      %v6934 = vpop.f32.mrb[0].mxu0
      %v6935 = vadd.f32 0.0, %v6934
      %v6936 = vpop.f32.mrb[0].mxu0
      %6937 = vmatprep.mubr.f32.mxu0 0.0
      %6938 = vmatmul.mubr.f32.gmra.mrb[0].mxu0 %v6773
      %v6939 = vpop.f32.mrb[0].mxu0
      %v6940 = vadd.f32 0.0, %v6939
      %v6941 = vpop.f32.mrb[0].mxu0
      %6942 = vmatprep.mubr.f32.mxu0 0.0
      %6943 = vmatmul.mubr.f32.gmra.mrb[0].mxu0 %v6776
      %v6944 = vpop.f32.mrb[0].mxu0
      %v6945 = vadd.f32 0.0, %v6944
      %v6946 = vpop.f32.mrb[0].mxu0
      %6947 = vmatprep.mubr.f32.mxu0 0.0
      %6948 = vmatmul.mubr.f32.gmra.mrb[0].mxu0 %v6779
      %v6949 = vpop.f32.mrb[0].mxu0
      %v6950 = vadd.f32 0.0, %v6949
      %v6951 = vpop.f32.mrb[0].mxu0
      %6952 = vmatprep.mubr.f32.mxu0 0.0
      %6953 = vmatmul.mubr.f32.gmra.mrb[0].mxu0 %v6782
      %v6954 = vpop.f32.mrb[0].mxu0
      %v6955 = vadd.f32 0.0, %v6954
      %v6956 = vpop.f32.mrb[0].mxu0
      %6957 = vmatprep.mubr.f32.mxu0 0.0
      %6958 = vmatmul.mubr.f32.gmra.mrb[0].mxu0 %v6785
      %v6959 = vpop.f32.mrb[0].mxu0
      %v6960 = vadd.f32 0.0, %v6959
      %v6961 = vpop.f32.mrb[0].mxu0
      %6962 = vmatprep.mubr.f32.mxu0 0.0
      %6963 = vmatmul.mubr.f32.gmra.mrb[0].mxu0 %v6788
      %v6964 = vpop.f32.mrb[0].mxu0
      %v6965 = vadd.f32 0.0, %v6964
      %v6966 = vpop.f32.mrb[0].mxu0
      %6967 = vmatprep.mubr.f32.mxu0 0.0
      %6968 = vmatmul.mubr.f32.gmra.mrb[0].mxu0 %v6791
      %v6969 = vpop.f32.mrb[0].mxu0
      %v6970 = vadd.f32 0.0, %v6969
      %v6971 = vpop.f32.mrb[0].mxu0
      %6972 = vmatprep.mubr.f32.mxu0 0.0
      %6973 = vmatmul.mubr.f32.gmra.mrb[0].mxu0 %v6794
      %v6974 = vpop.f32.mrb[0].mxu0
      %v6975 = vadd.f32 0.0, %v6974
      %v6976 = vpop.f32.mrb[0].mxu0
      %6977 = vmatprep.mubr.f32.mxu0 0.0
      %6978 = vmatmul.mubr.f32.gmra.mrb[0].mxu0 %v6797
      %v6979 = vpop.f32.mrb[0].mxu0
      %v6980 = vadd.f32 0.0, %v6979
      %v6981 = vpop.f32.mrb[0].mxu0
      %6982 = vmatprep.mubr.f32.mxu0 0.0
      %6983 = vmatmul.mubr.f32.gmra.mrb[0].mxu0 %v6800
      %v6984 = vpop.f32.mrb[0].mxu0
      %v6985 = vadd.f32 0.0, %v6984
      %v6986 = vpop.f32.mrb[0].mxu0
      %6987 = vmatprep.mubr.f32.mxu0 0.0
      %6988 = vmatmul.mubr.f32.gmra.mrb[0].mxu0 %v6803
      %v6989 = vpop.f32.mrb[0].mxu0
      %v6990 = vadd.f32 0.0, %v6989
      %v6991 = vpop.f32.mrb[0].mxu0
      %6992 = vmatprep.mubr.f32.mxu0 0.0
      %6993 = vmatmul.mubr.f32.gmra.mrb[0].mxu0 %v6806
      %v6994 = vpop.f32.mrb[0].mxu0
      %v6995 = vadd.f32 0.0, %v6994
      %v6996 = vpop.f32.mrb[0].mxu0
      %6997 = vmatprep.mubr.f32.mxu0 0.0
      %6998 = vmatmul.mubr.f32.gmra.mrb[0].mxu0 %v6809
      %v6999 = vpop.f32.mrb[0].mxu0
      %v7000 = vadd.f32 0.0, %v6999
      %v7001 = vpop.f32.mrb[0].mxu0
      %7002 = vmatprep.mubr.f32.mxu0 0.0
      %7003 = vmatmul.mubr.f32.gmra.mrb[0].mxu0 %v6812
      %v7004 = vpop.f32.mrb[0].mxu0
      %v7005 = vadd.f32 0.0, %v7004
      %v7006 = vpop.f32.mrb[0].mxu0
      %7007 = vmatprep.mubr.f32.mxu0 0.0
      %7008 = vmatmul.mubr.f32.gmra.mrb[0].mxu0 %v6815
      %v7009 = vpop.f32.mrb[0].mxu0
      %v7010 = vadd.f32 0.0, %v7009
      %v7011 = vpop.f32.mrb[0].mxu0
      %7012 = vmatprep.mubr.f32.mxu0 0.0
      %7013 = vmatmul.mubr.f32.gmra.mrb[0].mxu0 %v6818
      %v7014 = vpop.f32.mrb[0].mxu0
      %v7015 = vadd.f32 0.0, %v7014
      %v7016 = vpop.f32.mrb[0].mxu0
      %7017 = vmatprep.mubr.f32.mxu0 0.0
      %7018 = vmatmul.mubr.f32.gmra.mrb[0].mxu0 %v6821
      %v7019 = vpop.f32.mrb[0].mxu0
      %v7020 = vadd.f32 0.0, %v7019
      %v7021 = vpop.f32.mrb[0].mxu0
      %7022 = vmatprep.mubr.f32.mxu0 0.0
      %7023 = vmatmul.mubr.f32.gmra.mrb[0].mxu0 %v6824
      %v7024 = vpop.f32.mrb[0].mxu0
      %v7025 = vadd.f32 0.0, %v7024
      %v7026 = vpop.f32.mrb[0].mxu0
      %7027 = vmatprep.mubr.f32.mxu0 0.0
      %7028 = vmatmul.mubr.f32.gmra.mrb[0].mxu0 %v6827
      %v7029 = vpop.f32.mrb[0].mxu0
      %v7030 = vadd.f32 0.0, %v7029
      %v7031 = vpop.f32.mrb[0].mxu0
      %7032 = vmatprep.mubr.f32.mxu0 0.0
      %7033 = vmatmul.mubr.f32.gmra.mrb[0].mxu0 %v6830
      %v7034 = vpop.f32.mrb[0].mxu0
      %v7035 = vadd.f32 0.0, %v7034
      %v7036 = vpop.f32.mrb[0].mxu0
      %7037 = vmatprep.mubr.f32.mxu0 0.0
      %7038 = vmatmul.mubr.f32.gmra.mrb[0].mxu0 %v6833
      %v7039 = vpop.f32.mrb[0].mxu0
      %v7040 = vadd.f32 0.0, %v7039
      %v7041 = vpop.f32.mrb[0].mxu0
      %7042 = vmatprep.mubr.f32.mxu0 0.0
      %7043 = vmatmul.mubr.f32.gmra.mrb[0].mxu0 %v6836
      %v7044 = vpop.f32.mrb[0].mxu0
      %v7045 = vadd.f32 0.0, %v7044
      %v7046 = vpop.f32.mrb[0].mxu0
      %7047 = vmatprep.mubr.f32.mxu0 0.0
      %7048 = vmatmul.mubr.f32.gmra.mrb[0].mxu0 %v6839
      %v7049 = vpop.f32.mrb[0].mxu0
      %v7050 = vadd.f32 0.0, %v7049
      %v7051 = vpop.f32.mrb[0].mxu0
      %7052 = vmatprep.mubr.f32.mxu0 0.0
      %7053 = vmatmul.mubr.f32.gmra.mrb[0].mxu0 %v6842
      %v7054 = vpop.f32.mrb[0].mxu0
      %v7055 = vadd.f32 0.0, %v7054
      %v7056 = vpop.f32.mrb[0].mxu0
      %7057 = vmatprep.mubr.f32.mxu0 0.0
      %7058 = vmatmul.mubr.f32.gmra.mrb[0].mxu0 %v6845
      %v7059 = vpop.f32.mrb[0].mxu0
      %v7060 = vadd.f32 0.0, %v7059
      %v7061 = vpop.f32.mrb[0].mxu0
      %7062 = vmatprep.mubr.f32.mxu0 0.0
      %7063 = vmatmul.mubr.f32.gmra.mrb[0].mxu0 %v6848
      %v7064 = vpop.f32.mrb[0].mxu0
      %v7065 = vadd.f32 0.0, %v7064
      %v7066 = vpop.f32.mrb[0].mxu0
      %7067 = vmatprep.mubr.f32.mxu0 0.0
      %7068 = vmatmul.mubr.f32.gmra.mrb[0].mxu0 %v6851
      %v7069 = vpop.f32.mrb[0].mxu0
      %v7070 = vadd.f32 0.0, %v7069
      %v7071 = vpop.f32.mrb[0].mxu0
      %7072 = vmatprep.mubr.f32.mxu0 0.0
      %7073 = vmatmul.mubr.f32.gmra.mrb[0].mxu0 %v6854
      %v7074 = vpop.f32.mrb[0].mxu0
      %v7075 = vadd.f32 0.0, %v7074
      %v7076 = vpop.f32.mrb[0].mxu0
      %7077 = vmatprep.mubr.f32.mxu0 0.0
      %7078 = vmatmul.mubr.f32.gmra.mrb[0].mxu0 %v6856
      %v7079 = vpop.f32.mrb[0].mxu0
      %v7080 = vadd.f32 0.0, %v7079
      %v7081 = vpop.f32.mrb[0].mxu0
      %7082 = vdwg.mxu0
      %v7083 = vadd.f32 %v6698, %v6925
      %v7084 = vadd.f32 %v6699, %v6930
      %v7085 = vadd.f32 %v6700, %v6935
      %v7086 = vadd.f32 %v6701, %v6940
      %v7087 = vadd.f32 %v6702, %v6945
      %v7088 = vadd.f32 %v6703, %v6950
      %v7089 = vadd.f32 %v6704, %v6955
      %v7090 = vadd.f32 %v6705, %v6960
      %v7091 = vadd.f32 %v6706, %v6965
      %v7092 = vadd.f32 %v6707, %v6970
      %v7093 = vadd.f32 %v6708, %v6975
      %v7094 = vadd.f32 %v6709, %v6980
      %v7095 = vadd.f32 %v6710, %v6985
      %v7096 = vadd.f32 %v6711, %v6990
      %v7097 = vadd.f32 %v6712, %v6995
      %v7098 = vadd.f32 %v6713, %v7000
      %v7099 = vadd.f32 %v6714, %v7005
      %v7100 = vadd.f32 %v6715, %v7010
      %v7101 = vadd.f32 %v6716, %v7015
      %v7102 = vadd.f32 %v6717, %v7020
      %v7103 = vadd.f32 %v6718, %v7025
      %v7104 = vadd.f32 %v6719, %v7030
      %v7105 = vadd.f32 %v6720, %v7035
      %v7106 = vadd.f32 %v6721, %v7040
      %v7107 = vadd.f32 %v6722, %v7045
      %v7108 = vadd.f32 %v6723, %v7050
      %v7109 = vadd.f32 %v6724, %v7055
      %v7110 = vadd.f32 %v6725, %v7060
      %v7111 = vadd.f32 %v6726, %v7065
      %v7112 = vadd.f32 %v6727, %v7070
      %v7113 = vadd.f32 %v6728, %v7075
      %v7114 = vadd.f32 %v6729, %v7080
      %7115 = vmatprep.subr.mxu0 0.0
      %7116 = vmatpush1.msra.mxu0 %v889
      %7117 = vmatprep.subr.mxu0 0.0
      %7118 = vmatpush1.msra.mxu0 0.0
      %7119 = vmatprep.subr.mxu0 0.0
      %7120 = vmatpush1.msra.mxu0 0.0
      %7121 = vmatprep.subr.mxu0 0.0
      %7122 = vmatpush1.msra.mxu0 0.0
      %7123 = vmatprep.subr.mxu0 0.0
      %7124 = vmatpush1.msra.mxu0 0.0
      %7125 = vmatprep.subr.mxu0 0.0
      %7126 = vmatpush1.msra.mxu0 0.0
      %7127 = vmatprep.subr.mxu0 0.0
      %7128 = vmatpush1.msra.mxu0 0.0
      %7129 = vmatprep.subr.mxu0 0.0
      %7130 = vmatpush1.msra.mxu0 0.0
      %7131 = vmatprep.subr.mxu0 0.0
      %7132 = vmatpush1.msra.mxu0 0.0
      %7133 = vmatprep.subr.mxu0 0.0
      %7134 = vmatpush1.msra.mxu0 0.0
      %7135 = vmatprep.subr.mxu0 0.0
      %7136 = vmatpush1.msra.mxu0 0.0
      %7137 = vmatprep.subr.mxu0 0.0
      %7138 = vmatpush1.msra.mxu0 0.0
      %7139 = vmatprep.subr.mxu0 0.0
      %7140 = vmatpush1.msra.mxu0 0.0
      %7141 = vmatprep.subr.mxu0 0.0
      %7142 = vmatpush1.msra.mxu0 0.0
      %7143 = vmatprep.subr.mxu0 0.0
      %7144 = vmatpush1.msra.mxu0 0.0
      %7145 = vmatprep.subr.mxu0 0.0
      %7146 = vmatpush1.msra.mxu0 0.0
      %7147 = vmatprep.subr.mxu0 0.0
      %7148 = vmatpush1.msra.mxu0 0.0
      %7149 = vmatprep.subr.mxu0 0.0
      %7150 = vmatpush1.msra.mxu0 0.0
      %7151 = vmatprep.subr.mxu0 0.0
      %7152 = vmatpush1.msra.mxu0 0.0
      %7153 = vmatprep.subr.mxu0 0.0
      %7154 = vmatpush1.msra.mxu0 0.0
      %7155 = vmatprep.subr.mxu0 0.0
      %7156 = vmatpush1.msra.mxu0 0.0
      %7157 = vmatprep.subr.mxu0 0.0
      %7158 = vmatpush1.msra.mxu0 0.0
      %7159 = vmatprep.subr.mxu0 0.0
      %7160 = vmatpush1.msra.mxu0 0.0
      %7161 = vmatprep.subr.mxu0 0.0
      %7162 = vmatpush1.msra.mxu0 0.0
      %7163 = vmatprep.subr.mxu0 0.0
      %7164 = vmatpush1.msra.mxu0 0.0
      %7165 = vmatprep.subr.mxu0 0.0
      %7166 = vmatpush1.msra.mxu0 0.0
      %7167 = vmatprep.subr.mxu0 0.0
      %7168 = vmatpush1.msra.mxu0 0.0
      %7169 = vmatprep.subr.mxu0 0.0
      %7170 = vmatpush1.msra.mxu0 0.0
      %7171 = vmatprep.subr.mxu0 0.0
      %7172 = vmatpush1.msra.mxu0 0.0
      %7173 = vmatprep.subr.mxu0 0.0
      %7174 = vmatpush1.msra.mxu0 0.0
      %7175 = vmatprep.subr.mxu0 0.0
      %7176 = vmatpush1.msra.mxu0 0.0
      %7177 = vmatprep.subr.mxu0 0.0
      %7178 = vmatpush1.msra.mxu0 0.0
      %7179 = vmatprep.mubr.f32.mxu0 0.0
      %7180 = vmatmul.mubr.f32.gmra.mrb[0].mxu0 %v4610
      %v7181 = vpop.f32.mrb[0].mxu0
      %v7182 = vadd.f32 0.0, %v7181
      %v7183 = vpop.f32.mrb[0].mxu0
      %7184 = vmatprep.mubr.f32.mxu0 0.0
      %7185 = vmatmul.mubr.f32.gmra.mrb[0].mxu0 %v4612
      %v7186 = vpop.f32.mrb[0].mxu0
      %v7187 = vadd.f32 0.0, %v7186
      %v7188 = vpop.f32.mrb[0].mxu0
      %7189 = vmatprep.mubr.f32.mxu0 0.0
      %7190 = vmatmul.mubr.f32.gmra.mrb[0].mxu0 %v4614
      %v7191 = vpop.f32.mrb[0].mxu0
      %v7192 = vadd.f32 0.0, %v7191
      %v7193 = vpop.f32.mrb[0].mxu0
      %7194 = vmatprep.mubr.f32.mxu0 0.0
      %7195 = vmatmul.mubr.f32.gmra.mrb[0].mxu0 %v4616
      %v7196 = vpop.f32.mrb[0].mxu0
      %v7197 = vadd.f32 0.0, %v7196
      %v7198 = vpop.f32.mrb[0].mxu0
      %7199 = vmatprep.mubr.f32.mxu0 0.0
      %7200 = vmatmul.mubr.f32.gmra.mrb[0].mxu0 %v4618
      %v7201 = vpop.f32.mrb[0].mxu0
      %v7202 = vadd.f32 0.0, %v7201
      %v7203 = vpop.f32.mrb[0].mxu0
      %7204 = vmatprep.mubr.f32.mxu0 0.0
      %7205 = vmatmul.mubr.f32.gmra.mrb[0].mxu0 %v4620
      %v7206 = vpop.f32.mrb[0].mxu0
      %v7207 = vadd.f32 0.0, %v7206
      %v7208 = vpop.f32.mrb[0].mxu0
      %7209 = vmatprep.mubr.f32.mxu0 0.0
      %7210 = vmatmul.mubr.f32.gmra.mrb[0].mxu0 %v4622
      %v7211 = vpop.f32.mrb[0].mxu0
      %v7212 = vadd.f32 0.0, %v7211
      %v7213 = vpop.f32.mrb[0].mxu0
      %7214 = vmatprep.mubr.f32.mxu0 0.0
      %7215 = vmatmul.mubr.f32.gmra.mrb[0].mxu0 %v4624
      %v7216 = vpop.f32.mrb[0].mxu0
      %v7217 = vadd.f32 0.0, %v7216
      %v7218 = vpop.f32.mrb[0].mxu0
      %7219 = vmatprep.mubr.f32.mxu0 0.0
      %7220 = vmatmul.mubr.f32.gmra.mrb[0].mxu0 %v4626
      %v7221 = vpop.f32.mrb[0].mxu0
      %v7222 = vadd.f32 0.0, %v7221
      %v7223 = vpop.f32.mrb[0].mxu0
      %7224 = vmatprep.mubr.f32.mxu0 0.0
      %7225 = vmatmul.mubr.f32.gmra.mrb[0].mxu0 %v4628
      %v7226 = vpop.f32.mrb[0].mxu0
      %v7227 = vadd.f32 0.0, %v7226
      %v7228 = vpop.f32.mrb[0].mxu0
      %7229 = vmatprep.mubr.f32.mxu0 0.0
      %7230 = vmatmul.mubr.f32.gmra.mrb[0].mxu0 %v4630
      %v7231 = vpop.f32.mrb[0].mxu0
      %v7232 = vadd.f32 0.0, %v7231
      %v7233 = vpop.f32.mrb[0].mxu0
      %7234 = vmatprep.mubr.f32.mxu0 0.0
      %7235 = vmatmul.mubr.f32.gmra.mrb[0].mxu0 %v4632
      %v7236 = vpop.f32.mrb[0].mxu0
      %v7237 = vadd.f32 0.0, %v7236
      %v7238 = vpop.f32.mrb[0].mxu0
      %7239 = vmatprep.mubr.f32.mxu0 0.0
      %7240 = vmatmul.mubr.f32.gmra.mrb[0].mxu0 %v4634
      %v7241 = vpop.f32.mrb[0].mxu0
      %v7242 = vadd.f32 0.0, %v7241
      %v7243 = vpop.f32.mrb[0].mxu0
      %7244 = vmatprep.mubr.f32.mxu0 0.0
      %7245 = vmatmul.mubr.f32.gmra.mrb[0].mxu0 %v4636
      %v7246 = vpop.f32.mrb[0].mxu0
      %v7247 = vadd.f32 0.0, %v7246
      %v7248 = vpop.f32.mrb[0].mxu0
      %7249 = vmatprep.mubr.f32.mxu0 0.0
      %7250 = vmatmul.mubr.f32.gmra.mrb[0].mxu0 %v4638
      %v7251 = vpop.f32.mrb[0].mxu0
      %v7252 = vadd.f32 0.0, %v7251
      %v7253 = vpop.f32.mrb[0].mxu0
      %7254 = vmatprep.mubr.f32.mxu0 0.0
      %7255 = vmatmul.mubr.f32.gmra.mrb[0].mxu0 %v4640
      %v7256 = vpop.f32.mrb[0].mxu0
      %v7257 = vadd.f32 0.0, %v7256
      %v7258 = vpop.f32.mrb[0].mxu0
      %7259 = vmatprep.mubr.f32.mxu0 0.0
      %7260 = vmatmul.mubr.f32.gmra.mrb[0].mxu0 %v4642
      %v7261 = vpop.f32.mrb[0].mxu0
      %v7262 = vadd.f32 0.0, %v7261
      %v7263 = vpop.f32.mrb[0].mxu0
      %7264 = vmatprep.mubr.f32.mxu0 0.0
      %7265 = vmatmul.mubr.f32.gmra.mrb[0].mxu0 %v4644
      %v7266 = vpop.f32.mrb[0].mxu0
      %v7267 = vadd.f32 0.0, %v7266
      %v7268 = vpop.f32.mrb[0].mxu0
      %7269 = vmatprep.mubr.f32.mxu0 0.0
      %7270 = vmatmul.mubr.f32.gmra.mrb[0].mxu0 %v4646
      %v7271 = vpop.f32.mrb[0].mxu0
      %v7272 = vadd.f32 0.0, %v7271
      %v7273 = vpop.f32.mrb[0].mxu0
      %7274 = vmatprep.mubr.f32.mxu0 0.0
      %7275 = vmatmul.mubr.f32.gmra.mrb[0].mxu0 %v4648
      %v7276 = vpop.f32.mrb[0].mxu0
      %v7277 = vadd.f32 0.0, %v7276
      %v7278 = vpop.f32.mrb[0].mxu0
      %7279 = vmatprep.mubr.f32.mxu0 0.0
      %7280 = vmatmul.mubr.f32.gmra.mrb[0].mxu0 %v4650
      %v7281 = vpop.f32.mrb[0].mxu0
      %v7282 = vadd.f32 0.0, %v7281
      %v7283 = vpop.f32.mrb[0].mxu0
      %7284 = vmatprep.mubr.f32.mxu0 0.0
      %7285 = vmatmul.mubr.f32.gmra.mrb[0].mxu0 %v4652
      %v7286 = vpop.f32.mrb[0].mxu0
      %v7287 = vadd.f32 0.0, %v7286
      %v7288 = vpop.f32.mrb[0].mxu0
      %7289 = vmatprep.mubr.f32.mxu0 0.0
      %7290 = vmatmul.mubr.f32.gmra.mrb[0].mxu0 %v4654
      %v7291 = vpop.f32.mrb[0].mxu0
      %v7292 = vadd.f32 0.0, %v7291
      %v7293 = vpop.f32.mrb[0].mxu0
      %7294 = vmatprep.mubr.f32.mxu0 0.0
      %7295 = vmatmul.mubr.f32.gmra.mrb[0].mxu0 %v4656
      %v7296 = vpop.f32.mrb[0].mxu0
      %v7297 = vadd.f32 0.0, %v7296
      %v7298 = vpop.f32.mrb[0].mxu0
      %7299 = vmatprep.mubr.f32.mxu0 0.0
      %7300 = vmatmul.mubr.f32.gmra.mrb[0].mxu0 %v4658
      %v7301 = vpop.f32.mrb[0].mxu0
      %v7302 = vadd.f32 0.0, %v7301
      %v7303 = vpop.f32.mrb[0].mxu0
      %7304 = vmatprep.mubr.f32.mxu0 0.0
      %7305 = vmatmul.mubr.f32.gmra.mrb[0].mxu0 %v4660
      %v7306 = vpop.f32.mrb[0].mxu0
      %v7307 = vadd.f32 0.0, %v7306
      %v7308 = vpop.f32.mrb[0].mxu0
      %7309 = vmatprep.mubr.f32.mxu0 0.0
      %7310 = vmatmul.mubr.f32.gmra.mrb[0].mxu0 %v4662
      %v7311 = vpop.f32.mrb[0].mxu0
      %v7312 = vadd.f32 0.0, %v7311
      %v7313 = vpop.f32.mrb[0].mxu0
      %7314 = vmatprep.mubr.f32.mxu0 0.0
      %7315 = vmatmul.mubr.f32.gmra.mrb[0].mxu0 %v4664
      %v7316 = vpop.f32.mrb[0].mxu0
      %v7317 = vadd.f32 0.0, %v7316
      %v7318 = vpop.f32.mrb[0].mxu0
      %7319 = vmatprep.mubr.f32.mxu0 0.0
      %7320 = vmatmul.mubr.f32.gmra.mrb[0].mxu0 %v6079
      %v7321 = vpop.f32.mrb[0].mxu0
      %v7322 = vadd.f32 0.0, %v7321
      %v7323 = vpop.f32.mrb[0].mxu0
      %7324 = vmatprep.mubr.f32.mxu0 0.0
      %7325 = vmatmul.mubr.f32.gmra.mrb[0].mxu0 %v6081
      %v7326 = vpop.f32.mrb[0].mxu0
      %v7327 = vadd.f32 0.0, %v7326
      %v7328 = vpop.f32.mrb[0].mxu0
      %7329 = vmatprep.mubr.f32.mxu0 0.0
      %7330 = vmatmul.mubr.f32.gmra.mrb[0].mxu0 %v4604
      %v7331 = vpop.f32.mrb[0].mxu0
      %v7332 = vadd.f32 0.0, %v7331
      %v7333 = vpop.f32.mrb[0].mxu0
      %7334 = vmatprep.mubr.f32.mxu0 0.0
      %7335 = vmatmul.mubr.f32.gmra.mrb[0].mxu0 %v4604
      %v7336 = vpop.f32.mrb[0].mxu0
      %v7337 = vadd.f32 0.0, %v7336
      %v7338 = vpop.f32.mrb[0].mxu0
      %7339 = vdwg.mxu0
      %v7340 = vadd.f32 %v7083, %v7182
      %v7341 = vadd.f32 %v7084, %v7187
      %v7342 = vadd.f32 %v7085, %v7192
      %v7343 = vadd.f32 %v7086, %v7197
      %v7344 = vadd.f32 %v7087, %v7202
      %v7345 = vadd.f32 %v7088, %v7207
      %v7346 = vadd.f32 %v7089, %v7212
      %v7347 = vadd.f32 %v7090, %v7217
      %v7348 = vadd.f32 %v7091, %v7222
      %v7349 = vadd.f32 %v7092, %v7227
      %v7350 = vadd.f32 %v7093, %v7232
      %v7351 = vadd.f32 %v7094, %v7237
      %v7352 = vadd.f32 %v7095, %v7242
      %v7353 = vadd.f32 %v7096, %v7247
      %v7354 = vadd.f32 %v7097, %v7252
      %v7355 = vadd.f32 %v7098, %v7257
      %v7356 = vadd.f32 %v7099, %v7262
      %v7357 = vadd.f32 %v7100, %v7267
      %v7358 = vadd.f32 %v7101, %v7272
      %v7359 = vadd.f32 %v7102, %v7277
      %v7360 = vadd.f32 %v7103, %v7282
      %v7361 = vadd.f32 %v7104, %v7287
      %v7362 = vadd.f32 %v7105, %v7292
      %v7363 = vadd.f32 %v7106, %v7297
      %v7364 = vadd.f32 %v7107, %v7302
      %v7365 = vadd.f32 %v7108, %v7307
      %v7366 = vadd.f32 %v7109, %v7312
      %v7367 = vadd.f32 %v7110, %v7317
      %v7368 = vadd.f32 %v7111, %v7322
      %v7369 = vadd.f32 %v7112, %v7327
      %v7370 = vadd.f32 %v7113, %v7332
      %v7371 = vadd.f32 %v7114, %v7337
      %v7372 = vsel %vm1775, %v5218, 0.0
      %v7373 = vsel %vm1776, %v5220, 0.0
      %v7374 = vsel %vm1777, %v5222, 0.0
      %v7375 = vsel %vm1778, %v5224, 0.0
      %v7376 = vsel %vm1779, %v5226, 0.0
      %v7377 = vsel %vm1780, %v5228, 0.0
      %v7378 = vsel %vm1781, %v5230, 0.0
      %v7379 = vsel %vm1782, %v5232, 0.0
      %v7380 = vsel %vm1783, %v5234, 0.0
      %v7381 = vsel %vm1784, %v5236, 0.0
      %v7382 = vsel %vm1785, %v5238, 0.0
      %v7383 = vsel %vm1786, %v5240, 0.0
      %v7384 = vsel %vm1787, %v5242, 0.0
      %v7385 = vsel %vm1788, %v5244, 0.0
      %v7386 = vsel %vm1789, %v5246, 0.0
      %v7387 = vsel %vm1790, %v5248, 0.0
      %v7388 = vsel %vm1791, %v5250, 0.0
      %v7389 = vsel %vm1792, %v5252, 0.0
      %v7390 = vsel %vm1793, %v5254, 0.0
      %v7391 = vsel %vm1794, %v5256, 0.0
      %v7392 = vsel %vm1795, %v5258, 0.0
      %v7393 = vsel %vm1796, %v5260, 0.0
      %v7394 = vsel %vm1797, %v5262, 0.0
      %v7395 = vsel %vm1798, %v5264, 0.0
      %v7396 = vsel %vm1799, %v5266, 0.0
      %v7397 = vsel %vm1800, %v5268, 0.0
      %v7398 = vsel %vm1801, %v5270, 0.0
      %v7399 = vsel %vm1802, %v5272, 0.0
      %v7400 = vsel %vm1803, %v6341, 0.0
      %v7401 = vsel %vm1804, %v6342, 0.0
      %v7403 = vsel %vm4603, %v7372, 0
      %v7406 = vsel %vm4603, %v7373, 0
      %v7409 = vsel %vm4603, %v7374, 0
      %v7412 = vsel %vm4603, %v7375, 0
      %v7415 = vsel %vm4603, %v7376, 0
      %v7418 = vsel %vm4603, %v7377, 0
      %v7421 = vsel %vm4603, %v7378, 0
      %v7424 = vsel %vm4603, %v7379, 0
      %v7427 = vsel %vm4603, %v7380, 0
      %v7430 = vsel %vm4603, %v7381, 0
      %v7433 = vsel %vm4603, %v7382, 0
      %v7436 = vsel %vm4603, %v7383, 0
      %v7439 = vsel %vm4603, %v7384, 0
      %v7442 = vsel %vm4603, %v7385, 0
      %v7445 = vsel %vm4603, %v7386, 0
      %v7448 = vsel %vm4603, %v7387, 0
      %v7451 = vsel %vm4603, %v7388, 0
      %v7454 = vsel %vm4603, %v7389, 0
      %v7457 = vsel %vm4603, %v7390, 0
      %v7460 = vsel %vm4603, %v7391, 0
      %v7463 = vsel %vm4603, %v7392, 0
      %v7466 = vsel %vm4603, %v7393, 0
      %v7469 = vsel %vm4603, %v7394, 0
      %v7472 = vsel %vm4603, %v7395, 0
      %v7475 = vsel %vm4603, %v7396, 0
      %v7478 = vsel %vm4603, %v7397, 0
      %v7481 = vsel %vm4603, %v7398, 0
      %v7484 = vsel %vm4603, %v7399, 0
      %v7487 = vsel %vm4603, %v7400, 0
      %v7490 = vsel %vm4603, %v7401, 0
      %v7492 = vsel %vm4603, %v4025, 0
      %v7494 = vsel %vm4603, %v4026, 0
      %7496 = vmatprep.subr.mxu0 0.0
      %7497 = vmatpush1.msra.mxu0 %v890
      %7498 = vmatprep.subr.mxu0 0.0
      %7499 = vmatpush1.msra.mxu0 0.0
      %7500 = vmatprep.subr.mxu0 0.0
      %7501 = vmatpush1.msra.mxu0 0.0
      %7502 = vmatprep.subr.mxu0 0.0
      %7503 = vmatpush1.msra.mxu0 0.0
      %7504 = vmatprep.subr.mxu0 0.0
      %7505 = vmatpush1.msra.mxu0 0.0
      %7506 = vmatprep.subr.mxu0 0.0
      %7507 = vmatpush1.msra.mxu0 0.0
      %7508 = vmatprep.subr.mxu0 0.0
      %7509 = vmatpush1.msra.mxu0 0.0
      %7510 = vmatprep.subr.mxu0 0.0
      %7511 = vmatpush1.msra.mxu0 0.0
      %7512 = vmatprep.subr.mxu0 0.0
      %7513 = vmatpush1.msra.mxu0 0.0
      %7514 = vmatprep.subr.mxu0 0.0
      %7515 = vmatpush1.msra.mxu0 0.0
      %7516 = vmatprep.subr.mxu0 0.0
      %7517 = vmatpush1.msra.mxu0 0.0
      %7518 = vmatprep.subr.mxu0 0.0
      %7519 = vmatpush1.msra.mxu0 0.0
      %7520 = vmatprep.subr.mxu0 0.0
      %7521 = vmatpush1.msra.mxu0 0.0
      %7522 = vmatprep.subr.mxu0 0.0
      %7523 = vmatpush1.msra.mxu0 0.0
      %7524 = vmatprep.subr.mxu0 0.0
      %7525 = vmatpush1.msra.mxu0 0.0
      %7526 = vmatprep.subr.mxu0 0.0
      %7527 = vmatpush1.msra.mxu0 0.0
      %7528 = vmatprep.subr.mxu0 0.0
      %7529 = vmatpush1.msra.mxu0 0.0
      %7530 = vmatprep.subr.mxu0 0.0
      %7531 = vmatpush1.msra.mxu0 0.0
      %7532 = vmatprep.subr.mxu0 0.0
      %7533 = vmatpush1.msra.mxu0 0.0
      %7534 = vmatprep.subr.mxu0 0.0
      %7535 = vmatpush1.msra.mxu0 0.0
      %7536 = vmatprep.subr.mxu0 0.0
      %7537 = vmatpush1.msra.mxu0 0.0
      %7538 = vmatprep.subr.mxu0 0.0
      %7539 = vmatpush1.msra.mxu0 0.0
      %7540 = vmatprep.subr.mxu0 0.0
      %7541 = vmatpush1.msra.mxu0 0.0
      %7542 = vmatprep.subr.mxu0 0.0
      %7543 = vmatpush1.msra.mxu0 0.0
      %7544 = vmatprep.subr.mxu0 0.0
      %7545 = vmatpush1.msra.mxu0 0.0
      %7546 = vmatprep.subr.mxu0 0.0
      %7547 = vmatpush1.msra.mxu0 0.0
      %7548 = vmatprep.subr.mxu0 0.0
      %7549 = vmatpush1.msra.mxu0 0.0
      %7550 = vmatprep.subr.mxu0 0.0
      %7551 = vmatpush1.msra.mxu0 0.0
      %7552 = vmatprep.subr.mxu0 0.0
      %7553 = vmatpush1.msra.mxu0 0.0
      %7554 = vmatprep.subr.mxu0 0.0
      %7555 = vmatpush1.msra.mxu0 0.0
      %7556 = vmatprep.subr.mxu0 0.0
      %7557 = vmatpush1.msra.mxu0 0.0
      %7558 = vmatprep.subr.mxu0 0.0
      %7559 = vmatpush1.msra.mxu0 0.0
      %7560 = vmatprep.mubr.f32.mxu0 0.0
      %7561 = vmatmul.mubr.f32.gmra.mrb[0].mxu0 %v7403
      %v7562 = vpop.f32.mrb[0].mxu0
      %v7563 = vadd.f32 0.0, %v7562
      %v7564 = vpop.f32.mrb[0].mxu0
      %7565 = vmatprep.mubr.f32.mxu0 0.0
      %7566 = vmatmul.mubr.f32.gmra.mrb[0].mxu0 %v7406
      %v7567 = vpop.f32.mrb[0].mxu0
      %v7568 = vadd.f32 0.0, %v7567
      %v7569 = vpop.f32.mrb[0].mxu0
      %7570 = vmatprep.mubr.f32.mxu0 0.0
      %7571 = vmatmul.mubr.f32.gmra.mrb[0].mxu0 %v7409
      %v7572 = vpop.f32.mrb[0].mxu0
      %v7573 = vadd.f32 0.0, %v7572
      %v7574 = vpop.f32.mrb[0].mxu0
      %7575 = vmatprep.mubr.f32.mxu0 0.0
      %7576 = vmatmul.mubr.f32.gmra.mrb[0].mxu0 %v7412
      %v7577 = vpop.f32.mrb[0].mxu0
      %v7578 = vadd.f32 0.0, %v7577
      %v7579 = vpop.f32.mrb[0].mxu0
      %7580 = vmatprep.mubr.f32.mxu0 0.0
      %7581 = vmatmul.mubr.f32.gmra.mrb[0].mxu0 %v7415
      %v7582 = vpop.f32.mrb[0].mxu0
      %v7583 = vadd.f32 0.0, %v7582
      %v7584 = vpop.f32.mrb[0].mxu0
      %7585 = vmatprep.mubr.f32.mxu0 0.0
      %7586 = vmatmul.mubr.f32.gmra.mrb[0].mxu0 %v7418
      %v7587 = vpop.f32.mrb[0].mxu0
      %v7588 = vadd.f32 0.0, %v7587
      %v7589 = vpop.f32.mrb[0].mxu0
      %7590 = vmatprep.mubr.f32.mxu0 0.0
      %7591 = vmatmul.mubr.f32.gmra.mrb[0].mxu0 %v7421
      %v7592 = vpop.f32.mrb[0].mxu0
      %v7593 = vadd.f32 0.0, %v7592
      %v7594 = vpop.f32.mrb[0].mxu0
      %7595 = vmatprep.mubr.f32.mxu0 0.0
      %7596 = vmatmul.mubr.f32.gmra.mrb[0].mxu0 %v7424
      %v7597 = vpop.f32.mrb[0].mxu0
      %v7598 = vadd.f32 0.0, %v7597
      %v7599 = vpop.f32.mrb[0].mxu0
      %7600 = vmatprep.mubr.f32.mxu0 0.0
      %7601 = vmatmul.mubr.f32.gmra.mrb[0].mxu0 %v7427
      %v7602 = vpop.f32.mrb[0].mxu0
      %v7603 = vadd.f32 0.0, %v7602
      %v7604 = vpop.f32.mrb[0].mxu0
      %7605 = vmatprep.mubr.f32.mxu0 0.0
      %7606 = vmatmul.mubr.f32.gmra.mrb[0].mxu0 %v7430
      %v7607 = vpop.f32.mrb[0].mxu0
      %v7608 = vadd.f32 0.0, %v7607
      %v7609 = vpop.f32.mrb[0].mxu0
      %7610 = vmatprep.mubr.f32.mxu0 0.0
      %7611 = vmatmul.mubr.f32.gmra.mrb[0].mxu0 %v7433
      %v7612 = vpop.f32.mrb[0].mxu0
      %v7613 = vadd.f32 0.0, %v7612
      %v7614 = vpop.f32.mrb[0].mxu0
      %7615 = vmatprep.mubr.f32.mxu0 0.0
      %7616 = vmatmul.mubr.f32.gmra.mrb[0].mxu0 %v7436
      %v7617 = vpop.f32.mrb[0].mxu0
      %v7618 = vadd.f32 0.0, %v7617
      %v7619 = vpop.f32.mrb[0].mxu0
      %7620 = vmatprep.mubr.f32.mxu0 0.0
      %7621 = vmatmul.mubr.f32.gmra.mrb[0].mxu0 %v7439
      %v7622 = vpop.f32.mrb[0].mxu0
      %v7623 = vadd.f32 0.0, %v7622
      %v7624 = vpop.f32.mrb[0].mxu0
      %7625 = vmatprep.mubr.f32.mxu0 0.0
      %7626 = vmatmul.mubr.f32.gmra.mrb[0].mxu0 %v7442
      %v7627 = vpop.f32.mrb[0].mxu0
      %v7628 = vadd.f32 0.0, %v7627
      %v7629 = vpop.f32.mrb[0].mxu0
      %7630 = vmatprep.mubr.f32.mxu0 0.0
      %7631 = vmatmul.mubr.f32.gmra.mrb[0].mxu0 %v7445
      %v7632 = vpop.f32.mrb[0].mxu0
      %v7633 = vadd.f32 0.0, %v7632
      %v7634 = vpop.f32.mrb[0].mxu0
      %7635 = vmatprep.mubr.f32.mxu0 0.0
      %7636 = vmatmul.mubr.f32.gmra.mrb[0].mxu0 %v7448
      %v7637 = vpop.f32.mrb[0].mxu0
      %v7638 = vadd.f32 0.0, %v7637
      %v7639 = vpop.f32.mrb[0].mxu0
      %7640 = vmatprep.mubr.f32.mxu0 0.0
      %7641 = vmatmul.mubr.f32.gmra.mrb[0].mxu0 %v7451
      %v7642 = vpop.f32.mrb[0].mxu0
      %v7643 = vadd.f32 0.0, %v7642
      %v7644 = vpop.f32.mrb[0].mxu0
      %7645 = vmatprep.mubr.f32.mxu0 0.0
      %7646 = vmatmul.mubr.f32.gmra.mrb[0].mxu0 %v7454
      %v7647 = vpop.f32.mrb[0].mxu0
      %v7648 = vadd.f32 0.0, %v7647
      %v7649 = vpop.f32.mrb[0].mxu0
      %7650 = vmatprep.mubr.f32.mxu0 0.0
      %7651 = vmatmul.mubr.f32.gmra.mrb[0].mxu0 %v7457
      %v7652 = vpop.f32.mrb[0].mxu0
      %v7653 = vadd.f32 0.0, %v7652
      %v7654 = vpop.f32.mrb[0].mxu0
      %7655 = vmatprep.mubr.f32.mxu0 0.0
      %7656 = vmatmul.mubr.f32.gmra.mrb[0].mxu0 %v7460
      %v7657 = vpop.f32.mrb[0].mxu0
      %v7658 = vadd.f32 0.0, %v7657
      %v7659 = vpop.f32.mrb[0].mxu0
      %7660 = vmatprep.mubr.f32.mxu0 0.0
      %7661 = vmatmul.mubr.f32.gmra.mrb[0].mxu0 %v7463
      %v7662 = vpop.f32.mrb[0].mxu0
      %v7663 = vadd.f32 0.0, %v7662
      %v7664 = vpop.f32.mrb[0].mxu0
      %7665 = vmatprep.mubr.f32.mxu0 0.0
      %7666 = vmatmul.mubr.f32.gmra.mrb[0].mxu0 %v7466
      %v7667 = vpop.f32.mrb[0].mxu0
      %v7668 = vadd.f32 0.0, %v7667
      %v7669 = vpop.f32.mrb[0].mxu0
      %7670 = vmatprep.mubr.f32.mxu0 0.0
      %7671 = vmatmul.mubr.f32.gmra.mrb[0].mxu0 %v7469
      %v7672 = vpop.f32.mrb[0].mxu0
      %v7673 = vadd.f32 0.0, %v7672
      %v7674 = vpop.f32.mrb[0].mxu0
      %7675 = vmatprep.mubr.f32.mxu0 0.0
      %7676 = vmatmul.mubr.f32.gmra.mrb[0].mxu0 %v7472
      %v7677 = vpop.f32.mrb[0].mxu0
      %v7678 = vadd.f32 0.0, %v7677
      %v7679 = vpop.f32.mrb[0].mxu0
      %7680 = vmatprep.mubr.f32.mxu0 0.0
      %7681 = vmatmul.mubr.f32.gmra.mrb[0].mxu0 %v7475
      %v7682 = vpop.f32.mrb[0].mxu0
      %v7683 = vadd.f32 0.0, %v7682
      %v7684 = vpop.f32.mrb[0].mxu0
      %7685 = vmatprep.mubr.f32.mxu0 0.0
      %7686 = vmatmul.mubr.f32.gmra.mrb[0].mxu0 %v7478
      %v7687 = vpop.f32.mrb[0].mxu0
      %v7688 = vadd.f32 0.0, %v7687
      %v7689 = vpop.f32.mrb[0].mxu0
      %7690 = vmatprep.mubr.f32.mxu0 0.0
      %7691 = vmatmul.mubr.f32.gmra.mrb[0].mxu0 %v7481
      %v7692 = vpop.f32.mrb[0].mxu0
      %v7693 = vadd.f32 0.0, %v7692
      %v7694 = vpop.f32.mrb[0].mxu0
      %7695 = vmatprep.mubr.f32.mxu0 0.0
      %7696 = vmatmul.mubr.f32.gmra.mrb[0].mxu0 %v7484
      %v7697 = vpop.f32.mrb[0].mxu0
      %v7698 = vadd.f32 0.0, %v7697
      %v7699 = vpop.f32.mrb[0].mxu0
      %7700 = vmatprep.mubr.f32.mxu0 0.0
      %7701 = vmatmul.mubr.f32.gmra.mrb[0].mxu0 %v7487
      %v7702 = vpop.f32.mrb[0].mxu0
      %v7703 = vadd.f32 0.0, %v7702
      %v7704 = vpop.f32.mrb[0].mxu0
      %7705 = vmatprep.mubr.f32.mxu0 0.0
      %7706 = vmatmul.mubr.f32.gmra.mrb[0].mxu0 %v7490
      %v7707 = vpop.f32.mrb[0].mxu0
      %v7708 = vadd.f32 0.0, %v7707
      %v7709 = vpop.f32.mrb[0].mxu0
      %7710 = vmatprep.mubr.f32.mxu0 0.0
      %7711 = vmatmul.mubr.f32.gmra.mrb[0].mxu0 %v7492
      %v7712 = vpop.f32.mrb[0].mxu0
      %v7713 = vadd.f32 0.0, %v7712
      %v7714 = vpop.f32.mrb[0].mxu0
      %7715 = vmatprep.mubr.f32.mxu0 0.0
      %7716 = vmatmul.mubr.f32.gmra.mrb[0].mxu0 %v7494
      %v7717 = vpop.f32.mrb[0].mxu0
      %v7718 = vadd.f32 0.0, %v7717
      %v7719 = vpop.f32.mrb[0].mxu0
      %7720 = vdwg.mxu0
      %v7721 = vadd.f32 %v7340, %v7563
      %v7722 = vadd.f32 %v7341, %v7568
      %v7723 = vadd.f32 %v7342, %v7573
      %v7724 = vadd.f32 %v7343, %v7578
      %v7725 = vadd.f32 %v7344, %v7583
      %v7726 = vadd.f32 %v7345, %v7588
      %v7727 = vadd.f32 %v7346, %v7593
      %v7728 = vadd.f32 %v7347, %v7598
      %v7729 = vadd.f32 %v7348, %v7603
      %v7730 = vadd.f32 %v7349, %v7608
      %v7731 = vadd.f32 %v7350, %v7613
      %v7732 = vadd.f32 %v7351, %v7618
      %v7733 = vadd.f32 %v7352, %v7623
      %v7734 = vadd.f32 %v7353, %v7628
      %v7735 = vadd.f32 %v7354, %v7633
      %v7736 = vadd.f32 %v7355, %v7638
      %v7737 = vadd.f32 %v7356, %v7643
      %v7738 = vadd.f32 %v7357, %v7648
      %v7739 = vadd.f32 %v7358, %v7653
      %v7740 = vadd.f32 %v7359, %v7658
      %v7741 = vadd.f32 %v7360, %v7663
      %v7742 = vadd.f32 %v7361, %v7668
      %v7743 = vadd.f32 %v7362, %v7673
      %v7744 = vadd.f32 %v7363, %v7678
      %v7745 = vadd.f32 %v7364, %v7683
      %v7746 = vadd.f32 %v7365, %v7688
      %v7747 = vadd.f32 %v7366, %v7693
      %v7748 = vadd.f32 %v7367, %v7698
      %v7749 = vadd.f32 %v7368, %v7703
      %v7750 = vadd.f32 %v7369, %v7708
      %v7751 = vadd.f32 %v7370, %v7713
      %v7752 = vadd.f32 %v7371, %v7718
      %v7754 = vlaneseq
      %v7755 = vshrl.u32 %v7754, 7
      %v7756 = vsub.s32 0, %v7755
      %v7757 = vrot.slane %v900, %v7756
      %v7759 = vadd.f32 %v7721, %v7757
      %v7760 = vadd.f32 %v7722, %v7757
      %v7761 = vadd.f32 %v7723, %v7757
      %v7762 = vadd.f32 %v7724, %v7757
      %v7763 = vadd.f32 %v7725, %v7757
      %v7764 = vadd.f32 %v7726, %v7757
      %v7765 = vadd.f32 %v7727, %v7757
      %v7766 = vadd.f32 %v7728, %v7757
      %v7767 = vadd.f32 %v7729, %v7757
      %v7768 = vadd.f32 %v7730, %v7757
      %v7769 = vadd.f32 %v7731, %v7757
      %v7770 = vadd.f32 %v7732, %v7757
      %v7771 = vadd.f32 %v7733, %v7757
      %v7772 = vadd.f32 %v7734, %v7757
      %v7773 = vadd.f32 %v7735, %v7757
      %v7774 = vadd.f32 %v7736, %v7757
      %v7775 = vadd.f32 %v7737, %v7757
      %v7776 = vadd.f32 %v7738, %v7757
      %v7777 = vadd.f32 %v7739, %v7757
      %v7778 = vadd.f32 %v7740, %v7757
      %v7779 = vadd.f32 %v7741, %v7757
      %v7780 = vadd.f32 %v7742, %v7757
      %v7781 = vadd.f32 %v7743, %v7757
      %v7782 = vadd.f32 %v7744, %v7757
      %v7783 = vadd.f32 %v7745, %v7757
      %v7784 = vadd.f32 %v7746, %v7757
      %v7785 = vadd.f32 %v7747, %v7757
      %v7786 = vadd.f32 %v7748, %v7757
      %v7787 = vadd.f32 %v7749, %v7757
      %v7788 = vadd.f32 %v7750, %v7757
      %v7789 = vadd.f32 %v7751, %v7757
      %v7790 = vadd.f32 %v7752, %v7757
      %v7791 = vmax.f32 %v7759, 0.0
      %v7792 = vmax.f32 %v7760, 0.0
      %v7793 = vmax.f32 %v7761, 0.0
      %v7794 = vmax.f32 %v7762, 0.0
      %v7795 = vmax.f32 %v7763, 0.0
      %v7796 = vmax.f32 %v7764, 0.0
      %v7797 = vmax.f32 %v7765, 0.0
      %v7798 = vmax.f32 %v7766, 0.0
      %v7799 = vmax.f32 %v7767, 0.0
      %v7800 = vmax.f32 %v7768, 0.0
      %v7801 = vmax.f32 %v7769, 0.0
      %v7802 = vmax.f32 %v7770, 0.0
      %v7803 = vmax.f32 %v7771, 0.0
      %v7804 = vmax.f32 %v7772, 0.0
      %v7805 = vmax.f32 %v7773, 0.0
      %v7806 = vmax.f32 %v7774, 0.0
      %v7807 = vmax.f32 %v7775, 0.0
      %v7808 = vmax.f32 %v7776, 0.0
      %v7809 = vmax.f32 %v7777, 0.0
      %v7810 = vmax.f32 %v7778, 0.0
      %v7811 = vmax.f32 %v7779, 0.0
      %v7812 = vmax.f32 %v7780, 0.0
      %v7813 = vmax.f32 %v7781, 0.0
      %v7814 = vmax.f32 %v7782, 0.0
      %v7815 = vmax.f32 %v7783, 0.0
      %v7816 = vmax.f32 %v7784, 0.0
      %v7817 = vmax.f32 %v7785, 0.0
      %v7818 = vmax.f32 %v7786, 0.0
      %v7819 = vmax.f32 %v7787, 0.0
      %v7820 = vmax.f32 %v7788, 0.0
      %v7821 = vmax.f32 %v7789, 0.0
      %v7822 = vmax.f32 %v7790, 0.0
      %v7853 = vrot.slane %v7791, 7
      %v7854 = vsel %vm1001, %v1002, %v7853
      %v7855 = vrot.slane %v7792, 7
      %v7856 = vsel %vm1001, %v7853, %v7855
      %v7857 = vrot.slane %v7793, 7
      %v7858 = vsel %vm1001, %v7855, %v7857
      %v7859 = vrot.slane %v7794, 7
      %v7860 = vsel %vm1001, %v7857, %v7859
      %v7861 = vrot.slane %v7795, 7
      %v7862 = vsel %vm1001, %v7859, %v7861
      %v7863 = vrot.slane %v7796, 7
      %v7864 = vsel %vm1001, %v7861, %v7863
      %v7865 = vrot.slane %v7797, 7
      %v7866 = vsel %vm1001, %v7863, %v7865
      %v7867 = vrot.slane %v7798, 7
      %v7868 = vsel %vm1001, %v7865, %v7867
      %v7869 = vrot.slane %v7799, 7
      %v7870 = vsel %vm1001, %v7867, %v7869
      %v7871 = vrot.slane %v7800, 7
      %v7872 = vsel %vm1001, %v7869, %v7871
      %v7873 = vrot.slane %v7801, 7
      %v7874 = vsel %vm1001, %v7871, %v7873
      %v7875 = vrot.slane %v7802, 7
      %v7876 = vsel %vm1001, %v7873, %v7875
      %v7877 = vrot.slane %v7803, 7
      %v7878 = vsel %vm1001, %v7875, %v7877
      %v7879 = vrot.slane %v7804, 7
      %v7880 = vsel %vm1001, %v7877, %v7879
      %v7881 = vrot.slane %v7805, 7
      %v7882 = vsel %vm1001, %v7879, %v7881
      %v7883 = vrot.slane %v7806, 7
      %v7884 = vsel %vm1001, %v7881, %v7883
      %v7885 = vrot.slane %v7807, 7
      %v7886 = vsel %vm1001, %v7883, %v7885
      %v7887 = vrot.slane %v7808, 7
      %v7888 = vsel %vm1001, %v7885, %v7887
      %v7889 = vrot.slane %v7809, 7
      %v7890 = vsel %vm1001, %v7887, %v7889
      %v7891 = vrot.slane %v7810, 7
      %v7892 = vsel %vm1001, %v7889, %v7891
      %v7893 = vrot.slane %v7811, 7
      %v7894 = vsel %vm1001, %v7891, %v7893
      %v7895 = vrot.slane %v7812, 7
      %v7896 = vsel %vm1001, %v7893, %v7895
      %v7897 = vrot.slane %v7813, 7
      %v7898 = vsel %vm1001, %v7895, %v7897
      %v7899 = vrot.slane %v7814, 7
      %v7900 = vsel %vm1001, %v7897, %v7899
      %v7901 = vrot.slane %v7815, 7
      %v7902 = vsel %vm1001, %v7899, %v7901
      %v7903 = vrot.slane %v7816, 7
      %v7904 = vsel %vm1001, %v7901, %v7903
      %v7905 = vrot.slane %v7817, 7
      %v7906 = vsel %vm1001, %v7903, %v7905
      %v7907 = vrot.slane %v7818, 7
      %v7908 = vsel %vm1001, %v7905, %v7907
      %v7909 = vrot.slane %v7819, 7
      %v7910 = vsel %vm1001, %v7907, %v7909
      %v7911 = vrot.slane %v7820, 7
      %v7912 = vsel %vm1001, %v7909, %v7911
      %v7943 = vsel %vm940, %v7854, 0.0
      %v7944 = vsel %vm941, %v7856, 0.0
      %v7945 = vsel %vm942, %v7858, 0.0
      %v7946 = vsel %vm943, %v7860, 0.0
      %v7947 = vsel %vm944, %v7862, 0.0
      %v7948 = vsel %vm945, %v7864, 0.0
      %v7949 = vsel %vm946, %v7866, 0.0
      %v7950 = vsel %vm947, %v7868, 0.0
      %v7951 = vsel %vm948, %v7870, 0.0
      %v7952 = vsel %vm949, %v7872, 0.0
      %v7953 = vsel %vm950, %v7874, 0.0
      %v7954 = vsel %vm951, %v7876, 0.0
      %v7955 = vsel %vm952, %v7878, 0.0
      %v7956 = vsel %vm953, %v7880, 0.0
      %v7957 = vsel %vm954, %v7882, 0.0
      %v7958 = vsel %vm955, %v7884, 0.0
      %v7959 = vsel %vm956, %v7886, 0.0
      %v7960 = vsel %vm957, %v7888, 0.0
      %v7961 = vsel %vm958, %v7890, 0.0
      %v7962 = vsel %vm959, %v7892, 0.0
      %v7963 = vsel %vm960, %v7894, 0.0
      %v7964 = vsel %vm961, %v7896, 0.0
      %v7965 = vsel %vm962, %v7898, 0.0
      %v7966 = vsel %vm963, %v7900, 0.0
      %v7967 = vsel %vm964, %v7902, 0.0
      %v7968 = vsel %vm965, %v7904, 0.0
      %v7969 = vsel %vm966, %v7906, 0.0
      %v7970 = vsel %vm967, %v7908, 0.0
      %v7971 = vsel %vm968, %v7910, 0.0
      %v7972 = vsel %vm969, %v7912, 0.0
      %v7973 = vsel %vm4603, %v7791, 0
      %v7975 = vsel %vm4603, %v7792, 0
      %v7977 = vsel %vm4603, %v7793, 0
      %v7979 = vsel %vm4603, %v7794, 0
      %v7981 = vsel %vm4603, %v7795, 0
      %v7983 = vsel %vm4603, %v7796, 0
      %v7985 = vsel %vm4603, %v7797, 0
      %v7987 = vsel %vm4603, %v7798, 0
      %v7989 = vsel %vm4603, %v7799, 0
      %v7991 = vsel %vm4603, %v7800, 0
      %v7993 = vsel %vm4603, %v7801, 0
      %v7995 = vsel %vm4603, %v7802, 0
      %v7997 = vsel %vm4603, %v7803, 0
      %v7999 = vsel %vm4603, %v7804, 0
      %v8001 = vsel %vm4603, %v7805, 0
      %v8003 = vsel %vm4603, %v7806, 0
      %v8005 = vsel %vm4603, %v7807, 0
      %v8007 = vsel %vm4603, %v7808, 0
      %v8009 = vsel %vm4603, %v7809, 0
      %v8011 = vsel %vm4603, %v7810, 0
      %v8013 = vsel %vm4603, %v7811, 0
      %v8015 = vsel %vm4603, %v7812, 0
      %v8017 = vsel %vm4603, %v7813, 0
      %v8019 = vsel %vm4603, %v7814, 0
      %v8021 = vsel %vm4603, %v7815, 0
      %v8023 = vsel %vm4603, %v7816, 0
      %v8025 = vsel %vm4603, %v7817, 0
      %v8027 = vsel %vm4603, %v7818, 0
      %v8029 = vsel %vm4603, %v7819, 0
      %v8031 = vsel %vm4603, %v7820, 0
      %8033 = vmatprep.subr.mxu0 0.0
      %8034 = vmatpush1.msra.mxu0 %v892
      %8035 = vmatprep.subr.mxu0 0.0
      %8036 = vmatpush1.msra.mxu0 0.0
      %8037 = vmatprep.subr.mxu0 0.0
      %8038 = vmatpush1.msra.mxu0 0.0
      %8039 = vmatprep.subr.mxu0 0.0
      %8040 = vmatpush1.msra.mxu0 0.0
      %8041 = vmatprep.subr.mxu0 0.0
      %8042 = vmatpush1.msra.mxu0 0.0
      %8043 = vmatprep.subr.mxu0 0.0
      %8044 = vmatpush1.msra.mxu0 0.0
      %8045 = vmatprep.subr.mxu0 0.0
      %8046 = vmatpush1.msra.mxu0 0.0
      %8047 = vmatprep.subr.mxu0 0.0
      %8048 = vmatpush1.msra.mxu0 0.0
      %8049 = vmatprep.subr.mxu0 0.0
      %8050 = vmatpush1.msra.mxu0 0.0
      %8051 = vmatprep.subr.mxu0 0.0
      %8052 = vmatpush1.msra.mxu0 0.0
      %8053 = vmatprep.subr.mxu0 0.0
      %8054 = vmatpush1.msra.mxu0 0.0
      %8055 = vmatprep.subr.mxu0 0.0
      %8056 = vmatpush1.msra.mxu0 0.0
      %8057 = vmatprep.subr.mxu0 0.0
      %8058 = vmatpush1.msra.mxu0 0.0
      %8059 = vmatprep.subr.mxu0 0.0
      %8060 = vmatpush1.msra.mxu0 0.0
      %8061 = vmatprep.subr.mxu0 0.0
      %8062 = vmatpush1.msra.mxu0 0.0
      %8063 = vmatprep.subr.mxu0 0.0
      %8064 = vmatpush1.msra.mxu0 0.0
      %8065 = vmatprep.subr.mxu0 0.0
      %8066 = vmatpush1.msra.mxu0 0.0
      %8067 = vmatprep.subr.mxu0 0.0
      %8068 = vmatpush1.msra.mxu0 0.0
      %8069 = vmatprep.subr.mxu0 0.0
      %8070 = vmatpush1.msra.mxu0 0.0
      %8071 = vmatprep.subr.mxu0 0.0
      %8072 = vmatpush1.msra.mxu0 0.0
      %8073 = vmatprep.subr.mxu0 0.0
      %8074 = vmatpush1.msra.mxu0 0.0
      %8075 = vmatprep.subr.mxu0 0.0
      %8076 = vmatpush1.msra.mxu0 0.0
      %8077 = vmatprep.subr.mxu0 0.0
      %8078 = vmatpush1.msra.mxu0 0.0
      %8079 = vmatprep.subr.mxu0 0.0
      %8080 = vmatpush1.msra.mxu0 0.0
      %8081 = vmatprep.subr.mxu0 0.0
      %8082 = vmatpush1.msra.mxu0 0.0
      %8083 = vmatprep.subr.mxu0 0.0
      %8084 = vmatpush1.msra.mxu0 0.0
      %8085 = vmatprep.subr.mxu0 0.0
      %8086 = vmatpush1.msra.mxu0 0.0
      %8087 = vmatprep.subr.mxu0 0.0
      %8088 = vmatpush1.msra.mxu0 0.0
      %8089 = vmatprep.subr.mxu0 0.0
      %8090 = vmatpush1.msra.mxu0 0.0
      %8091 = vmatprep.subr.mxu0 0.0
      %8092 = vmatpush1.msra.mxu0 0.0
      %8093 = vmatprep.subr.mxu0 0.0
      %8094 = vmatpush1.msra.mxu0 0.0
      %8095 = vmatprep.subr.mxu0 0.0
      %8096 = vmatpush1.msra.mxu0 0.0
      %8097 = vmatprep.mubr.f32.mxu0 0.0
      %8098 = vmatmul.mubr.f32.gmra.mrb[0].mxu0 %v4604
      %v8099 = vpop.f32.mrb[0].mxu0
      %v8100 = vadd.f32 0.0, %v8099
      %v8101 = vpop.f32.mrb[0].mxu0
      %8102 = vmatprep.mubr.f32.mxu0 0.0
      %8103 = vmatmul.mubr.f32.gmra.mrb[0].mxu0 %v4604
      %v8104 = vpop.f32.mrb[0].mxu0
      %v8105 = vadd.f32 0.0, %v8104
      %v8106 = vpop.f32.mrb[0].mxu0
      %8107 = vmatprep.mubr.f32.mxu0 0.0
      %8108 = vmatmul.mubr.f32.gmra.mrb[0].mxu0 %v7973
      %v8109 = vpop.f32.mrb[0].mxu0
      %v8110 = vadd.f32 0.0, %v8109
      %v8111 = vpop.f32.mrb[0].mxu0
      %8112 = vmatprep.mubr.f32.mxu0 0.0
      %8113 = vmatmul.mubr.f32.gmra.mrb[0].mxu0 %v7975
      %v8114 = vpop.f32.mrb[0].mxu0
      %v8115 = vadd.f32 0.0, %v8114
      %v8116 = vpop.f32.mrb[0].mxu0
      %8117 = vmatprep.mubr.f32.mxu0 0.0
      %8118 = vmatmul.mubr.f32.gmra.mrb[0].mxu0 %v7977
      %v8119 = vpop.f32.mrb[0].mxu0
      %v8120 = vadd.f32 0.0, %v8119
      %v8121 = vpop.f32.mrb[0].mxu0
      %8122 = vmatprep.mubr.f32.mxu0 0.0
      %8123 = vmatmul.mubr.f32.gmra.mrb[0].mxu0 %v7979
      %v8124 = vpop.f32.mrb[0].mxu0
      %v8125 = vadd.f32 0.0, %v8124
      %v8126 = vpop.f32.mrb[0].mxu0
      %8127 = vmatprep.mubr.f32.mxu0 0.0
      %8128 = vmatmul.mubr.f32.gmra.mrb[0].mxu0 %v7981
      %v8129 = vpop.f32.mrb[0].mxu0
      %v8130 = vadd.f32 0.0, %v8129
      %v8131 = vpop.f32.mrb[0].mxu0
      %8132 = vmatprep.mubr.f32.mxu0 0.0
      %8133 = vmatmul.mubr.f32.gmra.mrb[0].mxu0 %v7983
      %v8134 = vpop.f32.mrb[0].mxu0
      %v8135 = vadd.f32 0.0, %v8134
      %v8136 = vpop.f32.mrb[0].mxu0
      %8137 = vmatprep.mubr.f32.mxu0 0.0
      %8138 = vmatmul.mubr.f32.gmra.mrb[0].mxu0 %v7985
      %v8139 = vpop.f32.mrb[0].mxu0
      %v8140 = vadd.f32 0.0, %v8139
      %v8141 = vpop.f32.mrb[0].mxu0
      %8142 = vmatprep.mubr.f32.mxu0 0.0
      %8143 = vmatmul.mubr.f32.gmra.mrb[0].mxu0 %v7987
      %v8144 = vpop.f32.mrb[0].mxu0
      %v8145 = vadd.f32 0.0, %v8144
      %v8146 = vpop.f32.mrb[0].mxu0
      %8147 = vmatprep.mubr.f32.mxu0 0.0
      %8148 = vmatmul.mubr.f32.gmra.mrb[0].mxu0 %v7989
      %v8149 = vpop.f32.mrb[0].mxu0
      %v8150 = vadd.f32 0.0, %v8149
      %v8151 = vpop.f32.mrb[0].mxu0
      %8152 = vmatprep.mubr.f32.mxu0 0.0
      %8153 = vmatmul.mubr.f32.gmra.mrb[0].mxu0 %v7991
      %v8154 = vpop.f32.mrb[0].mxu0
      %v8155 = vadd.f32 0.0, %v8154
      %v8156 = vpop.f32.mrb[0].mxu0
      %8157 = vmatprep.mubr.f32.mxu0 0.0
      %8158 = vmatmul.mubr.f32.gmra.mrb[0].mxu0 %v7993
      %v8159 = vpop.f32.mrb[0].mxu0
      %v8160 = vadd.f32 0.0, %v8159
      %v8161 = vpop.f32.mrb[0].mxu0
      %8162 = vmatprep.mubr.f32.mxu0 0.0
      %8163 = vmatmul.mubr.f32.gmra.mrb[0].mxu0 %v7995
      %v8164 = vpop.f32.mrb[0].mxu0
      %v8165 = vadd.f32 0.0, %v8164
      %v8166 = vpop.f32.mrb[0].mxu0
      %8167 = vmatprep.mubr.f32.mxu0 0.0
      %8168 = vmatmul.mubr.f32.gmra.mrb[0].mxu0 %v7997
      %v8169 = vpop.f32.mrb[0].mxu0
      %v8170 = vadd.f32 0.0, %v8169
      %v8171 = vpop.f32.mrb[0].mxu0
      %8172 = vmatprep.mubr.f32.mxu0 0.0
      %8173 = vmatmul.mubr.f32.gmra.mrb[0].mxu0 %v7999
      %v8174 = vpop.f32.mrb[0].mxu0
      %v8175 = vadd.f32 0.0, %v8174
      %v8176 = vpop.f32.mrb[0].mxu0
      %8177 = vmatprep.mubr.f32.mxu0 0.0
      %8178 = vmatmul.mubr.f32.gmra.mrb[0].mxu0 %v8001
      %v8179 = vpop.f32.mrb[0].mxu0
      %v8180 = vadd.f32 0.0, %v8179
      %v8181 = vpop.f32.mrb[0].mxu0
      %8182 = vmatprep.mubr.f32.mxu0 0.0
      %8183 = vmatmul.mubr.f32.gmra.mrb[0].mxu0 %v8003
      %v8184 = vpop.f32.mrb[0].mxu0
      %v8185 = vadd.f32 0.0, %v8184
      %v8186 = vpop.f32.mrb[0].mxu0
      %8187 = vmatprep.mubr.f32.mxu0 0.0
      %8188 = vmatmul.mubr.f32.gmra.mrb[0].mxu0 %v8005
      %v8189 = vpop.f32.mrb[0].mxu0
      %v8190 = vadd.f32 0.0, %v8189
      %v8191 = vpop.f32.mrb[0].mxu0
      %8192 = vmatprep.mubr.f32.mxu0 0.0
      %8193 = vmatmul.mubr.f32.gmra.mrb[0].mxu0 %v8007
      %v8194 = vpop.f32.mrb[0].mxu0
      %v8195 = vadd.f32 0.0, %v8194
      %v8196 = vpop.f32.mrb[0].mxu0
      %8197 = vmatprep.mubr.f32.mxu0 0.0
      %8198 = vmatmul.mubr.f32.gmra.mrb[0].mxu0 %v8009
      %v8199 = vpop.f32.mrb[0].mxu0
      %v8200 = vadd.f32 0.0, %v8199
      %v8201 = vpop.f32.mrb[0].mxu0
      %8202 = vmatprep.mubr.f32.mxu0 0.0
      %8203 = vmatmul.mubr.f32.gmra.mrb[0].mxu0 %v8011
      %v8204 = vpop.f32.mrb[0].mxu0
      %v8205 = vadd.f32 0.0, %v8204
      %v8206 = vpop.f32.mrb[0].mxu0
      %8207 = vmatprep.mubr.f32.mxu0 0.0
      %8208 = vmatmul.mubr.f32.gmra.mrb[0].mxu0 %v8013
      %v8209 = vpop.f32.mrb[0].mxu0
      %v8210 = vadd.f32 0.0, %v8209
      %v8211 = vpop.f32.mrb[0].mxu0
      %8212 = vmatprep.mubr.f32.mxu0 0.0
      %8213 = vmatmul.mubr.f32.gmra.mrb[0].mxu0 %v8015
      %v8214 = vpop.f32.mrb[0].mxu0
      %v8215 = vadd.f32 0.0, %v8214
      %v8216 = vpop.f32.mrb[0].mxu0
      %8217 = vmatprep.mubr.f32.mxu0 0.0
      %8218 = vmatmul.mubr.f32.gmra.mrb[0].mxu0 %v8017
      %v8219 = vpop.f32.mrb[0].mxu0
      %v8220 = vadd.f32 0.0, %v8219
      %v8221 = vpop.f32.mrb[0].mxu0
      %8222 = vmatprep.mubr.f32.mxu0 0.0
      %8223 = vmatmul.mubr.f32.gmra.mrb[0].mxu0 %v8019
      %v8224 = vpop.f32.mrb[0].mxu0
      %v8225 = vadd.f32 0.0, %v8224
      %v8226 = vpop.f32.mrb[0].mxu0
      %8227 = vmatprep.mubr.f32.mxu0 0.0
      %8228 = vmatmul.mubr.f32.gmra.mrb[0].mxu0 %v8021
      %v8229 = vpop.f32.mrb[0].mxu0
      %v8230 = vadd.f32 0.0, %v8229
      %v8231 = vpop.f32.mrb[0].mxu0
      %8232 = vmatprep.mubr.f32.mxu0 0.0
      %8233 = vmatmul.mubr.f32.gmra.mrb[0].mxu0 %v8023
      %v8234 = vpop.f32.mrb[0].mxu0
      %v8235 = vadd.f32 0.0, %v8234
      %v8236 = vpop.f32.mrb[0].mxu0
      %8237 = vmatprep.mubr.f32.mxu0 0.0
      %8238 = vmatmul.mubr.f32.gmra.mrb[0].mxu0 %v8025
      %v8239 = vpop.f32.mrb[0].mxu0
      %v8240 = vadd.f32 0.0, %v8239
      %v8241 = vpop.f32.mrb[0].mxu0
      %8242 = vmatprep.mubr.f32.mxu0 0.0
      %8243 = vmatmul.mubr.f32.gmra.mrb[0].mxu0 %v8027
      %v8244 = vpop.f32.mrb[0].mxu0
      %v8245 = vadd.f32 0.0, %v8244
      %v8246 = vpop.f32.mrb[0].mxu0
      %8247 = vmatprep.mubr.f32.mxu0 0.0
      %8248 = vmatmul.mubr.f32.gmra.mrb[0].mxu0 %v8029
      %v8249 = vpop.f32.mrb[0].mxu0
      %v8250 = vadd.f32 0.0, %v8249
      %v8251 = vpop.f32.mrb[0].mxu0
      %8252 = vmatprep.mubr.f32.mxu0 0.0
      %8253 = vmatmul.mubr.f32.gmra.mrb[0].mxu0 %v8031
      %v8254 = vpop.f32.mrb[0].mxu0
      %v8255 = vadd.f32 0.0, %v8254
      %v8256 = vpop.f32.mrb[0].mxu0
      %8257 = vdwg.mxu0
      %v8259 = vsel %vm4603, %v7943, 0
      %v8262 = vsel %vm4603, %v7944, 0
      %v8265 = vsel %vm4603, %v7945, 0
      %v8268 = vsel %vm4603, %v7946, 0
      %v8271 = vsel %vm4603, %v7947, 0
      %v8274 = vsel %vm4603, %v7948, 0
      %v8277 = vsel %vm4603, %v7949, 0
      %v8280 = vsel %vm4603, %v7950, 0
      %v8283 = vsel %vm4603, %v7951, 0
      %v8286 = vsel %vm4603, %v7952, 0
      %v8289 = vsel %vm4603, %v7953, 0
      %v8292 = vsel %vm4603, %v7954, 0
      %v8295 = vsel %vm4603, %v7955, 0
      %v8298 = vsel %vm4603, %v7956, 0
      %v8301 = vsel %vm4603, %v7957, 0
      %v8304 = vsel %vm4603, %v7958, 0
      %v8307 = vsel %vm4603, %v7959, 0
      %v8310 = vsel %vm4603, %v7960, 0
      %v8313 = vsel %vm4603, %v7961, 0
      %v8316 = vsel %vm4603, %v7962, 0
      %v8319 = vsel %vm4603, %v7963, 0
      %v8322 = vsel %vm4603, %v7964, 0
      %v8325 = vsel %vm4603, %v7965, 0
      %v8328 = vsel %vm4603, %v7966, 0
      %v8331 = vsel %vm4603, %v7967, 0
      %v8334 = vsel %vm4603, %v7968, 0
      %v8337 = vsel %vm4603, %v7969, 0
      %v8340 = vsel %vm4603, %v7970, 0
      %v8343 = vsel %vm4603, %v7971, 0
      %v8346 = vsel %vm4603, %v7972, 0
      %8348 = vmatprep.subr.mxu0 0.0
      %8349 = vmatpush1.msra.mxu0 %v891
      %8350 = vmatprep.subr.mxu0 0.0
      %8351 = vmatpush1.msra.mxu0 0.0
      %8352 = vmatprep.subr.mxu0 0.0
      %8353 = vmatpush1.msra.mxu0 0.0
      %8354 = vmatprep.subr.mxu0 0.0
      %8355 = vmatpush1.msra.mxu0 0.0
      %8356 = vmatprep.subr.mxu0 0.0
      %8357 = vmatpush1.msra.mxu0 0.0
      %8358 = vmatprep.subr.mxu0 0.0
      %8359 = vmatpush1.msra.mxu0 0.0
      %8360 = vmatprep.subr.mxu0 0.0
      %8361 = vmatpush1.msra.mxu0 0.0
      %8362 = vmatprep.subr.mxu0 0.0
      %8363 = vmatpush1.msra.mxu0 0.0
      %8364 = vmatprep.subr.mxu0 0.0
      %8365 = vmatpush1.msra.mxu0 0.0
      %8366 = vmatprep.subr.mxu0 0.0
      %8367 = vmatpush1.msra.mxu0 0.0
      %8368 = vmatprep.subr.mxu0 0.0
      %8369 = vmatpush1.msra.mxu0 0.0
      %8370 = vmatprep.subr.mxu0 0.0
      %8371 = vmatpush1.msra.mxu0 0.0
      %8372 = vmatprep.subr.mxu0 0.0
      %8373 = vmatpush1.msra.mxu0 0.0
      %8374 = vmatprep.subr.mxu0 0.0
      %8375 = vmatpush1.msra.mxu0 0.0
      %8376 = vmatprep.subr.mxu0 0.0
      %8377 = vmatpush1.msra.mxu0 0.0
      %8378 = vmatprep.subr.mxu0 0.0
      %8379 = vmatpush1.msra.mxu0 0.0
      %8380 = vmatprep.subr.mxu0 0.0
      %8381 = vmatpush1.msra.mxu0 0.0
      %8382 = vmatprep.subr.mxu0 0.0
      %8383 = vmatpush1.msra.mxu0 0.0
      %8384 = vmatprep.subr.mxu0 0.0
      %8385 = vmatpush1.msra.mxu0 0.0
      %8386 = vmatprep.subr.mxu0 0.0
      %8387 = vmatpush1.msra.mxu0 0.0
      %8388 = vmatprep.subr.mxu0 0.0
      %8389 = vmatpush1.msra.mxu0 0.0
      %8390 = vmatprep.subr.mxu0 0.0
      %8391 = vmatpush1.msra.mxu0 0.0
      %8392 = vmatprep.subr.mxu0 0.0
      %8393 = vmatpush1.msra.mxu0 0.0
      %8394 = vmatprep.subr.mxu0 0.0
      %8395 = vmatpush1.msra.mxu0 0.0
      %8396 = vmatprep.subr.mxu0 0.0
      %8397 = vmatpush1.msra.mxu0 0.0
      %8398 = vmatprep.subr.mxu0 0.0
      %8399 = vmatpush1.msra.mxu0 0.0
      %8400 = vmatprep.subr.mxu0 0.0
      %8401 = vmatpush1.msra.mxu0 0.0
      %8402 = vmatprep.subr.mxu0 0.0
      %8403 = vmatpush1.msra.mxu0 0.0
      %8404 = vmatprep.subr.mxu0 0.0
      %8405 = vmatpush1.msra.mxu0 0.0
      %8406 = vmatprep.subr.mxu0 0.0
      %8407 = vmatpush1.msra.mxu0 0.0
      %8408 = vmatprep.subr.mxu0 0.0
      %8409 = vmatpush1.msra.mxu0 0.0
      %8410 = vmatprep.subr.mxu0 0.0
      %8411 = vmatpush1.msra.mxu0 0.0
      %8412 = vmatprep.mubr.f32.mxu0 0.0
      %8413 = vmatmul.mubr.f32.gmra.mrb[0].mxu0 %v4891
      %v8414 = vpop.f32.mrb[0].mxu0
      %v8415 = vadd.f32 %v8100, %v8414
      %v8416 = vpop.f32.mrb[0].mxu0
      %8417 = vmatprep.mubr.f32.mxu0 0.0
      %8418 = vmatmul.mubr.f32.gmra.mrb[0].mxu0 %v4893
      %v8419 = vpop.f32.mrb[0].mxu0
      %v8420 = vadd.f32 %v8105, %v8419
      %v8421 = vpop.f32.mrb[0].mxu0
      %8422 = vmatprep.mubr.f32.mxu0 0.0
      %8423 = vmatmul.mubr.f32.gmra.mrb[0].mxu0 %v8259
      %v8424 = vpop.f32.mrb[0].mxu0
      %v8425 = vadd.f32 %v8110, %v8424
      %v8426 = vpop.f32.mrb[0].mxu0
      %8427 = vmatprep.mubr.f32.mxu0 0.0
      %8428 = vmatmul.mubr.f32.gmra.mrb[0].mxu0 %v8262
      %v8429 = vpop.f32.mrb[0].mxu0
      %v8430 = vadd.f32 %v8115, %v8429
      %v8431 = vpop.f32.mrb[0].mxu0
      %8432 = vmatprep.mubr.f32.mxu0 0.0
      %8433 = vmatmul.mubr.f32.gmra.mrb[0].mxu0 %v8265
      %v8434 = vpop.f32.mrb[0].mxu0
      %v8435 = vadd.f32 %v8120, %v8434
      %v8436 = vpop.f32.mrb[0].mxu0
      %8437 = vmatprep.mubr.f32.mxu0 0.0
      %8438 = vmatmul.mubr.f32.gmra.mrb[0].mxu0 %v8268
      %v8439 = vpop.f32.mrb[0].mxu0
      %v8440 = vadd.f32 %v8125, %v8439
      %v8441 = vpop.f32.mrb[0].mxu0
      %8442 = vmatprep.mubr.f32.mxu0 0.0
      %8443 = vmatmul.mubr.f32.gmra.mrb[0].mxu0 %v8271
      %v8444 = vpop.f32.mrb[0].mxu0
      %v8445 = vadd.f32 %v8130, %v8444
      %v8446 = vpop.f32.mrb[0].mxu0
      %8447 = vmatprep.mubr.f32.mxu0 0.0
      %8448 = vmatmul.mubr.f32.gmra.mrb[0].mxu0 %v8274
      %v8449 = vpop.f32.mrb[0].mxu0
      %v8450 = vadd.f32 %v8135, %v8449
      %v8451 = vpop.f32.mrb[0].mxu0
      %8452 = vmatprep.mubr.f32.mxu0 0.0
      %8453 = vmatmul.mubr.f32.gmra.mrb[0].mxu0 %v8277
      %v8454 = vpop.f32.mrb[0].mxu0
      %v8455 = vadd.f32 %v8140, %v8454
      %v8456 = vpop.f32.mrb[0].mxu0
      %8457 = vmatprep.mubr.f32.mxu0 0.0
      %8458 = vmatmul.mubr.f32.gmra.mrb[0].mxu0 %v8280
      %v8459 = vpop.f32.mrb[0].mxu0
      %v8460 = vadd.f32 %v8145, %v8459
      %v8461 = vpop.f32.mrb[0].mxu0
      %8462 = vmatprep.mubr.f32.mxu0 0.0
      %8463 = vmatmul.mubr.f32.gmra.mrb[0].mxu0 %v8283
      %v8464 = vpop.f32.mrb[0].mxu0
      %v8465 = vadd.f32 %v8150, %v8464
      %v8466 = vpop.f32.mrb[0].mxu0
      %8467 = vmatprep.mubr.f32.mxu0 0.0
      %8468 = vmatmul.mubr.f32.gmra.mrb[0].mxu0 %v8286
      %v8469 = vpop.f32.mrb[0].mxu0
      %v8470 = vadd.f32 %v8155, %v8469
      %v8471 = vpop.f32.mrb[0].mxu0
      %8472 = vmatprep.mubr.f32.mxu0 0.0
      %8473 = vmatmul.mubr.f32.gmra.mrb[0].mxu0 %v8289
      %v8474 = vpop.f32.mrb[0].mxu0
      %v8475 = vadd.f32 %v8160, %v8474
      %v8476 = vpop.f32.mrb[0].mxu0
      %8477 = vmatprep.mubr.f32.mxu0 0.0
      %8478 = vmatmul.mubr.f32.gmra.mrb[0].mxu0 %v8292
      %v8479 = vpop.f32.mrb[0].mxu0
      %v8480 = vadd.f32 %v8165, %v8479
      %v8481 = vpop.f32.mrb[0].mxu0
      %8482 = vmatprep.mubr.f32.mxu0 0.0
      %8483 = vmatmul.mubr.f32.gmra.mrb[0].mxu0 %v8295
      %v8484 = vpop.f32.mrb[0].mxu0
      %v8485 = vadd.f32 %v8170, %v8484
      %v8486 = vpop.f32.mrb[0].mxu0
      %8487 = vmatprep.mubr.f32.mxu0 0.0
      %8488 = vmatmul.mubr.f32.gmra.mrb[0].mxu0 %v8298
      %v8489 = vpop.f32.mrb[0].mxu0
      %v8490 = vadd.f32 %v8175, %v8489
      %v8491 = vpop.f32.mrb[0].mxu0
      %8492 = vmatprep.mubr.f32.mxu0 0.0
      %8493 = vmatmul.mubr.f32.gmra.mrb[0].mxu0 %v8301
      %v8494 = vpop.f32.mrb[0].mxu0
      %v8495 = vadd.f32 %v8180, %v8494
      %v8496 = vpop.f32.mrb[0].mxu0
      %8497 = vmatprep.mubr.f32.mxu0 0.0
      %8498 = vmatmul.mubr.f32.gmra.mrb[0].mxu0 %v8304
      %v8499 = vpop.f32.mrb[0].mxu0
      %v8500 = vadd.f32 %v8185, %v8499
      %v8501 = vpop.f32.mrb[0].mxu0
      %8502 = vmatprep.mubr.f32.mxu0 0.0
      %8503 = vmatmul.mubr.f32.gmra.mrb[0].mxu0 %v8307
      %v8504 = vpop.f32.mrb[0].mxu0
      %v8505 = vadd.f32 %v8190, %v8504
      %v8506 = vpop.f32.mrb[0].mxu0
      %8507 = vmatprep.mubr.f32.mxu0 0.0
      %8508 = vmatmul.mubr.f32.gmra.mrb[0].mxu0 %v8310
      %v8509 = vpop.f32.mrb[0].mxu0
      %v8510 = vadd.f32 %v8195, %v8509
      %v8511 = vpop.f32.mrb[0].mxu0
      %8512 = vmatprep.mubr.f32.mxu0 0.0
      %8513 = vmatmul.mubr.f32.gmra.mrb[0].mxu0 %v8313
      %v8514 = vpop.f32.mrb[0].mxu0
      %v8515 = vadd.f32 %v8200, %v8514
      %v8516 = vpop.f32.mrb[0].mxu0
      %8517 = vmatprep.mubr.f32.mxu0 0.0
      %8518 = vmatmul.mubr.f32.gmra.mrb[0].mxu0 %v8316
      %v8519 = vpop.f32.mrb[0].mxu0
      %v8520 = vadd.f32 %v8205, %v8519
      %v8521 = vpop.f32.mrb[0].mxu0
      %8522 = vmatprep.mubr.f32.mxu0 0.0
      %8523 = vmatmul.mubr.f32.gmra.mrb[0].mxu0 %v8319
      %v8524 = vpop.f32.mrb[0].mxu0
      %v8525 = vadd.f32 %v8210, %v8524
      %v8526 = vpop.f32.mrb[0].mxu0
      %8527 = vmatprep.mubr.f32.mxu0 0.0
      %8528 = vmatmul.mubr.f32.gmra.mrb[0].mxu0 %v8322
      %v8529 = vpop.f32.mrb[0].mxu0
      %v8530 = vadd.f32 %v8215, %v8529
      %v8531 = vpop.f32.mrb[0].mxu0
      %8532 = vmatprep.mubr.f32.mxu0 0.0
      %8533 = vmatmul.mubr.f32.gmra.mrb[0].mxu0 %v8325
      %v8534 = vpop.f32.mrb[0].mxu0
      %v8535 = vadd.f32 %v8220, %v8534
      %v8536 = vpop.f32.mrb[0].mxu0
      %8537 = vmatprep.mubr.f32.mxu0 0.0
      %8538 = vmatmul.mubr.f32.gmra.mrb[0].mxu0 %v8328
      %v8539 = vpop.f32.mrb[0].mxu0
      %v8540 = vadd.f32 %v8225, %v8539
      %v8541 = vpop.f32.mrb[0].mxu0
      %8542 = vmatprep.mubr.f32.mxu0 0.0
      %8543 = vmatmul.mubr.f32.gmra.mrb[0].mxu0 %v8331
      %v8544 = vpop.f32.mrb[0].mxu0
      %v8545 = vadd.f32 %v8230, %v8544
      %v8546 = vpop.f32.mrb[0].mxu0
      %8547 = vmatprep.mubr.f32.mxu0 0.0
      %8548 = vmatmul.mubr.f32.gmra.mrb[0].mxu0 %v8334
      %v8549 = vpop.f32.mrb[0].mxu0
      %v8550 = vadd.f32 %v8235, %v8549
      %v8551 = vpop.f32.mrb[0].mxu0
      %8552 = vmatprep.mubr.f32.mxu0 0.0
      %8553 = vmatmul.mubr.f32.gmra.mrb[0].mxu0 %v8337
      %v8554 = vpop.f32.mrb[0].mxu0
      %v8555 = vadd.f32 %v8240, %v8554
      %v8556 = vpop.f32.mrb[0].mxu0
      %8557 = vmatprep.mubr.f32.mxu0 0.0
      %8558 = vmatmul.mubr.f32.gmra.mrb[0].mxu0 %v8340
      %v8559 = vpop.f32.mrb[0].mxu0
      %v8560 = vadd.f32 %v8245, %v8559
      %v8561 = vpop.f32.mrb[0].mxu0
      %8562 = vmatprep.mubr.f32.mxu0 0.0
      %8563 = vmatmul.mubr.f32.gmra.mrb[0].mxu0 %v8343
      %v8564 = vpop.f32.mrb[0].mxu0
      %v8565 = vadd.f32 %v8250, %v8564
      %v8566 = vpop.f32.mrb[0].mxu0
      %8567 = vmatprep.mubr.f32.mxu0 0.0
      %8568 = vmatmul.mubr.f32.gmra.mrb[0].mxu0 %v8346
      %v8569 = vpop.f32.mrb[0].mxu0
      %v8570 = vadd.f32 %v8255, %v8569
      %v8571 = vpop.f32.mrb[0].mxu0
      %8572 = vdwg.mxu0
      %v8574 = vrot.slane %v7791, 1
      %v8575 = vsel %vm1808, %v1809, %v8574
      %v8576 = vrot.slane %v7792, 1
      %v8577 = vsel %vm1808, %v8574, %v8576
      %v8578 = vrot.slane %v7793, 1
      %v8579 = vsel %vm1808, %v8576, %v8578
      %v8580 = vrot.slane %v7794, 1
      %v8581 = vsel %vm1808, %v8578, %v8580
      %v8582 = vrot.slane %v7795, 1
      %v8583 = vsel %vm1808, %v8580, %v8582
      %v8584 = vrot.slane %v7796, 1
      %v8585 = vsel %vm1808, %v8582, %v8584
      %v8586 = vrot.slane %v7797, 1
      %v8587 = vsel %vm1808, %v8584, %v8586
      %v8588 = vrot.slane %v7798, 1
      %v8589 = vsel %vm1808, %v8586, %v8588
      %v8590 = vrot.slane %v7799, 1
      %v8591 = vsel %vm1808, %v8588, %v8590
      %v8592 = vrot.slane %v7800, 1
      %v8593 = vsel %vm1808, %v8590, %v8592
      %v8594 = vrot.slane %v7801, 1
      %v8595 = vsel %vm1808, %v8592, %v8594
      %v8596 = vrot.slane %v7802, 1
      %v8597 = vsel %vm1808, %v8594, %v8596
      %v8598 = vrot.slane %v7803, 1
      %v8599 = vsel %vm1808, %v8596, %v8598
      %v8600 = vrot.slane %v7804, 1
      %v8601 = vsel %vm1808, %v8598, %v8600
      %v8602 = vrot.slane %v7805, 1
      %v8603 = vsel %vm1808, %v8600, %v8602
      %v8604 = vrot.slane %v7806, 1
      %v8605 = vsel %vm1808, %v8602, %v8604
      %v8606 = vrot.slane %v7807, 1
      %v8607 = vsel %vm1808, %v8604, %v8606
      %v8608 = vrot.slane %v7808, 1
      %v8609 = vsel %vm1808, %v8606, %v8608
      %v8610 = vrot.slane %v7809, 1
      %v8611 = vsel %vm1808, %v8608, %v8610
      %v8612 = vrot.slane %v7810, 1
      %v8613 = vsel %vm1808, %v8610, %v8612
      %v8614 = vrot.slane %v7811, 1
      %v8615 = vsel %vm1808, %v8612, %v8614
      %v8616 = vrot.slane %v7812, 1
      %v8617 = vsel %vm1808, %v8614, %v8616
      %v8618 = vrot.slane %v7813, 1
      %v8619 = vsel %vm1808, %v8616, %v8618
      %v8620 = vrot.slane %v7814, 1
      %v8621 = vsel %vm1808, %v8618, %v8620
      %v8622 = vrot.slane %v7815, 1
      %v8623 = vsel %vm1808, %v8620, %v8622
      %v8624 = vrot.slane %v7816, 1
      %v8625 = vsel %vm1808, %v8622, %v8624
      %v8626 = vrot.slane %v7817, 1
      %v8627 = vsel %vm1808, %v8624, %v8626
      %v8628 = vrot.slane %v7818, 1
      %v8629 = vsel %vm1808, %v8626, %v8628
      %v8630 = vrot.slane %v7819, 1
      %v8631 = vsel %vm1808, %v8628, %v8630
      %v8632 = vrot.slane %v7820, 1
      %v8633 = vsel %vm1808, %v8630, %v8632
      %v8634 = vrot.slane %v7821, 1
      %v8635 = vsel %vm1808, %v8632, %v8634
      %v8667 = vsel %vm1776, %v8575, 0.0
      %v8668 = vsel %vm1777, %v8577, 0.0
      %v8669 = vsel %vm1778, %v8579, 0.0
      %v8670 = vsel %vm1779, %v8581, 0.0
      %v8671 = vsel %vm1780, %v8583, 0.0
      %v8672 = vsel %vm1781, %v8585, 0.0
      %v8673 = vsel %vm1782, %v8587, 0.0
      %v8674 = vsel %vm1783, %v8589, 0.0
      %v8675 = vsel %vm1784, %v8591, 0.0
      %v8676 = vsel %vm1785, %v8593, 0.0
      %v8677 = vsel %vm1786, %v8595, 0.0
      %v8678 = vsel %vm1787, %v8597, 0.0
      %v8679 = vsel %vm1788, %v8599, 0.0
      %v8680 = vsel %vm1789, %v8601, 0.0
      %v8681 = vsel %vm1790, %v8603, 0.0
      %v8682 = vsel %vm1791, %v8605, 0.0
      %v8683 = vsel %vm1792, %v8607, 0.0
      %v8684 = vsel %vm1793, %v8609, 0.0
      %v8685 = vsel %vm1794, %v8611, 0.0
      %v8686 = vsel %vm1795, %v8613, 0.0
      %v8687 = vsel %vm1796, %v8615, 0.0
      %v8688 = vsel %vm1797, %v8617, 0.0
      %v8689 = vsel %vm1798, %v8619, 0.0
      %v8690 = vsel %vm1799, %v8621, 0.0
      %v8691 = vsel %vm1800, %v8623, 0.0
      %v8692 = vsel %vm1801, %v8625, 0.0
      %v8693 = vsel %vm1802, %v8627, 0.0
      %v8694 = vsel %vm1803, %v8629, 0.0
      %v8695 = vsel %vm1804, %v8631, 0.0
      %v8696 = vsel %vm1805, %v8633, 0.0
      %v8697 = vsel %vm1806, %v8635, 0.0
      %v8699 = vsel %vm4603, %v8667, 0
      %v8702 = vsel %vm4603, %v8668, 0
      %v8705 = vsel %vm4603, %v8669, 0
      %v8708 = vsel %vm4603, %v8670, 0
      %v8711 = vsel %vm4603, %v8671, 0
      %v8714 = vsel %vm4603, %v8672, 0
      %v8717 = vsel %vm4603, %v8673, 0
      %v8720 = vsel %vm4603, %v8674, 0
      %v8723 = vsel %vm4603, %v8675, 0
      %v8726 = vsel %vm4603, %v8676, 0
      %v8729 = vsel %vm4603, %v8677, 0
      %v8732 = vsel %vm4603, %v8678, 0
      %v8735 = vsel %vm4603, %v8679, 0
      %v8738 = vsel %vm4603, %v8680, 0
      %v8741 = vsel %vm4603, %v8681, 0
      %v8744 = vsel %vm4603, %v8682, 0
      %v8747 = vsel %vm4603, %v8683, 0
      %v8750 = vsel %vm4603, %v8684, 0
      %v8753 = vsel %vm4603, %v8685, 0
      %v8756 = vsel %vm4603, %v8686, 0
      %v8759 = vsel %vm4603, %v8687, 0
      %v8762 = vsel %vm4603, %v8688, 0
      %v8765 = vsel %vm4603, %v8689, 0
      %v8768 = vsel %vm4603, %v8690, 0
      %v8771 = vsel %vm4603, %v8691, 0
      %v8774 = vsel %vm4603, %v8692, 0
      %v8777 = vsel %vm4603, %v8693, 0
      %v8780 = vsel %vm4603, %v8694, 0
      %v8783 = vsel %vm4603, %v8695, 0
      %v8786 = vsel %vm4603, %v8696, 0
      %v8789 = vsel %vm4603, %v8697, 0
      %8791 = vmatprep.subr.mxu0 0.0
      %8792 = vmatpush1.msra.mxu0 %v893
      %8793 = vmatprep.subr.mxu0 0.0
      %8794 = vmatpush1.msra.mxu0 0.0
      %8795 = vmatprep.subr.mxu0 0.0
      %8796 = vmatpush1.msra.mxu0 0.0
      %8797 = vmatprep.subr.mxu0 0.0
      %8798 = vmatpush1.msra.mxu0 0.0
      %8799 = vmatprep.subr.mxu0 0.0
      %8800 = vmatpush1.msra.mxu0 0.0
      %8801 = vmatprep.subr.mxu0 0.0
      %8802 = vmatpush1.msra.mxu0 0.0
      %8803 = vmatprep.subr.mxu0 0.0
      %8804 = vmatpush1.msra.mxu0 0.0
      %8805 = vmatprep.subr.mxu0 0.0
      %8806 = vmatpush1.msra.mxu0 0.0
      %8807 = vmatprep.subr.mxu0 0.0
      %8808 = vmatpush1.msra.mxu0 0.0
      %8809 = vmatprep.subr.mxu0 0.0
      %8810 = vmatpush1.msra.mxu0 0.0
      %8811 = vmatprep.subr.mxu0 0.0
      %8812 = vmatpush1.msra.mxu0 0.0
      %8813 = vmatprep.subr.mxu0 0.0
      %8814 = vmatpush1.msra.mxu0 0.0
      %8815 = vmatprep.subr.mxu0 0.0
      %8816 = vmatpush1.msra.mxu0 0.0
      %8817 = vmatprep.subr.mxu0 0.0
      %8818 = vmatpush1.msra.mxu0 0.0
      %8819 = vmatprep.subr.mxu0 0.0
      %8820 = vmatpush1.msra.mxu0 0.0
      %8821 = vmatprep.subr.mxu0 0.0
      %8822 = vmatpush1.msra.mxu0 0.0
      %8823 = vmatprep.subr.mxu0 0.0
      %8824 = vmatpush1.msra.mxu0 0.0
      %8825 = vmatprep.subr.mxu0 0.0
      %8826 = vmatpush1.msra.mxu0 0.0
      %8827 = vmatprep.subr.mxu0 0.0
      %8828 = vmatpush1.msra.mxu0 0.0
      %8829 = vmatprep.subr.mxu0 0.0
      %8830 = vmatpush1.msra.mxu0 0.0
      %8831 = vmatprep.subr.mxu0 0.0
      %8832 = vmatpush1.msra.mxu0 0.0
      %8833 = vmatprep.subr.mxu0 0.0
      %8834 = vmatpush1.msra.mxu0 0.0
      %8835 = vmatprep.subr.mxu0 0.0
      %8836 = vmatpush1.msra.mxu0 0.0
      %8837 = vmatprep.subr.mxu0 0.0
      %8838 = vmatpush1.msra.mxu0 0.0
      %8839 = vmatprep.subr.mxu0 0.0
      %8840 = vmatpush1.msra.mxu0 0.0
      %8841 = vmatprep.subr.mxu0 0.0
      %8842 = vmatpush1.msra.mxu0 0.0
      %8843 = vmatprep.subr.mxu0 0.0
      %8844 = vmatpush1.msra.mxu0 0.0
      %8845 = vmatprep.subr.mxu0 0.0
      %8846 = vmatpush1.msra.mxu0 0.0
      %8847 = vmatprep.subr.mxu0 0.0
      %8848 = vmatpush1.msra.mxu0 0.0
      %8849 = vmatprep.subr.mxu0 0.0
      %8850 = vmatpush1.msra.mxu0 0.0
      %8851 = vmatprep.subr.mxu0 0.0
      %8852 = vmatpush1.msra.mxu0 0.0
      %8853 = vmatprep.subr.mxu0 0.0
      %8854 = vmatpush1.msra.mxu0 0.0
      %8855 = vmatprep.mubr.f32.mxu0 0.0
      %8856 = vmatmul.mubr.f32.gmra.mrb[0].mxu0 %v5335
      %v8857 = vpop.f32.mrb[0].mxu0
      %v8858 = vadd.f32 0.0, %v8857
      %v8859 = vpop.f32.mrb[0].mxu0
      %8860 = vmatprep.mubr.f32.mxu0 0.0
      %8861 = vmatmul.mubr.f32.gmra.mrb[0].mxu0 %v8699
      %v8862 = vpop.f32.mrb[0].mxu0
      %v8863 = vadd.f32 0.0, %v8862
      %v8864 = vpop.f32.mrb[0].mxu0
      %8865 = vmatprep.mubr.f32.mxu0 0.0
      %8866 = vmatmul.mubr.f32.gmra.mrb[0].mxu0 %v8702
      %v8867 = vpop.f32.mrb[0].mxu0
      %v8868 = vadd.f32 0.0, %v8867
      %v8869 = vpop.f32.mrb[0].mxu0
      %8870 = vmatprep.mubr.f32.mxu0 0.0
      %8871 = vmatmul.mubr.f32.gmra.mrb[0].mxu0 %v8705
      %v8872 = vpop.f32.mrb[0].mxu0
      %v8873 = vadd.f32 0.0, %v8872
      %v8874 = vpop.f32.mrb[0].mxu0
      %8875 = vmatprep.mubr.f32.mxu0 0.0
      %8876 = vmatmul.mubr.f32.gmra.mrb[0].mxu0 %v8708
      %v8877 = vpop.f32.mrb[0].mxu0
      %v8878 = vadd.f32 0.0, %v8877
      %v8879 = vpop.f32.mrb[0].mxu0
      %8880 = vmatprep.mubr.f32.mxu0 0.0
      %8881 = vmatmul.mubr.f32.gmra.mrb[0].mxu0 %v8711
      %v8882 = vpop.f32.mrb[0].mxu0
      %v8883 = vadd.f32 0.0, %v8882
      %v8884 = vpop.f32.mrb[0].mxu0
      %8885 = vmatprep.mubr.f32.mxu0 0.0
      %8886 = vmatmul.mubr.f32.gmra.mrb[0].mxu0 %v8714
      %v8887 = vpop.f32.mrb[0].mxu0
      %v8888 = vadd.f32 0.0, %v8887
      %v8889 = vpop.f32.mrb[0].mxu0
      %8890 = vmatprep.mubr.f32.mxu0 0.0
      %8891 = vmatmul.mubr.f32.gmra.mrb[0].mxu0 %v8717
      %v8892 = vpop.f32.mrb[0].mxu0
      %v8893 = vadd.f32 0.0, %v8892
      %v8894 = vpop.f32.mrb[0].mxu0
      %8895 = vmatprep.mubr.f32.mxu0 0.0
      %8896 = vmatmul.mubr.f32.gmra.mrb[0].mxu0 %v8720
      %v8897 = vpop.f32.mrb[0].mxu0
      %v8898 = vadd.f32 0.0, %v8897
      %v8899 = vpop.f32.mrb[0].mxu0
      %8900 = vmatprep.mubr.f32.mxu0 0.0
      %8901 = vmatmul.mubr.f32.gmra.mrb[0].mxu0 %v8723
      %v8902 = vpop.f32.mrb[0].mxu0
      %v8903 = vadd.f32 0.0, %v8902
      %v8904 = vpop.f32.mrb[0].mxu0
      %8905 = vmatprep.mubr.f32.mxu0 0.0
      %8906 = vmatmul.mubr.f32.gmra.mrb[0].mxu0 %v8726
      %v8907 = vpop.f32.mrb[0].mxu0
      %v8908 = vadd.f32 0.0, %v8907
      %v8909 = vpop.f32.mrb[0].mxu0
      %8910 = vmatprep.mubr.f32.mxu0 0.0
      %8911 = vmatmul.mubr.f32.gmra.mrb[0].mxu0 %v8729
      %v8912 = vpop.f32.mrb[0].mxu0
      %v8913 = vadd.f32 0.0, %v8912
      %v8914 = vpop.f32.mrb[0].mxu0
      %8915 = vmatprep.mubr.f32.mxu0 0.0
      %8916 = vmatmul.mubr.f32.gmra.mrb[0].mxu0 %v8732
      %v8917 = vpop.f32.mrb[0].mxu0
      %v8918 = vadd.f32 0.0, %v8917
      %v8919 = vpop.f32.mrb[0].mxu0
      %8920 = vmatprep.mubr.f32.mxu0 0.0
      %8921 = vmatmul.mubr.f32.gmra.mrb[0].mxu0 %v8735
      %v8922 = vpop.f32.mrb[0].mxu0
      %v8923 = vadd.f32 0.0, %v8922
      %v8924 = vpop.f32.mrb[0].mxu0
      %8925 = vmatprep.mubr.f32.mxu0 0.0
      %8926 = vmatmul.mubr.f32.gmra.mrb[0].mxu0 %v8738
      %v8927 = vpop.f32.mrb[0].mxu0
      %v8928 = vadd.f32 0.0, %v8927
      %v8929 = vpop.f32.mrb[0].mxu0
      %8930 = vmatprep.mubr.f32.mxu0 0.0
      %8931 = vmatmul.mubr.f32.gmra.mrb[0].mxu0 %v8741
      %v8932 = vpop.f32.mrb[0].mxu0
      %v8933 = vadd.f32 0.0, %v8932
      %v8934 = vpop.f32.mrb[0].mxu0
      %8935 = vmatprep.mubr.f32.mxu0 0.0
      %8936 = vmatmul.mubr.f32.gmra.mrb[0].mxu0 %v8744
      %v8937 = vpop.f32.mrb[0].mxu0
      %v8938 = vadd.f32 0.0, %v8937
      %v8939 = vpop.f32.mrb[0].mxu0
      %8940 = vmatprep.mubr.f32.mxu0 0.0
      %8941 = vmatmul.mubr.f32.gmra.mrb[0].mxu0 %v8747
      %v8942 = vpop.f32.mrb[0].mxu0
      %v8943 = vadd.f32 0.0, %v8942
      %v8944 = vpop.f32.mrb[0].mxu0
      %8945 = vmatprep.mubr.f32.mxu0 0.0
      %8946 = vmatmul.mubr.f32.gmra.mrb[0].mxu0 %v8750
      %v8947 = vpop.f32.mrb[0].mxu0
      %v8948 = vadd.f32 0.0, %v8947
      %v8949 = vpop.f32.mrb[0].mxu0
      %8950 = vmatprep.mubr.f32.mxu0 0.0
      %8951 = vmatmul.mubr.f32.gmra.mrb[0].mxu0 %v8753
      %v8952 = vpop.f32.mrb[0].mxu0
      %v8953 = vadd.f32 0.0, %v8952
      %v8954 = vpop.f32.mrb[0].mxu0
      %8955 = vmatprep.mubr.f32.mxu0 0.0
      %8956 = vmatmul.mubr.f32.gmra.mrb[0].mxu0 %v8756
      %v8957 = vpop.f32.mrb[0].mxu0
      %v8958 = vadd.f32 0.0, %v8957
      %v8959 = vpop.f32.mrb[0].mxu0
      %8960 = vmatprep.mubr.f32.mxu0 0.0
      %8961 = vmatmul.mubr.f32.gmra.mrb[0].mxu0 %v8759
      %v8962 = vpop.f32.mrb[0].mxu0
      %v8963 = vadd.f32 0.0, %v8962
      %v8964 = vpop.f32.mrb[0].mxu0
      %8965 = vmatprep.mubr.f32.mxu0 0.0
      %8966 = vmatmul.mubr.f32.gmra.mrb[0].mxu0 %v8762
      %v8967 = vpop.f32.mrb[0].mxu0
      %v8968 = vadd.f32 0.0, %v8967
      %v8969 = vpop.f32.mrb[0].mxu0
      %8970 = vmatprep.mubr.f32.mxu0 0.0
      %8971 = vmatmul.mubr.f32.gmra.mrb[0].mxu0 %v8765
      %v8972 = vpop.f32.mrb[0].mxu0
      %v8973 = vadd.f32 0.0, %v8972
      %v8974 = vpop.f32.mrb[0].mxu0
      %8975 = vmatprep.mubr.f32.mxu0 0.0
      %8976 = vmatmul.mubr.f32.gmra.mrb[0].mxu0 %v8768
      %v8977 = vpop.f32.mrb[0].mxu0
      %v8978 = vadd.f32 0.0, %v8977
      %v8979 = vpop.f32.mrb[0].mxu0
      %8980 = vmatprep.mubr.f32.mxu0 0.0
      %8981 = vmatmul.mubr.f32.gmra.mrb[0].mxu0 %v8771
      %v8982 = vpop.f32.mrb[0].mxu0
      %v8983 = vadd.f32 0.0, %v8982
      %v8984 = vpop.f32.mrb[0].mxu0
      %8985 = vmatprep.mubr.f32.mxu0 0.0
      %8986 = vmatmul.mubr.f32.gmra.mrb[0].mxu0 %v8774
      %v8987 = vpop.f32.mrb[0].mxu0
      %v8988 = vadd.f32 0.0, %v8987
      %v8989 = vpop.f32.mrb[0].mxu0
      %8990 = vmatprep.mubr.f32.mxu0 0.0
      %8991 = vmatmul.mubr.f32.gmra.mrb[0].mxu0 %v8777
      %v8992 = vpop.f32.mrb[0].mxu0
      %v8993 = vadd.f32 0.0, %v8992
      %v8994 = vpop.f32.mrb[0].mxu0
      %8995 = vmatprep.mubr.f32.mxu0 0.0
      %8996 = vmatmul.mubr.f32.gmra.mrb[0].mxu0 %v8780
      %v8997 = vpop.f32.mrb[0].mxu0
      %v8998 = vadd.f32 0.0, %v8997
      %v8999 = vpop.f32.mrb[0].mxu0
      %9000 = vmatprep.mubr.f32.mxu0 0.0
      %9001 = vmatmul.mubr.f32.gmra.mrb[0].mxu0 %v8783
      %v9002 = vpop.f32.mrb[0].mxu0
      %v9003 = vadd.f32 0.0, %v9002
      %v9004 = vpop.f32.mrb[0].mxu0
      %9005 = vmatprep.mubr.f32.mxu0 0.0
      %9006 = vmatmul.mubr.f32.gmra.mrb[0].mxu0 %v8786
      %v9007 = vpop.f32.mrb[0].mxu0
      %v9008 = vadd.f32 0.0, %v9007
      %v9009 = vpop.f32.mrb[0].mxu0
      %9010 = vmatprep.mubr.f32.mxu0 0.0
      %9011 = vmatmul.mubr.f32.gmra.mrb[0].mxu0 %v8789
      %v9012 = vpop.f32.mrb[0].mxu0
      %v9013 = vadd.f32 0.0, %v9012
      %v9014 = vpop.f32.mrb[0].mxu0
      %9015 = vdwg.mxu0
      %v9016 = vadd.f32 %v8415, %v8858
      %v9017 = vadd.f32 %v8420, %v8863
      %v9018 = vadd.f32 %v8425, %v8868
      %v9019 = vadd.f32 %v8430, %v8873
      %v9020 = vadd.f32 %v8435, %v8878
      %v9021 = vadd.f32 %v8440, %v8883
      %v9022 = vadd.f32 %v8445, %v8888
      %v9023 = vadd.f32 %v8450, %v8893
      %v9024 = vadd.f32 %v8455, %v8898
      %v9025 = vadd.f32 %v8460, %v8903
      %v9026 = vadd.f32 %v8465, %v8908
      %v9027 = vadd.f32 %v8470, %v8913
      %v9028 = vadd.f32 %v8475, %v8918
      %v9029 = vadd.f32 %v8480, %v8923
      %v9030 = vadd.f32 %v8485, %v8928
      %v9031 = vadd.f32 %v8490, %v8933
      %v9032 = vadd.f32 %v8495, %v8938
      %v9033 = vadd.f32 %v8500, %v8943
      %v9034 = vadd.f32 %v8505, %v8948
      %v9035 = vadd.f32 %v8510, %v8953
      %v9036 = vadd.f32 %v8515, %v8958
      %v9037 = vadd.f32 %v8520, %v8963
      %v9038 = vadd.f32 %v8525, %v8968
      %v9039 = vadd.f32 %v8530, %v8973
      %v9040 = vadd.f32 %v8535, %v8978
      %v9041 = vadd.f32 %v8540, %v8983
      %v9042 = vadd.f32 %v8545, %v8988
      %v9043 = vadd.f32 %v8550, %v8993
      %v9044 = vadd.f32 %v8555, %v8998
      %v9045 = vadd.f32 %v8560, %v9003
      %v9046 = vadd.f32 %v8565, %v9008
      %v9047 = vadd.f32 %v8570, %v9013
      %v9049 = vrot.slane %v7821, 7
      %v9050 = vsel %vm1001, %v7911, %v9049
      %v9051 = vrot.slane %v7822, 7
      %v9052 = vsel %vm1001, %v9049, %v9051
      %v9055 = vsel %vm938, %v7854, 0.0
      %v9056 = vsel %vm939, %v7856, 0.0
      %v9057 = vsel %vm940, %v7858, 0.0
      %v9058 = vsel %vm941, %v7860, 0.0
      %v9059 = vsel %vm942, %v7862, 0.0
      %v9060 = vsel %vm943, %v7864, 0.0
      %v9061 = vsel %vm944, %v7866, 0.0
      %v9062 = vsel %vm945, %v7868, 0.0
      %v9063 = vsel %vm946, %v7870, 0.0
      %v9064 = vsel %vm947, %v7872, 0.0
      %v9065 = vsel %vm948, %v7874, 0.0
      %v9066 = vsel %vm949, %v7876, 0.0
      %v9067 = vsel %vm950, %v7878, 0.0
      %v9068 = vsel %vm951, %v7880, 0.0
      %v9069 = vsel %vm952, %v7882, 0.0
      %v9070 = vsel %vm953, %v7884, 0.0
      %v9071 = vsel %vm954, %v7886, 0.0
      %v9072 = vsel %vm955, %v7888, 0.0
      %v9073 = vsel %vm956, %v7890, 0.0
      %v9074 = vsel %vm957, %v7892, 0.0
      %v9075 = vsel %vm958, %v7894, 0.0
      %v9076 = vsel %vm959, %v7896, 0.0
      %v9077 = vsel %vm960, %v7898, 0.0
      %v9078 = vsel %vm961, %v7900, 0.0
      %v9079 = vsel %vm962, %v7902, 0.0
      %v9080 = vsel %vm963, %v7904, 0.0
      %v9081 = vsel %vm964, %v7906, 0.0
      %v9082 = vsel %vm965, %v7908, 0.0
      %v9083 = vsel %vm966, %v7910, 0.0
      %v9084 = vsel %vm967, %v7912, 0.0
      %v9085 = vsel %vm968, %v9050, 0.0
      %v9086 = vsel %vm969, %v9052, 0.0
      %v9088 = vsel %vm4603, %v9055, 0
      %v9091 = vsel %vm4603, %v9056, 0
      %v9094 = vsel %vm4603, %v9057, 0
      %v9097 = vsel %vm4603, %v9058, 0
      %v9100 = vsel %vm4603, %v9059, 0
      %v9103 = vsel %vm4603, %v9060, 0
      %v9106 = vsel %vm4603, %v9061, 0
      %v9109 = vsel %vm4603, %v9062, 0
      %v9112 = vsel %vm4603, %v9063, 0
      %v9115 = vsel %vm4603, %v9064, 0
      %v9118 = vsel %vm4603, %v9065, 0
      %v9121 = vsel %vm4603, %v9066, 0
      %v9124 = vsel %vm4603, %v9067, 0
      %v9127 = vsel %vm4603, %v9068, 0
      %v9130 = vsel %vm4603, %v9069, 0
      %v9133 = vsel %vm4603, %v9070, 0
      %v9136 = vsel %vm4603, %v9071, 0
      %v9139 = vsel %vm4603, %v9072, 0
      %v9142 = vsel %vm4603, %v9073, 0
      %v9145 = vsel %vm4603, %v9074, 0
      %v9148 = vsel %vm4603, %v9075, 0
      %v9151 = vsel %vm4603, %v9076, 0
      %v9154 = vsel %vm4603, %v9077, 0
      %v9157 = vsel %vm4603, %v9078, 0
      %v9160 = vsel %vm4603, %v9079, 0
      %v9163 = vsel %vm4603, %v9080, 0
      %v9166 = vsel %vm4603, %v9081, 0
      %v9169 = vsel %vm4603, %v9082, 0
      %v9172 = vsel %vm4603, %v9083, 0
      %v9175 = vsel %vm4603, %v9084, 0
      %v9178 = vsel %vm4603, %v9085, 0
      %v9181 = vsel %vm4603, %v9086, 0
      %9183 = vmatprep.subr.mxu0 0.0
      %9184 = vmatpush1.msra.mxu0 %v894
      %9185 = vmatprep.subr.mxu0 0.0
      %9186 = vmatpush1.msra.mxu0 0.0
      %9187 = vmatprep.subr.mxu0 0.0
      %9188 = vmatpush1.msra.mxu0 0.0
      %9189 = vmatprep.subr.mxu0 0.0
      %9190 = vmatpush1.msra.mxu0 0.0
      %9191 = vmatprep.subr.mxu0 0.0
      %9192 = vmatpush1.msra.mxu0 0.0
      %9193 = vmatprep.subr.mxu0 0.0
      %9194 = vmatpush1.msra.mxu0 0.0
      %9195 = vmatprep.subr.mxu0 0.0
      %9196 = vmatpush1.msra.mxu0 0.0
      %9197 = vmatprep.subr.mxu0 0.0
      %9198 = vmatpush1.msra.mxu0 0.0
      %9199 = vmatprep.subr.mxu0 0.0
      %9200 = vmatpush1.msra.mxu0 0.0
      %9201 = vmatprep.subr.mxu0 0.0
      %9202 = vmatpush1.msra.mxu0 0.0
      %9203 = vmatprep.subr.mxu0 0.0
      %9204 = vmatpush1.msra.mxu0 0.0
      %9205 = vmatprep.subr.mxu0 0.0
      %9206 = vmatpush1.msra.mxu0 0.0
      %9207 = vmatprep.subr.mxu0 0.0
      %9208 = vmatpush1.msra.mxu0 0.0
      %9209 = vmatprep.subr.mxu0 0.0
      %9210 = vmatpush1.msra.mxu0 0.0
      %9211 = vmatprep.subr.mxu0 0.0
      %9212 = vmatpush1.msra.mxu0 0.0
      %9213 = vmatprep.subr.mxu0 0.0
      %9214 = vmatpush1.msra.mxu0 0.0
      %9215 = vmatprep.subr.mxu0 0.0
      %9216 = vmatpush1.msra.mxu0 0.0
      %9217 = vmatprep.subr.mxu0 0.0
      %9218 = vmatpush1.msra.mxu0 0.0
      %9219 = vmatprep.subr.mxu0 0.0
      %9220 = vmatpush1.msra.mxu0 0.0
      %9221 = vmatprep.subr.mxu0 0.0
      %9222 = vmatpush1.msra.mxu0 0.0
      %9223 = vmatprep.subr.mxu0 0.0
      %9224 = vmatpush1.msra.mxu0 0.0
      %9225 = vmatprep.subr.mxu0 0.0
      %9226 = vmatpush1.msra.mxu0 0.0
      %9227 = vmatprep.subr.mxu0 0.0
      %9228 = vmatpush1.msra.mxu0 0.0
      %9229 = vmatprep.subr.mxu0 0.0
      %9230 = vmatpush1.msra.mxu0 0.0
      %9231 = vmatprep.subr.mxu0 0.0
      %9232 = vmatpush1.msra.mxu0 0.0
      %9233 = vmatprep.subr.mxu0 0.0
      %9234 = vmatpush1.msra.mxu0 0.0
      %9235 = vmatprep.subr.mxu0 0.0
      %9236 = vmatpush1.msra.mxu0 0.0
      %9237 = vmatprep.subr.mxu0 0.0
      %9238 = vmatpush1.msra.mxu0 0.0
      %9239 = vmatprep.subr.mxu0 0.0
      %9240 = vmatpush1.msra.mxu0 0.0
      %9241 = vmatprep.subr.mxu0 0.0
      %9242 = vmatpush1.msra.mxu0 0.0
      %9243 = vmatprep.subr.mxu0 0.0
      %9244 = vmatpush1.msra.mxu0 0.0
      %9245 = vmatprep.subr.mxu0 0.0
      %9246 = vmatpush1.msra.mxu0 0.0
      %9247 = vmatprep.mubr.f32.mxu0 0.0
      %9248 = vmatmul.mubr.f32.gmra.mrb[0].mxu0 %v9088
      %v9249 = vpop.f32.mrb[0].mxu0
      %v9250 = vadd.f32 0.0, %v9249
      %v9251 = vpop.f32.mrb[0].mxu0
      %9252 = vmatprep.mubr.f32.mxu0 0.0
      %9253 = vmatmul.mubr.f32.gmra.mrb[0].mxu0 %v9091
      %v9254 = vpop.f32.mrb[0].mxu0
      %v9255 = vadd.f32 0.0, %v9254
      %v9256 = vpop.f32.mrb[0].mxu0
      %9257 = vmatprep.mubr.f32.mxu0 0.0
      %9258 = vmatmul.mubr.f32.gmra.mrb[0].mxu0 %v9094
      %v9259 = vpop.f32.mrb[0].mxu0
      %v9260 = vadd.f32 0.0, %v9259
      %v9261 = vpop.f32.mrb[0].mxu0
      %9262 = vmatprep.mubr.f32.mxu0 0.0
      %9263 = vmatmul.mubr.f32.gmra.mrb[0].mxu0 %v9097
      %v9264 = vpop.f32.mrb[0].mxu0
      %v9265 = vadd.f32 0.0, %v9264
      %v9266 = vpop.f32.mrb[0].mxu0
      %9267 = vmatprep.mubr.f32.mxu0 0.0
      %9268 = vmatmul.mubr.f32.gmra.mrb[0].mxu0 %v9100
      %v9269 = vpop.f32.mrb[0].mxu0
      %v9270 = vadd.f32 0.0, %v9269
      %v9271 = vpop.f32.mrb[0].mxu0
      %9272 = vmatprep.mubr.f32.mxu0 0.0
      %9273 = vmatmul.mubr.f32.gmra.mrb[0].mxu0 %v9103
      %v9274 = vpop.f32.mrb[0].mxu0
      %v9275 = vadd.f32 0.0, %v9274
      %v9276 = vpop.f32.mrb[0].mxu0
      %9277 = vmatprep.mubr.f32.mxu0 0.0
      %9278 = vmatmul.mubr.f32.gmra.mrb[0].mxu0 %v9106
      %v9279 = vpop.f32.mrb[0].mxu0
      %v9280 = vadd.f32 0.0, %v9279
      %v9281 = vpop.f32.mrb[0].mxu0
      %9282 = vmatprep.mubr.f32.mxu0 0.0
      %9283 = vmatmul.mubr.f32.gmra.mrb[0].mxu0 %v9109
      %v9284 = vpop.f32.mrb[0].mxu0
      %v9285 = vadd.f32 0.0, %v9284
      %v9286 = vpop.f32.mrb[0].mxu0
      %9287 = vmatprep.mubr.f32.mxu0 0.0
      %9288 = vmatmul.mubr.f32.gmra.mrb[0].mxu0 %v9112
      %v9289 = vpop.f32.mrb[0].mxu0
      %v9290 = vadd.f32 0.0, %v9289
      %v9291 = vpop.f32.mrb[0].mxu0
      %9292 = vmatprep.mubr.f32.mxu0 0.0
      %9293 = vmatmul.mubr.f32.gmra.mrb[0].mxu0 %v9115
      %v9294 = vpop.f32.mrb[0].mxu0
      %v9295 = vadd.f32 0.0, %v9294
      %v9296 = vpop.f32.mrb[0].mxu0
      %9297 = vmatprep.mubr.f32.mxu0 0.0
      %9298 = vmatmul.mubr.f32.gmra.mrb[0].mxu0 %v9118
      %v9299 = vpop.f32.mrb[0].mxu0
      %v9300 = vadd.f32 0.0, %v9299
      %v9301 = vpop.f32.mrb[0].mxu0
      %9302 = vmatprep.mubr.f32.mxu0 0.0
      %9303 = vmatmul.mubr.f32.gmra.mrb[0].mxu0 %v9121
      %v9304 = vpop.f32.mrb[0].mxu0
      %v9305 = vadd.f32 0.0, %v9304
      %v9306 = vpop.f32.mrb[0].mxu0
      %9307 = vmatprep.mubr.f32.mxu0 0.0
      %9308 = vmatmul.mubr.f32.gmra.mrb[0].mxu0 %v9124
      %v9309 = vpop.f32.mrb[0].mxu0
      %v9310 = vadd.f32 0.0, %v9309
      %v9311 = vpop.f32.mrb[0].mxu0
      %9312 = vmatprep.mubr.f32.mxu0 0.0
      %9313 = vmatmul.mubr.f32.gmra.mrb[0].mxu0 %v9127
      %v9314 = vpop.f32.mrb[0].mxu0
      %v9315 = vadd.f32 0.0, %v9314
      %v9316 = vpop.f32.mrb[0].mxu0
      %9317 = vmatprep.mubr.f32.mxu0 0.0
      %9318 = vmatmul.mubr.f32.gmra.mrb[0].mxu0 %v9130
      %v9319 = vpop.f32.mrb[0].mxu0
      %v9320 = vadd.f32 0.0, %v9319
      %v9321 = vpop.f32.mrb[0].mxu0
      %9322 = vmatprep.mubr.f32.mxu0 0.0
      %9323 = vmatmul.mubr.f32.gmra.mrb[0].mxu0 %v9133
      %v9324 = vpop.f32.mrb[0].mxu0
      %v9325 = vadd.f32 0.0, %v9324
      %v9326 = vpop.f32.mrb[0].mxu0
      %9327 = vmatprep.mubr.f32.mxu0 0.0
      %9328 = vmatmul.mubr.f32.gmra.mrb[0].mxu0 %v9136
      %v9329 = vpop.f32.mrb[0].mxu0
      %v9330 = vadd.f32 0.0, %v9329
      %v9331 = vpop.f32.mrb[0].mxu0
      %9332 = vmatprep.mubr.f32.mxu0 0.0
      %9333 = vmatmul.mubr.f32.gmra.mrb[0].mxu0 %v9139
      %v9334 = vpop.f32.mrb[0].mxu0
      %v9335 = vadd.f32 0.0, %v9334
      %v9336 = vpop.f32.mrb[0].mxu0
      %9337 = vmatprep.mubr.f32.mxu0 0.0
      %9338 = vmatmul.mubr.f32.gmra.mrb[0].mxu0 %v9142
      %v9339 = vpop.f32.mrb[0].mxu0
      %v9340 = vadd.f32 0.0, %v9339
      %v9341 = vpop.f32.mrb[0].mxu0
      %9342 = vmatprep.mubr.f32.mxu0 0.0
      %9343 = vmatmul.mubr.f32.gmra.mrb[0].mxu0 %v9145
      %v9344 = vpop.f32.mrb[0].mxu0
      %v9345 = vadd.f32 0.0, %v9344
      %v9346 = vpop.f32.mrb[0].mxu0
      %9347 = vmatprep.mubr.f32.mxu0 0.0
      %9348 = vmatmul.mubr.f32.gmra.mrb[0].mxu0 %v9148
      %v9349 = vpop.f32.mrb[0].mxu0
      %v9350 = vadd.f32 0.0, %v9349
      %v9351 = vpop.f32.mrb[0].mxu0
      %9352 = vmatprep.mubr.f32.mxu0 0.0
      %9353 = vmatmul.mubr.f32.gmra.mrb[0].mxu0 %v9151
      %v9354 = vpop.f32.mrb[0].mxu0
      %v9355 = vadd.f32 0.0, %v9354
      %v9356 = vpop.f32.mrb[0].mxu0
      %9357 = vmatprep.mubr.f32.mxu0 0.0
      %9358 = vmatmul.mubr.f32.gmra.mrb[0].mxu0 %v9154
      %v9359 = vpop.f32.mrb[0].mxu0
      %v9360 = vadd.f32 0.0, %v9359
      %v9361 = vpop.f32.mrb[0].mxu0
      %9362 = vmatprep.mubr.f32.mxu0 0.0
      %9363 = vmatmul.mubr.f32.gmra.mrb[0].mxu0 %v9157
      %v9364 = vpop.f32.mrb[0].mxu0
      %v9365 = vadd.f32 0.0, %v9364
      %v9366 = vpop.f32.mrb[0].mxu0
      %9367 = vmatprep.mubr.f32.mxu0 0.0
      %9368 = vmatmul.mubr.f32.gmra.mrb[0].mxu0 %v9160
      %v9369 = vpop.f32.mrb[0].mxu0
      %v9370 = vadd.f32 0.0, %v9369
      %v9371 = vpop.f32.mrb[0].mxu0
      %9372 = vmatprep.mubr.f32.mxu0 0.0
      %9373 = vmatmul.mubr.f32.gmra.mrb[0].mxu0 %v9163
      %v9374 = vpop.f32.mrb[0].mxu0
      %v9375 = vadd.f32 0.0, %v9374
      %v9376 = vpop.f32.mrb[0].mxu0
      %9377 = vmatprep.mubr.f32.mxu0 0.0
      %9378 = vmatmul.mubr.f32.gmra.mrb[0].mxu0 %v9166
      %v9379 = vpop.f32.mrb[0].mxu0
      %v9380 = vadd.f32 0.0, %v9379
      %v9381 = vpop.f32.mrb[0].mxu0
      %9382 = vmatprep.mubr.f32.mxu0 0.0
      %9383 = vmatmul.mubr.f32.gmra.mrb[0].mxu0 %v9169
      %v9384 = vpop.f32.mrb[0].mxu0
      %v9385 = vadd.f32 0.0, %v9384
      %v9386 = vpop.f32.mrb[0].mxu0
      %9387 = vmatprep.mubr.f32.mxu0 0.0
      %9388 = vmatmul.mubr.f32.gmra.mrb[0].mxu0 %v9172
      %v9389 = vpop.f32.mrb[0].mxu0
      %v9390 = vadd.f32 0.0, %v9389
      %v9391 = vpop.f32.mrb[0].mxu0
      %9392 = vmatprep.mubr.f32.mxu0 0.0
      %9393 = vmatmul.mubr.f32.gmra.mrb[0].mxu0 %v9175
      %v9394 = vpop.f32.mrb[0].mxu0
      %v9395 = vadd.f32 0.0, %v9394
      %v9396 = vpop.f32.mrb[0].mxu0
      %9397 = vmatprep.mubr.f32.mxu0 0.0
      %9398 = vmatmul.mubr.f32.gmra.mrb[0].mxu0 %v9178
      %v9399 = vpop.f32.mrb[0].mxu0
      %v9400 = vadd.f32 0.0, %v9399
      %v9401 = vpop.f32.mrb[0].mxu0
      %9402 = vmatprep.mubr.f32.mxu0 0.0
      %9403 = vmatmul.mubr.f32.gmra.mrb[0].mxu0 %v9181
      %v9404 = vpop.f32.mrb[0].mxu0
      %v9405 = vadd.f32 0.0, %v9404
      %v9406 = vpop.f32.mrb[0].mxu0
      %9407 = vdwg.mxu0
      %v9408 = vadd.f32 %v9016, %v9250
      %v9409 = vadd.f32 %v9017, %v9255
      %v9410 = vadd.f32 %v9018, %v9260
      %v9411 = vadd.f32 %v9019, %v9265
      %v9412 = vadd.f32 %v9020, %v9270
      %v9413 = vadd.f32 %v9021, %v9275
      %v9414 = vadd.f32 %v9022, %v9280
      %v9415 = vadd.f32 %v9023, %v9285
      %v9416 = vadd.f32 %v9024, %v9290
      %v9417 = vadd.f32 %v9025, %v9295
      %v9418 = vadd.f32 %v9026, %v9300
      %v9419 = vadd.f32 %v9027, %v9305
      %v9420 = vadd.f32 %v9028, %v9310
      %v9421 = vadd.f32 %v9029, %v9315
      %v9422 = vadd.f32 %v9030, %v9320
      %v9423 = vadd.f32 %v9031, %v9325
      %v9424 = vadd.f32 %v9032, %v9330
      %v9425 = vadd.f32 %v9033, %v9335
      %v9426 = vadd.f32 %v9034, %v9340
      %v9427 = vadd.f32 %v9035, %v9345
      %v9428 = vadd.f32 %v9036, %v9350
      %v9429 = vadd.f32 %v9037, %v9355
      %v9430 = vadd.f32 %v9038, %v9360
      %v9431 = vadd.f32 %v9039, %v9365
      %v9432 = vadd.f32 %v9040, %v9370
      %v9433 = vadd.f32 %v9041, %v9375
      %v9434 = vadd.f32 %v9042, %v9380
      %v9435 = vadd.f32 %v9043, %v9385
      %v9436 = vadd.f32 %v9044, %v9390
      %v9437 = vadd.f32 %v9045, %v9395
      %v9438 = vadd.f32 %v9046, %v9400
      %v9439 = vadd.f32 %v9047, %v9405
      %v9440 = vsel %vm4603, %v7821, 0
      %v9442 = vsel %vm4603, %v7822, 0
      %9444 = vmatprep.subr.mxu0 0.0
      %9445 = vmatpush1.msra.mxu0 %v895
      %9446 = vmatprep.subr.mxu0 0.0
      %9447 = vmatpush1.msra.mxu0 0.0
      %9448 = vmatprep.subr.mxu0 0.0
      %9449 = vmatpush1.msra.mxu0 0.0
      %9450 = vmatprep.subr.mxu0 0.0
      %9451 = vmatpush1.msra.mxu0 0.0
      %9452 = vmatprep.subr.mxu0 0.0
      %9453 = vmatpush1.msra.mxu0 0.0
      %9454 = vmatprep.subr.mxu0 0.0
      %9455 = vmatpush1.msra.mxu0 0.0
      %9456 = vmatprep.subr.mxu0 0.0
      %9457 = vmatpush1.msra.mxu0 0.0
      %9458 = vmatprep.subr.mxu0 0.0
      %9459 = vmatpush1.msra.mxu0 0.0
      %9460 = vmatprep.subr.mxu0 0.0
      %9461 = vmatpush1.msra.mxu0 0.0
      %9462 = vmatprep.subr.mxu0 0.0
      %9463 = vmatpush1.msra.mxu0 0.0
      %9464 = vmatprep.subr.mxu0 0.0
      %9465 = vmatpush1.msra.mxu0 0.0
      %9466 = vmatprep.subr.mxu0 0.0
      %9467 = vmatpush1.msra.mxu0 0.0
      %9468 = vmatprep.subr.mxu0 0.0
      %9469 = vmatpush1.msra.mxu0 0.0
      %9470 = vmatprep.subr.mxu0 0.0
      %9471 = vmatpush1.msra.mxu0 0.0
      %9472 = vmatprep.subr.mxu0 0.0
      %9473 = vmatpush1.msra.mxu0 0.0
      %9474 = vmatprep.subr.mxu0 0.0
      %9475 = vmatpush1.msra.mxu0 0.0
      %9476 = vmatprep.subr.mxu0 0.0
      %9477 = vmatpush1.msra.mxu0 0.0
      %9478 = vmatprep.subr.mxu0 0.0
      %9479 = vmatpush1.msra.mxu0 0.0
      %9480 = vmatprep.subr.mxu0 0.0
      %9481 = vmatpush1.msra.mxu0 0.0
      %9482 = vmatprep.subr.mxu0 0.0
      %9483 = vmatpush1.msra.mxu0 0.0
      %9484 = vmatprep.subr.mxu0 0.0
      %9485 = vmatpush1.msra.mxu0 0.0
      %9486 = vmatprep.subr.mxu0 0.0
      %9487 = vmatpush1.msra.mxu0 0.0
      %9488 = vmatprep.subr.mxu0 0.0
      %9489 = vmatpush1.msra.mxu0 0.0
      %9490 = vmatprep.subr.mxu0 0.0
      %9491 = vmatpush1.msra.mxu0 0.0
      %9492 = vmatprep.subr.mxu0 0.0
      %9493 = vmatpush1.msra.mxu0 0.0
      %9494 = vmatprep.subr.mxu0 0.0
      %9495 = vmatpush1.msra.mxu0 0.0
      %9496 = vmatprep.subr.mxu0 0.0
      %9497 = vmatpush1.msra.mxu0 0.0
      %9498 = vmatprep.subr.mxu0 0.0
      %9499 = vmatpush1.msra.mxu0 0.0
      %9500 = vmatprep.subr.mxu0 0.0
      %9501 = vmatpush1.msra.mxu0 0.0
      %9502 = vmatprep.subr.mxu0 0.0
      %9503 = vmatpush1.msra.mxu0 0.0
      %9504 = vmatprep.subr.mxu0 0.0
      %9505 = vmatpush1.msra.mxu0 0.0
      %9506 = vmatprep.subr.mxu0 0.0
      %9507 = vmatpush1.msra.mxu0 0.0
      %9508 = vmatprep.mubr.f32.mxu0 0.0
      %9509 = vmatmul.mubr.f32.gmra.mrb[0].mxu0 %v7973
      %v9510 = vpop.f32.mrb[0].mxu0
      %v9511 = vadd.f32 0.0, %v9510
      %v9512 = vpop.f32.mrb[0].mxu0
      %9513 = vmatprep.mubr.f32.mxu0 0.0
      %9514 = vmatmul.mubr.f32.gmra.mrb[0].mxu0 %v7975
      %v9515 = vpop.f32.mrb[0].mxu0
      %v9516 = vadd.f32 0.0, %v9515
      %v9517 = vpop.f32.mrb[0].mxu0
      %9518 = vmatprep.mubr.f32.mxu0 0.0
      %9519 = vmatmul.mubr.f32.gmra.mrb[0].mxu0 %v7977
      %v9520 = vpop.f32.mrb[0].mxu0
      %v9521 = vadd.f32 0.0, %v9520
      %v9522 = vpop.f32.mrb[0].mxu0
      %9523 = vmatprep.mubr.f32.mxu0 0.0
      %9524 = vmatmul.mubr.f32.gmra.mrb[0].mxu0 %v7979
      %v9525 = vpop.f32.mrb[0].mxu0
      %v9526 = vadd.f32 0.0, %v9525
      %v9527 = vpop.f32.mrb[0].mxu0
      %9528 = vmatprep.mubr.f32.mxu0 0.0
      %9529 = vmatmul.mubr.f32.gmra.mrb[0].mxu0 %v7981
      %v9530 = vpop.f32.mrb[0].mxu0
      %v9531 = vadd.f32 0.0, %v9530
      %v9532 = vpop.f32.mrb[0].mxu0
      %9533 = vmatprep.mubr.f32.mxu0 0.0
      %9534 = vmatmul.mubr.f32.gmra.mrb[0].mxu0 %v7983
      %v9535 = vpop.f32.mrb[0].mxu0
      %v9536 = vadd.f32 0.0, %v9535
      %v9537 = vpop.f32.mrb[0].mxu0
      %9538 = vmatprep.mubr.f32.mxu0 0.0
      %9539 = vmatmul.mubr.f32.gmra.mrb[0].mxu0 %v7985
      %v9540 = vpop.f32.mrb[0].mxu0
      %v9541 = vadd.f32 0.0, %v9540
      %v9542 = vpop.f32.mrb[0].mxu0
      %9543 = vmatprep.mubr.f32.mxu0 0.0
      %9544 = vmatmul.mubr.f32.gmra.mrb[0].mxu0 %v7987
      %v9545 = vpop.f32.mrb[0].mxu0
      %v9546 = vadd.f32 0.0, %v9545
      %v9547 = vpop.f32.mrb[0].mxu0
      %9548 = vmatprep.mubr.f32.mxu0 0.0
      %9549 = vmatmul.mubr.f32.gmra.mrb[0].mxu0 %v7989
      %v9550 = vpop.f32.mrb[0].mxu0
      %v9551 = vadd.f32 0.0, %v9550
      %v9552 = vpop.f32.mrb[0].mxu0
      %9553 = vmatprep.mubr.f32.mxu0 0.0
      %9554 = vmatmul.mubr.f32.gmra.mrb[0].mxu0 %v7991
      %v9555 = vpop.f32.mrb[0].mxu0
      %v9556 = vadd.f32 0.0, %v9555
      %v9557 = vpop.f32.mrb[0].mxu0
      %9558 = vmatprep.mubr.f32.mxu0 0.0
      %9559 = vmatmul.mubr.f32.gmra.mrb[0].mxu0 %v7993
      %v9560 = vpop.f32.mrb[0].mxu0
      %v9561 = vadd.f32 0.0, %v9560
      %v9562 = vpop.f32.mrb[0].mxu0
      %9563 = vmatprep.mubr.f32.mxu0 0.0
      %9564 = vmatmul.mubr.f32.gmra.mrb[0].mxu0 %v7995
      %v9565 = vpop.f32.mrb[0].mxu0
      %v9566 = vadd.f32 0.0, %v9565
      %v9567 = vpop.f32.mrb[0].mxu0
      %9568 = vmatprep.mubr.f32.mxu0 0.0
      %9569 = vmatmul.mubr.f32.gmra.mrb[0].mxu0 %v7997
      %v9570 = vpop.f32.mrb[0].mxu0
      %v9571 = vadd.f32 0.0, %v9570
      %v9572 = vpop.f32.mrb[0].mxu0
      %9573 = vmatprep.mubr.f32.mxu0 0.0
      %9574 = vmatmul.mubr.f32.gmra.mrb[0].mxu0 %v7999
      %v9575 = vpop.f32.mrb[0].mxu0
      %v9576 = vadd.f32 0.0, %v9575
      %v9577 = vpop.f32.mrb[0].mxu0
      %9578 = vmatprep.mubr.f32.mxu0 0.0
      %9579 = vmatmul.mubr.f32.gmra.mrb[0].mxu0 %v8001
      %v9580 = vpop.f32.mrb[0].mxu0
      %v9581 = vadd.f32 0.0, %v9580
      %v9582 = vpop.f32.mrb[0].mxu0
      %9583 = vmatprep.mubr.f32.mxu0 0.0
      %9584 = vmatmul.mubr.f32.gmra.mrb[0].mxu0 %v8003
      %v9585 = vpop.f32.mrb[0].mxu0
      %v9586 = vadd.f32 0.0, %v9585
      %v9587 = vpop.f32.mrb[0].mxu0
      %9588 = vmatprep.mubr.f32.mxu0 0.0
      %9589 = vmatmul.mubr.f32.gmra.mrb[0].mxu0 %v8005
      %v9590 = vpop.f32.mrb[0].mxu0
      %v9591 = vadd.f32 0.0, %v9590
      %v9592 = vpop.f32.mrb[0].mxu0
      %9593 = vmatprep.mubr.f32.mxu0 0.0
      %9594 = vmatmul.mubr.f32.gmra.mrb[0].mxu0 %v8007
      %v9595 = vpop.f32.mrb[0].mxu0
      %v9596 = vadd.f32 0.0, %v9595
      %v9597 = vpop.f32.mrb[0].mxu0
      %9598 = vmatprep.mubr.f32.mxu0 0.0
      %9599 = vmatmul.mubr.f32.gmra.mrb[0].mxu0 %v8009
      %v9600 = vpop.f32.mrb[0].mxu0
      %v9601 = vadd.f32 0.0, %v9600
      %v9602 = vpop.f32.mrb[0].mxu0
      %9603 = vmatprep.mubr.f32.mxu0 0.0
      %9604 = vmatmul.mubr.f32.gmra.mrb[0].mxu0 %v8011
      %v9605 = vpop.f32.mrb[0].mxu0
      %v9606 = vadd.f32 0.0, %v9605
      %v9607 = vpop.f32.mrb[0].mxu0
      %9608 = vmatprep.mubr.f32.mxu0 0.0
      %9609 = vmatmul.mubr.f32.gmra.mrb[0].mxu0 %v8013
      %v9610 = vpop.f32.mrb[0].mxu0
      %v9611 = vadd.f32 0.0, %v9610
      %v9612 = vpop.f32.mrb[0].mxu0
      %9613 = vmatprep.mubr.f32.mxu0 0.0
      %9614 = vmatmul.mubr.f32.gmra.mrb[0].mxu0 %v8015
      %v9615 = vpop.f32.mrb[0].mxu0
      %v9616 = vadd.f32 0.0, %v9615
      %v9617 = vpop.f32.mrb[0].mxu0
      %9618 = vmatprep.mubr.f32.mxu0 0.0
      %9619 = vmatmul.mubr.f32.gmra.mrb[0].mxu0 %v8017
      %v9620 = vpop.f32.mrb[0].mxu0
      %v9621 = vadd.f32 0.0, %v9620
      %v9622 = vpop.f32.mrb[0].mxu0
      %9623 = vmatprep.mubr.f32.mxu0 0.0
      %9624 = vmatmul.mubr.f32.gmra.mrb[0].mxu0 %v8019
      %v9625 = vpop.f32.mrb[0].mxu0
      %v9626 = vadd.f32 0.0, %v9625
      %v9627 = vpop.f32.mrb[0].mxu0
      %9628 = vmatprep.mubr.f32.mxu0 0.0
      %9629 = vmatmul.mubr.f32.gmra.mrb[0].mxu0 %v8021
      %v9630 = vpop.f32.mrb[0].mxu0
      %v9631 = vadd.f32 0.0, %v9630
      %v9632 = vpop.f32.mrb[0].mxu0
      %9633 = vmatprep.mubr.f32.mxu0 0.0
      %9634 = vmatmul.mubr.f32.gmra.mrb[0].mxu0 %v8023
      %v9635 = vpop.f32.mrb[0].mxu0
      %v9636 = vadd.f32 0.0, %v9635
      %v9637 = vpop.f32.mrb[0].mxu0
      %9638 = vmatprep.mubr.f32.mxu0 0.0
      %9639 = vmatmul.mubr.f32.gmra.mrb[0].mxu0 %v8025
      %v9640 = vpop.f32.mrb[0].mxu0
      %v9641 = vadd.f32 0.0, %v9640
      %v9642 = vpop.f32.mrb[0].mxu0
      %9643 = vmatprep.mubr.f32.mxu0 0.0
      %9644 = vmatmul.mubr.f32.gmra.mrb[0].mxu0 %v8027
      %v9645 = vpop.f32.mrb[0].mxu0
      %v9646 = vadd.f32 0.0, %v9645
      %v9647 = vpop.f32.mrb[0].mxu0
      %9648 = vmatprep.mubr.f32.mxu0 0.0
      %9649 = vmatmul.mubr.f32.gmra.mrb[0].mxu0 %v8029
      %v9650 = vpop.f32.mrb[0].mxu0
      %v9651 = vadd.f32 0.0, %v9650
      %v9652 = vpop.f32.mrb[0].mxu0
      %9653 = vmatprep.mubr.f32.mxu0 0.0
      %9654 = vmatmul.mubr.f32.gmra.mrb[0].mxu0 %v8031
      %v9655 = vpop.f32.mrb[0].mxu0
      %v9656 = vadd.f32 0.0, %v9655
      %v9657 = vpop.f32.mrb[0].mxu0
      %9658 = vmatprep.mubr.f32.mxu0 0.0
      %9659 = vmatmul.mubr.f32.gmra.mrb[0].mxu0 %v9440
      %v9660 = vpop.f32.mrb[0].mxu0
      %v9661 = vadd.f32 0.0, %v9660
      %v9662 = vpop.f32.mrb[0].mxu0
      %9663 = vmatprep.mubr.f32.mxu0 0.0
      %9664 = vmatmul.mubr.f32.gmra.mrb[0].mxu0 %v9442
      %v9665 = vpop.f32.mrb[0].mxu0
      %v9666 = vadd.f32 0.0, %v9665
      %v9667 = vpop.f32.mrb[0].mxu0
      %9668 = vdwg.mxu0
      %v9669 = vadd.f32 %v9408, %v9511
      %v9670 = vadd.f32 %v9409, %v9516
      %v9671 = vadd.f32 %v9410, %v9521
      %v9672 = vadd.f32 %v9411, %v9526
      %v9673 = vadd.f32 %v9412, %v9531
      %v9674 = vadd.f32 %v9413, %v9536
      %v9675 = vadd.f32 %v9414, %v9541
      %v9676 = vadd.f32 %v9415, %v9546
      %v9677 = vadd.f32 %v9416, %v9551
      %v9678 = vadd.f32 %v9417, %v9556
      %v9679 = vadd.f32 %v9418, %v9561
      %v9680 = vadd.f32 %v9419, %v9566
      %v9681 = vadd.f32 %v9420, %v9571
      %v9682 = vadd.f32 %v9421, %v9576
      %v9683 = vadd.f32 %v9422, %v9581
      %v9684 = vadd.f32 %v9423, %v9586
      %v9685 = vadd.f32 %v9424, %v9591
      %v9686 = vadd.f32 %v9425, %v9596
      %v9687 = vadd.f32 %v9426, %v9601
      %v9688 = vadd.f32 %v9427, %v9606
      %v9689 = vadd.f32 %v9428, %v9611
      %v9690 = vadd.f32 %v9429, %v9616
      %v9691 = vadd.f32 %v9430, %v9621
      %v9692 = vadd.f32 %v9431, %v9626
      %v9693 = vadd.f32 %v9432, %v9631
      %v9694 = vadd.f32 %v9433, %v9636
      %v9695 = vadd.f32 %v9434, %v9641
      %v9696 = vadd.f32 %v9435, %v9646
      %v9697 = vadd.f32 %v9436, %v9651
      %v9698 = vadd.f32 %v9437, %v9656
      %v9699 = vadd.f32 %v9438, %v9661
      %v9700 = vadd.f32 %v9439, %v9666
      %v9701 = vrot.slane %v7822, 1
      %v9702 = vsel %vm1808, %v8634, %v9701
      %v9703 = vsel %vm1808, %v9701, %v1809
      %v9706 = vsel %vm1775, %v8577, 0.0
      %v9707 = vsel %vm1776, %v8579, 0.0
      %v9708 = vsel %vm1777, %v8581, 0.0
      %v9709 = vsel %vm1778, %v8583, 0.0
      %v9710 = vsel %vm1779, %v8585, 0.0
      %v9711 = vsel %vm1780, %v8587, 0.0
      %v9712 = vsel %vm1781, %v8589, 0.0
      %v9713 = vsel %vm1782, %v8591, 0.0
      %v9714 = vsel %vm1783, %v8593, 0.0
      %v9715 = vsel %vm1784, %v8595, 0.0
      %v9716 = vsel %vm1785, %v8597, 0.0
      %v9717 = vsel %vm1786, %v8599, 0.0
      %v9718 = vsel %vm1787, %v8601, 0.0
      %v9719 = vsel %vm1788, %v8603, 0.0
      %v9720 = vsel %vm1789, %v8605, 0.0
      %v9721 = vsel %vm1790, %v8607, 0.0
      %v9722 = vsel %vm1791, %v8609, 0.0
      %v9723 = vsel %vm1792, %v8611, 0.0
      %v9724 = vsel %vm1793, %v8613, 0.0
      %v9725 = vsel %vm1794, %v8615, 0.0
      %v9726 = vsel %vm1795, %v8617, 0.0
      %v9727 = vsel %vm1796, %v8619, 0.0
      %v9728 = vsel %vm1797, %v8621, 0.0
      %v9729 = vsel %vm1798, %v8623, 0.0
      %v9730 = vsel %vm1799, %v8625, 0.0
      %v9731 = vsel %vm1800, %v8627, 0.0
      %v9732 = vsel %vm1801, %v8629, 0.0
      %v9733 = vsel %vm1802, %v8631, 0.0
      %v9734 = vsel %vm1803, %v8633, 0.0
      %v9735 = vsel %vm1804, %v8635, 0.0
      %v9736 = vsel %vm1805, %v9702, 0.0
      %v9737 = vsel %vm1806, %v9703, 0.0
      %v9739 = vsel %vm4603, %v9706, 0
      %v9742 = vsel %vm4603, %v9707, 0
      %v9745 = vsel %vm4603, %v9708, 0
      %v9748 = vsel %vm4603, %v9709, 0
      %v9751 = vsel %vm4603, %v9710, 0
      %v9754 = vsel %vm4603, %v9711, 0
      %v9757 = vsel %vm4603, %v9712, 0
      %v9760 = vsel %vm4603, %v9713, 0
      %v9763 = vsel %vm4603, %v9714, 0
      %v9766 = vsel %vm4603, %v9715, 0
      %v9769 = vsel %vm4603, %v9716, 0
      %v9772 = vsel %vm4603, %v9717, 0
      %v9775 = vsel %vm4603, %v9718, 0
      %v9778 = vsel %vm4603, %v9719, 0
      %v9781 = vsel %vm4603, %v9720, 0
      %v9784 = vsel %vm4603, %v9721, 0
      %v9787 = vsel %vm4603, %v9722, 0
      %v9790 = vsel %vm4603, %v9723, 0
      %v9793 = vsel %vm4603, %v9724, 0
      %v9796 = vsel %vm4603, %v9725, 0
      %v9799 = vsel %vm4603, %v9726, 0
      %v9802 = vsel %vm4603, %v9727, 0
      %v9805 = vsel %vm4603, %v9728, 0
      %v9808 = vsel %vm4603, %v9729, 0
      %v9811 = vsel %vm4603, %v9730, 0
      %v9814 = vsel %vm4603, %v9731, 0
      %v9817 = vsel %vm4603, %v9732, 0
      %v9820 = vsel %vm4603, %v9733, 0
      %v9823 = vsel %vm4603, %v9734, 0
      %v9826 = vsel %vm4603, %v9735, 0
      %v9829 = vsel %vm4603, %v9736, 0
      %v9832 = vsel %vm4603, %v9737, 0
      %9834 = vmatprep.subr.mxu0 0.0
      %9835 = vmatpush1.msra.mxu0 %v896
      %9836 = vmatprep.subr.mxu0 0.0
      %9837 = vmatpush1.msra.mxu0 0.0
      %9838 = vmatprep.subr.mxu0 0.0
      %9839 = vmatpush1.msra.mxu0 0.0
      %9840 = vmatprep.subr.mxu0 0.0
      %9841 = vmatpush1.msra.mxu0 0.0
      %9842 = vmatprep.subr.mxu0 0.0
      %9843 = vmatpush1.msra.mxu0 0.0
      %9844 = vmatprep.subr.mxu0 0.0
      %9845 = vmatpush1.msra.mxu0 0.0
      %9846 = vmatprep.subr.mxu0 0.0
      %9847 = vmatpush1.msra.mxu0 0.0
      %9848 = vmatprep.subr.mxu0 0.0
      %9849 = vmatpush1.msra.mxu0 0.0
      %9850 = vmatprep.subr.mxu0 0.0
      %9851 = vmatpush1.msra.mxu0 0.0
      %9852 = vmatprep.subr.mxu0 0.0
      %9853 = vmatpush1.msra.mxu0 0.0
      %9854 = vmatprep.subr.mxu0 0.0
      %9855 = vmatpush1.msra.mxu0 0.0
      %9856 = vmatprep.subr.mxu0 0.0
      %9857 = vmatpush1.msra.mxu0 0.0
      %9858 = vmatprep.subr.mxu0 0.0
      %9859 = vmatpush1.msra.mxu0 0.0
      %9860 = vmatprep.subr.mxu0 0.0
      %9861 = vmatpush1.msra.mxu0 0.0
      %9862 = vmatprep.subr.mxu0 0.0
      %9863 = vmatpush1.msra.mxu0 0.0
      %9864 = vmatprep.subr.mxu0 0.0
      %9865 = vmatpush1.msra.mxu0 0.0
      %9866 = vmatprep.subr.mxu0 0.0
      %9867 = vmatpush1.msra.mxu0 0.0
      %9868 = vmatprep.subr.mxu0 0.0
      %9869 = vmatpush1.msra.mxu0 0.0
      %9870 = vmatprep.subr.mxu0 0.0
      %9871 = vmatpush1.msra.mxu0 0.0
      %9872 = vmatprep.subr.mxu0 0.0
      %9873 = vmatpush1.msra.mxu0 0.0
      %9874 = vmatprep.subr.mxu0 0.0
      %9875 = vmatpush1.msra.mxu0 0.0
      %9876 = vmatprep.subr.mxu0 0.0
      %9877 = vmatpush1.msra.mxu0 0.0
      %9878 = vmatprep.subr.mxu0 0.0
      %9879 = vmatpush1.msra.mxu0 0.0
      %9880 = vmatprep.subr.mxu0 0.0
      %9881 = vmatpush1.msra.mxu0 0.0
      %9882 = vmatprep.subr.mxu0 0.0
      %9883 = vmatpush1.msra.mxu0 0.0
      %9884 = vmatprep.subr.mxu0 0.0
      %9885 = vmatpush1.msra.mxu0 0.0
      %9886 = vmatprep.subr.mxu0 0.0
      %9887 = vmatpush1.msra.mxu0 0.0
      %9888 = vmatprep.subr.mxu0 0.0
      %9889 = vmatpush1.msra.mxu0 0.0
      %9890 = vmatprep.subr.mxu0 0.0
      %9891 = vmatpush1.msra.mxu0 0.0
      %9892 = vmatprep.subr.mxu0 0.0
      %9893 = vmatpush1.msra.mxu0 0.0
      %9894 = vmatprep.subr.mxu0 0.0
      %9895 = vmatpush1.msra.mxu0 0.0
      %9896 = vmatprep.subr.mxu0 0.0
      %9897 = vmatpush1.msra.mxu0 0.0
      %9898 = vmatprep.mubr.f32.mxu0 0.0
      %9899 = vmatmul.mubr.f32.gmra.mrb[0].mxu0 %v9739
      %v9900 = vpop.f32.mrb[0].mxu0
      %v9901 = vadd.f32 0.0, %v9900
      %v9902 = vpop.f32.mrb[0].mxu0
      %9903 = vmatprep.mubr.f32.mxu0 0.0
      %9904 = vmatmul.mubr.f32.gmra.mrb[0].mxu0 %v9742
      %v9905 = vpop.f32.mrb[0].mxu0
      %v9906 = vadd.f32 0.0, %v9905
      %v9907 = vpop.f32.mrb[0].mxu0
      %9908 = vmatprep.mubr.f32.mxu0 0.0
      %9909 = vmatmul.mubr.f32.gmra.mrb[0].mxu0 %v9745
      %v9910 = vpop.f32.mrb[0].mxu0
      %v9911 = vadd.f32 0.0, %v9910
      %v9912 = vpop.f32.mrb[0].mxu0
      %9913 = vmatprep.mubr.f32.mxu0 0.0
      %9914 = vmatmul.mubr.f32.gmra.mrb[0].mxu0 %v9748
      %v9915 = vpop.f32.mrb[0].mxu0
      %v9916 = vadd.f32 0.0, %v9915
      %v9917 = vpop.f32.mrb[0].mxu0
      %9918 = vmatprep.mubr.f32.mxu0 0.0
      %9919 = vmatmul.mubr.f32.gmra.mrb[0].mxu0 %v9751
      %v9920 = vpop.f32.mrb[0].mxu0
      %v9921 = vadd.f32 0.0, %v9920
      %v9922 = vpop.f32.mrb[0].mxu0
      %9923 = vmatprep.mubr.f32.mxu0 0.0
      %9924 = vmatmul.mubr.f32.gmra.mrb[0].mxu0 %v9754
      %v9925 = vpop.f32.mrb[0].mxu0
      %v9926 = vadd.f32 0.0, %v9925
      %v9927 = vpop.f32.mrb[0].mxu0
      %9928 = vmatprep.mubr.f32.mxu0 0.0
      %9929 = vmatmul.mubr.f32.gmra.mrb[0].mxu0 %v9757
      %v9930 = vpop.f32.mrb[0].mxu0
      %v9931 = vadd.f32 0.0, %v9930
      %v9932 = vpop.f32.mrb[0].mxu0
      %9933 = vmatprep.mubr.f32.mxu0 0.0
      %9934 = vmatmul.mubr.f32.gmra.mrb[0].mxu0 %v9760
      %v9935 = vpop.f32.mrb[0].mxu0
      %v9936 = vadd.f32 0.0, %v9935
      %v9937 = vpop.f32.mrb[0].mxu0
      %9938 = vmatprep.mubr.f32.mxu0 0.0
      %9939 = vmatmul.mubr.f32.gmra.mrb[0].mxu0 %v9763
      %v9940 = vpop.f32.mrb[0].mxu0
      %v9941 = vadd.f32 0.0, %v9940
      %v9942 = vpop.f32.mrb[0].mxu0
      %9943 = vmatprep.mubr.f32.mxu0 0.0
      %9944 = vmatmul.mubr.f32.gmra.mrb[0].mxu0 %v9766
      %v9945 = vpop.f32.mrb[0].mxu0
      %v9946 = vadd.f32 0.0, %v9945
      %v9947 = vpop.f32.mrb[0].mxu0
      %9948 = vmatprep.mubr.f32.mxu0 0.0
      %9949 = vmatmul.mubr.f32.gmra.mrb[0].mxu0 %v9769
      %v9950 = vpop.f32.mrb[0].mxu0
      %v9951 = vadd.f32 0.0, %v9950
      %v9952 = vpop.f32.mrb[0].mxu0
      %9953 = vmatprep.mubr.f32.mxu0 0.0
      %9954 = vmatmul.mubr.f32.gmra.mrb[0].mxu0 %v9772
      %v9955 = vpop.f32.mrb[0].mxu0
      %v9956 = vadd.f32 0.0, %v9955
      %v9957 = vpop.f32.mrb[0].mxu0
      %9958 = vmatprep.mubr.f32.mxu0 0.0
      %9959 = vmatmul.mubr.f32.gmra.mrb[0].mxu0 %v9775
      %v9960 = vpop.f32.mrb[0].mxu0
      %v9961 = vadd.f32 0.0, %v9960
      %v9962 = vpop.f32.mrb[0].mxu0
      %9963 = vmatprep.mubr.f32.mxu0 0.0
      %9964 = vmatmul.mubr.f32.gmra.mrb[0].mxu0 %v9778
      %v9965 = vpop.f32.mrb[0].mxu0
      %v9966 = vadd.f32 0.0, %v9965
      %v9967 = vpop.f32.mrb[0].mxu0
      %9968 = vmatprep.mubr.f32.mxu0 0.0
      %9969 = vmatmul.mubr.f32.gmra.mrb[0].mxu0 %v9781
      %v9970 = vpop.f32.mrb[0].mxu0
      %v9971 = vadd.f32 0.0, %v9970
      %v9972 = vpop.f32.mrb[0].mxu0
      %9973 = vmatprep.mubr.f32.mxu0 0.0
      %9974 = vmatmul.mubr.f32.gmra.mrb[0].mxu0 %v9784
      %v9975 = vpop.f32.mrb[0].mxu0
      %v9976 = vadd.f32 0.0, %v9975
      %v9977 = vpop.f32.mrb[0].mxu0
      %9978 = vmatprep.mubr.f32.mxu0 0.0
      %9979 = vmatmul.mubr.f32.gmra.mrb[0].mxu0 %v9787
      %v9980 = vpop.f32.mrb[0].mxu0
      %v9981 = vadd.f32 0.0, %v9980
      %v9982 = vpop.f32.mrb[0].mxu0
      %9983 = vmatprep.mubr.f32.mxu0 0.0
      %9984 = vmatmul.mubr.f32.gmra.mrb[0].mxu0 %v9790
      %v9985 = vpop.f32.mrb[0].mxu0
      %v9986 = vadd.f32 0.0, %v9985
      %v9987 = vpop.f32.mrb[0].mxu0
      %9988 = vmatprep.mubr.f32.mxu0 0.0
      %9989 = vmatmul.mubr.f32.gmra.mrb[0].mxu0 %v9793
      %v9990 = vpop.f32.mrb[0].mxu0
      %v9991 = vadd.f32 0.0, %v9990
      %v9992 = vpop.f32.mrb[0].mxu0
      %9993 = vmatprep.mubr.f32.mxu0 0.0
      %9994 = vmatmul.mubr.f32.gmra.mrb[0].mxu0 %v9796
      %v9995 = vpop.f32.mrb[0].mxu0
      %v9996 = vadd.f32 0.0, %v9995
      %v9997 = vpop.f32.mrb[0].mxu0
      %9998 = vmatprep.mubr.f32.mxu0 0.0
      %9999 = vmatmul.mubr.f32.gmra.mrb[0].mxu0 %v9799
      %v10000 = vpop.f32.mrb[0].mxu0
      %v10001 = vadd.f32 0.0, %v10000
      %v10002 = vpop.f32.mrb[0].mxu0
      %10003 = vmatprep.mubr.f32.mxu0 0.0
      %10004 = vmatmul.mubr.f32.gmra.mrb[0].mxu0 %v9802
      %v10005 = vpop.f32.mrb[0].mxu0
      %v10006 = vadd.f32 0.0, %v10005
      %v10007 = vpop.f32.mrb[0].mxu0
      %10008 = vmatprep.mubr.f32.mxu0 0.0
      %10009 = vmatmul.mubr.f32.gmra.mrb[0].mxu0 %v9805
      %v10010 = vpop.f32.mrb[0].mxu0
      %v10011 = vadd.f32 0.0, %v10010
      %v10012 = vpop.f32.mrb[0].mxu0
      %10013 = vmatprep.mubr.f32.mxu0 0.0
      %10014 = vmatmul.mubr.f32.gmra.mrb[0].mxu0 %v9808
      %v10015 = vpop.f32.mrb[0].mxu0
      %v10016 = vadd.f32 0.0, %v10015
      %v10017 = vpop.f32.mrb[0].mxu0
      %10018 = vmatprep.mubr.f32.mxu0 0.0
      %10019 = vmatmul.mubr.f32.gmra.mrb[0].mxu0 %v9811
      %v10020 = vpop.f32.mrb[0].mxu0
      %v10021 = vadd.f32 0.0, %v10020
      %v10022 = vpop.f32.mrb[0].mxu0
      %10023 = vmatprep.mubr.f32.mxu0 0.0
      %10024 = vmatmul.mubr.f32.gmra.mrb[0].mxu0 %v9814
      %v10025 = vpop.f32.mrb[0].mxu0
      %v10026 = vadd.f32 0.0, %v10025
      %v10027 = vpop.f32.mrb[0].mxu0
      %10028 = vmatprep.mubr.f32.mxu0 0.0
      %10029 = vmatmul.mubr.f32.gmra.mrb[0].mxu0 %v9817
      %v10030 = vpop.f32.mrb[0].mxu0
      %v10031 = vadd.f32 0.0, %v10030
      %v10032 = vpop.f32.mrb[0].mxu0
      %10033 = vmatprep.mubr.f32.mxu0 0.0
      %10034 = vmatmul.mubr.f32.gmra.mrb[0].mxu0 %v9820
      %v10035 = vpop.f32.mrb[0].mxu0
      %v10036 = vadd.f32 0.0, %v10035
      %v10037 = vpop.f32.mrb[0].mxu0
      %10038 = vmatprep.mubr.f32.mxu0 0.0
      %10039 = vmatmul.mubr.f32.gmra.mrb[0].mxu0 %v9823
      %v10040 = vpop.f32.mrb[0].mxu0
      %v10041 = vadd.f32 0.0, %v10040
      %v10042 = vpop.f32.mrb[0].mxu0
      %10043 = vmatprep.mubr.f32.mxu0 0.0
      %10044 = vmatmul.mubr.f32.gmra.mrb[0].mxu0 %v9826
      %v10045 = vpop.f32.mrb[0].mxu0
      %v10046 = vadd.f32 0.0, %v10045
      %v10047 = vpop.f32.mrb[0].mxu0
      %10048 = vmatprep.mubr.f32.mxu0 0.0
      %10049 = vmatmul.mubr.f32.gmra.mrb[0].mxu0 %v9829
      %v10050 = vpop.f32.mrb[0].mxu0
      %v10051 = vadd.f32 0.0, %v10050
      %v10052 = vpop.f32.mrb[0].mxu0
      %10053 = vmatprep.mubr.f32.mxu0 0.0
      %10054 = vmatmul.mubr.f32.gmra.mrb[0].mxu0 %v9832
      %v10055 = vpop.f32.mrb[0].mxu0
      %v10056 = vadd.f32 0.0, %v10055
      %v10057 = vpop.f32.mrb[0].mxu0
      %10058 = vdwg.mxu0
      %v10059 = vadd.f32 %v9669, %v9901
      %v10060 = vadd.f32 %v9670, %v9906
      %v10061 = vadd.f32 %v9671, %v9911
      %v10062 = vadd.f32 %v9672, %v9916
      %v10063 = vadd.f32 %v9673, %v9921
      %v10064 = vadd.f32 %v9674, %v9926
      %v10065 = vadd.f32 %v9675, %v9931
      %v10066 = vadd.f32 %v9676, %v9936
      %v10067 = vadd.f32 %v9677, %v9941
      %v10068 = vadd.f32 %v9678, %v9946
      %v10069 = vadd.f32 %v9679, %v9951
      %v10070 = vadd.f32 %v9680, %v9956
      %v10071 = vadd.f32 %v9681, %v9961
      %v10072 = vadd.f32 %v9682, %v9966
      %v10073 = vadd.f32 %v9683, %v9971
      %v10074 = vadd.f32 %v9684, %v9976
      %v10075 = vadd.f32 %v9685, %v9981
      %v10076 = vadd.f32 %v9686, %v9986
      %v10077 = vadd.f32 %v9687, %v9991
      %v10078 = vadd.f32 %v9688, %v9996
      %v10079 = vadd.f32 %v9689, %v10001
      %v10080 = vadd.f32 %v9690, %v10006
      %v10081 = vadd.f32 %v9691, %v10011
      %v10082 = vadd.f32 %v9692, %v10016
      %v10083 = vadd.f32 %v9693, %v10021
      %v10084 = vadd.f32 %v9694, %v10026
      %v10085 = vadd.f32 %v9695, %v10031
      %v10086 = vadd.f32 %v9696, %v10036
      %v10087 = vadd.f32 %v9697, %v10041
      %v10088 = vadd.f32 %v9698, %v10046
      %v10089 = vadd.f32 %v9699, %v10051
      %v10090 = vadd.f32 %v9700, %v10056
      %v10091 = vsel %vm1001, %v9051, %v1002
      %v10093 = vsel %vm938, %v7858, 0.0
      %v10094 = vsel %vm939, %v7860, 0.0
      %v10095 = vsel %vm940, %v7862, 0.0
      %v10096 = vsel %vm941, %v7864, 0.0
      %v10097 = vsel %vm942, %v7866, 0.0
      %v10098 = vsel %vm943, %v7868, 0.0
      %v10099 = vsel %vm944, %v7870, 0.0
      %v10100 = vsel %vm945, %v7872, 0.0
      %v10101 = vsel %vm946, %v7874, 0.0
      %v10102 = vsel %vm947, %v7876, 0.0
      %v10103 = vsel %vm948, %v7878, 0.0
      %v10104 = vsel %vm949, %v7880, 0.0
      %v10105 = vsel %vm950, %v7882, 0.0
      %v10106 = vsel %vm951, %v7884, 0.0
      %v10107 = vsel %vm952, %v7886, 0.0
      %v10108 = vsel %vm953, %v7888, 0.0
      %v10109 = vsel %vm954, %v7890, 0.0
      %v10110 = vsel %vm955, %v7892, 0.0
      %v10111 = vsel %vm956, %v7894, 0.0
      %v10112 = vsel %vm957, %v7896, 0.0
      %v10113 = vsel %vm958, %v7898, 0.0
      %v10114 = vsel %vm959, %v7900, 0.0
      %v10115 = vsel %vm960, %v7902, 0.0
      %v10116 = vsel %vm961, %v7904, 0.0
      %v10117 = vsel %vm962, %v7906, 0.0
      %v10118 = vsel %vm963, %v7908, 0.0
      %v10119 = vsel %vm964, %v7910, 0.0
      %v10120 = vsel %vm965, %v7912, 0.0
      %v10121 = vsel %vm966, %v9050, 0.0
      %v10122 = vsel %vm967, %v9052, 0.0
      %v10123 = vsel %vm968, %v10091, 0.0
      %v10125 = vsel %vm4603, %v10093, 0
      %v10128 = vsel %vm4603, %v10094, 0
      %v10131 = vsel %vm4603, %v10095, 0
      %v10134 = vsel %vm4603, %v10096, 0
      %v10137 = vsel %vm4603, %v10097, 0
      %v10140 = vsel %vm4603, %v10098, 0
      %v10143 = vsel %vm4603, %v10099, 0
      %v10146 = vsel %vm4603, %v10100, 0
      %v10149 = vsel %vm4603, %v10101, 0
      %v10152 = vsel %vm4603, %v10102, 0
      %v10155 = vsel %vm4603, %v10103, 0
      %v10158 = vsel %vm4603, %v10104, 0
      %v10161 = vsel %vm4603, %v10105, 0
      %v10164 = vsel %vm4603, %v10106, 0
      %v10167 = vsel %vm4603, %v10107, 0
      %v10170 = vsel %vm4603, %v10108, 0
      %v10173 = vsel %vm4603, %v10109, 0
      %v10176 = vsel %vm4603, %v10110, 0
      %v10179 = vsel %vm4603, %v10111, 0
      %v10182 = vsel %vm4603, %v10112, 0
      %v10185 = vsel %vm4603, %v10113, 0
      %v10188 = vsel %vm4603, %v10114, 0
      %v10191 = vsel %vm4603, %v10115, 0
      %v10194 = vsel %vm4603, %v10116, 0
      %v10197 = vsel %vm4603, %v10117, 0
      %v10200 = vsel %vm4603, %v10118, 0
      %v10203 = vsel %vm4603, %v10119, 0
      %v10206 = vsel %vm4603, %v10120, 0
      %v10209 = vsel %vm4603, %v10121, 0
      %v10212 = vsel %vm4603, %v10122, 0
      %v10215 = vsel %vm4603, %v10123, 0
      %10217 = vmatprep.subr.mxu0 0.0
      %10218 = vmatpush1.msra.mxu0 %v897
      %10219 = vmatprep.subr.mxu0 0.0
      %10220 = vmatpush1.msra.mxu0 0.0
      %10221 = vmatprep.subr.mxu0 0.0
      %10222 = vmatpush1.msra.mxu0 0.0
      %10223 = vmatprep.subr.mxu0 0.0
      %10224 = vmatpush1.msra.mxu0 0.0
      %10225 = vmatprep.subr.mxu0 0.0
      %10226 = vmatpush1.msra.mxu0 0.0
      %10227 = vmatprep.subr.mxu0 0.0
      %10228 = vmatpush1.msra.mxu0 0.0
      %10229 = vmatprep.subr.mxu0 0.0
      %10230 = vmatpush1.msra.mxu0 0.0
      %10231 = vmatprep.subr.mxu0 0.0
      %10232 = vmatpush1.msra.mxu0 0.0
      %10233 = vmatprep.subr.mxu0 0.0
      %10234 = vmatpush1.msra.mxu0 0.0
      %10235 = vmatprep.subr.mxu0 0.0
      %10236 = vmatpush1.msra.mxu0 0.0
      %10237 = vmatprep.subr.mxu0 0.0
      %10238 = vmatpush1.msra.mxu0 0.0
      %10239 = vmatprep.subr.mxu0 0.0
      %10240 = vmatpush1.msra.mxu0 0.0
      %10241 = vmatprep.subr.mxu0 0.0
      %10242 = vmatpush1.msra.mxu0 0.0
      %10243 = vmatprep.subr.mxu0 0.0
      %10244 = vmatpush1.msra.mxu0 0.0
      %10245 = vmatprep.subr.mxu0 0.0
      %10246 = vmatpush1.msra.mxu0 0.0
      %10247 = vmatprep.subr.mxu0 0.0
      %10248 = vmatpush1.msra.mxu0 0.0
      %10249 = vmatprep.subr.mxu0 0.0
      %10250 = vmatpush1.msra.mxu0 0.0
      %10251 = vmatprep.subr.mxu0 0.0
      %10252 = vmatpush1.msra.mxu0 0.0
      %10253 = vmatprep.subr.mxu0 0.0
      %10254 = vmatpush1.msra.mxu0 0.0
      %10255 = vmatprep.subr.mxu0 0.0
      %10256 = vmatpush1.msra.mxu0 0.0
      %10257 = vmatprep.subr.mxu0 0.0
      %10258 = vmatpush1.msra.mxu0 0.0
      %10259 = vmatprep.subr.mxu0 0.0
      %10260 = vmatpush1.msra.mxu0 0.0
      %10261 = vmatprep.subr.mxu0 0.0
      %10262 = vmatpush1.msra.mxu0 0.0
      %10263 = vmatprep.subr.mxu0 0.0
      %10264 = vmatpush1.msra.mxu0 0.0
      %10265 = vmatprep.subr.mxu0 0.0
      %10266 = vmatpush1.msra.mxu0 0.0
      %10267 = vmatprep.subr.mxu0 0.0
      %10268 = vmatpush1.msra.mxu0 0.0
      %10269 = vmatprep.subr.mxu0 0.0
      %10270 = vmatpush1.msra.mxu0 0.0
      %10271 = vmatprep.subr.mxu0 0.0
      %10272 = vmatpush1.msra.mxu0 0.0
      %10273 = vmatprep.subr.mxu0 0.0
      %10274 = vmatpush1.msra.mxu0 0.0
      %10275 = vmatprep.subr.mxu0 0.0
      %10276 = vmatpush1.msra.mxu0 0.0
      %10277 = vmatprep.subr.mxu0 0.0
      %10278 = vmatpush1.msra.mxu0 0.0
      %10279 = vmatprep.subr.mxu0 0.0
      %10280 = vmatpush1.msra.mxu0 0.0
      %10281 = vmatprep.mubr.f32.mxu0 0.0
      %10282 = vmatmul.mubr.f32.gmra.mrb[0].mxu0 %v10125
      %v10283 = vpop.f32.mrb[0].mxu0
      %v10284 = vadd.f32 0.0, %v10283
      %v10285 = vpop.f32.mrb[0].mxu0
      %10286 = vmatprep.mubr.f32.mxu0 0.0
      %10287 = vmatmul.mubr.f32.gmra.mrb[0].mxu0 %v10128
      %v10288 = vpop.f32.mrb[0].mxu0
      %v10289 = vadd.f32 0.0, %v10288
      %v10290 = vpop.f32.mrb[0].mxu0
      %10291 = vmatprep.mubr.f32.mxu0 0.0
      %10292 = vmatmul.mubr.f32.gmra.mrb[0].mxu0 %v10131
      %v10293 = vpop.f32.mrb[0].mxu0
      %v10294 = vadd.f32 0.0, %v10293
      %v10295 = vpop.f32.mrb[0].mxu0
      %10296 = vmatprep.mubr.f32.mxu0 0.0
      %10297 = vmatmul.mubr.f32.gmra.mrb[0].mxu0 %v10134
      %v10298 = vpop.f32.mrb[0].mxu0
      %v10299 = vadd.f32 0.0, %v10298
      %v10300 = vpop.f32.mrb[0].mxu0
      %10301 = vmatprep.mubr.f32.mxu0 0.0
      %10302 = vmatmul.mubr.f32.gmra.mrb[0].mxu0 %v10137
      %v10303 = vpop.f32.mrb[0].mxu0
      %v10304 = vadd.f32 0.0, %v10303
      %v10305 = vpop.f32.mrb[0].mxu0
      %10306 = vmatprep.mubr.f32.mxu0 0.0
      %10307 = vmatmul.mubr.f32.gmra.mrb[0].mxu0 %v10140
      %v10308 = vpop.f32.mrb[0].mxu0
      %v10309 = vadd.f32 0.0, %v10308
      %v10310 = vpop.f32.mrb[0].mxu0
      %10311 = vmatprep.mubr.f32.mxu0 0.0
      %10312 = vmatmul.mubr.f32.gmra.mrb[0].mxu0 %v10143
      %v10313 = vpop.f32.mrb[0].mxu0
      %v10314 = vadd.f32 0.0, %v10313
      %v10315 = vpop.f32.mrb[0].mxu0
      %10316 = vmatprep.mubr.f32.mxu0 0.0
      %10317 = vmatmul.mubr.f32.gmra.mrb[0].mxu0 %v10146
      %v10318 = vpop.f32.mrb[0].mxu0
      %v10319 = vadd.f32 0.0, %v10318
      %v10320 = vpop.f32.mrb[0].mxu0
      %10321 = vmatprep.mubr.f32.mxu0 0.0
      %10322 = vmatmul.mubr.f32.gmra.mrb[0].mxu0 %v10149
      %v10323 = vpop.f32.mrb[0].mxu0
      %v10324 = vadd.f32 0.0, %v10323
      %v10325 = vpop.f32.mrb[0].mxu0
      %10326 = vmatprep.mubr.f32.mxu0 0.0
      %10327 = vmatmul.mubr.f32.gmra.mrb[0].mxu0 %v10152
      %v10328 = vpop.f32.mrb[0].mxu0
      %v10329 = vadd.f32 0.0, %v10328
      %v10330 = vpop.f32.mrb[0].mxu0
      %10331 = vmatprep.mubr.f32.mxu0 0.0
      %10332 = vmatmul.mubr.f32.gmra.mrb[0].mxu0 %v10155
      %v10333 = vpop.f32.mrb[0].mxu0
      %v10334 = vadd.f32 0.0, %v10333
      %v10335 = vpop.f32.mrb[0].mxu0
      %10336 = vmatprep.mubr.f32.mxu0 0.0
      %10337 = vmatmul.mubr.f32.gmra.mrb[0].mxu0 %v10158
      %v10338 = vpop.f32.mrb[0].mxu0
      %v10339 = vadd.f32 0.0, %v10338
      %v10340 = vpop.f32.mrb[0].mxu0
      %10341 = vmatprep.mubr.f32.mxu0 0.0
      %10342 = vmatmul.mubr.f32.gmra.mrb[0].mxu0 %v10161
      %v10343 = vpop.f32.mrb[0].mxu0
      %v10344 = vadd.f32 0.0, %v10343
      %v10345 = vpop.f32.mrb[0].mxu0
      %10346 = vmatprep.mubr.f32.mxu0 0.0
      %10347 = vmatmul.mubr.f32.gmra.mrb[0].mxu0 %v10164
      %v10348 = vpop.f32.mrb[0].mxu0
      %v10349 = vadd.f32 0.0, %v10348
      %v10350 = vpop.f32.mrb[0].mxu0
      %10351 = vmatprep.mubr.f32.mxu0 0.0
      %10352 = vmatmul.mubr.f32.gmra.mrb[0].mxu0 %v10167
      %v10353 = vpop.f32.mrb[0].mxu0
      %v10354 = vadd.f32 0.0, %v10353
      %v10355 = vpop.f32.mrb[0].mxu0
      %10356 = vmatprep.mubr.f32.mxu0 0.0
      %10357 = vmatmul.mubr.f32.gmra.mrb[0].mxu0 %v10170
      %v10358 = vpop.f32.mrb[0].mxu0
      %v10359 = vadd.f32 0.0, %v10358
      %v10360 = vpop.f32.mrb[0].mxu0
      %10361 = vmatprep.mubr.f32.mxu0 0.0
      %10362 = vmatmul.mubr.f32.gmra.mrb[0].mxu0 %v10173
      %v10363 = vpop.f32.mrb[0].mxu0
      %v10364 = vadd.f32 0.0, %v10363
      %v10365 = vpop.f32.mrb[0].mxu0
      %10366 = vmatprep.mubr.f32.mxu0 0.0
      %10367 = vmatmul.mubr.f32.gmra.mrb[0].mxu0 %v10176
      %v10368 = vpop.f32.mrb[0].mxu0
      %v10369 = vadd.f32 0.0, %v10368
      %v10370 = vpop.f32.mrb[0].mxu0
      %10371 = vmatprep.mubr.f32.mxu0 0.0
      %10372 = vmatmul.mubr.f32.gmra.mrb[0].mxu0 %v10179
      %v10373 = vpop.f32.mrb[0].mxu0
      %v10374 = vadd.f32 0.0, %v10373
      %v10375 = vpop.f32.mrb[0].mxu0
      %10376 = vmatprep.mubr.f32.mxu0 0.0
      %10377 = vmatmul.mubr.f32.gmra.mrb[0].mxu0 %v10182
      %v10378 = vpop.f32.mrb[0].mxu0
      %v10379 = vadd.f32 0.0, %v10378
      %v10380 = vpop.f32.mrb[0].mxu0
      %10381 = vmatprep.mubr.f32.mxu0 0.0
      %10382 = vmatmul.mubr.f32.gmra.mrb[0].mxu0 %v10185
      %v10383 = vpop.f32.mrb[0].mxu0
      %v10384 = vadd.f32 0.0, %v10383
      %v10385 = vpop.f32.mrb[0].mxu0
      %10386 = vmatprep.mubr.f32.mxu0 0.0
      %10387 = vmatmul.mubr.f32.gmra.mrb[0].mxu0 %v10188
      %v10388 = vpop.f32.mrb[0].mxu0
      %v10389 = vadd.f32 0.0, %v10388
      %v10390 = vpop.f32.mrb[0].mxu0
      %10391 = vmatprep.mubr.f32.mxu0 0.0
      %10392 = vmatmul.mubr.f32.gmra.mrb[0].mxu0 %v10191
      %v10393 = vpop.f32.mrb[0].mxu0
      %v10394 = vadd.f32 0.0, %v10393
      %v10395 = vpop.f32.mrb[0].mxu0
      %10396 = vmatprep.mubr.f32.mxu0 0.0
      %10397 = vmatmul.mubr.f32.gmra.mrb[0].mxu0 %v10194
      %v10398 = vpop.f32.mrb[0].mxu0
      %v10399 = vadd.f32 0.0, %v10398
      %v10400 = vpop.f32.mrb[0].mxu0
      %10401 = vmatprep.mubr.f32.mxu0 0.0
      %10402 = vmatmul.mubr.f32.gmra.mrb[0].mxu0 %v10197
      %v10403 = vpop.f32.mrb[0].mxu0
      %v10404 = vadd.f32 0.0, %v10403
      %v10405 = vpop.f32.mrb[0].mxu0
      %10406 = vmatprep.mubr.f32.mxu0 0.0
      %10407 = vmatmul.mubr.f32.gmra.mrb[0].mxu0 %v10200
      %v10408 = vpop.f32.mrb[0].mxu0
      %v10409 = vadd.f32 0.0, %v10408
      %v10410 = vpop.f32.mrb[0].mxu0
      %10411 = vmatprep.mubr.f32.mxu0 0.0
      %10412 = vmatmul.mubr.f32.gmra.mrb[0].mxu0 %v10203
      %v10413 = vpop.f32.mrb[0].mxu0
      %v10414 = vadd.f32 0.0, %v10413
      %v10415 = vpop.f32.mrb[0].mxu0
      %10416 = vmatprep.mubr.f32.mxu0 0.0
      %10417 = vmatmul.mubr.f32.gmra.mrb[0].mxu0 %v10206
      %v10418 = vpop.f32.mrb[0].mxu0
      %v10419 = vadd.f32 0.0, %v10418
      %v10420 = vpop.f32.mrb[0].mxu0
      %10421 = vmatprep.mubr.f32.mxu0 0.0
      %10422 = vmatmul.mubr.f32.gmra.mrb[0].mxu0 %v10209
      %v10423 = vpop.f32.mrb[0].mxu0
      %v10424 = vadd.f32 0.0, %v10423
      %v10425 = vpop.f32.mrb[0].mxu0
      %10426 = vmatprep.mubr.f32.mxu0 0.0
      %10427 = vmatmul.mubr.f32.gmra.mrb[0].mxu0 %v10212
      %v10428 = vpop.f32.mrb[0].mxu0
      %v10429 = vadd.f32 0.0, %v10428
      %v10430 = vpop.f32.mrb[0].mxu0
      %10431 = vmatprep.mubr.f32.mxu0 0.0
      %10432 = vmatmul.mubr.f32.gmra.mrb[0].mxu0 %v10215
      %v10433 = vpop.f32.mrb[0].mxu0
      %v10434 = vadd.f32 0.0, %v10433
      %v10435 = vpop.f32.mrb[0].mxu0
      %10436 = vmatprep.mubr.f32.mxu0 0.0
      %10437 = vmatmul.mubr.f32.gmra.mrb[0].mxu0 %v6856
      %v10438 = vpop.f32.mrb[0].mxu0
      %v10439 = vadd.f32 0.0, %v10438
      %v10440 = vpop.f32.mrb[0].mxu0
      %10441 = vdwg.mxu0
      %v10442 = vadd.f32 %v10059, %v10284
      %v10443 = vadd.f32 %v10060, %v10289
      %v10444 = vadd.f32 %v10061, %v10294
      %v10445 = vadd.f32 %v10062, %v10299
      %v10446 = vadd.f32 %v10063, %v10304
      %v10447 = vadd.f32 %v10064, %v10309
      %v10448 = vadd.f32 %v10065, %v10314
      %v10449 = vadd.f32 %v10066, %v10319
      %v10450 = vadd.f32 %v10067, %v10324
      %v10451 = vadd.f32 %v10068, %v10329
      %v10452 = vadd.f32 %v10069, %v10334
      %v10453 = vadd.f32 %v10070, %v10339
      %v10454 = vadd.f32 %v10071, %v10344
      %v10455 = vadd.f32 %v10072, %v10349
      %v10456 = vadd.f32 %v10073, %v10354
      %v10457 = vadd.f32 %v10074, %v10359
      %v10458 = vadd.f32 %v10075, %v10364
      %v10459 = vadd.f32 %v10076, %v10369
      %v10460 = vadd.f32 %v10077, %v10374
      %v10461 = vadd.f32 %v10078, %v10379
      %v10462 = vadd.f32 %v10079, %v10384
      %v10463 = vadd.f32 %v10080, %v10389
      %v10464 = vadd.f32 %v10081, %v10394
      %v10465 = vadd.f32 %v10082, %v10399
      %v10466 = vadd.f32 %v10083, %v10404
      %v10467 = vadd.f32 %v10084, %v10409
      %v10468 = vadd.f32 %v10085, %v10414
      %v10469 = vadd.f32 %v10086, %v10419
      %v10470 = vadd.f32 %v10087, %v10424
      %v10471 = vadd.f32 %v10088, %v10429
      %v10472 = vadd.f32 %v10089, %v10434
      %v10473 = vadd.f32 %v10090, %v10439
      %10474 = vmatprep.subr.mxu0 0.0
      %10475 = vmatpush1.msra.mxu0 %v898
      %10476 = vmatprep.subr.mxu0 0.0
      %10477 = vmatpush1.msra.mxu0 0.0
      %10478 = vmatprep.subr.mxu0 0.0
      %10479 = vmatpush1.msra.mxu0 0.0
      %10480 = vmatprep.subr.mxu0 0.0
      %10481 = vmatpush1.msra.mxu0 0.0
      %10482 = vmatprep.subr.mxu0 0.0
      %10483 = vmatpush1.msra.mxu0 0.0
      %10484 = vmatprep.subr.mxu0 0.0
      %10485 = vmatpush1.msra.mxu0 0.0
      %10486 = vmatprep.subr.mxu0 0.0
      %10487 = vmatpush1.msra.mxu0 0.0
      %10488 = vmatprep.subr.mxu0 0.0
      %10489 = vmatpush1.msra.mxu0 0.0
      %10490 = vmatprep.subr.mxu0 0.0
      %10491 = vmatpush1.msra.mxu0 0.0
      %10492 = vmatprep.subr.mxu0 0.0
      %10493 = vmatpush1.msra.mxu0 0.0
      %10494 = vmatprep.subr.mxu0 0.0
      %10495 = vmatpush1.msra.mxu0 0.0
      %10496 = vmatprep.subr.mxu0 0.0
      %10497 = vmatpush1.msra.mxu0 0.0
      %10498 = vmatprep.subr.mxu0 0.0
      %10499 = vmatpush1.msra.mxu0 0.0
      %10500 = vmatprep.subr.mxu0 0.0
      %10501 = vmatpush1.msra.mxu0 0.0
      %10502 = vmatprep.subr.mxu0 0.0
      %10503 = vmatpush1.msra.mxu0 0.0
      %10504 = vmatprep.subr.mxu0 0.0
      %10505 = vmatpush1.msra.mxu0 0.0
      %10506 = vmatprep.subr.mxu0 0.0
      %10507 = vmatpush1.msra.mxu0 0.0
      %10508 = vmatprep.subr.mxu0 0.0
      %10509 = vmatpush1.msra.mxu0 0.0
      %10510 = vmatprep.subr.mxu0 0.0
      %10511 = vmatpush1.msra.mxu0 0.0
      %10512 = vmatprep.subr.mxu0 0.0
      %10513 = vmatpush1.msra.mxu0 0.0
      %10514 = vmatprep.subr.mxu0 0.0
      %10515 = vmatpush1.msra.mxu0 0.0
      %10516 = vmatprep.subr.mxu0 0.0
      %10517 = vmatpush1.msra.mxu0 0.0
      %10518 = vmatprep.subr.mxu0 0.0
      %10519 = vmatpush1.msra.mxu0 0.0
      %10520 = vmatprep.subr.mxu0 0.0
      %10521 = vmatpush1.msra.mxu0 0.0
      %10522 = vmatprep.subr.mxu0 0.0
      %10523 = vmatpush1.msra.mxu0 0.0
      %10524 = vmatprep.subr.mxu0 0.0
      %10525 = vmatpush1.msra.mxu0 0.0
      %10526 = vmatprep.subr.mxu0 0.0
      %10527 = vmatpush1.msra.mxu0 0.0
      %10528 = vmatprep.subr.mxu0 0.0
      %10529 = vmatpush1.msra.mxu0 0.0
      %10530 = vmatprep.subr.mxu0 0.0
      %10531 = vmatpush1.msra.mxu0 0.0
      %10532 = vmatprep.subr.mxu0 0.0
      %10533 = vmatpush1.msra.mxu0 0.0
      %10534 = vmatprep.subr.mxu0 0.0
      %10535 = vmatpush1.msra.mxu0 0.0
      %10536 = vmatprep.subr.mxu0 0.0
      %10537 = vmatpush1.msra.mxu0 0.0
      %10538 = vmatprep.mubr.f32.mxu0 0.0
      %10539 = vmatmul.mubr.f32.gmra.mrb[0].mxu0 %v7977
      %v10540 = vpop.f32.mrb[0].mxu0
      %v10541 = vadd.f32 0.0, %v10540
      %v10542 = vpop.f32.mrb[0].mxu0
      %10543 = vmatprep.mubr.f32.mxu0 0.0
      %10544 = vmatmul.mubr.f32.gmra.mrb[0].mxu0 %v7979
      %v10545 = vpop.f32.mrb[0].mxu0
      %v10546 = vadd.f32 0.0, %v10545
      %v10547 = vpop.f32.mrb[0].mxu0
      %10548 = vmatprep.mubr.f32.mxu0 0.0
      %10549 = vmatmul.mubr.f32.gmra.mrb[0].mxu0 %v7981
      %v10550 = vpop.f32.mrb[0].mxu0
      %v10551 = vadd.f32 0.0, %v10550
      %v10552 = vpop.f32.mrb[0].mxu0
      %10553 = vmatprep.mubr.f32.mxu0 0.0
      %10554 = vmatmul.mubr.f32.gmra.mrb[0].mxu0 %v7983
      %v10555 = vpop.f32.mrb[0].mxu0
      %v10556 = vadd.f32 0.0, %v10555
      %v10557 = vpop.f32.mrb[0].mxu0
      %10558 = vmatprep.mubr.f32.mxu0 0.0
      %10559 = vmatmul.mubr.f32.gmra.mrb[0].mxu0 %v7985
      %v10560 = vpop.f32.mrb[0].mxu0
      %v10561 = vadd.f32 0.0, %v10560
      %v10562 = vpop.f32.mrb[0].mxu0
      %10563 = vmatprep.mubr.f32.mxu0 0.0
      %10564 = vmatmul.mubr.f32.gmra.mrb[0].mxu0 %v7987
      %v10565 = vpop.f32.mrb[0].mxu0
      %v10566 = vadd.f32 0.0, %v10565
      %v10567 = vpop.f32.mrb[0].mxu0
      %10568 = vmatprep.mubr.f32.mxu0 0.0
      %10569 = vmatmul.mubr.f32.gmra.mrb[0].mxu0 %v7989
      %v10570 = vpop.f32.mrb[0].mxu0
      %v10571 = vadd.f32 0.0, %v10570
      %v10572 = vpop.f32.mrb[0].mxu0
      %10573 = vmatprep.mubr.f32.mxu0 0.0
      %10574 = vmatmul.mubr.f32.gmra.mrb[0].mxu0 %v7991
      %v10575 = vpop.f32.mrb[0].mxu0
      %v10576 = vadd.f32 0.0, %v10575
      %v10577 = vpop.f32.mrb[0].mxu0
      %10578 = vmatprep.mubr.f32.mxu0 0.0
      %10579 = vmatmul.mubr.f32.gmra.mrb[0].mxu0 %v7993
      %v10580 = vpop.f32.mrb[0].mxu0
      %v10581 = vadd.f32 0.0, %v10580
      %v10582 = vpop.f32.mrb[0].mxu0
      %10583 = vmatprep.mubr.f32.mxu0 0.0
      %10584 = vmatmul.mubr.f32.gmra.mrb[0].mxu0 %v7995
      %v10585 = vpop.f32.mrb[0].mxu0
      %v10586 = vadd.f32 0.0, %v10585
      %v10587 = vpop.f32.mrb[0].mxu0
      %10588 = vmatprep.mubr.f32.mxu0 0.0
      %10589 = vmatmul.mubr.f32.gmra.mrb[0].mxu0 %v7997
      %v10590 = vpop.f32.mrb[0].mxu0
      %v10591 = vadd.f32 0.0, %v10590
      %v10592 = vpop.f32.mrb[0].mxu0
      %10593 = vmatprep.mubr.f32.mxu0 0.0
      %10594 = vmatmul.mubr.f32.gmra.mrb[0].mxu0 %v7999
      %v10595 = vpop.f32.mrb[0].mxu0
      %v10596 = vadd.f32 0.0, %v10595
      %v10597 = vpop.f32.mrb[0].mxu0
      %10598 = vmatprep.mubr.f32.mxu0 0.0
      %10599 = vmatmul.mubr.f32.gmra.mrb[0].mxu0 %v8001
      %v10600 = vpop.f32.mrb[0].mxu0
      %v10601 = vadd.f32 0.0, %v10600
      %v10602 = vpop.f32.mrb[0].mxu0
      %10603 = vmatprep.mubr.f32.mxu0 0.0
      %10604 = vmatmul.mubr.f32.gmra.mrb[0].mxu0 %v8003
      %v10605 = vpop.f32.mrb[0].mxu0
      %v10606 = vadd.f32 0.0, %v10605
      %v10607 = vpop.f32.mrb[0].mxu0
      %10608 = vmatprep.mubr.f32.mxu0 0.0
      %10609 = vmatmul.mubr.f32.gmra.mrb[0].mxu0 %v8005
      %v10610 = vpop.f32.mrb[0].mxu0
      %v10611 = vadd.f32 0.0, %v10610
      %v10612 = vpop.f32.mrb[0].mxu0
      %10613 = vmatprep.mubr.f32.mxu0 0.0
      %10614 = vmatmul.mubr.f32.gmra.mrb[0].mxu0 %v8007
      %v10615 = vpop.f32.mrb[0].mxu0
      %v10616 = vadd.f32 0.0, %v10615
      %v10617 = vpop.f32.mrb[0].mxu0
      %10618 = vmatprep.mubr.f32.mxu0 0.0
      %10619 = vmatmul.mubr.f32.gmra.mrb[0].mxu0 %v8009
      %v10620 = vpop.f32.mrb[0].mxu0
      %v10621 = vadd.f32 0.0, %v10620
      %v10622 = vpop.f32.mrb[0].mxu0
      %10623 = vmatprep.mubr.f32.mxu0 0.0
      %10624 = vmatmul.mubr.f32.gmra.mrb[0].mxu0 %v8011
      %v10625 = vpop.f32.mrb[0].mxu0
      %v10626 = vadd.f32 0.0, %v10625
      %v10627 = vpop.f32.mrb[0].mxu0
      %10628 = vmatprep.mubr.f32.mxu0 0.0
      %10629 = vmatmul.mubr.f32.gmra.mrb[0].mxu0 %v8013
      %v10630 = vpop.f32.mrb[0].mxu0
      %v10631 = vadd.f32 0.0, %v10630
      %v10632 = vpop.f32.mrb[0].mxu0
      %10633 = vmatprep.mubr.f32.mxu0 0.0
      %10634 = vmatmul.mubr.f32.gmra.mrb[0].mxu0 %v8015
      %v10635 = vpop.f32.mrb[0].mxu0
      %v10636 = vadd.f32 0.0, %v10635
      %v10637 = vpop.f32.mrb[0].mxu0
      %10638 = vmatprep.mubr.f32.mxu0 0.0
      %10639 = vmatmul.mubr.f32.gmra.mrb[0].mxu0 %v8017
      %v10640 = vpop.f32.mrb[0].mxu0
      %v10641 = vadd.f32 0.0, %v10640
      %v10642 = vpop.f32.mrb[0].mxu0
      %10643 = vmatprep.mubr.f32.mxu0 0.0
      %10644 = vmatmul.mubr.f32.gmra.mrb[0].mxu0 %v8019
      %v10645 = vpop.f32.mrb[0].mxu0
      %v10646 = vadd.f32 0.0, %v10645
      %v10647 = vpop.f32.mrb[0].mxu0
      %10648 = vmatprep.mubr.f32.mxu0 0.0
      %10649 = vmatmul.mubr.f32.gmra.mrb[0].mxu0 %v8021
      %v10650 = vpop.f32.mrb[0].mxu0
      %v10651 = vadd.f32 0.0, %v10650
      %v10652 = vpop.f32.mrb[0].mxu0
      %10653 = vmatprep.mubr.f32.mxu0 0.0
      %10654 = vmatmul.mubr.f32.gmra.mrb[0].mxu0 %v8023
      %v10655 = vpop.f32.mrb[0].mxu0
      %v10656 = vadd.f32 0.0, %v10655
      %v10657 = vpop.f32.mrb[0].mxu0
      %10658 = vmatprep.mubr.f32.mxu0 0.0
      %10659 = vmatmul.mubr.f32.gmra.mrb[0].mxu0 %v8025
      %v10660 = vpop.f32.mrb[0].mxu0
      %v10661 = vadd.f32 0.0, %v10660
      %v10662 = vpop.f32.mrb[0].mxu0
      %10663 = vmatprep.mubr.f32.mxu0 0.0
      %10664 = vmatmul.mubr.f32.gmra.mrb[0].mxu0 %v8027
      %v10665 = vpop.f32.mrb[0].mxu0
      %v10666 = vadd.f32 0.0, %v10665
      %v10667 = vpop.f32.mrb[0].mxu0
      %10668 = vmatprep.mubr.f32.mxu0 0.0
      %10669 = vmatmul.mubr.f32.gmra.mrb[0].mxu0 %v8029
      %v10670 = vpop.f32.mrb[0].mxu0
      %v10671 = vadd.f32 0.0, %v10670
      %v10672 = vpop.f32.mrb[0].mxu0
      %10673 = vmatprep.mubr.f32.mxu0 0.0
      %10674 = vmatmul.mubr.f32.gmra.mrb[0].mxu0 %v8031
      %v10675 = vpop.f32.mrb[0].mxu0
      %v10676 = vadd.f32 0.0, %v10675
      %v10677 = vpop.f32.mrb[0].mxu0
      %10678 = vmatprep.mubr.f32.mxu0 0.0
      %10679 = vmatmul.mubr.f32.gmra.mrb[0].mxu0 %v9440
      %v10680 = vpop.f32.mrb[0].mxu0
      %v10681 = vadd.f32 0.0, %v10680
      %v10682 = vpop.f32.mrb[0].mxu0
      %10683 = vmatprep.mubr.f32.mxu0 0.0
      %10684 = vmatmul.mubr.f32.gmra.mrb[0].mxu0 %v9442
      %v10685 = vpop.f32.mrb[0].mxu0
      %v10686 = vadd.f32 0.0, %v10685
      %v10687 = vpop.f32.mrb[0].mxu0
      %10688 = vmatprep.mubr.f32.mxu0 0.0
      %10689 = vmatmul.mubr.f32.gmra.mrb[0].mxu0 %v4604
      %v10690 = vpop.f32.mrb[0].mxu0
      %v10691 = vadd.f32 0.0, %v10690
      %v10692 = vpop.f32.mrb[0].mxu0
      %10693 = vmatprep.mubr.f32.mxu0 0.0
      %10694 = vmatmul.mubr.f32.gmra.mrb[0].mxu0 %v4604
      %v10695 = vpop.f32.mrb[0].mxu0
      %v10696 = vadd.f32 0.0, %v10695
      %v10697 = vpop.f32.mrb[0].mxu0
      %10698 = vdwg.mxu0
      %v10699 = vadd.f32 %v10442, %v10541
      %v10700 = vadd.f32 %v10443, %v10546
      %v10701 = vadd.f32 %v10444, %v10551
      %v10702 = vadd.f32 %v10445, %v10556
      %v10703 = vadd.f32 %v10446, %v10561
      %v10704 = vadd.f32 %v10447, %v10566
      %v10705 = vadd.f32 %v10448, %v10571
      %v10706 = vadd.f32 %v10449, %v10576
      %v10707 = vadd.f32 %v10450, %v10581
      %v10708 = vadd.f32 %v10451, %v10586
      %v10709 = vadd.f32 %v10452, %v10591
      %v10710 = vadd.f32 %v10453, %v10596
      %v10711 = vadd.f32 %v10454, %v10601
      %v10712 = vadd.f32 %v10455, %v10606
      %v10713 = vadd.f32 %v10456, %v10611
      %v10714 = vadd.f32 %v10457, %v10616
      %v10715 = vadd.f32 %v10458, %v10621
      %v10716 = vadd.f32 %v10459, %v10626
      %v10717 = vadd.f32 %v10460, %v10631
      %v10718 = vadd.f32 %v10461, %v10636
      %v10719 = vadd.f32 %v10462, %v10641
      %v10720 = vadd.f32 %v10463, %v10646
      %v10721 = vadd.f32 %v10464, %v10651
      %v10722 = vadd.f32 %v10465, %v10656
      %v10723 = vadd.f32 %v10466, %v10661
      %v10724 = vadd.f32 %v10467, %v10666
      %v10725 = vadd.f32 %v10468, %v10671
      %v10726 = vadd.f32 %v10469, %v10676
      %v10727 = vadd.f32 %v10470, %v10681
      %v10728 = vadd.f32 %v10471, %v10686
      %v10729 = vadd.f32 %v10472, %v10691
      %v10730 = vadd.f32 %v10473, %v10696
      %v10731 = vsel %vm1775, %v8581, 0.0
      %v10732 = vsel %vm1776, %v8583, 0.0
      %v10733 = vsel %vm1777, %v8585, 0.0
      %v10734 = vsel %vm1778, %v8587, 0.0
      %v10735 = vsel %vm1779, %v8589, 0.0
      %v10736 = vsel %vm1780, %v8591, 0.0
      %v10737 = vsel %vm1781, %v8593, 0.0
      %v10738 = vsel %vm1782, %v8595, 0.0
      %v10739 = vsel %vm1783, %v8597, 0.0
      %v10740 = vsel %vm1784, %v8599, 0.0
      %v10741 = vsel %vm1785, %v8601, 0.0
      %v10742 = vsel %vm1786, %v8603, 0.0
      %v10743 = vsel %vm1787, %v8605, 0.0
      %v10744 = vsel %vm1788, %v8607, 0.0
      %v10745 = vsel %vm1789, %v8609, 0.0
      %v10746 = vsel %vm1790, %v8611, 0.0
      %v10747 = vsel %vm1791, %v8613, 0.0
      %v10748 = vsel %vm1792, %v8615, 0.0
      %v10749 = vsel %vm1793, %v8617, 0.0
      %v10750 = vsel %vm1794, %v8619, 0.0
      %v10751 = vsel %vm1795, %v8621, 0.0
      %v10752 = vsel %vm1796, %v8623, 0.0
      %v10753 = vsel %vm1797, %v8625, 0.0
      %v10754 = vsel %vm1798, %v8627, 0.0
      %v10755 = vsel %vm1799, %v8629, 0.0
      %v10756 = vsel %vm1800, %v8631, 0.0
      %v10757 = vsel %vm1801, %v8633, 0.0
      %v10758 = vsel %vm1802, %v8635, 0.0
      %v10759 = vsel %vm1803, %v9702, 0.0
      %v10760 = vsel %vm1804, %v9703, 0.0
      %v10762 = vsel %vm4603, %v10731, 0
      %v10765 = vsel %vm4603, %v10732, 0
      %v10768 = vsel %vm4603, %v10733, 0
      %v10771 = vsel %vm4603, %v10734, 0
      %v10774 = vsel %vm4603, %v10735, 0
      %v10777 = vsel %vm4603, %v10736, 0
      %v10780 = vsel %vm4603, %v10737, 0
      %v10783 = vsel %vm4603, %v10738, 0
      %v10786 = vsel %vm4603, %v10739, 0
      %v10789 = vsel %vm4603, %v10740, 0
      %v10792 = vsel %vm4603, %v10741, 0
      %v10795 = vsel %vm4603, %v10742, 0
      %v10798 = vsel %vm4603, %v10743, 0
      %v10801 = vsel %vm4603, %v10744, 0
      %v10804 = vsel %vm4603, %v10745, 0
      %v10807 = vsel %vm4603, %v10746, 0
      %v10810 = vsel %vm4603, %v10747, 0
      %v10813 = vsel %vm4603, %v10748, 0
      %v10816 = vsel %vm4603, %v10749, 0
      %v10819 = vsel %vm4603, %v10750, 0
      %v10822 = vsel %vm4603, %v10751, 0
      %v10825 = vsel %vm4603, %v10752, 0
      %v10828 = vsel %vm4603, %v10753, 0
      %v10831 = vsel %vm4603, %v10754, 0
      %v10834 = vsel %vm4603, %v10755, 0
      %v10837 = vsel %vm4603, %v10756, 0
      %v10840 = vsel %vm4603, %v10757, 0
      %v10843 = vsel %vm4603, %v10758, 0
      %v10846 = vsel %vm4603, %v10759, 0
      %v10849 = vsel %vm4603, %v10760, 0
      %10851 = vmatprep.subr.mxu0 0.0
      %10852 = vmatpush1.msra.mxu0 %v899
      %10853 = vmatprep.subr.mxu0 0.0
      %10854 = vmatpush1.msra.mxu0 0.0
      %10855 = vmatprep.subr.mxu0 0.0
      %10856 = vmatpush1.msra.mxu0 0.0
      %10857 = vmatprep.subr.mxu0 0.0
      %10858 = vmatpush1.msra.mxu0 0.0
      %10859 = vmatprep.subr.mxu0 0.0
      %10860 = vmatpush1.msra.mxu0 0.0
      %10861 = vmatprep.subr.mxu0 0.0
      %10862 = vmatpush1.msra.mxu0 0.0
      %10863 = vmatprep.subr.mxu0 0.0
      %10864 = vmatpush1.msra.mxu0 0.0
      %10865 = vmatprep.subr.mxu0 0.0
      %10866 = vmatpush1.msra.mxu0 0.0
      %10867 = vmatprep.subr.mxu0 0.0
      %10868 = vmatpush1.msra.mxu0 0.0
      %10869 = vmatprep.subr.mxu0 0.0
      %10870 = vmatpush1.msra.mxu0 0.0
      %10871 = vmatprep.subr.mxu0 0.0
      %10872 = vmatpush1.msra.mxu0 0.0
      %10873 = vmatprep.subr.mxu0 0.0
      %10874 = vmatpush1.msra.mxu0 0.0
      %10875 = vmatprep.subr.mxu0 0.0
      %10876 = vmatpush1.msra.mxu0 0.0
      %10877 = vmatprep.subr.mxu0 0.0
      %10878 = vmatpush1.msra.mxu0 0.0
      %10879 = vmatprep.subr.mxu0 0.0
      %10880 = vmatpush1.msra.mxu0 0.0
      %10881 = vmatprep.subr.mxu0 0.0
      %10882 = vmatpush1.msra.mxu0 0.0
      %10883 = vmatprep.subr.mxu0 0.0
      %10884 = vmatpush1.msra.mxu0 0.0
      %10885 = vmatprep.subr.mxu0 0.0
      %10886 = vmatpush1.msra.mxu0 0.0
      %10887 = vmatprep.subr.mxu0 0.0
      %10888 = vmatpush1.msra.mxu0 0.0
      %10889 = vmatprep.subr.mxu0 0.0
      %10890 = vmatpush1.msra.mxu0 0.0
      %10891 = vmatprep.subr.mxu0 0.0
      %10892 = vmatpush1.msra.mxu0 0.0
      %10893 = vmatprep.subr.mxu0 0.0
      %10894 = vmatpush1.msra.mxu0 0.0
      %10895 = vmatprep.subr.mxu0 0.0
      %10896 = vmatpush1.msra.mxu0 0.0
      %10897 = vmatprep.subr.mxu0 0.0
      %10898 = vmatpush1.msra.mxu0 0.0
      %10899 = vmatprep.subr.mxu0 0.0
      %10900 = vmatpush1.msra.mxu0 0.0
      %10901 = vmatprep.subr.mxu0 0.0
      %10902 = vmatpush1.msra.mxu0 0.0
      %10903 = vmatprep.subr.mxu0 0.0
      %10904 = vmatpush1.msra.mxu0 0.0
      %10905 = vmatprep.subr.mxu0 0.0
      %10906 = vmatpush1.msra.mxu0 0.0
      %10907 = vmatprep.subr.mxu0 0.0
      %10908 = vmatpush1.msra.mxu0 0.0
      %10909 = vmatprep.subr.mxu0 0.0
      %10910 = vmatpush1.msra.mxu0 0.0
      %10911 = vmatprep.subr.mxu0 0.0
      %10912 = vmatpush1.msra.mxu0 0.0
      %10913 = vmatprep.subr.mxu0 0.0
      %10914 = vmatpush1.msra.mxu0 0.0
      %10915 = vmatprep.mubr.f32.mxu0 0.0
      %10916 = vmatmul.mubr.f32.gmra.mrb[0].mxu0 %v10762
      %v10917 = vpop.f32.mrb[0].mxu0
      %v10918 = vadd.f32 0.0, %v10917
      %v10919 = vpop.f32.mrb[0].mxu0
      %10920 = vmatprep.mubr.f32.mxu0 0.0
      %10921 = vmatmul.mubr.f32.gmra.mrb[0].mxu0 %v10765
      %v10922 = vpop.f32.mrb[0].mxu0
      %v10923 = vadd.f32 0.0, %v10922
      %v10924 = vpop.f32.mrb[0].mxu0
      %10925 = vmatprep.mubr.f32.mxu0 0.0
      %10926 = vmatmul.mubr.f32.gmra.mrb[0].mxu0 %v10768
      %v10927 = vpop.f32.mrb[0].mxu0
      %v10928 = vadd.f32 0.0, %v10927
      %v10929 = vpop.f32.mrb[0].mxu0
      %10930 = vmatprep.mubr.f32.mxu0 0.0
      %10931 = vmatmul.mubr.f32.gmra.mrb[0].mxu0 %v10771
      %v10932 = vpop.f32.mrb[0].mxu0
      %v10933 = vadd.f32 0.0, %v10932
      %v10934 = vpop.f32.mrb[0].mxu0
      %10935 = vmatprep.mubr.f32.mxu0 0.0
      %10936 = vmatmul.mubr.f32.gmra.mrb[0].mxu0 %v10774
      %v10937 = vpop.f32.mrb[0].mxu0
      %v10938 = vadd.f32 0.0, %v10937
      %v10939 = vpop.f32.mrb[0].mxu0
      %10940 = vmatprep.mubr.f32.mxu0 0.0
      %10941 = vmatmul.mubr.f32.gmra.mrb[0].mxu0 %v10777
      %v10942 = vpop.f32.mrb[0].mxu0
      %v10943 = vadd.f32 0.0, %v10942
      %v10944 = vpop.f32.mrb[0].mxu0
      %10945 = vmatprep.mubr.f32.mxu0 0.0
      %10946 = vmatmul.mubr.f32.gmra.mrb[0].mxu0 %v10780
      %v10947 = vpop.f32.mrb[0].mxu0
      %v10948 = vadd.f32 0.0, %v10947
      %v10949 = vpop.f32.mrb[0].mxu0
      %10950 = vmatprep.mubr.f32.mxu0 0.0
      %10951 = vmatmul.mubr.f32.gmra.mrb[0].mxu0 %v10783
      %v10952 = vpop.f32.mrb[0].mxu0
      %v10953 = vadd.f32 0.0, %v10952
      %v10954 = vpop.f32.mrb[0].mxu0
      %10955 = vmatprep.mubr.f32.mxu0 0.0
      %10956 = vmatmul.mubr.f32.gmra.mrb[0].mxu0 %v10786
      %v10957 = vpop.f32.mrb[0].mxu0
      %v10958 = vadd.f32 0.0, %v10957
      %v10959 = vpop.f32.mrb[0].mxu0
      %10960 = vmatprep.mubr.f32.mxu0 0.0
      %10961 = vmatmul.mubr.f32.gmra.mrb[0].mxu0 %v10789
      %v10962 = vpop.f32.mrb[0].mxu0
      %v10963 = vadd.f32 0.0, %v10962
      %v10964 = vpop.f32.mrb[0].mxu0
      %10965 = vmatprep.mubr.f32.mxu0 0.0
      %10966 = vmatmul.mubr.f32.gmra.mrb[0].mxu0 %v10792
      %v10967 = vpop.f32.mrb[0].mxu0
      %v10968 = vadd.f32 0.0, %v10967
      %v10969 = vpop.f32.mrb[0].mxu0
      %10970 = vmatprep.mubr.f32.mxu0 0.0
      %10971 = vmatmul.mubr.f32.gmra.mrb[0].mxu0 %v10795
      %v10972 = vpop.f32.mrb[0].mxu0
      %v10973 = vadd.f32 0.0, %v10972
      %v10974 = vpop.f32.mrb[0].mxu0
      %10975 = vmatprep.mubr.f32.mxu0 0.0
      %10976 = vmatmul.mubr.f32.gmra.mrb[0].mxu0 %v10798
      %v10977 = vpop.f32.mrb[0].mxu0
      %v10978 = vadd.f32 0.0, %v10977
      %v10979 = vpop.f32.mrb[0].mxu0
      %10980 = vmatprep.mubr.f32.mxu0 0.0
      %10981 = vmatmul.mubr.f32.gmra.mrb[0].mxu0 %v10801
      %v10982 = vpop.f32.mrb[0].mxu0
      %v10983 = vadd.f32 0.0, %v10982
      %v10984 = vpop.f32.mrb[0].mxu0
      %10985 = vmatprep.mubr.f32.mxu0 0.0
      %10986 = vmatmul.mubr.f32.gmra.mrb[0].mxu0 %v10804
      %v10987 = vpop.f32.mrb[0].mxu0
      %v10988 = vadd.f32 0.0, %v10987
      %v10989 = vpop.f32.mrb[0].mxu0
      %10990 = vmatprep.mubr.f32.mxu0 0.0
      %10991 = vmatmul.mubr.f32.gmra.mrb[0].mxu0 %v10807
      %v10992 = vpop.f32.mrb[0].mxu0
      %v10993 = vadd.f32 0.0, %v10992
      %v10994 = vpop.f32.mrb[0].mxu0
      %10995 = vmatprep.mubr.f32.mxu0 0.0
      %10996 = vmatmul.mubr.f32.gmra.mrb[0].mxu0 %v10810
      %v10997 = vpop.f32.mrb[0].mxu0
      %v10998 = vadd.f32 0.0, %v10997
      %v10999 = vpop.f32.mrb[0].mxu0
      %11000 = vmatprep.mubr.f32.mxu0 0.0
      %11001 = vmatmul.mubr.f32.gmra.mrb[0].mxu0 %v10813
      %v11002 = vpop.f32.mrb[0].mxu0
      %v11003 = vadd.f32 0.0, %v11002
      %v11004 = vpop.f32.mrb[0].mxu0
      %11005 = vmatprep.mubr.f32.mxu0 0.0
      %11006 = vmatmul.mubr.f32.gmra.mrb[0].mxu0 %v10816
      %v11007 = vpop.f32.mrb[0].mxu0
      %v11008 = vadd.f32 0.0, %v11007
      %v11009 = vpop.f32.mrb[0].mxu0
      %11010 = vmatprep.mubr.f32.mxu0 0.0
      %11011 = vmatmul.mubr.f32.gmra.mrb[0].mxu0 %v10819
      %v11012 = vpop.f32.mrb[0].mxu0
      %v11013 = vadd.f32 0.0, %v11012
      %v11014 = vpop.f32.mrb[0].mxu0
      %11015 = vmatprep.mubr.f32.mxu0 0.0
      %11016 = vmatmul.mubr.f32.gmra.mrb[0].mxu0 %v10822
      %v11017 = vpop.f32.mrb[0].mxu0
      %v11018 = vadd.f32 0.0, %v11017
      %v11019 = vpop.f32.mrb[0].mxu0
      %11020 = vmatprep.mubr.f32.mxu0 0.0
      %11021 = vmatmul.mubr.f32.gmra.mrb[0].mxu0 %v10825
      %v11022 = vpop.f32.mrb[0].mxu0
      %v11023 = vadd.f32 0.0, %v11022
      %v11024 = vpop.f32.mrb[0].mxu0
      %11025 = vmatprep.mubr.f32.mxu0 0.0
      %11026 = vmatmul.mubr.f32.gmra.mrb[0].mxu0 %v10828
      %v11027 = vpop.f32.mrb[0].mxu0
      %v11028 = vadd.f32 0.0, %v11027
      %v11029 = vpop.f32.mrb[0].mxu0
      %11030 = vmatprep.mubr.f32.mxu0 0.0
      %11031 = vmatmul.mubr.f32.gmra.mrb[0].mxu0 %v10831
      %v11032 = vpop.f32.mrb[0].mxu0
      %v11033 = vadd.f32 0.0, %v11032
      %v11034 = vpop.f32.mrb[0].mxu0
      %11035 = vmatprep.mubr.f32.mxu0 0.0
      %11036 = vmatmul.mubr.f32.gmra.mrb[0].mxu0 %v10834
      %v11037 = vpop.f32.mrb[0].mxu0
      %v11038 = vadd.f32 0.0, %v11037
      %v11039 = vpop.f32.mrb[0].mxu0
      %11040 = vmatprep.mubr.f32.mxu0 0.0
      %11041 = vmatmul.mubr.f32.gmra.mrb[0].mxu0 %v10837
      %v11042 = vpop.f32.mrb[0].mxu0
      %v11043 = vadd.f32 0.0, %v11042
      %v11044 = vpop.f32.mrb[0].mxu0
      %11045 = vmatprep.mubr.f32.mxu0 0.0
      %11046 = vmatmul.mubr.f32.gmra.mrb[0].mxu0 %v10840
      %v11047 = vpop.f32.mrb[0].mxu0
      %v11048 = vadd.f32 0.0, %v11047
      %v11049 = vpop.f32.mrb[0].mxu0
      %11050 = vmatprep.mubr.f32.mxu0 0.0
      %11051 = vmatmul.mubr.f32.gmra.mrb[0].mxu0 %v10843
      %v11052 = vpop.f32.mrb[0].mxu0
      %v11053 = vadd.f32 0.0, %v11052
      %v11054 = vpop.f32.mrb[0].mxu0
      %11055 = vmatprep.mubr.f32.mxu0 0.0
      %11056 = vmatmul.mubr.f32.gmra.mrb[0].mxu0 %v10846
      %v11057 = vpop.f32.mrb[0].mxu0
      %v11058 = vadd.f32 0.0, %v11057
      %v11059 = vpop.f32.mrb[0].mxu0
      %11060 = vmatprep.mubr.f32.mxu0 0.0
      %11061 = vmatmul.mubr.f32.gmra.mrb[0].mxu0 %v10849
      %v11062 = vpop.f32.mrb[0].mxu0
      %v11063 = vadd.f32 0.0, %v11062
      %v11064 = vpop.f32.mrb[0].mxu0
      %11065 = vmatprep.mubr.f32.mxu0 0.0
      %11066 = vmatmul.mubr.f32.gmra.mrb[0].mxu0 %v7492
      %v11067 = vpop.f32.mrb[0].mxu0
      %v11068 = vadd.f32 0.0, %v11067
      %v11069 = vpop.f32.mrb[0].mxu0
      %11070 = vmatprep.mubr.f32.mxu0 0.0
      %11071 = vmatmul.mubr.f32.gmra.mrb[0].mxu0 %v7494
      %v11072 = vpop.f32.mrb[0].mxu0
      %v11073 = vadd.f32 0.0, %v11072
      %v11074 = vpop.f32.mrb[0].mxu0
      %11075 = vdwg.mxu0
      %v11076 = vadd.f32 %v10699, %v10918
      %v11077 = vadd.f32 %v10700, %v10923
      %v11078 = vadd.f32 %v10701, %v10928
      %v11079 = vadd.f32 %v10702, %v10933
      %v11080 = vadd.f32 %v10703, %v10938
      %v11081 = vadd.f32 %v10704, %v10943
      %v11082 = vadd.f32 %v10705, %v10948
      %v11083 = vadd.f32 %v10706, %v10953
      %v11084 = vadd.f32 %v10707, %v10958
      %v11085 = vadd.f32 %v10708, %v10963
      %v11086 = vadd.f32 %v10709, %v10968
      %v11087 = vadd.f32 %v10710, %v10973
      %v11088 = vadd.f32 %v10711, %v10978
      %v11089 = vadd.f32 %v10712, %v10983
      %v11090 = vadd.f32 %v10713, %v10988
      %v11091 = vadd.f32 %v10714, %v10993
      %v11092 = vadd.f32 %v10715, %v10998
      %v11093 = vadd.f32 %v10716, %v11003
      %v11094 = vadd.f32 %v10717, %v11008
      %v11095 = vadd.f32 %v10718, %v11013
      %v11096 = vadd.f32 %v10719, %v11018
      %v11097 = vadd.f32 %v10720, %v11023
      %v11098 = vadd.f32 %v10721, %v11028
      %v11099 = vadd.f32 %v10722, %v11033
      %v11100 = vadd.f32 %v10723, %v11038
      %v11101 = vadd.f32 %v10724, %v11043
      %v11102 = vadd.f32 %v10725, %v11048
      %v11103 = vadd.f32 %v10726, %v11053
      %v11104 = vadd.f32 %v10727, %v11058
      %v11105 = vadd.f32 %v10728, %v11063
      %v11106 = vadd.f32 %v10729, %v11068
      %v11107 = vadd.f32 %v10730, %v11073
      %v11109 = vlaneseq
      %v11110 = vshrl.u32 %v11109, 7
      %v11111 = vsub.s32 0, %v11110
      %v11112 = vrot.slane %v901, %v11111
      %v11114 = vadd.f32 %v11076, %v11112
      %v11115 = vadd.f32 %v11077, %v11112
      %v11116 = vadd.f32 %v11078, %v11112
      %v11117 = vadd.f32 %v11079, %v11112
      %v11118 = vadd.f32 %v11080, %v11112
      %v11119 = vadd.f32 %v11081, %v11112
      %v11120 = vadd.f32 %v11082, %v11112
      %v11121 = vadd.f32 %v11083, %v11112
      %v11122 = vadd.f32 %v11084, %v11112
      %v11123 = vadd.f32 %v11085, %v11112
      %v11124 = vadd.f32 %v11086, %v11112
      %v11125 = vadd.f32 %v11087, %v11112
      %v11126 = vadd.f32 %v11088, %v11112
      %v11127 = vadd.f32 %v11089, %v11112
      %v11128 = vadd.f32 %v11090, %v11112
      %v11129 = vadd.f32 %v11091, %v11112
      %v11130 = vadd.f32 %v11092, %v11112
      %v11131 = vadd.f32 %v11093, %v11112
      %v11132 = vadd.f32 %v11094, %v11112
      %v11133 = vadd.f32 %v11095, %v11112
      %v11134 = vadd.f32 %v11096, %v11112
      %v11135 = vadd.f32 %v11097, %v11112
      %v11136 = vadd.f32 %v11098, %v11112
      %v11137 = vadd.f32 %v11099, %v11112
      %v11138 = vadd.f32 %v11100, %v11112
      %v11139 = vadd.f32 %v11101, %v11112
      %v11140 = vadd.f32 %v11102, %v11112
      %v11141 = vadd.f32 %v11103, %v11112
      %v11142 = vadd.f32 %v11104, %v11112
      %v11143 = vadd.f32 %v11105, %v11112
      %v11144 = vadd.f32 %v11106, %v11112
      %v11145 = vadd.f32 %v11107, %v11112
      %v11146 = vmax.f32 %v11114, 0.0
      %v11147 = vmax.f32 %v11115, 0.0
      %v11148 = vmax.f32 %v11116, 0.0
      %v11149 = vmax.f32 %v11117, 0.0
      %v11150 = vmax.f32 %v11118, 0.0
      %v11151 = vmax.f32 %v11119, 0.0
      %v11152 = vmax.f32 %v11120, 0.0
      %v11153 = vmax.f32 %v11121, 0.0
      %v11154 = vmax.f32 %v11122, 0.0
      %v11155 = vmax.f32 %v11123, 0.0
      %v11156 = vmax.f32 %v11124, 0.0
      %v11157 = vmax.f32 %v11125, 0.0
      %v11158 = vmax.f32 %v11126, 0.0
      %v11159 = vmax.f32 %v11127, 0.0
      %v11160 = vmax.f32 %v11128, 0.0
      %v11161 = vmax.f32 %v11129, 0.0
      %v11162 = vmax.f32 %v11130, 0.0
      %v11163 = vmax.f32 %v11131, 0.0
      %v11164 = vmax.f32 %v11132, 0.0
      %v11165 = vmax.f32 %v11133, 0.0
      %v11166 = vmax.f32 %v11134, 0.0
      %v11167 = vmax.f32 %v11135, 0.0
      %v11168 = vmax.f32 %v11136, 0.0
      %v11169 = vmax.f32 %v11137, 0.0
      %v11170 = vmax.f32 %v11138, 0.0
      %v11171 = vmax.f32 %v11139, 0.0
      %v11172 = vmax.f32 %v11140, 0.0
      %v11173 = vmax.f32 %v11141, 0.0
      %v11174 = vmax.f32 %v11142, 0.0
      %v11175 = vmax.f32 %v11143, 0.0
      %v11176 = vmax.f32 %v11144, 0.0
      %v11177 = vmax.f32 %v11145, 0.0
      %v11178 = vld [vmem:[%s5] sm:$0xf]
      %11179 = vmatprep.subr.mxu0 0.0
      %11180 = vmatpush1.msra.mxu0 %v902
      %11181 = vmatprep.subr.mxu0 0.0
      %11182 = vmatpush1.msra.mxu0 0.0
      %11183 = vmatprep.subr.mxu0 0.0
      %11184 = vmatpush1.msra.mxu0 0.0
      %11185 = vmatprep.subr.mxu0 0.0
      %11186 = vmatpush1.msra.mxu0 0.0
      %11187 = vmatprep.subr.mxu0 0.0
      %11188 = vmatpush1.msra.mxu0 0.0
      %11189 = vmatprep.subr.mxu0 0.0
      %11190 = vmatpush1.msra.mxu0 0.0
      %11191 = vmatprep.subr.mxu0 0.0
      %11192 = vmatpush1.msra.mxu0 0.0
      %11193 = vmatprep.subr.mxu0 0.0
      %11194 = vmatpush1.msra.mxu0 0.0
      %11195 = vmatprep.subr.mxu0 0.0
      %11196 = vmatpush1.msra.mxu0 0.0
      %11197 = vmatprep.subr.mxu0 0.0
      %11198 = vmatpush1.msra.mxu0 0.0
      %11199 = vmatprep.subr.mxu0 0.0
      %11200 = vmatpush1.msra.mxu0 0.0
      %11201 = vmatprep.subr.mxu0 0.0
      %11202 = vmatpush1.msra.mxu0 0.0
      %11203 = vmatprep.subr.mxu0 0.0
      %11204 = vmatpush1.msra.mxu0 0.0
      %11205 = vmatprep.subr.mxu0 0.0
      %11206 = vmatpush1.msra.mxu0 0.0
      %11207 = vmatprep.subr.mxu0 0.0
      %11208 = vmatpush1.msra.mxu0 0.0
      %11209 = vmatprep.subr.mxu0 0.0
      %11210 = vmatpush1.msra.mxu0 0.0
      %11211 = vmatprep.subr.mxu0 0.0
      %11212 = vmatpush1.msra.mxu0 0.0
      %11213 = vmatprep.subr.mxu0 0.0
      %11214 = vmatpush1.msra.mxu0 0.0
      %11215 = vmatprep.subr.mxu0 0.0
      %11216 = vmatpush1.msra.mxu0 0.0
      %11217 = vmatprep.subr.mxu0 0.0
      %11218 = vmatpush1.msra.mxu0 0.0
      %11219 = vmatprep.subr.mxu0 0.0
      %11220 = vmatpush1.msra.mxu0 0.0
      %11221 = vmatprep.subr.mxu0 0.0
      %11222 = vmatpush1.msra.mxu0 0.0
      %11223 = vmatprep.subr.mxu0 0.0
      %11224 = vmatpush1.msra.mxu0 0.0
      %11225 = vmatprep.subr.mxu0 0.0
      %11226 = vmatpush1.msra.mxu0 0.0
      %11227 = vmatprep.subr.mxu0 0.0
      %11228 = vmatpush1.msra.mxu0 0.0
      %11229 = vmatprep.subr.mxu0 0.0
      %11230 = vmatpush1.msra.mxu0 0.0
      %11231 = vmatprep.subr.mxu0 0.0
      %11232 = vmatpush1.msra.mxu0 0.0
      %11233 = vmatprep.subr.mxu0 0.0
      %11234 = vmatpush1.msra.mxu0 0.0
      %11235 = vmatprep.subr.mxu0 0.0
      %11236 = vmatpush1.msra.mxu0 0.0
      %11237 = vmatprep.subr.mxu0 0.0
      %11238 = vmatpush1.msra.mxu0 0.0
      %11239 = vmatprep.subr.mxu0 0.0
      %11240 = vmatpush1.msra.mxu0 0.0
      %11241 = vmatprep.subr.mxu0 0.0
      %11242 = vmatpush1.msra.mxu0 0.0
      %11243 = vmatprep.mubr.f32.mxu0 0.0
      %11244 = vmatmul.mubr.f32.gmra.mrb[0].mxu0 %v4606
      %v11245 = vpop.f32.mrb[0].mxu0
      %v11246 = vadd.f32 0.0, %v11245
      %v11247 = vpop.f32.mrb[0].mxu0
      %11248 = vmatprep.mubr.f32.mxu0 0.0
      %11249 = vmatmul.mubr.f32.gmra.mrb[0].mxu0 %v4608
      %v11250 = vpop.f32.mrb[0].mxu0
      %v11251 = vadd.f32 0.0, %v11250
      %v11252 = vpop.f32.mrb[0].mxu0
      %11253 = vmatprep.mubr.f32.mxu0 0.0
      %11254 = vmatmul.mubr.f32.gmra.mrb[0].mxu0 %v4610
      %v11255 = vpop.f32.mrb[0].mxu0
      %v11256 = vadd.f32 0.0, %v11255
      %v11257 = vpop.f32.mrb[0].mxu0
      %11258 = vmatprep.mubr.f32.mxu0 0.0
      %11259 = vmatmul.mubr.f32.gmra.mrb[0].mxu0 %v4612
      %v11260 = vpop.f32.mrb[0].mxu0
      %v11261 = vadd.f32 0.0, %v11260
      %v11262 = vpop.f32.mrb[0].mxu0
      %11263 = vmatprep.mubr.f32.mxu0 0.0
      %11264 = vmatmul.mubr.f32.gmra.mrb[0].mxu0 %v4614
      %v11265 = vpop.f32.mrb[0].mxu0
      %v11266 = vadd.f32 0.0, %v11265
      %v11267 = vpop.f32.mrb[0].mxu0
      %11268 = vmatprep.mubr.f32.mxu0 0.0
      %11269 = vmatmul.mubr.f32.gmra.mrb[0].mxu0 %v4616
      %v11270 = vpop.f32.mrb[0].mxu0
      %v11271 = vadd.f32 0.0, %v11270
      %v11272 = vpop.f32.mrb[0].mxu0
      %11273 = vmatprep.mubr.f32.mxu0 0.0
      %11274 = vmatmul.mubr.f32.gmra.mrb[0].mxu0 %v4618
      %v11275 = vpop.f32.mrb[0].mxu0
      %v11276 = vadd.f32 0.0, %v11275
      %v11277 = vpop.f32.mrb[0].mxu0
      %11278 = vmatprep.mubr.f32.mxu0 0.0
      %11279 = vmatmul.mubr.f32.gmra.mrb[0].mxu0 %v4620
      %v11280 = vpop.f32.mrb[0].mxu0
      %v11281 = vadd.f32 0.0, %v11280
      %v11282 = vpop.f32.mrb[0].mxu0
      %11283 = vmatprep.mubr.f32.mxu0 0.0
      %11284 = vmatmul.mubr.f32.gmra.mrb[0].mxu0 %v4622
      %v11285 = vpop.f32.mrb[0].mxu0
      %v11286 = vadd.f32 0.0, %v11285
      %v11287 = vpop.f32.mrb[0].mxu0
      %11288 = vmatprep.mubr.f32.mxu0 0.0
      %11289 = vmatmul.mubr.f32.gmra.mrb[0].mxu0 %v4624
      %v11290 = vpop.f32.mrb[0].mxu0
      %v11291 = vadd.f32 0.0, %v11290
      %v11292 = vpop.f32.mrb[0].mxu0
      %11293 = vmatprep.mubr.f32.mxu0 0.0
      %11294 = vmatmul.mubr.f32.gmra.mrb[0].mxu0 %v4626
      %v11295 = vpop.f32.mrb[0].mxu0
      %v11296 = vadd.f32 0.0, %v11295
      %v11297 = vpop.f32.mrb[0].mxu0
      %11298 = vmatprep.mubr.f32.mxu0 0.0
      %11299 = vmatmul.mubr.f32.gmra.mrb[0].mxu0 %v4628
      %v11300 = vpop.f32.mrb[0].mxu0
      %v11301 = vadd.f32 0.0, %v11300
      %v11302 = vpop.f32.mrb[0].mxu0
      %11303 = vmatprep.mubr.f32.mxu0 0.0
      %11304 = vmatmul.mubr.f32.gmra.mrb[0].mxu0 %v4630
      %v11305 = vpop.f32.mrb[0].mxu0
      %v11306 = vadd.f32 0.0, %v11305
      %v11307 = vpop.f32.mrb[0].mxu0
      %11308 = vmatprep.mubr.f32.mxu0 0.0
      %11309 = vmatmul.mubr.f32.gmra.mrb[0].mxu0 %v4632
      %v11310 = vpop.f32.mrb[0].mxu0
      %v11311 = vadd.f32 0.0, %v11310
      %v11312 = vpop.f32.mrb[0].mxu0
      %11313 = vmatprep.mubr.f32.mxu0 0.0
      %11314 = vmatmul.mubr.f32.gmra.mrb[0].mxu0 %v4634
      %v11315 = vpop.f32.mrb[0].mxu0
      %v11316 = vadd.f32 0.0, %v11315
      %v11317 = vpop.f32.mrb[0].mxu0
      %11318 = vmatprep.mubr.f32.mxu0 0.0
      %11319 = vmatmul.mubr.f32.gmra.mrb[0].mxu0 %v4636
      %v11320 = vpop.f32.mrb[0].mxu0
      %v11321 = vadd.f32 0.0, %v11320
      %v11322 = vpop.f32.mrb[0].mxu0
      %11323 = vmatprep.mubr.f32.mxu0 0.0
      %11324 = vmatmul.mubr.f32.gmra.mrb[0].mxu0 %v4638
      %v11325 = vpop.f32.mrb[0].mxu0
      %v11326 = vadd.f32 0.0, %v11325
      %v11327 = vpop.f32.mrb[0].mxu0
      %11328 = vmatprep.mubr.f32.mxu0 0.0
      %11329 = vmatmul.mubr.f32.gmra.mrb[0].mxu0 %v4640
      %v11330 = vpop.f32.mrb[0].mxu0
      %v11331 = vadd.f32 0.0, %v11330
      %v11332 = vpop.f32.mrb[0].mxu0
      %11333 = vmatprep.mubr.f32.mxu0 0.0
      %11334 = vmatmul.mubr.f32.gmra.mrb[0].mxu0 %v4642
      %v11335 = vpop.f32.mrb[0].mxu0
      %v11336 = vadd.f32 0.0, %v11335
      %v11337 = vpop.f32.mrb[0].mxu0
      %11338 = vmatprep.mubr.f32.mxu0 0.0
      %11339 = vmatmul.mubr.f32.gmra.mrb[0].mxu0 %v4644
      %v11340 = vpop.f32.mrb[0].mxu0
      %v11341 = vadd.f32 0.0, %v11340
      %v11342 = vpop.f32.mrb[0].mxu0
      %11343 = vmatprep.mubr.f32.mxu0 0.0
      %11344 = vmatmul.mubr.f32.gmra.mrb[0].mxu0 %v4646
      %v11345 = vpop.f32.mrb[0].mxu0
      %v11346 = vadd.f32 0.0, %v11345
      %v11347 = vpop.f32.mrb[0].mxu0
      %11348 = vmatprep.mubr.f32.mxu0 0.0
      %11349 = vmatmul.mubr.f32.gmra.mrb[0].mxu0 %v4648
      %v11350 = vpop.f32.mrb[0].mxu0
      %v11351 = vadd.f32 0.0, %v11350
      %v11352 = vpop.f32.mrb[0].mxu0
      %11353 = vmatprep.mubr.f32.mxu0 0.0
      %11354 = vmatmul.mubr.f32.gmra.mrb[0].mxu0 %v4650
      %v11355 = vpop.f32.mrb[0].mxu0
      %v11356 = vadd.f32 0.0, %v11355
      %v11357 = vpop.f32.mrb[0].mxu0
      %11358 = vmatprep.mubr.f32.mxu0 0.0
      %11359 = vmatmul.mubr.f32.gmra.mrb[0].mxu0 %v4652
      %v11360 = vpop.f32.mrb[0].mxu0
      %v11361 = vadd.f32 0.0, %v11360
      %v11362 = vpop.f32.mrb[0].mxu0
      %11363 = vmatprep.mubr.f32.mxu0 0.0
      %11364 = vmatmul.mubr.f32.gmra.mrb[0].mxu0 %v4654
      %v11365 = vpop.f32.mrb[0].mxu0
      %v11366 = vadd.f32 0.0, %v11365
      %v11367 = vpop.f32.mrb[0].mxu0
      %11368 = vmatprep.mubr.f32.mxu0 0.0
      %11369 = vmatmul.mubr.f32.gmra.mrb[0].mxu0 %v4656
      %v11370 = vpop.f32.mrb[0].mxu0
      %v11371 = vadd.f32 0.0, %v11370
      %v11372 = vpop.f32.mrb[0].mxu0
      %11373 = vmatprep.mubr.f32.mxu0 0.0
      %11374 = vmatmul.mubr.f32.gmra.mrb[0].mxu0 %v4658
      %v11375 = vpop.f32.mrb[0].mxu0
      %v11376 = vadd.f32 0.0, %v11375
      %v11377 = vpop.f32.mrb[0].mxu0
      %11378 = vmatprep.mubr.f32.mxu0 0.0
      %11379 = vmatmul.mubr.f32.gmra.mrb[0].mxu0 %v4660
      %v11380 = vpop.f32.mrb[0].mxu0
      %v11381 = vadd.f32 0.0, %v11380
      %v11382 = vpop.f32.mrb[0].mxu0
      %11383 = vmatprep.mubr.f32.mxu0 0.0
      %11384 = vmatmul.mubr.f32.gmra.mrb[0].mxu0 %v4662
      %v11385 = vpop.f32.mrb[0].mxu0
      %v11386 = vadd.f32 0.0, %v11385
      %v11387 = vpop.f32.mrb[0].mxu0
      %11388 = vmatprep.mubr.f32.mxu0 0.0
      %11389 = vmatmul.mubr.f32.gmra.mrb[0].mxu0 %v4664
      %v11390 = vpop.f32.mrb[0].mxu0
      %v11391 = vadd.f32 0.0, %v11390
      %v11392 = vpop.f32.mrb[0].mxu0
      %11393 = vmatprep.mubr.f32.mxu0 0.0
      %11394 = vmatmul.mubr.f32.gmra.mrb[0].mxu0 %v6079
      %v11395 = vpop.f32.mrb[0].mxu0
      %v11396 = vadd.f32 0.0, %v11395
      %v11397 = vpop.f32.mrb[0].mxu0
      %11398 = vmatprep.mubr.f32.mxu0 0.0
      %11399 = vmatmul.mubr.f32.gmra.mrb[0].mxu0 %v6081
      %v11400 = vpop.f32.mrb[0].mxu0
      %v11401 = vadd.f32 0.0, %v11400
      %v11402 = vpop.f32.mrb[0].mxu0
      %11403 = vdwg.mxu0
      %v11405 = vsel %vm1190, %v11178, 0
      %11407 = vmatprep.subr.mxu0 0.0
      %11408 = vmatpush1.msra.mxu0 %v11405
      %11409 = vmatprep.subr.mxu0 0.0
      %11410 = vmatpush1.msra.mxu0 0.0
      %11411 = vmatprep.subr.mxu0 0.0
      %11412 = vmatpush1.msra.mxu0 0.0
      %11413 = vmatprep.subr.mxu0 0.0
      %11414 = vmatpush1.msra.mxu0 0.0
      %11415 = vmatprep.subr.mxu0 0.0
      %11416 = vmatpush1.msra.mxu0 0.0
      %11417 = vmatprep.subr.mxu0 0.0
      %11418 = vmatpush1.msra.mxu0 0.0
      %11419 = vmatprep.subr.mxu0 0.0
      %11420 = vmatpush1.msra.mxu0 0.0
      %11421 = vmatprep.subr.mxu0 0.0
      %11422 = vmatpush1.msra.mxu0 0.0
      %11423 = vmatprep.subr.mxu0 0.0
      %11424 = vmatpush1.msra.mxu0 0.0
      %11425 = vmatprep.subr.mxu0 0.0
      %11426 = vmatpush1.msra.mxu0 0.0
      %11427 = vmatprep.subr.mxu0 0.0
      %11428 = vmatpush1.msra.mxu0 0.0
      %11429 = vmatprep.subr.mxu0 0.0
      %11430 = vmatpush1.msra.mxu0 0.0
      %11431 = vmatprep.subr.mxu0 0.0
      %11432 = vmatpush1.msra.mxu0 0.0
      %11433 = vmatprep.subr.mxu0 0.0
      %11434 = vmatpush1.msra.mxu0 0.0
      %11435 = vmatprep.subr.mxu0 0.0
      %11436 = vmatpush1.msra.mxu0 0.0
      %11437 = vmatprep.subr.mxu0 0.0
      %11438 = vmatpush1.msra.mxu0 0.0
      %11439 = vmatprep.subr.mxu0 0.0
      %11440 = vmatpush1.msra.mxu0 0.0
      %11441 = vmatprep.subr.mxu0 0.0
      %11442 = vmatpush1.msra.mxu0 0.0
      %11443 = vmatprep.subr.mxu0 0.0
      %11444 = vmatpush1.msra.mxu0 0.0
      %11445 = vmatprep.subr.mxu0 0.0
      %11446 = vmatpush1.msra.mxu0 0.0
      %11447 = vmatprep.subr.mxu0 0.0
      %11448 = vmatpush1.msra.mxu0 0.0
      %11449 = vmatprep.subr.mxu0 0.0
      %11450 = vmatpush1.msra.mxu0 0.0
      %11451 = vmatprep.subr.mxu0 0.0
      %11452 = vmatpush1.msra.mxu0 0.0
      %11453 = vmatprep.subr.mxu0 0.0
      %11454 = vmatpush1.msra.mxu0 0.0
      %11455 = vmatprep.subr.mxu0 0.0
      %11456 = vmatpush1.msra.mxu0 0.0
      %11457 = vmatprep.subr.mxu0 0.0
      %11458 = vmatpush1.msra.mxu0 0.0
      %11459 = vmatprep.subr.mxu0 0.0
      %11460 = vmatpush1.msra.mxu0 0.0
      %11461 = vmatprep.subr.mxu0 0.0
      %11462 = vmatpush1.msra.mxu0 0.0
      %11463 = vmatprep.subr.mxu0 0.0
      %11464 = vmatpush1.msra.mxu0 0.0
      %11465 = vmatprep.subr.mxu0 0.0
      %11466 = vmatpush1.msra.mxu0 0.0
      %11467 = vmatprep.subr.mxu0 0.0
      %11468 = vmatpush1.msra.mxu0 0.0
      %11469 = vmatprep.subr.mxu0 0.0
      %11470 = vmatpush1.msra.mxu0 0.0
      %11471 = vmatprep.mubr.f32.mxu0 0.0
      %11472 = vmatmul.mubr.f32.gmra.mrb[0].mxu0 %v1130
      %v11473 = vpop.f32.mrb[0].mxu0
      %v11474 = vadd.f32 %v11246, %v11473
      %v11475 = vpop.f32.mrb[0].mxu0
      %11476 = vmatprep.mubr.f32.mxu0 0.0
      %11477 = vmatmul.mubr.f32.gmra.mrb[0].mxu0 %v1132
      %v11478 = vpop.f32.mrb[0].mxu0
      %v11479 = vadd.f32 %v11251, %v11478
      %v11480 = vpop.f32.mrb[0].mxu0
      %11481 = vmatprep.mubr.f32.mxu0 0.0
      %11482 = vmatmul.mubr.f32.gmra.mrb[0].mxu0 %v1134
      %v11483 = vpop.f32.mrb[0].mxu0
      %v11484 = vadd.f32 %v11256, %v11483
      %v11485 = vpop.f32.mrb[0].mxu0
      %11486 = vmatprep.mubr.f32.mxu0 0.0
      %11487 = vmatmul.mubr.f32.gmra.mrb[0].mxu0 %v1136
      %v11488 = vpop.f32.mrb[0].mxu0
      %v11489 = vadd.f32 %v11261, %v11488
      %v11490 = vpop.f32.mrb[0].mxu0
      %11491 = vmatprep.mubr.f32.mxu0 0.0
      %11492 = vmatmul.mubr.f32.gmra.mrb[0].mxu0 %v1138
      %v11493 = vpop.f32.mrb[0].mxu0
      %v11494 = vadd.f32 %v11266, %v11493
      %v11495 = vpop.f32.mrb[0].mxu0
      %11496 = vmatprep.mubr.f32.mxu0 0.0
      %11497 = vmatmul.mubr.f32.gmra.mrb[0].mxu0 %v1140
      %v11498 = vpop.f32.mrb[0].mxu0
      %v11499 = vadd.f32 %v11271, %v11498
      %v11500 = vpop.f32.mrb[0].mxu0
      %11501 = vmatprep.mubr.f32.mxu0 0.0
      %11502 = vmatmul.mubr.f32.gmra.mrb[0].mxu0 %v1142
      %v11503 = vpop.f32.mrb[0].mxu0
      %v11504 = vadd.f32 %v11276, %v11503
      %v11505 = vpop.f32.mrb[0].mxu0
      %11506 = vmatprep.mubr.f32.mxu0 0.0
      %11507 = vmatmul.mubr.f32.gmra.mrb[0].mxu0 %v1144
      %v11508 = vpop.f32.mrb[0].mxu0
      %v11509 = vadd.f32 %v11281, %v11508
      %v11510 = vpop.f32.mrb[0].mxu0
      %11511 = vmatprep.mubr.f32.mxu0 0.0
      %11512 = vmatmul.mubr.f32.gmra.mrb[0].mxu0 %v1146
      %v11513 = vpop.f32.mrb[0].mxu0
      %v11514 = vadd.f32 %v11286, %v11513
      %v11515 = vpop.f32.mrb[0].mxu0
      %11516 = vmatprep.mubr.f32.mxu0 0.0
      %11517 = vmatmul.mubr.f32.gmra.mrb[0].mxu0 %v1148
      %v11518 = vpop.f32.mrb[0].mxu0
      %v11519 = vadd.f32 %v11291, %v11518
      %v11520 = vpop.f32.mrb[0].mxu0
      %11521 = vmatprep.mubr.f32.mxu0 0.0
      %11522 = vmatmul.mubr.f32.gmra.mrb[0].mxu0 %v1150
      %v11523 = vpop.f32.mrb[0].mxu0
      %v11524 = vadd.f32 %v11296, %v11523
      %v11525 = vpop.f32.mrb[0].mxu0
      %11526 = vmatprep.mubr.f32.mxu0 0.0
      %11527 = vmatmul.mubr.f32.gmra.mrb[0].mxu0 %v1152
      %v11528 = vpop.f32.mrb[0].mxu0
      %v11529 = vadd.f32 %v11301, %v11528
      %v11530 = vpop.f32.mrb[0].mxu0
      %11531 = vmatprep.mubr.f32.mxu0 0.0
      %11532 = vmatmul.mubr.f32.gmra.mrb[0].mxu0 %v1154
      %v11533 = vpop.f32.mrb[0].mxu0
      %v11534 = vadd.f32 %v11306, %v11533
      %v11535 = vpop.f32.mrb[0].mxu0
      %11536 = vmatprep.mubr.f32.mxu0 0.0
      %11537 = vmatmul.mubr.f32.gmra.mrb[0].mxu0 %v1156
      %v11538 = vpop.f32.mrb[0].mxu0
      %v11539 = vadd.f32 %v11311, %v11538
      %v11540 = vpop.f32.mrb[0].mxu0
      %11541 = vmatprep.mubr.f32.mxu0 0.0
      %11542 = vmatmul.mubr.f32.gmra.mrb[0].mxu0 %v1158
      %v11543 = vpop.f32.mrb[0].mxu0
      %v11544 = vadd.f32 %v11316, %v11543
      %v11545 = vpop.f32.mrb[0].mxu0
      %11546 = vmatprep.mubr.f32.mxu0 0.0
      %11547 = vmatmul.mubr.f32.gmra.mrb[0].mxu0 %v1160
      %v11548 = vpop.f32.mrb[0].mxu0
      %v11549 = vadd.f32 %v11321, %v11548
      %v11550 = vpop.f32.mrb[0].mxu0
      %11551 = vmatprep.mubr.f32.mxu0 0.0
      %11552 = vmatmul.mubr.f32.gmra.mrb[0].mxu0 %v1162
      %v11553 = vpop.f32.mrb[0].mxu0
      %v11554 = vadd.f32 %v11326, %v11553
      %v11555 = vpop.f32.mrb[0].mxu0
      %11556 = vmatprep.mubr.f32.mxu0 0.0
      %11557 = vmatmul.mubr.f32.gmra.mrb[0].mxu0 %v1164
      %v11558 = vpop.f32.mrb[0].mxu0
      %v11559 = vadd.f32 %v11331, %v11558
      %v11560 = vpop.f32.mrb[0].mxu0
      %11561 = vmatprep.mubr.f32.mxu0 0.0
      %11562 = vmatmul.mubr.f32.gmra.mrb[0].mxu0 %v1166
      %v11563 = vpop.f32.mrb[0].mxu0
      %v11564 = vadd.f32 %v11336, %v11563
      %v11565 = vpop.f32.mrb[0].mxu0
      %11566 = vmatprep.mubr.f32.mxu0 0.0
      %11567 = vmatmul.mubr.f32.gmra.mrb[0].mxu0 %v1168
      %v11568 = vpop.f32.mrb[0].mxu0
      %v11569 = vadd.f32 %v11341, %v11568
      %v11570 = vpop.f32.mrb[0].mxu0
      %11571 = vmatprep.mubr.f32.mxu0 0.0
      %11572 = vmatmul.mubr.f32.gmra.mrb[0].mxu0 %v1170
      %v11573 = vpop.f32.mrb[0].mxu0
      %v11574 = vadd.f32 %v11346, %v11573
      %v11575 = vpop.f32.mrb[0].mxu0
      %11576 = vmatprep.mubr.f32.mxu0 0.0
      %11577 = vmatmul.mubr.f32.gmra.mrb[0].mxu0 %v1172
      %v11578 = vpop.f32.mrb[0].mxu0
      %v11579 = vadd.f32 %v11351, %v11578
      %v11580 = vpop.f32.mrb[0].mxu0
      %11581 = vmatprep.mubr.f32.mxu0 0.0
      %11582 = vmatmul.mubr.f32.gmra.mrb[0].mxu0 %v1174
      %v11583 = vpop.f32.mrb[0].mxu0
      %v11584 = vadd.f32 %v11356, %v11583
      %v11585 = vpop.f32.mrb[0].mxu0
      %11586 = vmatprep.mubr.f32.mxu0 0.0
      %11587 = vmatmul.mubr.f32.gmra.mrb[0].mxu0 %v1176
      %v11588 = vpop.f32.mrb[0].mxu0
      %v11589 = vadd.f32 %v11361, %v11588
      %v11590 = vpop.f32.mrb[0].mxu0
      %11591 = vmatprep.mubr.f32.mxu0 0.0
      %11592 = vmatmul.mubr.f32.gmra.mrb[0].mxu0 %v1178
      %v11593 = vpop.f32.mrb[0].mxu0
      %v11594 = vadd.f32 %v11366, %v11593
      %v11595 = vpop.f32.mrb[0].mxu0
      %11596 = vmatprep.mubr.f32.mxu0 0.0
      %11597 = vmatmul.mubr.f32.gmra.mrb[0].mxu0 %v1180
      %v11598 = vpop.f32.mrb[0].mxu0
      %v11599 = vadd.f32 %v11371, %v11598
      %v11600 = vpop.f32.mrb[0].mxu0
      %11601 = vmatprep.mubr.f32.mxu0 0.0
      %11602 = vmatmul.mubr.f32.gmra.mrb[0].mxu0 %v1182
      %v11603 = vpop.f32.mrb[0].mxu0
      %v11604 = vadd.f32 %v11376, %v11603
      %v11605 = vpop.f32.mrb[0].mxu0
      %11606 = vmatprep.mubr.f32.mxu0 0.0
      %11607 = vmatmul.mubr.f32.gmra.mrb[0].mxu0 %v1184
      %v11608 = vpop.f32.mrb[0].mxu0
      %v11609 = vadd.f32 %v11381, %v11608
      %v11610 = vpop.f32.mrb[0].mxu0
      %11611 = vmatprep.mubr.f32.mxu0 0.0
      %11612 = vmatmul.mubr.f32.gmra.mrb[0].mxu0 %v1186
      %v11613 = vpop.f32.mrb[0].mxu0
      %v11614 = vadd.f32 %v11386, %v11613
      %v11615 = vpop.f32.mrb[0].mxu0
      %11616 = vmatprep.mubr.f32.mxu0 0.0
      %11617 = vmatmul.mubr.f32.gmra.mrb[0].mxu0 %v1188
      %v11618 = vpop.f32.mrb[0].mxu0
      %v11619 = vadd.f32 %v11391, %v11618
      %v11620 = vpop.f32.mrb[0].mxu0
      %11621 = vmatprep.mubr.f32.mxu0 0.0
      %11622 = vmatmul.mubr.f32.gmra.mrb[0].mxu0 %v2688
      %v11623 = vpop.f32.mrb[0].mxu0
      %v11624 = vadd.f32 %v11396, %v11623
      %v11625 = vpop.f32.mrb[0].mxu0
      %11626 = vmatprep.mubr.f32.mxu0 0.0
      %11627 = vmatmul.mubr.f32.gmra.mrb[0].mxu0 %v2690
      %v11628 = vpop.f32.mrb[0].mxu0
      %v11629 = vadd.f32 %v11401, %v11628
      %v11630 = vpop.f32.mrb[0].mxu0
      %11631 = vdwg.mxu0
      %11632 = vmatprep.subr.mxu0 0.0
      %11633 = vmatpush1.msra.mxu0 %v903
      %11634 = vmatprep.subr.mxu0 0.0
      %11635 = vmatpush1.msra.mxu0 0.0
      %11636 = vmatprep.subr.mxu0 0.0
      %11637 = vmatpush1.msra.mxu0 0.0
      %11638 = vmatprep.subr.mxu0 0.0
      %11639 = vmatpush1.msra.mxu0 0.0
      %11640 = vmatprep.subr.mxu0 0.0
      %11641 = vmatpush1.msra.mxu0 0.0
      %11642 = vmatprep.subr.mxu0 0.0
      %11643 = vmatpush1.msra.mxu0 0.0
      %11644 = vmatprep.subr.mxu0 0.0
      %11645 = vmatpush1.msra.mxu0 0.0
      %11646 = vmatprep.subr.mxu0 0.0
      %11647 = vmatpush1.msra.mxu0 0.0
      %11648 = vmatprep.subr.mxu0 0.0
      %11649 = vmatpush1.msra.mxu0 0.0
      %11650 = vmatprep.subr.mxu0 0.0
      %11651 = vmatpush1.msra.mxu0 0.0
      %11652 = vmatprep.subr.mxu0 0.0
      %11653 = vmatpush1.msra.mxu0 0.0
      %11654 = vmatprep.subr.mxu0 0.0
      %11655 = vmatpush1.msra.mxu0 0.0
      %11656 = vmatprep.subr.mxu0 0.0
      %11657 = vmatpush1.msra.mxu0 0.0
      %11658 = vmatprep.subr.mxu0 0.0
      %11659 = vmatpush1.msra.mxu0 0.0
      %11660 = vmatprep.subr.mxu0 0.0
      %11661 = vmatpush1.msra.mxu0 0.0
      %11662 = vmatprep.subr.mxu0 0.0
      %11663 = vmatpush1.msra.mxu0 0.0
      %11664 = vmatprep.subr.mxu0 0.0
      %11665 = vmatpush1.msra.mxu0 0.0
      %11666 = vmatprep.subr.mxu0 0.0
      %11667 = vmatpush1.msra.mxu0 0.0
      %11668 = vmatprep.subr.mxu0 0.0
      %11669 = vmatpush1.msra.mxu0 0.0
      %11670 = vmatprep.subr.mxu0 0.0
      %11671 = vmatpush1.msra.mxu0 0.0
      %11672 = vmatprep.subr.mxu0 0.0
      %11673 = vmatpush1.msra.mxu0 0.0
      %11674 = vmatprep.subr.mxu0 0.0
      %11675 = vmatpush1.msra.mxu0 0.0
      %11676 = vmatprep.subr.mxu0 0.0
      %11677 = vmatpush1.msra.mxu0 0.0
      %11678 = vmatprep.subr.mxu0 0.0
      %11679 = vmatpush1.msra.mxu0 0.0
      %11680 = vmatprep.subr.mxu0 0.0
      %11681 = vmatpush1.msra.mxu0 0.0
      %11682 = vmatprep.subr.mxu0 0.0
      %11683 = vmatpush1.msra.mxu0 0.0
      %11684 = vmatprep.subr.mxu0 0.0
      %11685 = vmatpush1.msra.mxu0 0.0
      %11686 = vmatprep.subr.mxu0 0.0
      %11687 = vmatpush1.msra.mxu0 0.0
      %11688 = vmatprep.subr.mxu0 0.0
      %11689 = vmatpush1.msra.mxu0 0.0
      %11690 = vmatprep.subr.mxu0 0.0
      %11691 = vmatpush1.msra.mxu0 0.0
      %11692 = vmatprep.subr.mxu0 0.0
      %11693 = vmatpush1.msra.mxu0 0.0
      %11694 = vmatprep.subr.mxu0 0.0
      %11695 = vmatpush1.msra.mxu0 0.0
      %11696 = vmatprep.mubr.f32.mxu0 0.0
      %11697 = vmatmul.mubr.f32.gmra.mrb[0].mxu0 %v7973
      %v11698 = vpop.f32.mrb[0].mxu0
      %v11699 = vadd.f32 0.0, %v11698
      %v11700 = vpop.f32.mrb[0].mxu0
      %11701 = vmatprep.mubr.f32.mxu0 0.0
      %11702 = vmatmul.mubr.f32.gmra.mrb[0].mxu0 %v7975
      %v11703 = vpop.f32.mrb[0].mxu0
      %v11704 = vadd.f32 0.0, %v11703
      %v11705 = vpop.f32.mrb[0].mxu0
      %11706 = vmatprep.mubr.f32.mxu0 0.0
      %11707 = vmatmul.mubr.f32.gmra.mrb[0].mxu0 %v7977
      %v11708 = vpop.f32.mrb[0].mxu0
      %v11709 = vadd.f32 0.0, %v11708
      %v11710 = vpop.f32.mrb[0].mxu0
      %11711 = vmatprep.mubr.f32.mxu0 0.0
      %11712 = vmatmul.mubr.f32.gmra.mrb[0].mxu0 %v7979
      %v11713 = vpop.f32.mrb[0].mxu0
      %v11714 = vadd.f32 0.0, %v11713
      %v11715 = vpop.f32.mrb[0].mxu0
      %11716 = vmatprep.mubr.f32.mxu0 0.0
      %11717 = vmatmul.mubr.f32.gmra.mrb[0].mxu0 %v7981
      %v11718 = vpop.f32.mrb[0].mxu0
      %v11719 = vadd.f32 0.0, %v11718
      %v11720 = vpop.f32.mrb[0].mxu0
      %11721 = vmatprep.mubr.f32.mxu0 0.0
      %11722 = vmatmul.mubr.f32.gmra.mrb[0].mxu0 %v7983
      %v11723 = vpop.f32.mrb[0].mxu0
      %v11724 = vadd.f32 0.0, %v11723
      %v11725 = vpop.f32.mrb[0].mxu0
      %11726 = vmatprep.mubr.f32.mxu0 0.0
      %11727 = vmatmul.mubr.f32.gmra.mrb[0].mxu0 %v7985
      %v11728 = vpop.f32.mrb[0].mxu0
      %v11729 = vadd.f32 0.0, %v11728
      %v11730 = vpop.f32.mrb[0].mxu0
      %11731 = vmatprep.mubr.f32.mxu0 0.0
      %11732 = vmatmul.mubr.f32.gmra.mrb[0].mxu0 %v7987
      %v11733 = vpop.f32.mrb[0].mxu0
      %v11734 = vadd.f32 0.0, %v11733
      %v11735 = vpop.f32.mrb[0].mxu0
      %11736 = vmatprep.mubr.f32.mxu0 0.0
      %11737 = vmatmul.mubr.f32.gmra.mrb[0].mxu0 %v7989
      %v11738 = vpop.f32.mrb[0].mxu0
      %v11739 = vadd.f32 0.0, %v11738
      %v11740 = vpop.f32.mrb[0].mxu0
      %11741 = vmatprep.mubr.f32.mxu0 0.0
      %11742 = vmatmul.mubr.f32.gmra.mrb[0].mxu0 %v7991
      %v11743 = vpop.f32.mrb[0].mxu0
      %v11744 = vadd.f32 0.0, %v11743
      %v11745 = vpop.f32.mrb[0].mxu0
      %11746 = vmatprep.mubr.f32.mxu0 0.0
      %11747 = vmatmul.mubr.f32.gmra.mrb[0].mxu0 %v7993
      %v11748 = vpop.f32.mrb[0].mxu0
      %v11749 = vadd.f32 0.0, %v11748
      %v11750 = vpop.f32.mrb[0].mxu0
      %11751 = vmatprep.mubr.f32.mxu0 0.0
      %11752 = vmatmul.mubr.f32.gmra.mrb[0].mxu0 %v7995
      %v11753 = vpop.f32.mrb[0].mxu0
      %v11754 = vadd.f32 0.0, %v11753
      %v11755 = vpop.f32.mrb[0].mxu0
      %11756 = vmatprep.mubr.f32.mxu0 0.0
      %11757 = vmatmul.mubr.f32.gmra.mrb[0].mxu0 %v7997
      %v11758 = vpop.f32.mrb[0].mxu0
      %v11759 = vadd.f32 0.0, %v11758
      %v11760 = vpop.f32.mrb[0].mxu0
      %11761 = vmatprep.mubr.f32.mxu0 0.0
      %11762 = vmatmul.mubr.f32.gmra.mrb[0].mxu0 %v7999
      %v11763 = vpop.f32.mrb[0].mxu0
      %v11764 = vadd.f32 0.0, %v11763
      %v11765 = vpop.f32.mrb[0].mxu0
      %11766 = vmatprep.mubr.f32.mxu0 0.0
      %11767 = vmatmul.mubr.f32.gmra.mrb[0].mxu0 %v8001
      %v11768 = vpop.f32.mrb[0].mxu0
      %v11769 = vadd.f32 0.0, %v11768
      %v11770 = vpop.f32.mrb[0].mxu0
      %11771 = vmatprep.mubr.f32.mxu0 0.0
      %11772 = vmatmul.mubr.f32.gmra.mrb[0].mxu0 %v8003
      %v11773 = vpop.f32.mrb[0].mxu0
      %v11774 = vadd.f32 0.0, %v11773
      %v11775 = vpop.f32.mrb[0].mxu0
      %11776 = vmatprep.mubr.f32.mxu0 0.0
      %11777 = vmatmul.mubr.f32.gmra.mrb[0].mxu0 %v8005
      %v11778 = vpop.f32.mrb[0].mxu0
      %v11779 = vadd.f32 0.0, %v11778
      %v11780 = vpop.f32.mrb[0].mxu0
      %11781 = vmatprep.mubr.f32.mxu0 0.0
      %11782 = vmatmul.mubr.f32.gmra.mrb[0].mxu0 %v8007
      %v11783 = vpop.f32.mrb[0].mxu0
      %v11784 = vadd.f32 0.0, %v11783
      %v11785 = vpop.f32.mrb[0].mxu0
      %11786 = vmatprep.mubr.f32.mxu0 0.0
      %11787 = vmatmul.mubr.f32.gmra.mrb[0].mxu0 %v8009
      %v11788 = vpop.f32.mrb[0].mxu0
      %v11789 = vadd.f32 0.0, %v11788
      %v11790 = vpop.f32.mrb[0].mxu0
      %11791 = vmatprep.mubr.f32.mxu0 0.0
      %11792 = vmatmul.mubr.f32.gmra.mrb[0].mxu0 %v8011
      %v11793 = vpop.f32.mrb[0].mxu0
      %v11794 = vadd.f32 0.0, %v11793
      %v11795 = vpop.f32.mrb[0].mxu0
      %11796 = vmatprep.mubr.f32.mxu0 0.0
      %11797 = vmatmul.mubr.f32.gmra.mrb[0].mxu0 %v8013
      %v11798 = vpop.f32.mrb[0].mxu0
      %v11799 = vadd.f32 0.0, %v11798
      %v11800 = vpop.f32.mrb[0].mxu0
      %11801 = vmatprep.mubr.f32.mxu0 0.0
      %11802 = vmatmul.mubr.f32.gmra.mrb[0].mxu0 %v8015
      %v11803 = vpop.f32.mrb[0].mxu0
      %v11804 = vadd.f32 0.0, %v11803
      %v11805 = vpop.f32.mrb[0].mxu0
      %11806 = vmatprep.mubr.f32.mxu0 0.0
      %11807 = vmatmul.mubr.f32.gmra.mrb[0].mxu0 %v8017
      %v11808 = vpop.f32.mrb[0].mxu0
      %v11809 = vadd.f32 0.0, %v11808
      %v11810 = vpop.f32.mrb[0].mxu0
      %11811 = vmatprep.mubr.f32.mxu0 0.0
      %11812 = vmatmul.mubr.f32.gmra.mrb[0].mxu0 %v8019
      %v11813 = vpop.f32.mrb[0].mxu0
      %v11814 = vadd.f32 0.0, %v11813
      %v11815 = vpop.f32.mrb[0].mxu0
      %11816 = vmatprep.mubr.f32.mxu0 0.0
      %11817 = vmatmul.mubr.f32.gmra.mrb[0].mxu0 %v8021
      %v11818 = vpop.f32.mrb[0].mxu0
      %v11819 = vadd.f32 0.0, %v11818
      %v11820 = vpop.f32.mrb[0].mxu0
      %11821 = vmatprep.mubr.f32.mxu0 0.0
      %11822 = vmatmul.mubr.f32.gmra.mrb[0].mxu0 %v8023
      %v11823 = vpop.f32.mrb[0].mxu0
      %v11824 = vadd.f32 0.0, %v11823
      %v11825 = vpop.f32.mrb[0].mxu0
      %11826 = vmatprep.mubr.f32.mxu0 0.0
      %11827 = vmatmul.mubr.f32.gmra.mrb[0].mxu0 %v8025
      %v11828 = vpop.f32.mrb[0].mxu0
      %v11829 = vadd.f32 0.0, %v11828
      %v11830 = vpop.f32.mrb[0].mxu0
      %11831 = vmatprep.mubr.f32.mxu0 0.0
      %11832 = vmatmul.mubr.f32.gmra.mrb[0].mxu0 %v8027
      %v11833 = vpop.f32.mrb[0].mxu0
      %v11834 = vadd.f32 0.0, %v11833
      %v11835 = vpop.f32.mrb[0].mxu0
      %11836 = vmatprep.mubr.f32.mxu0 0.0
      %11837 = vmatmul.mubr.f32.gmra.mrb[0].mxu0 %v8029
      %v11838 = vpop.f32.mrb[0].mxu0
      %v11839 = vadd.f32 0.0, %v11838
      %v11840 = vpop.f32.mrb[0].mxu0
      %11841 = vmatprep.mubr.f32.mxu0 0.0
      %11842 = vmatmul.mubr.f32.gmra.mrb[0].mxu0 %v8031
      %v11843 = vpop.f32.mrb[0].mxu0
      %v11844 = vadd.f32 0.0, %v11843
      %v11845 = vpop.f32.mrb[0].mxu0
      %11846 = vmatprep.mubr.f32.mxu0 0.0
      %11847 = vmatmul.mubr.f32.gmra.mrb[0].mxu0 %v9440
      %v11848 = vpop.f32.mrb[0].mxu0
      %v11849 = vadd.f32 0.0, %v11848
      %v11850 = vpop.f32.mrb[0].mxu0
      %11851 = vmatprep.mubr.f32.mxu0 0.0
      %11852 = vmatmul.mubr.f32.gmra.mrb[0].mxu0 %v9442
      %v11853 = vpop.f32.mrb[0].mxu0
      %v11854 = vadd.f32 0.0, %v11853
      %v11855 = vpop.f32.mrb[0].mxu0
      %11856 = vdwg.mxu0
      %v11857 = vadd.f32 %v11474, %v11699
      %v11858 = vadd.f32 %v11479, %v11704
      %v11859 = vadd.f32 %v11484, %v11709
      %v11860 = vadd.f32 %v11489, %v11714
      %v11861 = vadd.f32 %v11494, %v11719
      %v11862 = vadd.f32 %v11499, %v11724
      %v11863 = vadd.f32 %v11504, %v11729
      %v11864 = vadd.f32 %v11509, %v11734
      %v11865 = vadd.f32 %v11514, %v11739
      %v11866 = vadd.f32 %v11519, %v11744
      %v11867 = vadd.f32 %v11524, %v11749
      %v11868 = vadd.f32 %v11529, %v11754
      %v11869 = vadd.f32 %v11534, %v11759
      %v11870 = vadd.f32 %v11539, %v11764
      %v11871 = vadd.f32 %v11544, %v11769
      %v11872 = vadd.f32 %v11549, %v11774
      %v11873 = vadd.f32 %v11554, %v11779
      %v11874 = vadd.f32 %v11559, %v11784
      %v11875 = vadd.f32 %v11564, %v11789
      %v11876 = vadd.f32 %v11569, %v11794
      %v11877 = vadd.f32 %v11574, %v11799
      %v11878 = vadd.f32 %v11579, %v11804
      %v11879 = vadd.f32 %v11584, %v11809
      %v11880 = vadd.f32 %v11589, %v11814
      %v11881 = vadd.f32 %v11594, %v11819
      %v11882 = vadd.f32 %v11599, %v11824
      %v11883 = vadd.f32 %v11604, %v11829
      %v11884 = vadd.f32 %v11609, %v11834
      %v11885 = vadd.f32 %v11614, %v11839
      %v11886 = vadd.f32 %v11619, %v11844
      %v11887 = vadd.f32 %v11624, %v11849
      %v11888 = vadd.f32 %v11629, %v11854
      %v11890 = vsel %vm4603, %v11146, 0
      %v11893 = vsel %vm4603, %v11147, 0
      %v11896 = vsel %vm4603, %v11148, 0
      %v11899 = vsel %vm4603, %v11149, 0
      %v11902 = vsel %vm4603, %v11150, 0
      %v11905 = vsel %vm4603, %v11151, 0
      %v11908 = vsel %vm4603, %v11152, 0
      %v11911 = vsel %vm4603, %v11153, 0
      %v11914 = vsel %vm4603, %v11154, 0
      %v11917 = vsel %vm4603, %v11155, 0
      %v11920 = vsel %vm4603, %v11156, 0
      %v11923 = vsel %vm4603, %v11157, 0
      %v11926 = vsel %vm4603, %v11158, 0
      %v11929 = vsel %vm4603, %v11159, 0
      %v11932 = vsel %vm4603, %v11160, 0
      %v11935 = vsel %vm4603, %v11161, 0
      %v11938 = vsel %vm4603, %v11162, 0
      %v11941 = vsel %vm4603, %v11163, 0
      %v11944 = vsel %vm4603, %v11164, 0
      %v11947 = vsel %vm4603, %v11165, 0
      %v11950 = vsel %vm4603, %v11166, 0
      %v11953 = vsel %vm4603, %v11167, 0
      %v11956 = vsel %vm4603, %v11168, 0
      %v11959 = vsel %vm4603, %v11169, 0
      %v11962 = vsel %vm4603, %v11170, 0
      %v11965 = vsel %vm4603, %v11171, 0
      %v11968 = vsel %vm4603, %v11172, 0
      %v11971 = vsel %vm4603, %v11173, 0
      %v11974 = vsel %vm4603, %v11174, 0
      %v11977 = vsel %vm4603, %v11175, 0
      %v11980 = vsel %vm4603, %v11176, 0
      %v11983 = vsel %vm4603, %v11177, 0
      %11985 = vmatprep.subr.mxu0 0.0
      %11986 = vmatpush1.msra.mxu0 %v904
      %11987 = vmatprep.subr.mxu0 0.0
      %11988 = vmatpush1.msra.mxu0 0.0
      %11989 = vmatprep.subr.mxu0 0.0
      %11990 = vmatpush1.msra.mxu0 0.0
      %11991 = vmatprep.subr.mxu0 0.0
      %11992 = vmatpush1.msra.mxu0 0.0
      %11993 = vmatprep.subr.mxu0 0.0
      %11994 = vmatpush1.msra.mxu0 0.0
      %11995 = vmatprep.subr.mxu0 0.0
      %11996 = vmatpush1.msra.mxu0 0.0
      %11997 = vmatprep.subr.mxu0 0.0
      %11998 = vmatpush1.msra.mxu0 0.0
      %11999 = vmatprep.subr.mxu0 0.0
      %12000 = vmatpush1.msra.mxu0 0.0
      %12001 = vmatprep.subr.mxu0 0.0
      %12002 = vmatpush1.msra.mxu0 0.0
      %12003 = vmatprep.subr.mxu0 0.0
      %12004 = vmatpush1.msra.mxu0 0.0
      %12005 = vmatprep.subr.mxu0 0.0
      %12006 = vmatpush1.msra.mxu0 0.0
      %12007 = vmatprep.subr.mxu0 0.0
      %12008 = vmatpush1.msra.mxu0 0.0
      %12009 = vmatprep.subr.mxu0 0.0
      %12010 = vmatpush1.msra.mxu0 0.0
      %12011 = vmatprep.subr.mxu0 0.0
      %12012 = vmatpush1.msra.mxu0 0.0
      %12013 = vmatprep.subr.mxu0 0.0
      %12014 = vmatpush1.msra.mxu0 0.0
      %12015 = vmatprep.subr.mxu0 0.0
      %12016 = vmatpush1.msra.mxu0 0.0
      %12017 = vmatprep.subr.mxu0 0.0
      %12018 = vmatpush1.msra.mxu0 0.0
      %12019 = vmatprep.subr.mxu0 0.0
      %12020 = vmatpush1.msra.mxu0 0.0
      %12021 = vmatprep.subr.mxu0 0.0
      %12022 = vmatpush1.msra.mxu0 0.0
      %12023 = vmatprep.subr.mxu0 0.0
      %12024 = vmatpush1.msra.mxu0 0.0
      %12025 = vmatprep.subr.mxu0 0.0
      %12026 = vmatpush1.msra.mxu0 0.0
      %12027 = vmatprep.subr.mxu0 0.0
      %12028 = vmatpush1.msra.mxu0 0.0
      %12029 = vmatprep.subr.mxu0 0.0
      %12030 = vmatpush1.msra.mxu0 0.0
      %12031 = vmatprep.subr.mxu0 0.0
      %12032 = vmatpush1.msra.mxu0 0.0
      %12033 = vmatprep.subr.mxu0 0.0
      %12034 = vmatpush1.msra.mxu0 0.0
      %12035 = vmatprep.subr.mxu0 0.0
      %12036 = vmatpush1.msra.mxu0 0.0
      %12037 = vmatprep.subr.mxu0 0.0
      %12038 = vmatpush1.msra.mxu0 0.0
      %12039 = vmatprep.subr.mxu0 0.0
      %12040 = vmatpush1.msra.mxu0 0.0
      %12041 = vmatprep.subr.mxu0 0.0
      %12042 = vmatpush1.msra.mxu0 0.0
      %12043 = vmatprep.subr.mxu0 0.0
      %12044 = vmatpush1.msra.mxu0 0.0
      %12045 = vmatprep.subr.mxu0 0.0
      %12046 = vmatpush1.msra.mxu0 0.0
      %12047 = vmatprep.subr.mxu0 0.0
      %12048 = vmatpush1.msra.mxu0 0.0
      %12049 = vmatprep.mubr.f32.mxu0 0.0
      %12050 = vmatmul.mubr.f32.gmra.mrb[0].mxu0 %v11890
      %v12051 = vpop.f32.mrb[0].mxu0
      %v12052 = vadd.f32 0.0, %v12051
      %v12053 = vpop.f32.mrb[0].mxu0
      %12054 = vmatprep.mubr.f32.mxu0 0.0
      %12055 = vmatmul.mubr.f32.gmra.mrb[0].mxu0 %v11893
      %v12056 = vpop.f32.mrb[0].mxu0
      %v12057 = vadd.f32 0.0, %v12056
      %v12058 = vpop.f32.mrb[0].mxu0
      %12059 = vmatprep.mubr.f32.mxu0 0.0
      %12060 = vmatmul.mubr.f32.gmra.mrb[0].mxu0 %v11896
      %v12061 = vpop.f32.mrb[0].mxu0
      %v12062 = vadd.f32 0.0, %v12061
      %v12063 = vpop.f32.mrb[0].mxu0
      %12064 = vmatprep.mubr.f32.mxu0 0.0
      %12065 = vmatmul.mubr.f32.gmra.mrb[0].mxu0 %v11899
      %v12066 = vpop.f32.mrb[0].mxu0
      %v12067 = vadd.f32 0.0, %v12066
      %v12068 = vpop.f32.mrb[0].mxu0
      %12069 = vmatprep.mubr.f32.mxu0 0.0
      %12070 = vmatmul.mubr.f32.gmra.mrb[0].mxu0 %v11902
      %v12071 = vpop.f32.mrb[0].mxu0
      %v12072 = vadd.f32 0.0, %v12071
      %v12073 = vpop.f32.mrb[0].mxu0
      %12074 = vmatprep.mubr.f32.mxu0 0.0
      %12075 = vmatmul.mubr.f32.gmra.mrb[0].mxu0 %v11905
      %v12076 = vpop.f32.mrb[0].mxu0
      %v12077 = vadd.f32 0.0, %v12076
      %v12078 = vpop.f32.mrb[0].mxu0
      %12079 = vmatprep.mubr.f32.mxu0 0.0
      %12080 = vmatmul.mubr.f32.gmra.mrb[0].mxu0 %v11908
      %v12081 = vpop.f32.mrb[0].mxu0
      %v12082 = vadd.f32 0.0, %v12081
      %v12083 = vpop.f32.mrb[0].mxu0
      %12084 = vmatprep.mubr.f32.mxu0 0.0
      %12085 = vmatmul.mubr.f32.gmra.mrb[0].mxu0 %v11911
      %v12086 = vpop.f32.mrb[0].mxu0
      %v12087 = vadd.f32 0.0, %v12086
      %v12088 = vpop.f32.mrb[0].mxu0
      %12089 = vmatprep.mubr.f32.mxu0 0.0
      %12090 = vmatmul.mubr.f32.gmra.mrb[0].mxu0 %v11914
      %v12091 = vpop.f32.mrb[0].mxu0
      %v12092 = vadd.f32 0.0, %v12091
      %v12093 = vpop.f32.mrb[0].mxu0
      %12094 = vmatprep.mubr.f32.mxu0 0.0
      %12095 = vmatmul.mubr.f32.gmra.mrb[0].mxu0 %v11917
      %v12096 = vpop.f32.mrb[0].mxu0
      %v12097 = vadd.f32 0.0, %v12096
      %v12098 = vpop.f32.mrb[0].mxu0
      %12099 = vmatprep.mubr.f32.mxu0 0.0
      %12100 = vmatmul.mubr.f32.gmra.mrb[0].mxu0 %v11920
      %v12101 = vpop.f32.mrb[0].mxu0
      %v12102 = vadd.f32 0.0, %v12101
      %v12103 = vpop.f32.mrb[0].mxu0
      %12104 = vmatprep.mubr.f32.mxu0 0.0
      %12105 = vmatmul.mubr.f32.gmra.mrb[0].mxu0 %v11923
      %v12106 = vpop.f32.mrb[0].mxu0
      %v12107 = vadd.f32 0.0, %v12106
      %v12108 = vpop.f32.mrb[0].mxu0
      %12109 = vmatprep.mubr.f32.mxu0 0.0
      %12110 = vmatmul.mubr.f32.gmra.mrb[0].mxu0 %v11926
      %v12111 = vpop.f32.mrb[0].mxu0
      %v12112 = vadd.f32 0.0, %v12111
      %v12113 = vpop.f32.mrb[0].mxu0
      %12114 = vmatprep.mubr.f32.mxu0 0.0
      %12115 = vmatmul.mubr.f32.gmra.mrb[0].mxu0 %v11929
      %v12116 = vpop.f32.mrb[0].mxu0
      %v12117 = vadd.f32 0.0, %v12116
      %v12118 = vpop.f32.mrb[0].mxu0
      %12119 = vmatprep.mubr.f32.mxu0 0.0
      %12120 = vmatmul.mubr.f32.gmra.mrb[0].mxu0 %v11932
      %v12121 = vpop.f32.mrb[0].mxu0
      %v12122 = vadd.f32 0.0, %v12121
      %v12123 = vpop.f32.mrb[0].mxu0
      %12124 = vmatprep.mubr.f32.mxu0 0.0
      %12125 = vmatmul.mubr.f32.gmra.mrb[0].mxu0 %v11935
      %v12126 = vpop.f32.mrb[0].mxu0
      %v12127 = vadd.f32 0.0, %v12126
      %v12128 = vpop.f32.mrb[0].mxu0
      %12129 = vmatprep.mubr.f32.mxu0 0.0
      %12130 = vmatmul.mubr.f32.gmra.mrb[0].mxu0 %v11938
      %v12131 = vpop.f32.mrb[0].mxu0
      %v12132 = vadd.f32 0.0, %v12131
      %v12133 = vpop.f32.mrb[0].mxu0
      %12134 = vmatprep.mubr.f32.mxu0 0.0
      %12135 = vmatmul.mubr.f32.gmra.mrb[0].mxu0 %v11941
      %v12136 = vpop.f32.mrb[0].mxu0
      %v12137 = vadd.f32 0.0, %v12136
      %v12138 = vpop.f32.mrb[0].mxu0
      %12139 = vmatprep.mubr.f32.mxu0 0.0
      %12140 = vmatmul.mubr.f32.gmra.mrb[0].mxu0 %v11944
      %v12141 = vpop.f32.mrb[0].mxu0
      %v12142 = vadd.f32 0.0, %v12141
      %v12143 = vpop.f32.mrb[0].mxu0
      %12144 = vmatprep.mubr.f32.mxu0 0.0
      %12145 = vmatmul.mubr.f32.gmra.mrb[0].mxu0 %v11947
      %v12146 = vpop.f32.mrb[0].mxu0
      %v12147 = vadd.f32 0.0, %v12146
      %v12148 = vpop.f32.mrb[0].mxu0
      %12149 = vmatprep.mubr.f32.mxu0 0.0
      %12150 = vmatmul.mubr.f32.gmra.mrb[0].mxu0 %v11950
      %v12151 = vpop.f32.mrb[0].mxu0
      %v12152 = vadd.f32 0.0, %v12151
      %v12153 = vpop.f32.mrb[0].mxu0
      %12154 = vmatprep.mubr.f32.mxu0 0.0
      %12155 = vmatmul.mubr.f32.gmra.mrb[0].mxu0 %v11953
      %v12156 = vpop.f32.mrb[0].mxu0
      %v12157 = vadd.f32 0.0, %v12156
      %v12158 = vpop.f32.mrb[0].mxu0
      %12159 = vmatprep.mubr.f32.mxu0 0.0
      %12160 = vmatmul.mubr.f32.gmra.mrb[0].mxu0 %v11956
      %v12161 = vpop.f32.mrb[0].mxu0
      %v12162 = vadd.f32 0.0, %v12161
      %v12163 = vpop.f32.mrb[0].mxu0
      %12164 = vmatprep.mubr.f32.mxu0 0.0
      %12165 = vmatmul.mubr.f32.gmra.mrb[0].mxu0 %v11959
      %v12166 = vpop.f32.mrb[0].mxu0
      %v12167 = vadd.f32 0.0, %v12166
      %v12168 = vpop.f32.mrb[0].mxu0
      %12169 = vmatprep.mubr.f32.mxu0 0.0
      %12170 = vmatmul.mubr.f32.gmra.mrb[0].mxu0 %v11962
      %v12171 = vpop.f32.mrb[0].mxu0
      %v12172 = vadd.f32 0.0, %v12171
      %v12173 = vpop.f32.mrb[0].mxu0
      %12174 = vmatprep.mubr.f32.mxu0 0.0
      %12175 = vmatmul.mubr.f32.gmra.mrb[0].mxu0 %v11965
      %v12176 = vpop.f32.mrb[0].mxu0
      %v12177 = vadd.f32 0.0, %v12176
      %v12178 = vpop.f32.mrb[0].mxu0
      %12179 = vmatprep.mubr.f32.mxu0 0.0
      %12180 = vmatmul.mubr.f32.gmra.mrb[0].mxu0 %v11968
      %v12181 = vpop.f32.mrb[0].mxu0
      %v12182 = vadd.f32 0.0, %v12181
      %v12183 = vpop.f32.mrb[0].mxu0
      %12184 = vmatprep.mubr.f32.mxu0 0.0
      %12185 = vmatmul.mubr.f32.gmra.mrb[0].mxu0 %v11971
      %v12186 = vpop.f32.mrb[0].mxu0
      %v12187 = vadd.f32 0.0, %v12186
      %v12188 = vpop.f32.mrb[0].mxu0
      %12189 = vmatprep.mubr.f32.mxu0 0.0
      %12190 = vmatmul.mubr.f32.gmra.mrb[0].mxu0 %v11974
      %v12191 = vpop.f32.mrb[0].mxu0
      %v12192 = vadd.f32 0.0, %v12191
      %v12193 = vpop.f32.mrb[0].mxu0
      %12194 = vmatprep.mubr.f32.mxu0 0.0
      %12195 = vmatmul.mubr.f32.gmra.mrb[0].mxu0 %v11977
      %v12196 = vpop.f32.mrb[0].mxu0
      %v12197 = vadd.f32 0.0, %v12196
      %v12198 = vpop.f32.mrb[0].mxu0
      %12199 = vmatprep.mubr.f32.mxu0 0.0
      %12200 = vmatmul.mubr.f32.gmra.mrb[0].mxu0 %v11980
      %v12201 = vpop.f32.mrb[0].mxu0
      %v12202 = vadd.f32 0.0, %v12201
      %v12203 = vpop.f32.mrb[0].mxu0
      %12204 = vmatprep.mubr.f32.mxu0 0.0
      %12205 = vmatmul.mubr.f32.gmra.mrb[0].mxu0 %v11983
      %v12206 = vpop.f32.mrb[0].mxu0
      %v12207 = vadd.f32 0.0, %v12206
      %v12208 = vpop.f32.mrb[0].mxu0
      %12209 = vdwg.mxu0
      %v12210 = vadd.f32 %v11857, %v12052
      %v12211 = vadd.f32 %v11858, %v12057
      %v12212 = vadd.f32 %v11859, %v12062
      %v12213 = vadd.f32 %v11860, %v12067
      %v12214 = vadd.f32 %v11861, %v12072
      %v12215 = vadd.f32 %v11862, %v12077
      %v12216 = vadd.f32 %v11863, %v12082
      %v12217 = vadd.f32 %v11864, %v12087
      %v12218 = vadd.f32 %v11865, %v12092
      %v12219 = vadd.f32 %v11866, %v12097
      %v12220 = vadd.f32 %v11867, %v12102
      %v12221 = vadd.f32 %v11868, %v12107
      %v12222 = vadd.f32 %v11869, %v12112
      %v12223 = vadd.f32 %v11870, %v12117
      %v12224 = vadd.f32 %v11871, %v12122
      %v12225 = vadd.f32 %v11872, %v12127
      %v12226 = vadd.f32 %v11873, %v12132
      %v12227 = vadd.f32 %v11874, %v12137
      %v12228 = vadd.f32 %v11875, %v12142
      %v12229 = vadd.f32 %v11876, %v12147
      %v12230 = vadd.f32 %v11877, %v12152
      %v12231 = vadd.f32 %v11878, %v12157
      %v12232 = vadd.f32 %v11879, %v12162
      %v12233 = vadd.f32 %v11880, %v12167
      %v12234 = vadd.f32 %v11881, %v12172
      %v12235 = vadd.f32 %v11882, %v12177
      %v12236 = vadd.f32 %v11883, %v12182
      %v12237 = vadd.f32 %v11884, %v12187
      %v12238 = vadd.f32 %v11885, %v12192
      %v12239 = vadd.f32 %v11886, %v12197
      %v12240 = vadd.f32 %v11887, %v12202
      %v12241 = vadd.f32 %v11888, %v12207
      %v12242 = vld [vmem:[%s7] sm:$0x1]
      %v12244 = vlaneseq
      %v12245 = vshrl.u32 %v12244, 7
      %v12246 = vsub.s32 0, %v12245
      %v12247 = vrot.slane %v12242, %v12246
      %v12249 = vadd.f32 %v12210, %v12247
      %v12250 = vadd.f32 %v12211, %v12247
      %v12251 = vadd.f32 %v12212, %v12247
      %v12252 = vadd.f32 %v12213, %v12247
      %v12253 = vadd.f32 %v12214, %v12247
      %v12254 = vadd.f32 %v12215, %v12247
      %v12255 = vadd.f32 %v12216, %v12247
      %v12256 = vadd.f32 %v12217, %v12247
      %v12257 = vadd.f32 %v12218, %v12247
      %v12258 = vadd.f32 %v12219, %v12247
      %v12259 = vadd.f32 %v12220, %v12247
      %v12260 = vadd.f32 %v12221, %v12247
      %v12261 = vadd.f32 %v12222, %v12247
      %v12262 = vadd.f32 %v12223, %v12247
      %v12263 = vadd.f32 %v12224, %v12247
      %v12264 = vadd.f32 %v12225, %v12247
      %v12265 = vadd.f32 %v12226, %v12247
      %v12266 = vadd.f32 %v12227, %v12247
      %v12267 = vadd.f32 %v12228, %v12247
      %v12268 = vadd.f32 %v12229, %v12247
      %v12269 = vadd.f32 %v12230, %v12247
      %v12270 = vadd.f32 %v12231, %v12247
      %v12271 = vadd.f32 %v12232, %v12247
      %v12272 = vadd.f32 %v12233, %v12247
      %v12273 = vadd.f32 %v12234, %v12247
      %v12274 = vadd.f32 %v12235, %v12247
      %v12275 = vadd.f32 %v12236, %v12247
      %v12276 = vadd.f32 %v12237, %v12247
      %v12277 = vadd.f32 %v12238, %v12247
      %v12278 = vadd.f32 %v12239, %v12247
      %v12279 = vadd.f32 %v12240, %v12247
      %v12280 = vadd.f32 %v12241, %v12247
      %v12281 = vmax.f32 %v12249, 0.0
      %v12282 = vmax.f32 %v12250, 0.0
      %v12283 = vmax.f32 %v12251, 0.0
      %v12284 = vmax.f32 %v12252, 0.0
      %v12285 = vmax.f32 %v12253, 0.0
      %v12286 = vmax.f32 %v12254, 0.0
      %v12287 = vmax.f32 %v12255, 0.0
      %v12288 = vmax.f32 %v12256, 0.0
      %v12289 = vmax.f32 %v12257, 0.0
      %v12290 = vmax.f32 %v12258, 0.0
      %v12291 = vmax.f32 %v12259, 0.0
      %v12292 = vmax.f32 %v12260, 0.0
      %v12293 = vmax.f32 %v12261, 0.0
      %v12294 = vmax.f32 %v12262, 0.0
      %v12295 = vmax.f32 %v12263, 0.0
      %v12296 = vmax.f32 %v12264, 0.0
      %v12297 = vmax.f32 %v12265, 0.0
      %v12298 = vmax.f32 %v12266, 0.0
      %v12299 = vmax.f32 %v12267, 0.0
      %v12300 = vmax.f32 %v12268, 0.0
      %v12301 = vmax.f32 %v12269, 0.0
      %v12302 = vmax.f32 %v12270, 0.0
      %v12303 = vmax.f32 %v12271, 0.0
      %v12304 = vmax.f32 %v12272, 0.0
      %v12305 = vmax.f32 %v12273, 0.0
      %v12306 = vmax.f32 %v12274, 0.0
      %v12307 = vmax.f32 %v12275, 0.0
      %v12308 = vmax.f32 %v12276, 0.0
      %v12309 = vmax.f32 %v12277, 0.0
      %v12310 = vmax.f32 %v12278, 0.0
      %v12311 = vmax.f32 %v12279, 0.0
      %v12312 = vmax.f32 %v12280, 0.0
      %vm12313 = vcmask 130048
      %v12314 = vsel %vm12313, %v12281, 0.0
      %v12315 = vsel %vm12313, %v12282, 0.0
      %v12316 = vadd.f32 %v12314, %v12315
      %v12317 = vsel %vm12313, %v12283, 0.0
      %v12318 = vadd.f32 %v12316, %v12317
      %v12319 = vsel %vm12313, %v12284, 0.0
      %v12320 = vadd.f32 %v12318, %v12319
      %v12321 = vsel %vm12313, %v12285, 0.0
      %v12322 = vadd.f32 %v12320, %v12321
      %v12323 = vsel %vm12313, %v12286, 0.0
      %v12324 = vadd.f32 %v12322, %v12323
      %v12325 = vsel %vm12313, %v12287, 0.0
      %v12326 = vadd.f32 %v12324, %v12325
      %v12327 = vsel %vm12313, %v12288, 0.0
      %v12328 = vadd.f32 %v12326, %v12327
      %v12329 = vsel %vm12313, %v12289, 0.0
      %v12330 = vadd.f32 %v12328, %v12329
      %v12331 = vsel %vm12313, %v12290, 0.0
      %v12332 = vadd.f32 %v12330, %v12331
      %v12333 = vsel %vm12313, %v12291, 0.0
      %v12334 = vadd.f32 %v12332, %v12333
      %v12335 = vsel %vm12313, %v12292, 0.0
      %v12336 = vadd.f32 %v12334, %v12335
      %v12337 = vsel %vm12313, %v12293, 0.0
      %v12338 = vadd.f32 %v12336, %v12337
      %v12339 = vsel %vm12313, %v12294, 0.0
      %v12340 = vadd.f32 %v12338, %v12339
      %v12341 = vsel %vm12313, %v12295, 0.0
      %v12342 = vadd.f32 %v12340, %v12341
      %v12343 = vsel %vm12313, %v12296, 0.0
      %v12344 = vadd.f32 %v12342, %v12343
      %v12345 = vsel %vm12313, %v12297, 0.0
      %v12346 = vadd.f32 %v12344, %v12345
      %v12347 = vsel %vm12313, %v12298, 0.0
      %v12348 = vadd.f32 %v12346, %v12347
      %v12349 = vsel %vm12313, %v12299, 0.0
      %v12350 = vadd.f32 %v12348, %v12349
      %v12351 = vsel %vm12313, %v12300, 0.0
      %v12352 = vadd.f32 %v12350, %v12351
      %v12353 = vsel %vm12313, %v12301, 0.0
      %v12354 = vadd.f32 %v12352, %v12353
      %v12355 = vsel %vm12313, %v12302, 0.0
      %v12356 = vadd.f32 %v12354, %v12355
      %v12357 = vsel %vm12313, %v12303, 0.0
      %v12358 = vadd.f32 %v12356, %v12357
      %v12359 = vsel %vm12313, %v12304, 0.0
      %v12360 = vadd.f32 %v12358, %v12359
      %v12361 = vsel %vm12313, %v12305, 0.0
      %v12362 = vadd.f32 %v12360, %v12361
      %v12363 = vsel %vm12313, %v12306, 0.0
      %v12364 = vadd.f32 %v12362, %v12363
      %v12365 = vsel %vm12313, %v12307, 0.0
      %v12366 = vadd.f32 %v12364, %v12365
      %v12367 = vsel %vm12313, %v12308, 0.0
      %v12368 = vadd.f32 %v12366, %v12367
      %v12369 = vsel %vm12313, %v12309, 0.0
      %v12370 = vadd.f32 %v12368, %v12369
      %v12371 = vsel %vm12313, %v12310, 0.0
      %v12372 = vadd.f32 %v12370, %v12371
      %v12373 = vsel %vm12313, %v12311, 0.0
      %v12374 = vadd.f32 %v12372, %v12373
      %v12375 = vsel %vm12313, %v12312, 0.0
      %v12376 = vadd.f32 %v12374, %v12375
      %v12377 = vrot.slane %v12376, 4
      %v12378 = vadd.f32 %v12376, %v12377
      %v12379 = vrot.slane %v12378, 2
      %v12380 = vadd.f32 %v12378, %v12379
      %v12381 = vrot.slane %v12380, 1
      %v12382 = vadd.f32 %v12380, %v12381
      %v12383 = vmul.f32 %v12382, 0.00390625
      %v12384 = vld [vmem:[%s8] sm:$0xff]
      %v12385 = vld [vmem:[%s8 + $0x8] sm:$0xff]
      %v12386 = vld [vmem:[%s9] sm:$0x1]
      %v12388 = vsel %vm12313, %v12383, 0
      %12390 = vmatprep.subr.mxu0 0.0
      %12391 = vmatpush1.msra.mxu0 %v12384
      %12392 = vmatprep.subr.mxu0 0.0
      %12393 = vmatpush1.msra.mxu0 %v12385
      %12394 = vmatprep.subr.mxu0 0.0
      %12395 = vmatpush1.msra.mxu0 0.0
      %12396 = vmatprep.subr.mxu0 0.0
      %12397 = vmatpush1.msra.mxu0 0.0
      %12398 = vmatprep.subr.mxu0 0.0
      %12399 = vmatpush1.msra.mxu0 0.0
      %12400 = vmatprep.subr.mxu0 0.0
      %12401 = vmatpush1.msra.mxu0 0.0
      %12402 = vmatprep.subr.mxu0 0.0
      %12403 = vmatpush1.msra.mxu0 0.0
      %12404 = vmatprep.subr.mxu0 0.0
      %12405 = vmatpush1.msra.mxu0 0.0
      %12406 = vmatprep.subr.mxu0 0.0
      %12407 = vmatpush1.msra.mxu0 0.0
      %12408 = vmatprep.subr.mxu0 0.0
      %12409 = vmatpush1.msra.mxu0 0.0
      %12410 = vmatprep.subr.mxu0 0.0
      %12411 = vmatpush1.msra.mxu0 0.0
      %12412 = vmatprep.subr.mxu0 0.0
      %12413 = vmatpush1.msra.mxu0 0.0
      %12414 = vmatprep.subr.mxu0 0.0
      %12415 = vmatpush1.msra.mxu0 0.0
      %12416 = vmatprep.subr.mxu0 0.0
      %12417 = vmatpush1.msra.mxu0 0.0
      %12418 = vmatprep.subr.mxu0 0.0
      %12419 = vmatpush1.msra.mxu0 0.0
      %12420 = vmatprep.subr.mxu0 0.0
      %12421 = vmatpush1.msra.mxu0 0.0
      %12422 = vmatprep.subr.mxu0 0.0
      %12423 = vmatpush1.msra.mxu0 0.0
      %12424 = vmatprep.subr.mxu0 0.0
      %12425 = vmatpush1.msra.mxu0 0.0
      %12426 = vmatprep.subr.mxu0 0.0
      %12427 = vmatpush1.msra.mxu0 0.0
      %12428 = vmatprep.subr.mxu0 0.0
      %12429 = vmatpush1.msra.mxu0 0.0
      %12430 = vmatprep.subr.mxu0 0.0
      %12431 = vmatpush1.msra.mxu0 0.0
      %12432 = vmatprep.subr.mxu0 0.0
      %12433 = vmatpush1.msra.mxu0 0.0
      %12434 = vmatprep.subr.mxu0 0.0
      %12435 = vmatpush1.msra.mxu0 0.0
      %12436 = vmatprep.subr.mxu0 0.0
      %12437 = vmatpush1.msra.mxu0 0.0
      %12438 = vmatprep.subr.mxu0 0.0
      %12439 = vmatpush1.msra.mxu0 0.0
      %12440 = vmatprep.subr.mxu0 0.0
      %12441 = vmatpush1.msra.mxu0 0.0
      %12442 = vmatprep.subr.mxu0 0.0
      %12443 = vmatpush1.msra.mxu0 0.0
      %12444 = vmatprep.subr.mxu0 0.0
      %12445 = vmatpush1.msra.mxu0 0.0
      %12446 = vmatprep.subr.mxu0 0.0
      %12447 = vmatpush1.msra.mxu0 0.0
      %12448 = vmatprep.subr.mxu0 0.0
      %12449 = vmatpush1.msra.mxu0 0.0
      %12450 = vmatprep.subr.mxu0 0.0
      %12451 = vmatpush1.msra.mxu0 0.0
      %12452 = vmatprep.subr.mxu0 0.0
      %12453 = vmatpush1.msra.mxu0 0.0
      %12454 = vmatprep.mubr.f32.mxu0 0.0
      %12455 = vmatmul.mubr.f32.gmra.mrb[0].mxu0 %v12388
      %v12456 = vpop.f32.mrb[0].mxu0
      %v12457 = vadd.f32 %v12386, %v12456
      %v12458 = vpop.f32.mrb[0].mxu0
      %12459 = vdwg.mxu0
      %v12460 = vadd.f32 %v12457, 3.0
      %v12461 = vmax.f32 %v12460, 0.0
      %v12462 = vmin.f32 %v12461, 6.0
      %v12463 = vmul.f32 %v12462, 0.16666667
      %v12464 = vlaneseq
      %v12465 = vshrl.u32 %v12464, 7
      %v12466 = vsub.s32 0, %v12465
      %v12467 = vrot.slane %v12463, %v12466
      %v12468 = vmul.f32 %v12281, %v12467
      %v12469 = vmul.f32 %v12282, %v12467
      %v12470 = vmul.f32 %v12283, %v12467
      %v12471 = vmul.f32 %v12284, %v12467
      %v12472 = vmul.f32 %v12285, %v12467
      %v12473 = vmul.f32 %v12286, %v12467
      %v12474 = vmul.f32 %v12287, %v12467
      %v12475 = vmul.f32 %v12288, %v12467
      %v12476 = vmul.f32 %v12289, %v12467
      %v12477 = vmul.f32 %v12290, %v12467
      %v12478 = vmul.f32 %v12291, %v12467
      %v12479 = vmul.f32 %v12292, %v12467
      %v12480 = vmul.f32 %v12293, %v12467
      %v12481 = vmul.f32 %v12294, %v12467
      %v12482 = vmul.f32 %v12295, %v12467
      %v12483 = vmul.f32 %v12296, %v12467
      %v12484 = vmul.f32 %v12297, %v12467
      %v12485 = vmul.f32 %v12298, %v12467
      %v12486 = vmul.f32 %v12299, %v12467
      %v12487 = vmul.f32 %v12300, %v12467
      %v12488 = vmul.f32 %v12301, %v12467
      %v12489 = vmul.f32 %v12302, %v12467
      %v12490 = vmul.f32 %v12303, %v12467
      %v12491 = vmul.f32 %v12304, %v12467
      %v12492 = vmul.f32 %v12305, %v12467
      %v12493 = vmul.f32 %v12306, %v12467
      %v12494 = vmul.f32 %v12307, %v12467
      %v12495 = vmul.f32 %v12308, %v12467
      %v12496 = vmul.f32 %v12309, %v12467
      %v12497 = vmul.f32 %v12310, %v12467
      %v12498 = vmul.f32 %v12311, %v12467
      %v12499 = vmul.f32 %v12312, %v12467
      %12500 = vst.msk [vmem:[%s359] sm:$0xff] %vm12313, %v12468
      %12501 = vst.msk [vmem:[%s359 + $0x8] sm:$0xff] %vm12313, %v12469
      %12502 = vst.msk [vmem:[%s359 + $0x10] sm:$0xff] %vm12313, %v12470
      %12503 = vst.msk [vmem:[%s359 + $0x18] sm:$0xff] %vm12313, %v12471
      %12504 = vst.msk [vmem:[%s359 + $0x20] sm:$0xff] %vm12313, %v12472
      %12505 = vst.msk [vmem:[%s359 + $0x28] sm:$0xff] %vm12313, %v12473
      %12506 = vst.msk [vmem:[%s359 + $0x30] sm:$0xff] %vm12313, %v12474
      %12507 = vst.msk [vmem:[%s359 + $0x38] sm:$0xff] %vm12313, %v12475
      %12508 = vst.msk [vmem:[%s359 + $0x40] sm:$0xff] %vm12313, %v12476
      %12509 = vst.msk [vmem:[%s359 + $0x48] sm:$0xff] %vm12313, %v12477
      %12510 = vst.msk [vmem:[%s359 + $0x50] sm:$0xff] %vm12313, %v12478
      %12511 = vst.msk [vmem:[%s359 + $0x58] sm:$0xff] %vm12313, %v12479
      %12512 = vst.msk [vmem:[%s359 + $0x60] sm:$0xff] %vm12313, %v12480
      %12513 = vst.msk [vmem:[%s359 + $0x68] sm:$0xff] %vm12313, %v12481
      %12514 = vst.msk [vmem:[%s359 + $0x70] sm:$0xff] %vm12313, %v12482
      %12515 = vst.msk [vmem:[%s359 + $0x78] sm:$0xff] %vm12313, %v12483
      %12516 = vst.msk [vmem:[%s359 + $0x80] sm:$0xff] %vm12313, %v12484
      %12517 = vst.msk [vmem:[%s359 + $0x88] sm:$0xff] %vm12313, %v12485
      %12518 = vst.msk [vmem:[%s359 + $0x90] sm:$0xff] %vm12313, %v12486
      %12519 = vst.msk [vmem:[%s359 + $0x98] sm:$0xff] %vm12313, %v12487
      %12520 = vst.msk [vmem:[%s359 + $0xa0] sm:$0xff] %vm12313, %v12488
      %12521 = vst.msk [vmem:[%s359 + $0xa8] sm:$0xff] %vm12313, %v12489
      %12522 = vst.msk [vmem:[%s359 + $0xb0] sm:$0xff] %vm12313, %v12490
      %12523 = vst.msk [vmem:[%s359 + $0xb8] sm:$0xff] %vm12313, %v12491
      %12524 = vst.msk [vmem:[%s359 + $0xc0] sm:$0xff] %vm12313, %v12492
      %12525 = vst.msk [vmem:[%s359 + $0xc8] sm:$0xff] %vm12313, %v12493
      %12526 = vst.msk [vmem:[%s359 + $0xd0] sm:$0xff] %vm12313, %v12494
      %12527 = vst.msk [vmem:[%s359 + $0xd8] sm:$0xff] %vm12313, %v12495
      %12528 = vst.msk [vmem:[%s359 + $0xe0] sm:$0xff] %vm12313, %v12496
      %12529 = vst.msk [vmem:[%s359 + $0xe8] sm:$0xff] %vm12313, %v12497
      %12530 = vst.msk [vmem:[%s359 + $0xf0] sm:$0xff] %vm12313, %v12498
      %12531 = vst.msk [vmem:[%s359 + $0xf8] sm:$0xff] %vm12313, %v12499
      %p12532 = scmp.lt.s32.totalorder %s21, 1
      %s12533 = scalar_select %p12532, %s21, 1
      %s12534 = smul.addr %s12533, 32
      %s12535 = smul.addr %s12534, 8
      %s12536 = scalar_lea.vmem %s10, %s12535
      // Predicated region
      $region61: #{tpu_custom_call.1} parent=59 // pred_check
        %p12537 = pneg %p254
      $region62: #{tpu_custom_call.1} parent=59 // pred_check_branch
        %12539 = sbr.rel (%p12537) target = $region64
      $region63: #{tpu_custom_call.1} parent=59 // pred_region
        _
      $region64: #{tpu_custom_call.1} parent=59 // pred_fallthru
        _
    $region60: #{tpu_custom_call.1} parent=5 // pred_fallthru
      _
    %p12540 = scmp.le.s32.totalorder 2, %s16
    // Predicated region
    $region65: #{tpu_custom_call.1} parent=5 // pred_check
      %p12541 = pneg %p12540
    $region66: #{tpu_custom_call.1} parent=5 // pred_check_branch
      %12543 = sbr.rel (%p12541) target = $region68
    $region67: #{tpu_custom_call.1} parent=5 // pred_region
      %s12544 = ssub.s32 %s16, 2
      // Predicated region
      $region69: #{tpu_custom_call.1} parent=67 // pred_check
        %p12545 = pneg %p260
      $region70: #{tpu_custom_call.1} parent=67 // pred_check_branch
        %12547 = sbr.rel (%p12545) target = $region72
      $region71: #{tpu_custom_call.1} parent=67 // pred_region
        %p12548 = scmp.lt.s32.totalorder %s22, 1
        %s12549 = scalar_select %p12548, %s22, 1
        %s12550 = smul.addr %s12549, 32
        %s12551 = smul.addr %s12550, 8
        %s12552 = scalar_lea.vmem %s10, %s12551
      $region72: #{tpu_custom_call.1} parent=67 // pred_fallthru
        _
    $region68: #{tpu_custom_call.1} parent=5 // pred_fallthru
      _
  $region6: #{tpu_custom_call.1} parent=0 // loop_footer
    %s20 = sadd.s32 1, %s16
  $region7: #{tpu_custom_call.1} parent=0 // loop_footer_branch
    %15 = sbr.rel target = $region3
  $region8: #{tpu_custom_call.1} parent=0 // loop_exit
    _

</llo_original>
